<compile_context>
chip_gen: v7x
topology: tpu7x:2x2x1
jax: 0.10.0
libtpu: 0.0.40
codegen_flags: <defaults>
</compile_context>

<pallas_src>
import math

import jax
import jax.numpy as jnp
from jax.experimental import pallas as pl
from jax.experimental.pallas import tpu as pltpu

# ---------------- configuration (small, consistent with the module) ----------------
TOKEN_NUM = 20
D_MODEL = 32
NHEAD = 4
HEAD_DIM = D_MODEL // NHEAD
DOS_NUM = 8
NUM_ENC = 2
NUM_DEC = 2
DFF = 64
NUM_RADIAL = 64                      # RPEncoding(num_radial=64, lmax=3, cutoff=10.0)
LMAX = 3
RP_DIM = NUM_RADIAL * (LMAX + 1) ** 2
CUTOFF = 10.0
LN_EPS = 1e-5
NEG_INF = -1e30
ATTN_SCALE = 1.0 / math.sqrt(HEAD_DIM)
NUM_FEAT_PAD = 8                     # pad the 3 numeric features to 8 (sublane-friendly K)
VEC_W = 128                          # lane width of the packed 1-D parameter table
OUT_LANES = 128                      # lane-dense fused output slab width


# ====================== in-kernel building blocks (traced inside Pallas) ======================

def _ln(x, g, b):
    mean = jnp.mean(x, axis=-1, keepdims=True)
    var = jnp.mean((x - mean) ** 2, axis=-1, keepdims=True)
    return (x - mean) * jax.lax.rsqrt(var + LN_EPS) * g + b


def _softmax_rows(s, exact=False):
    m = jnp.max(s, axis=-1, keepdims=True)
    e = jnp.exp(s - m)
    l = jnp.sum(e, axis=-1, keepdims=True)
    if exact:                                    # used where probs are a consumed output
        return e / l
    return e * pl.reciprocal(l, approx=True)     # EUP reciprocal (free slot)


def _leaky_relu(x):
    return jnp.where(x >= 0.0, x, 0.01 * x)


def _mm(x, w):
    """bf16 MXU matmul with f32 accumulate; activation cast only at the dot."""
    return jnp.dot(x.astype(w.dtype), w, preferred_element_type=jnp.float32)


def _mha_bt(q3, k3, v3, bias=None, need_probs=False):
    """Batched (over BT) multi-head attention on projected (BT, rows, D) q/k/v.
    Scale is folded into q at weight-prep time.  Probabilities only when consumed."""
    outs = []
    prob_sum = None
    for h in range(NHEAD):
        sl = slice(h * HEAD_DIM, (h + 1) * HEAD_DIM)
        qh, kh, vh = q3[..., sl], k3[..., sl], v3[..., sl]
        s = jnp.einsum("bqd,bkd->bqk", qh, kh, preferred_element_type=jnp.float32)
        if bias is not None:
            s = s + bias
        p = _softmax_rows(s, exact=need_probs)
        outs.append(jnp.einsum("bqk,bkd->bqd", p, vh,
                               preferred_element_type=jnp.float32))
        if need_probs:
            prob_sum = p if prob_sum is None else prob_sum + p
    out = jnp.concatenate(outs, axis=-1)
    probs = None if prob_sum is None else prob_sum * (1.0 / NHEAD)
    return out, probs


def _encoder_layer_bt(x3, rp_l, lw, vec):
    """x3: (BT, L, D) un-projected q=k=v (reference semantics: no in/out projection,
    scaled q.k score, un-scaled rp bias).  rp_l: (BT, L, L, D) projected rp features."""
    bt, l, _ = x3.shape
    outs = []
    for h in range(NHEAD):
        sl = slice(h * HEAD_DIM, (h + 1) * HEAD_DIM)
        qh = x3[..., sl]                                        # (BT, L, Dh)
        rph = rp_l[..., sl]                                     # (BT, L, L, Dh)
        bias_h = jnp.sum(qh[:, :, None, :] * rph, axis=-1)      # (BT, L, L)
        s = (jnp.einsum("bid,bjd->bij", qh, qh,
                        preferred_element_type=jnp.float32) * ATTN_SCALE + bias_h)
        p = _softmax_rows(s)
        outs.append(jnp.einsum("bij,bjd->bid", p, qh,
                               preferred_element_type=jnp.float32))
    attn_out = jnp.concatenate(outs, axis=-1)                   # (BT, L, D)
    x = _ln((x3 + attn_out).reshape(bt * l, D_MODEL), vec("n1_g"), vec("n1_b"))
    h1 = _leaky_relu(_mm(x, lw["lin1_w"]) + vec("lin1_b"))
    h2 = _mm(h1, lw["lin2_w"]) + vec("lin2_b")
    x = _ln(x + h2, vec("n2_g"), vec("n2_b"))
    return x.reshape(bt, l, D_MODEL)


def _decoder_layer_bt(x3, mem3, mask_b, lw, vec, need_probs):
    bt, q_len, d = x3.shape
    l = mem3.shape[1]
    rd = bt * q_len
    x = x3.reshape(rd, d)

    # self attention: fused QKV matmul (no zero-bias key-padding tensor materialized)
    qkv = _mm(x, lw["sa_wqkv"]) + vec("sa_bqkv")
    q3 = qkv[:, :d].reshape(bt, q_len, d)
    k3 = qkv[:, d:2 * d].reshape(bt, q_len, d)
    v3 = qkv[:, 2 * d:].reshape(bt, q_len, d)
    sa, _ = _mha_bt(q3, k3, v3)
    sa = _mm(sa.reshape(rd, d), lw["sa_wo"]) + vec("sa_bo")
    x = _ln(x + sa, vec("n1_g"), vec("n1_b"))

    # cross attention: fused KV matmul on memory, mask as additive bias (BT, 1, L)
    qc = _mm(x, lw["ca_wq"]) + vec("ca_bq")
    kv = _mm(mem3.reshape(bt * l, d), lw["ca_wkv"]) + vec("ca_bkv")
    k3 = kv[:, :d].reshape(bt, l, d)
    v3 = kv[:, d:].reshape(bt, l, d)
    ca, probs = _mha_bt(qc.reshape(bt, q_len, d), k3, v3, bias=mask_b,
                        need_probs=need_probs)
    ca = _mm(ca.reshape(rd, d), lw["ca_wo"]) + vec("ca_bo")
    x = _ln(x + ca, vec("n2_g"), vec("n2_b"))

    h1 = _leaky_relu(_mm(x, lw["lin1_w"]) + vec("lin1_b"))
    h2 = _mm(h1, lw["lin2_w"]) + vec("lin2_b")
    x = _ln(x + h2, vec("n3_g"), vec("n3_b"))
    return x.reshape(bt, q_len, d), probs


def _cnn_head(xc3, cnn_ws, vec):
    """Conv1d(k=3, pad=1) stack: one (Cin -> 3*Cout) matmul per layer, then per-tap
    time shifts + sum.  Shifts are per batch element (no cross-element mixing)."""
    n = len(cnn_ws)
    for i, w in enumerate(cnn_ws):
        bt, t, cin = xc3.shape
        cout = w.shape[1] // 3
        z = _mm(xc3.reshape(bt * t, cin), w).reshape(bt, t, 3 * cout)
        z0 = z[..., :cout]                 # tap for x[t-1]
        z1 = z[..., cout:2 * cout]         # tap for x[t]
        z2 = z[..., 2 * cout:]             # tap for x[t+1]
        zrow = jnp.zeros((bt, 1, cout), jnp.float32)
        y = (jnp.concatenate([zrow, z0[:, :-1, :]], axis=1)
             + z1
             + jnp.concatenate([z2[:, 1:, :], zrow], axis=1)
             + vec(f"cnn{i}_b"))
        if i < n - 1:
            y = jnp.maximum(y, 0.0)
        xc3 = y
    return xc3                              # (BT, T, 1)


# ============================ JAX glue (features, kept in XLA) ============================

def real_sph_harm_l3(dirs):
    x, y, z = dirs[..., 0], dirs[..., 1], dirs[..., 2]
    Y = [
        0.28209479177 * jnp.ones_like(x),
        0.4886025119 * y, 0.4886025119 * z, 0.4886025119 * x,
        1.0925484306 * x * y, 1.0925484306 * y * z,
        0.3153915653 * (3.0 * z * z - 1.0),
        1.0925484306 * x * z, 0.5462742153 * (x * x - y * y),
        0.5900435899 * y * (3.0 * x * x - y * y),
        2.8906114426 * x * y * z,
        0.4570457995 * y * (5.0 * z * z - 1.0),
        0.3731763326 * z * (5.0 * z * z - 3.0),
        0.4570457995 * x * (5.0 * z * z - 1.0),
        1.4453057213 * z * (x * x - y * y),
        0.5900435899 * x * (x * x - 3.0 * y * y),
    ]
    return jnp.stack(Y, axis=-1)


def rp_encoding(dist, dirs):
    # TODO(synk): RPEncoding source was not provided; implemented as Gaussian radial
    # basis (num_radial centers over [0, cutoff]) outer-product with real spherical
    # harmonics up to lmax=3  -> out_dim = num_radial * (lmax+1)^2.
    centers = jnp.linspace(0.0, CUTOFF, NUM_RADIAL)
    width = CUTOFF / NUM_RADIAL
    radial = jnp.exp(-((dist[..., None] - centers) ** 2) / (2.0 * width * width))
    sph = real_sph_harm_l3(dirs)
    out = radial[..., :, None] * sph[..., None, :]
    return out.reshape(dist.shape + (RP_DIM,))


def compute_relative_features(pos_atoms):
    # TODO(synk): compute_relative_features source not provided; assumed pairwise
    # distances + unit direction vectors over the atom positions (pos[:, 2:]).
    diff = pos_atoms[:, :, None, :] - pos_atoms[:, None, :, :]
    dist = jnp.sqrt(jnp.sum(diff * diff, axis=-1) + 1e-12)
    dirs = diff / (dist[..., None] + 1e-12)
    return dist, dirs


# ============================ weight preparation (fusion-friendly) ============================

class _VecPack:
    """All 1-D parameters packed into one (rows, 128) lane-padded f32 table."""

    def __init__(self):
        self._rows = []
        self.index = {}          # name -> (row, width)  (static Python ints)

    def add(self, name, v):
        v = jnp.asarray(v, jnp.float32).reshape(-1)
        self.index[name] = (len(self._rows), int(v.shape[0]))
        self._rows.append(jnp.pad(v, (0, VEC_W - v.shape[0])))

    def pack(self):
        rows = list(self._rows)
        while len(rows) % 8 != 0:            # keep the sublane dim a multiple of 8
            rows.append(jnp.zeros((VEC_W,), jnp.float32))
        return jnp.stack(rows, axis=0)


def _prepare_kernel_params(params):
    """Repack the reference parameter tree: bf16 matmul weights (scale folded into q),
    fused QKV / KV weights, per-layer conv taps concatenated along lanes, and every
    1-D parameter packed into a single (rows, 128) VMEM table."""
    bf16 = jnp.bfloat16
    vp = _VecPack()

    vp.add("atom_norm_g", params["atom_norm"]["g"])
    vp.add("atom_norm_b", params["atom_norm"]["b"])
    vp.add("num_b", params["num_enc"]["b"])
    vp.add("num_norm_g", params["num_norm"]["g"])
    vp.add("num_norm_b", params["num_norm"]["b"])
    vp.add("fuse_b", params["fuse_proj"]["b"])
    vp.add("dec_norm_g", params["dec_norm"]["g"])
    vp.add("dec_norm_b", params["dec_norm"]["b"])

    kp = {
        "num_w": jnp.pad(params["num_enc"]["w"],
                         ((0, NUM_FEAT_PAD - 3), (0, 0))).astype(bf16),
        "fuse_w": params["fuse_proj"]["w"].astype(bf16),
        "tgt": params["tgt"].astype(jnp.float32),
        "enc": [],
        "dec": [],
        "cnn": [],
    }

    for li, lp in enumerate(params["enc_layers"]):
        kp["enc"].append({"lin1_w": lp["lin1"]["w"].astype(bf16),
                          "lin2_w": lp["lin2"]["w"].astype(bf16)})
        vp.add(f"enc{li}_lin1_b", lp["lin1"]["b"])
        vp.add(f"enc{li}_lin2_b", lp["lin2"]["b"])
        vp.add(f"enc{li}_n1_g", lp["norm1"]["g"])
        vp.add(f"enc{li}_n1_b", lp["norm1"]["b"])
        vp.add(f"enc{li}_n2_g", lp["norm2"]["g"])
        vp.add(f"enc{li}_n2_b", lp["norm2"]["b"])

    for li, lp in enumerate(params["dec_layers"]):
        sa, ca = lp["self_attn"], lp["cross_attn"]
        kp["dec"].append({
            # scale folded into the q part of the fused weights
            "sa_wqkv": jnp.concatenate([sa["q"]["w"] * ATTN_SCALE, sa["k"]["w"],
                                        sa["v"]["w"]], axis=1).astype(bf16),
            "sa_wo": sa["o"]["w"].astype(bf16),
            "ca_wq": (ca["q"]["w"] * ATTN_SCALE).astype(bf16),
            "ca_wkv": jnp.concatenate([ca["k"]["w"], ca["v"]["w"]], axis=1).astype(bf16),
            "ca_wo": ca["o"]["w"].astype(bf16),
            "lin1_w": lp["lin1"]["w"].astype(bf16),
            "lin2_w": lp["lin2"]["w"].astype(bf16),
        })
        vp.add(f"dec{li}_sa_bqkv",
               jnp.concatenate([sa["q"]["b"] * ATTN_SCALE, sa["k"]["b"], sa["v"]["b"]]))
        vp.add(f"dec{li}_sa_bo", sa["o"]["b"])
        vp.add(f"dec{li}_ca_bq", ca["q"]["b"] * ATTN_SCALE)
        vp.add(f"dec{li}_ca_bkv", jnp.concatenate([ca["k"]["b"], ca["v"]["b"]]))
        vp.add(f"dec{li}_ca_bo", ca["o"]["b"])
        vp.add(f"dec{li}_lin1_b", lp["lin1"]["b"])
        vp.add(f"dec{li}_lin2_b", lp["lin2"]["b"])
        vp.add(f"dec{li}_n1_g", lp["norm1"]["g"])
        vp.add(f"dec{li}_n1_b", lp["norm1"]["b"])
        vp.add(f"dec{li}_n2_g", lp["norm2"]["g"])
        vp.add(f"dec{li}_n2_b", lp["norm2"]["b"])
        vp.add(f"dec{li}_n3_g", lp["norm3"]["g"])
        vp.add(f"dec{li}_n3_b", lp["norm3"]["b"])

    for i, cp in enumerate(params["cnn"]):
        # w: (Cout, Cin, 3) -> per-tap (Cin, Cout) blocks concatenated along lanes.
        w_taps = jnp.concatenate([cp["w"][:, :, k].T for k in range(3)], axis=1)
        kp["cnn"].append(w_taps.astype(bf16))
        vp.add(f"cnn{i}_b", cp["b"])

    kp["vecs"] = vp.pack()
    return kp, vp.index


def _pick_batch_tile(b):
    """Largest tile in {16,8,4,2} that divides B and still leaves >=2 grid steps
    (so both v7x TensorCores get work); otherwise 1 element per step."""
    for bt in (16, 8, 4, 2):
        if b % bt == 0 and b // bt >= 2:
            return bt
    return 1


# ==================================== fused forward ====================================

def transformer_forward(params, src, mask, pos):
    B, Lp = src.shape
    L = Lp - 2
    atom_idx = src[:, 2:]
    mask_a = mask[:, :L]

    # ---- XLA-side prep: embedding gather + numeric features + pairwise geometry ----
    atom_emb = params["tok_emb"][atom_idx].astype(jnp.float32)          # (B, L, D)
    # TODO(synk): AtomFeatureEncoder source not provided; assumed 3 scalar features
    # derived from the atomic index followed by a Linear(3, d_model).
    z = atom_idx.astype(jnp.float32)
    num_feats = jnp.stack([z, jnp.sqrt(z + 1.0), jnp.log(z + 1.0)], axis=-1)
    num_feats = jnp.pad(num_feats, ((0, 0), (0, 0), (0, NUM_FEAT_PAD - 3)))  # (B, L, 8)

    dist, dirs = compute_relative_features(pos[:, 2:, :])
    rp_feats = rp_encoding(dist, dirs)                                   # (B, L, L, RP_DIM)
    rp_w_all = jnp.concatenate([lp["rp_proj"]["w"] for lp in params["enc_layers"]],
                               axis=1).astype(jnp.bfloat16)
    rp_b_all = jnp.concatenate([lp["rp_proj"]["b"] for lp in params["enc_layers"]],
                               axis=0).astype(jnp.float32)
    # rp projection fused in XLA -> ship only the projected (B, L, L, NUM_ENC*D)
    # (~16 KiB/elem) into the kernel instead of the raw RP_DIM=1024 feature stream.
    rp_emb = jnp.einsum("bijr,rd->bijd", rp_feats.astype(jnp.bfloat16), rp_w_all,
                        preferred_element_type=jnp.float32) + rp_b_all
    rp_list = [rp_emb[..., li * D_MODEL:(li + 1) * D_MODEL] for li in range(NUM_ENC)]
    mask_bias = jnp.where(mask_a, NEG_INF, 0.0).astype(jnp.float32)[:, None, :]  # (B,1,L)

    kp, vec_index = _prepare_kernel_params(params)
    leaves, treedef = jax.tree_util.tree_flatten(kp)
    n_leaves = len(leaves)

    BT = _pick_batch_tile(B)
    acts = [atom_emb, num_feats] + rp_list + [mask_bias]
    n_acts = len(acts)

    def kernel(*refs):
        ae_ref, nf_ref = refs[0], refs[1]
        rp_refs = refs[2:2 + NUM_ENC]
        mb_ref = refs[2 + NUM_ENC]
        p_refs = list(refs[n_acts:n_acts + n_leaves])
        out_ref = refs[n_acts + n_leaves]
        kpr = jax.tree_util.tree_unflatten(treedef, p_refs)

        vecs = kpr["vecs"][...]                                  # (rows, 128) f32 table

        def V(name):
            r, n = vec_index[name]
            return vecs[r:r + 1, :n]

        rows = BT * L
        # ---- embedding front-end (LN + numeric linear + LN + fuse projection) ----
        ae = _ln(ae_ref[...].reshape(rows, D_MODEL), V("atom_norm_g"), V("atom_norm_b"))
        ne = _mm(nf_ref[...].reshape(rows, NUM_FEAT_PAD), kpr["num_w"][...]) + V("num_b")
        ne = _ln(ne, V("num_norm_g"), V("num_norm_b"))
        x = _mm(jnp.concatenate([ae, ne], axis=-1), kpr["fuse_w"][...]) + V("fuse_b")
        x3 = x.reshape(BT, L, D_MODEL)

        # ---- encoder stack (rp already projected per layer, sliced in XLA) ----
        for li in range(NUM_ENC):
            lw = {k: kpr["enc"][li][k][...] for k in ("lin1_w", "lin2_w")}
            vec = lambda n, _p=f"enc{li}_": V(_p + n)            # noqa: E731
            x3 = _encoder_layer_bt(x3, rp_refs[li][...], lw, vec)
        mem3 = x3

        # ---- decoder stack (probs only from the last layer's cross-attention) ----
        mask_b = mb_ref[...]                                     # (BT, 1, L)
        tgt = jnp.broadcast_to(kpr["tgt"][...][None], (BT, DOS_NUM, D_MODEL))
        attn = None
        for li in range(NUM_DEC):
            lw = {k: kpr["dec"][li][k][...]
                  for k in ("sa_wqkv", "sa_wo", "ca_wq", "ca_wkv", "ca_wo",
                            "lin1_w", "lin2_w")}
            vec = lambda n, _p=f"dec{li}_": V(_p + n)            # noqa: E731
            tgt, probs = _decoder_layer_bt(tgt, mem3, mask_b, lw, vec,
                                           need_probs=(li == NUM_DEC - 1))
            if probs is not None:
                attn = probs
        rd = BT * DOS_NUM
        hs = _ln(tgt.reshape(rd, D_MODEL), V("dec_norm_g"), V("dec_norm_b"))
        hs3 = hs.reshape(BT, DOS_NUM, D_MODEL)

        # ---- fused 6-layer CNN head ----
        res3 = _cnn_head(hs3, [w[...] for w in kpr["cnn"]], V)   # (BT, DOS_NUM, 1)

        # ---- single lane-dense output slab: lane 0 = dos value, lanes 1..L = attn ----
        res2 = res3.reshape(rd, 1)
        attn2 = attn.reshape(rd, L)
        pad = jnp.zeros((rd, OUT_LANES - 1 - L), jnp.float32)
        out_ref[...] = jnp.concatenate([res2, attn2, pad], axis=-1).reshape(
            BT, DOS_NUM, OUT_LANES)

    def batch_spec(a):
        tr = a.shape[1:]
        return pl.BlockSpec((BT,) + tr, lambda b, _n=len(tr): (b,) + (0,) * _n)

    def full_spec(a):
        return pl.BlockSpec(a.shape, lambda b, _n=a.ndim: (0,) * _n)

    in_specs = [batch_spec(a) for a in acts] + [full_spec(l) for l in leaves]
    out_shape = jax.ShapeDtypeStruct((B, DOS_NUM, OUT_LANES), jnp.float32)
    out_specs = pl.BlockSpec((BT, DOS_NUM, OUT_LANES), lambda b: (b, 0, 0))

    bytes_accessed = int(sum(a.size * a.dtype.itemsize for a in acts)
                         + sum(l.size * l.dtype.itemsize for l in leaves)
                         + B * DOS_NUM * OUT_LANES * 4)
    flops = int(3_000_000 * B)          # rough: frontend/encoder/decoder/CNN matmuls
    transcend = int(B * (NUM_ENC * NHEAD * L * L
                         + NUM_DEC * NHEAD * (DOS_NUM * DOS_NUM + DOS_NUM * L)))

    slab = pl.pallas_call(
        kernel,
        grid=(B // BT,),
        in_specs=in_specs,
        out_specs=out_specs,
        out_shape=out_shape,
        compiler_params=pltpu.CompilerParams(
            dimension_semantics=("parallel",)),      # v7x: batch tiles across both TCs
        cost_estimate=pl.CostEstimate(flops=flops, transcendentals=transcend,
                                      bytes_accessed=bytes_accessed),
    )(*acts, *leaves)

    res = slab[:, :, 0:1]
    attn = slab[:, :, 1:1 + L]
    return res, attn


# ================================ parameter init ================================

def init_params(key):
    keys = iter(jax.random.split(key, 512))

    def nk():
        return next(keys)

    def lin(in_d, out_d):
        std = (2.0 / (in_d + out_d)) ** 0.5
        return {"w": std * jax.random.normal(nk(), (in_d, out_d), jnp.float32),
                "b": jnp.zeros((out_d,), jnp.float32)}

    def ln(dd):
        return {"g": jnp.ones((dd,), jnp.float32), "b": jnp.zeros((dd,), jnp.float32)}

    def mha_p(dd):
        return {"q": lin(dd, dd), "k": lin(dd, dd), "v": lin(dd, dd), "o": lin(dd, dd)}

    d = D_MODEL
    params = {
        "tok_emb": (2.0 / (TOKEN_NUM + d)) ** 0.5
                   * jax.random.normal(nk(), (TOKEN_NUM, d), jnp.float32),
        "num_enc": lin(3, d),
        "atom_norm": ln(d),
        "num_norm": ln(d),
        "fuse_proj": lin(2 * d, d),
        "enc_layers": [
            {"rp_proj": lin(RP_DIM, d), "lin1": lin(d, DFF), "lin2": lin(DFF, d),
             "norm1": ln(d), "norm2": ln(d)}
            for _ in range(NUM_ENC)
        ],
        "dec_layers": [
            {"self_attn": mha_p(d), "cross_attn": mha_p(d),
             "lin1": lin(d, DFF), "lin2": lin(DFF, d),
             "norm1": ln(d), "norm2": ln(d), "norm3": ln(d)}
            for _ in range(NUM_DEC)
        ],
        "dec_norm": ln(d),
        "tgt": 0.1 * jax.random.normal(nk(), (DOS_NUM, d), jnp.float32),
        "query_embed": 0.1 * jax.random.normal(nk(), (DOS_NUM, d), jnp.float32),  # unused
    }

    cnn = []
    cin = d
    for i in range(6):
        cout = 3 * d if i < 5 else 1
        std = (2.0 / (cin * 3 + cout * 3)) ** 0.5
        cnn.append({"w": std * jax.random.normal(nk(), (cout, cin, 3), jnp.float32),
                    "b": jnp.zeros((cout,), jnp.float32)})
        cin = cout
    params["cnn"] = cnn
    return params


# ==================================== main ====================================

if __name__ == "__main__":
    key = jax.random.PRNGKey(0)
    pkey, skey, poskey = jax.random.split(key, 3)
    params = init_params(pkey)

    B, Lp = 2, 10                      # atom_len = Lp - 2 = 8
    src = jax.random.randint(skey, (B, Lp), 0, TOKEN_NUM, dtype=jnp.int32)
    pos = 3.0 * jax.random.normal(poskey, (B, Lp, 3), jnp.float32)
    mask = jnp.zeros((B, Lp), dtype=bool).at[1, 6:].set(True)   # True = padded key

    res, attn = jax.jit(transformer_forward)(params, src, mask, pos)
    jax.block_until_ready((res, attn))
    assert res.shape == (B, DOS_NUM, 1), res.shape
    assert attn.shape == (B, DOS_NUM, Lp - 2), attn.shape
    print("KERNEL_OK")
</pallas_src>

<mosaic_0001>
module attributes {stable_mosaic.version = 11 : i64} {
  func.func @kernel(%arg0: i32, %arg1: memref<1x8x32xf32, #tpu.memory_space<vmem>>, %arg2: memref<1x8x8xf32, #tpu.memory_space<vmem>>, %arg3: memref<1x8x8x32xf32, #tpu.memory_space<vmem>>, %arg4: memref<1x8x8x32xf32, #tpu.memory_space<vmem>>, %arg5: memref<1x1x8xf32, #tpu.memory_space<vmem>>, %arg6: memref<32x288xbf16, #tpu.memory_space<vmem>>, %arg7: memref<96x288xbf16, #tpu.memory_space<vmem>>, %arg8: memref<96x288xbf16, #tpu.memory_space<vmem>>, %arg9: memref<96x288xbf16, #tpu.memory_space<vmem>>, %arg10: memref<96x288xbf16, #tpu.memory_space<vmem>>, %arg11: memref<96x3xbf16, #tpu.memory_space<vmem>>, %arg12: memref<32x64xbf16, #tpu.memory_space<vmem>>, %arg13: memref<32x32xbf16, #tpu.memory_space<vmem>>, %arg14: memref<32x32xbf16, #tpu.memory_space<vmem>>, %arg15: memref<32x64xbf16, #tpu.memory_space<vmem>>, %arg16: memref<64x32xbf16, #tpu.memory_space<vmem>>, %arg17: memref<32x32xbf16, #tpu.memory_space<vmem>>, %arg18: memref<32x96xbf16, #tpu.memory_space<vmem>>, %arg19: memref<32x64xbf16, #tpu.memory_space<vmem>>, %arg20: memref<32x32xbf16, #tpu.memory_space<vmem>>, %arg21: memref<32x32xbf16, #tpu.memory_space<vmem>>, %arg22: memref<32x64xbf16, #tpu.memory_space<vmem>>, %arg23: memref<64x32xbf16, #tpu.memory_space<vmem>>, %arg24: memref<32x32xbf16, #tpu.memory_space<vmem>>, %arg25: memref<32x96xbf16, #tpu.memory_space<vmem>>, %arg26: memref<32x64xbf16, #tpu.memory_space<vmem>>, %arg27: memref<64x32xbf16, #tpu.memory_space<vmem>>, %arg28: memref<32x64xbf16, #tpu.memory_space<vmem>>, %arg29: memref<64x32xbf16, #tpu.memory_space<vmem>>, %arg30: memref<64x32xbf16, #tpu.memory_space<vmem>>, %arg31: memref<8x32xbf16, #tpu.memory_space<vmem>>, %arg32: memref<8x32xf32, #tpu.memory_space<vmem>>, %arg33: memref<56x128xf32, #tpu.memory_space<vmem>>, %arg34: memref<1x8x128xf32, #tpu.memory_space<vmem>>) attributes {dimension_semantics = [#tpu.dimension_semantics<parallel>], iteration_bounds = array<i64: 2>, scalar_prefetch = 0 : i64, scratch_operands = 0 : i64, tpu.core_type = #tpu.core_type<tc>, window_params = [{transform_indices = @transform_0, window_bounds = array<i64: 1, 8, 32>}, {transform_indices = @transform_1, window_bounds = array<i64: 1, 8, 8>}, {transform_indices = @transform_2, window_bounds = array<i64: 1, 8, 8, 32>}, {transform_indices = @transform_3, window_bounds = array<i64: 1, 8, 8, 32>}, {transform_indices = @transform_4, window_bounds = array<i64: 1, 1, 8>}, {pipeline_mode = #tpu.pipeline_mode<synchronous>, transform_indices = @transform_5, window_bounds = array<i64: 32, 288>}, {pipeline_mode = #tpu.pipeline_mode<synchronous>, transform_indices = @transform_6, window_bounds = array<i64: 96, 288>}, {pipeline_mode = #tpu.pipeline_mode<synchronous>, transform_indices = @transform_7, window_bounds = array<i64: 96, 288>}, {pipeline_mode = #tpu.pipeline_mode<synchronous>, transform_indices = @transform_8, window_bounds = array<i64: 96, 288>}, {pipeline_mode = #tpu.pipeline_mode<synchronous>, transform_indices = @transform_9, window_bounds = array<i64: 96, 288>}, {pipeline_mode = #tpu.pipeline_mode<synchronous>, transform_indices = @transform_10, window_bounds = array<i64: 96, 3>}, {pipeline_mode = #tpu.pipeline_mode<synchronous>, transform_indices = @transform_11, window_bounds = array<i64: 32, 64>}, {pipeline_mode = #tpu.pipeline_mode<synchronous>, transform_indices = @transform_12, window_bounds = array<i64: 32, 32>}, {pipeline_mode = #tpu.pipeline_mode<synchronous>, transform_indices = @transform_13, window_bounds = array<i64: 32, 32>}, {pipeline_mode = #tpu.pipeline_mode<synchronous>, transform_indices = @transform_14, window_bounds = array<i64: 32, 64>}, {pipeline_mode = #tpu.pipeline_mode<synchronous>, transform_indices = @transform_15, window_bounds = array<i64: 64, 32>}, {pipeline_mode = #tpu.pipeline_mode<synchronous>, transform_indices = @transform_16, window_bounds = array<i64: 32, 32>}, {pipeline_mode = #tpu.pipeline_mode<synchronous>, transform_indices = @transform_17, window_bounds = array<i64: 32, 96>}, {pipeline_mode = #tpu.pipeline_mode<synchronous>, transform_indices = @transform_18, window_bounds = array<i64: 32, 64>}, {pipeline_mode = #tpu.pipeline_mode<synchronous>, transform_indices = @transform_19, window_bounds = array<i64: 32, 32>}, {pipeline_mode = #tpu.pipeline_mode<synchronous>, transform_indices = @transform_20, window_bounds = array<i64: 32, 32>}, {pipeline_mode = #tpu.pipeline_mode<synchronous>, transform_indices = @transform_21, window_bounds = array<i64: 32, 64>}, {pipeline_mode = #tpu.pipeline_mode<synchronous>, transform_indices = @transform_22, window_bounds = array<i64: 64, 32>}, {pipeline_mode = #tpu.pipeline_mode<synchronous>, transform_indices = @transform_23, window_bounds = array<i64: 32, 32>}, {pipeline_mode = #tpu.pipeline_mode<synchronous>, transform_indices = @transform_24, window_bounds = array<i64: 32, 96>}, {pipeline_mode = #tpu.pipeline_mode<synchronous>, transform_indices = @transform_25, window_bounds = array<i64: 32, 64>}, {pipeline_mode = #tpu.pipeline_mode<synchronous>, transform_indices = @transform_26, window_bounds = array<i64: 64, 32>}, {pipeline_mode = #tpu.pipeline_mode<synchronous>, transform_indices = @transform_27, window_bounds = array<i64: 32, 64>}, {pipeline_mode = #tpu.pipeline_mode<synchronous>, transform_indices = @transform_28, window_bounds = array<i64: 64, 32>}, {pipeline_mode = #tpu.pipeline_mode<synchronous>, transform_indices = @transform_29, window_bounds = array<i64: 64, 32>}, {pipeline_mode = #tpu.pipeline_mode<synchronous>, transform_indices = @transform_30, window_bounds = array<i64: 8, 32>}, {pipeline_mode = #tpu.pipeline_mode<synchronous>, transform_indices = @transform_31, window_bounds = array<i64: 8, 32>}, {pipeline_mode = #tpu.pipeline_mode<synchronous>, transform_indices = @transform_32, window_bounds = array<i64: 56, 128>}, {transform_indices = @transform_33, window_bounds = array<i64: 1, 8, 128>}]} {
    %c0 = arith.constant 0 : index
    %c0_0 = arith.constant 0 : index
    %0 = vector.load %arg33[%c0, %c0_0] : memref<56x128xf32, #tpu.memory_space<vmem>>, vector<56x128xf32>
    %c0_1 = arith.constant 0 : index
    %c0_2 = arith.constant 0 : index
    %c0_3 = arith.constant 0 : index
    %1 = vector.load %arg1[%c0_1, %c0_2, %c0_3] : memref<1x8x32xf32, #tpu.memory_space<vmem>>, vector<1x8x32xf32>
    %2 = vector.shape_cast %1 : vector<1x8x32xf32> to vector<8x32xf32>
    %3 = vector.extract_strided_slice %0 {offsets = [0, 0], sizes = [1, 32], strides = [1, 1]} : vector<56x128xf32> to vector<1x32xf32>
    %4 = vector.extract_strided_slice %0 {offsets = [1, 0], sizes = [1, 32], strides = [1, 1]} : vector<56x128xf32> to vector<1x32xf32>
    %cst = arith.constant dense<0.000000e+00> : vector<8xf32>
    %5 = vector.multi_reduction <add>, %2, %cst [1] : vector<8x32xf32> to vector<8xf32>
    %6 = vector.shape_cast %5 : vector<8xf32> to vector<8x1xf32>
    %cst_4 = arith.constant 3.200000e+01 : f32
    %7 = vector.broadcast %cst_4 : f32 to vector<8x1xf32>
    %8 = arith.divf %6, %7 : vector<8x1xf32>
    %9 = vector.broadcast %8 : vector<8x1xf32> to vector<8x32xf32>
    %10 = arith.subf %2, %9 : vector<8x32xf32>
    %11 = arith.mulf %10, %10 : vector<8x32xf32>
    %cst_5 = arith.constant dense<0.000000e+00> : vector<8xf32>
    %12 = vector.multi_reduction <add>, %11, %cst_5 [1] : vector<8x32xf32> to vector<8xf32>
    %13 = vector.shape_cast %12 : vector<8xf32> to vector<8x1xf32>
    %cst_6 = arith.constant 3.200000e+01 : f32
    %14 = vector.broadcast %cst_6 : f32 to vector<8x1xf32>
    %15 = arith.divf %13, %14 : vector<8x1xf32>
    %16 = vector.broadcast %8 : vector<8x1xf32> to vector<8x32xf32>
    %17 = arith.subf %2, %16 : vector<8x32xf32>
    %cst_7 = arith.constant 9.99999974E-6 : f32
    %18 = vector.broadcast %cst_7 : f32 to vector<8x1xf32>
    %19 = arith.addf %15, %18 : vector<8x1xf32>
    %20 = math.rsqrt %19 : vector<8x1xf32>
    %21 = vector.broadcast %20 : vector<8x1xf32> to vector<8x32xf32>
    %22 = arith.mulf %17, %21 : vector<8x32xf32>
    %23 = vector.broadcast %3 : vector<1x32xf32> to vector<8x32xf32>
    %24 = arith.mulf %22, %23 : vector<8x32xf32>
    %25 = vector.broadcast %4 : vector<1x32xf32> to vector<8x32xf32>
    %26 = arith.addf %24, %25 : vector<8x32xf32>
    %c0_8 = arith.constant 0 : index
    %c0_9 = arith.constant 0 : index
    %c0_10 = arith.constant 0 : index
    %27 = vector.load %arg2[%c0_8, %c0_9, %c0_10] : memref<1x8x8xf32, #tpu.memory_space<vmem>>, vector<1x8x8xf32>
    %28 = vector.shape_cast %27 : vector<1x8x8xf32> to vector<8x8xf32>
    %c0_11 = arith.constant 0 : index
    %c0_12 = arith.constant 0 : index
    %29 = vector.load %arg31[%c0_11, %c0_12] : memref<8x32xbf16, #tpu.memory_space<vmem>>, vector<8x32xbf16>
    %30 = arith.truncf %28 : vector<8x8xf32> to vector<8x8xbf16>
    %cst_13 = arith.constant dense<0.000000e+00> : vector<8x32xf32>
    %31 = tpu.matmul %30, %29, %cst_13 {dimension_numbers = #tpu.dot_dimension_numbers<[1], [0], [0], [1], [0, 0, 1, 1], [], []>} : vector<8x8xbf16>, vector<8x32xbf16>, vector<8x32xf32> -> vector<8x32xf32>
    %32 = vector.extract_strided_slice %0 {offsets = [2, 0], sizes = [1, 32], strides = [1, 1]} : vector<56x128xf32> to vector<1x32xf32>
    %33 = vector.broadcast %32 : vector<1x32xf32> to vector<8x32xf32>
    %34 = arith.addf %31, %33 : vector<8x32xf32>
    %35 = vector.extract_strided_slice %0 {offsets = [3, 0], sizes = [1, 32], strides = [1, 1]} : vector<56x128xf32> to vector<1x32xf32>
    %36 = vector.extract_strided_slice %0 {offsets = [4, 0], sizes = [1, 32], strides = [1, 1]} : vector<56x128xf32> to vector<1x32xf32>
    %cst_14 = arith.constant dense<0.000000e+00> : vector<8xf32>
    %37 = vector.multi_reduction <add>, %34, %cst_14 [1] : vector<8x32xf32> to vector<8xf32>
    %38 = vector.shape_cast %37 : vector<8xf32> to vector<8x1xf32>
    %cst_15 = arith.constant 3.200000e+01 : f32
    %39 = vector.broadcast %cst_15 : f32 to vector<8x1xf32>
    %40 = arith.divf %38, %39 : vector<8x1xf32>
    %41 = vector.broadcast %40 : vector<8x1xf32> to vector<8x32xf32>
    %42 = arith.subf %34, %41 : vector<8x32xf32>
    %43 = arith.mulf %42, %42 : vector<8x32xf32>
    %cst_16 = arith.constant dense<0.000000e+00> : vector<8xf32>
    %44 = vector.multi_reduction <add>, %43, %cst_16 [1] : vector<8x32xf32> to vector<8xf32>
    %45 = vector.shape_cast %44 : vector<8xf32> to vector<8x1xf32>
    %cst_17 = arith.constant 3.200000e+01 : f32
    %46 = vector.broadcast %cst_17 : f32 to vector<8x1xf32>
    %47 = arith.divf %45, %46 : vector<8x1xf32>
    %48 = vector.broadcast %40 : vector<8x1xf32> to vector<8x32xf32>
    %49 = arith.subf %34, %48 : vector<8x32xf32>
    %cst_18 = arith.constant 9.99999974E-6 : f32
    %50 = vector.broadcast %cst_18 : f32 to vector<8x1xf32>
    %51 = arith.addf %47, %50 : vector<8x1xf32>
    %52 = math.rsqrt %51 : vector<8x1xf32>
    %53 = vector.broadcast %52 : vector<8x1xf32> to vector<8x32xf32>
    %54 = arith.mulf %49, %53 : vector<8x32xf32>
    %55 = vector.broadcast %35 : vector<1x32xf32> to vector<8x32xf32>
    %56 = arith.mulf %54, %55 : vector<8x32xf32>
    %57 = vector.broadcast %36 : vector<1x32xf32> to vector<8x32xf32>
    %58 = arith.addf %56, %57 : vector<8x32xf32>
    %59 = tpu.concatenate %26, %58 in 1 : vector<8x32xf32>, vector<8x32xf32> -> vector<8x64xf32>
    %c0_19 = arith.constant 0 : index
    %c0_20 = arith.constant 0 : index
    %60 = vector.load %arg30[%c0_19, %c0_20] : memref<64x32xbf16, #tpu.memory_space<vmem>>, vector<64x32xbf16>
    %61 = arith.truncf %59 : vector<8x64xf32> to vector<8x64xbf16>
    %cst_21 = arith.constant dense<0.000000e+00> : vector<8x32xf32>
    %62 = tpu.matmul %61, %60, %cst_21 {dimension_numbers = #tpu.dot_dimension_numbers<[1], [0], [0], [1], [0, 0, 1, 1], [], []>} : vector<8x64xbf16>, vector<64x32xbf16>, vector<8x32xf32> -> vector<8x32xf32>
    %63 = vector.extract_strided_slice %0 {offsets = [5, 0], sizes = [1, 32], strides = [1, 1]} : vector<56x128xf32> to vector<1x32xf32>
    %64 = vector.broadcast %63 : vector<1x32xf32> to vector<8x32xf32>
    %65 = arith.addf %62, %64 : vector<8x32xf32>
    %66 = vector.shape_cast %65 : vector<8x32xf32> to vector<1x8x32xf32>
    %c0_22 = arith.constant 0 : index
    %c0_23 = arith.constant 0 : index
    %67 = vector.load %arg26[%c0_22, %c0_23] : memref<32x64xbf16, #tpu.memory_space<vmem>>, vector<32x64xbf16>
    %c0_24 = arith.constant 0 : index
    %c0_25 = arith.constant 0 : index
    %68 = vector.load %arg27[%c0_24, %c0_25] : memref<64x32xbf16, #tpu.memory_space<vmem>>, vector<64x32xbf16>
    %c0_26 = arith.constant 0 : index
    %c0_27 = arith.constant 0 : index
    %c0_28 = arith.constant 0 : index
    %c0_29 = arith.constant 0 : index
    %69 = vector.load %arg3[%c0_26, %c0_27, %c0_28, %c0_29] : memref<1x8x8x32xf32, #tpu.memory_space<vmem>>, vector<1x8x8x32xf32>
    %70 = vector.extract_strided_slice %66 {offsets = [0, 0, 0], sizes = [1, 8, 8], strides = [1, 1, 1]} : vector<1x8x32xf32> to vector<1x8x8xf32>
    %71 = vector.extract_strided_slice %69 {offsets = [0, 0, 0, 0], sizes = [1, 8, 8, 8], strides = [1, 1, 1, 1]} : vector<1x8x8x32xf32> to vector<1x8x8x8xf32>
    %72 = vector.shape_cast %70 : vector<1x8x8xf32> to vector<1x8x1x8xf32>
    %73 = vector.broadcast %72 : vector<1x8x1x8xf32> to vector<1x8x8x8xf32>
    %74 = arith.mulf %73, %71 : vector<1x8x8x8xf32>
    %cst_30 = arith.constant dense<0.000000e+00> : vector<1x8x8xf32>
    %75 = vector.multi_reduction <add>, %74, %cst_30 [3] : vector<1x8x8x8xf32> to vector<1x8x8xf32>
    "tpu.trace_start"() <{level = 10 : i32, message = "bid,bjd->bij"}> : () -> ()
    %cst_31 = arith.constant dense<0.000000e+00> : vector<1x8x8xf32>
    %76 = tpu.matmul %70, %70, %cst_31 {dimension_numbers = #tpu.dot_dimension_numbers<[2], [2], [1], [1], [0, 0, 0, 1, 1, 1], [0], [0]>} : vector<1x8x8xf32>, vector<1x8x8xf32>, vector<1x8x8xf32> -> vector<1x8x8xf32>
    "tpu.trace_stop"() : () -> ()
    %cst_32 = arith.constant 0.353553385 : f32
    %77 = vector.broadcast %cst_32 : f32 to vector<1x8x8xf32>
    %78 = arith.mulf %76, %77 : vector<1x8x8xf32>
    %79 = arith.addf %78, %75 : vector<1x8x8xf32>
    %cst_33 = arith.constant dense<0xFF800000> : vector<1x8xf32>
    %80 = vector.multi_reduction <maximumf>, %79, %cst_33 [2] : vector<1x8x8xf32> to vector<1x8xf32>
    %81 = vector.shape_cast %80 : vector<1x8xf32> to vector<1x8x1xf32>
    %82 = vector.broadcast %81 : vector<1x8x1xf32> to vector<1x8x8xf32>
    %83 = arith.subf %79, %82 : vector<1x8x8xf32>
    %84 = math.exp %83 : vector<1x8x8xf32>
    %cst_34 = arith.constant dense<0.000000e+00> : vector<1x8xf32>
    %85 = vector.multi_reduction <add>, %84, %cst_34 [2] : vector<1x8x8xf32> to vector<1x8xf32>
    %86 = vector.shape_cast %85 : vector<1x8xf32> to vector<1x8x1xf32>
    %87 = tpu.reciprocal %86 {approx = true} : vector<1x8x1xf32> -> vector<1x8x1xf32>
    %88 = vector.broadcast %87 : vector<1x8x1xf32> to vector<1x8x8xf32>
    %89 = arith.mulf %84, %88 : vector<1x8x8xf32>
    "tpu.trace_start"() <{level = 10 : i32, message = "bij,bjd->bid"}> : () -> ()
    %cst_35 = arith.constant dense<0.000000e+00> : vector<1x8x8xf32>
    %90 = tpu.matmul %89, %70, %cst_35 {dimension_numbers = #tpu.dot_dimension_numbers<[2], [1], [1], [2], [0, 0, 0, 1, 1, 2], [0], [0]>} : vector<1x8x8xf32>, vector<1x8x8xf32>, vector<1x8x8xf32> -> vector<1x8x8xf32>
    "tpu.trace_stop"() : () -> ()
    %91 = vector.extract_strided_slice %66 {offsets = [0, 0, 8], sizes = [1, 8, 8], strides = [1, 1, 1]} : vector<1x8x32xf32> to vector<1x8x8xf32>
    %92 = vector.extract_strided_slice %69 {offsets = [0, 0, 0, 8], sizes = [1, 8, 8, 8], strides = [1, 1, 1, 1]} : vector<1x8x8x32xf32> to vector<1x8x8x8xf32>
    %93 = vector.shape_cast %91 : vector<1x8x8xf32> to vector<1x8x1x8xf32>
    %94 = vector.broadcast %93 : vector<1x8x1x8xf32> to vector<1x8x8x8xf32>
    %95 = arith.mulf %94, %92 : vector<1x8x8x8xf32>
    %cst_36 = arith.constant dense<0.000000e+00> : vector<1x8x8xf32>
    %96 = vector.multi_reduction <add>, %95, %cst_36 [3] : vector<1x8x8x8xf32> to vector<1x8x8xf32>
    "tpu.trace_start"() <{level = 10 : i32, message = "bid,bjd->bij"}> : () -> ()
    %cst_37 = arith.constant dense<0.000000e+00> : vector<1x8x8xf32>
    %97 = tpu.matmul %91, %91, %cst_37 {dimension_numbers = #tpu.dot_dimension_numbers<[2], [2], [1], [1], [0, 0, 0, 1, 1, 1], [0], [0]>} : vector<1x8x8xf32>, vector<1x8x8xf32>, vector<1x8x8xf32> -> vector<1x8x8xf32>
    "tpu.trace_stop"() : () -> ()
    %cst_38 = arith.constant 0.353553385 : f32
    %98 = vector.broadcast %cst_38 : f32 to vector<1x8x8xf32>
    %99 = arith.mulf %97, %98 : vector<1x8x8xf32>
    %100 = arith.addf %99, %96 : vector<1x8x8xf32>
    %cst_39 = arith.constant dense<0xFF800000> : vector<1x8xf32>
    %101 = vector.multi_reduction <maximumf>, %100, %cst_39 [2] : vector<1x8x8xf32> to vector<1x8xf32>
    %102 = vector.shape_cast %101 : vector<1x8xf32> to vector<1x8x1xf32>
    %103 = vector.broadcast %102 : vector<1x8x1xf32> to vector<1x8x8xf32>
    %104 = arith.subf %100, %103 : vector<1x8x8xf32>
    %105 = math.exp %104 : vector<1x8x8xf32>
    %cst_40 = arith.constant dense<0.000000e+00> : vector<1x8xf32>
    %106 = vector.multi_reduction <add>, %105, %cst_40 [2] : vector<1x8x8xf32> to vector<1x8xf32>
    %107 = vector.shape_cast %106 : vector<1x8xf32> to vector<1x8x1xf32>
    %108 = tpu.reciprocal %107 {approx = true} : vector<1x8x1xf32> -> vector<1x8x1xf32>
    %109 = vector.broadcast %108 : vector<1x8x1xf32> to vector<1x8x8xf32>
    %110 = arith.mulf %105, %109 : vector<1x8x8xf32>
    "tpu.trace_start"() <{level = 10 : i32, message = "bij,bjd->bid"}> : () -> ()
    %cst_41 = arith.constant dense<0.000000e+00> : vector<1x8x8xf32>
    %111 = tpu.matmul %110, %91, %cst_41 {dimension_numbers = #tpu.dot_dimension_numbers<[2], [1], [1], [2], [0, 0, 0, 1, 1, 2], [0], [0]>} : vector<1x8x8xf32>, vector<1x8x8xf32>, vector<1x8x8xf32> -> vector<1x8x8xf32>
    "tpu.trace_stop"() : () -> ()
    %112 = vector.extract_strided_slice %66 {offsets = [0, 0, 16], sizes = [1, 8, 8], strides = [1, 1, 1]} : vector<1x8x32xf32> to vector<1x8x8xf32>
    %113 = vector.extract_strided_slice %69 {offsets = [0, 0, 0, 16], sizes = [1, 8, 8, 8], strides = [1, 1, 1, 1]} : vector<1x8x8x32xf32> to vector<1x8x8x8xf32>
    %114 = vector.shape_cast %112 : vector<1x8x8xf32> to vector<1x8x1x8xf32>
    %115 = vector.broadcast %114 : vector<1x8x1x8xf32> to vector<1x8x8x8xf32>
    %116 = arith.mulf %115, %113 : vector<1x8x8x8xf32>
    %cst_42 = arith.constant dense<0.000000e+00> : vector<1x8x8xf32>
    %117 = vector.multi_reduction <add>, %116, %cst_42 [3] : vector<1x8x8x8xf32> to vector<1x8x8xf32>
    "tpu.trace_start"() <{level = 10 : i32, message = "bid,bjd->bij"}> : () -> ()
    %cst_43 = arith.constant dense<0.000000e+00> : vector<1x8x8xf32>
    %118 = tpu.matmul %112, %112, %cst_43 {dimension_numbers = #tpu.dot_dimension_numbers<[2], [2], [1], [1], [0, 0, 0, 1, 1, 1], [0], [0]>} : vector<1x8x8xf32>, vector<1x8x8xf32>, vector<1x8x8xf32> -> vector<1x8x8xf32>
    "tpu.trace_stop"() : () -> ()
    %cst_44 = arith.constant 0.353553385 : f32
    %119 = vector.broadcast %cst_44 : f32 to vector<1x8x8xf32>
    %120 = arith.mulf %118, %119 : vector<1x8x8xf32>
    %121 = arith.addf %120, %117 : vector<1x8x8xf32>
    %cst_45 = arith.constant dense<0xFF800000> : vector<1x8xf32>
    %122 = vector.multi_reduction <maximumf>, %121, %cst_45 [2] : vector<1x8x8xf32> to vector<1x8xf32>
    %123 = vector.shape_cast %122 : vector<1x8xf32> to vector<1x8x1xf32>
    %124 = vector.broadcast %123 : vector<1x8x1xf32> to vector<1x8x8xf32>
    %125 = arith.subf %121, %124 : vector<1x8x8xf32>
    %126 = math.exp %125 : vector<1x8x8xf32>
    %cst_46 = arith.constant dense<0.000000e+00> : vector<1x8xf32>
    %127 = vector.multi_reduction <add>, %126, %cst_46 [2] : vector<1x8x8xf32> to vector<1x8xf32>
    %128 = vector.shape_cast %127 : vector<1x8xf32> to vector<1x8x1xf32>
    %129 = tpu.reciprocal %128 {approx = true} : vector<1x8x1xf32> -> vector<1x8x1xf32>
    %130 = vector.broadcast %129 : vector<1x8x1xf32> to vector<1x8x8xf32>
    %131 = arith.mulf %126, %130 : vector<1x8x8xf32>
    "tpu.trace_start"() <{level = 10 : i32, message = "bij,bjd->bid"}> : () -> ()
    %cst_47 = arith.constant dense<0.000000e+00> : vector<1x8x8xf32>
    %132 = tpu.matmul %131, %112, %cst_47 {dimension_numbers = #tpu.dot_dimension_numbers<[2], [1], [1], [2], [0, 0, 0, 1, 1, 2], [0], [0]>} : vector<1x8x8xf32>, vector<1x8x8xf32>, vector<1x8x8xf32> -> vector<1x8x8xf32>
    "tpu.trace_stop"() : () -> ()
    %133 = vector.extract_strided_slice %66 {offsets = [0, 0, 24], sizes = [1, 8, 8], strides = [1, 1, 1]} : vector<1x8x32xf32> to vector<1x8x8xf32>
    %134 = vector.extract_strided_slice %69 {offsets = [0, 0, 0, 24], sizes = [1, 8, 8, 8], strides = [1, 1, 1, 1]} : vector<1x8x8x32xf32> to vector<1x8x8x8xf32>
    %135 = vector.shape_cast %133 : vector<1x8x8xf32> to vector<1x8x1x8xf32>
    %136 = vector.broadcast %135 : vector<1x8x1x8xf32> to vector<1x8x8x8xf32>
    %137 = arith.mulf %136, %134 : vector<1x8x8x8xf32>
    %cst_48 = arith.constant dense<0.000000e+00> : vector<1x8x8xf32>
    %138 = vector.multi_reduction <add>, %137, %cst_48 [3] : vector<1x8x8x8xf32> to vector<1x8x8xf32>
    "tpu.trace_start"() <{level = 10 : i32, message = "bid,bjd->bij"}> : () -> ()
    %cst_49 = arith.constant dense<0.000000e+00> : vector<1x8x8xf32>
    %139 = tpu.matmul %133, %133, %cst_49 {dimension_numbers = #tpu.dot_dimension_numbers<[2], [2], [1], [1], [0, 0, 0, 1, 1, 1], [0], [0]>} : vector<1x8x8xf32>, vector<1x8x8xf32>, vector<1x8x8xf32> -> vector<1x8x8xf32>
    "tpu.trace_stop"() : () -> ()
    %cst_50 = arith.constant 0.353553385 : f32
    %140 = vector.broadcast %cst_50 : f32 to vector<1x8x8xf32>
    %141 = arith.mulf %139, %140 : vector<1x8x8xf32>
    %142 = arith.addf %141, %138 : vector<1x8x8xf32>
    %cst_51 = arith.constant dense<0xFF800000> : vector<1x8xf32>
    %143 = vector.multi_reduction <maximumf>, %142, %cst_51 [2] : vector<1x8x8xf32> to vector<1x8xf32>
    %144 = vector.shape_cast %143 : vector<1x8xf32> to vector<1x8x1xf32>
    %145 = vector.broadcast %144 : vector<1x8x1xf32> to vector<1x8x8xf32>
    %146 = arith.subf %142, %145 : vector<1x8x8xf32>
    %147 = math.exp %146 : vector<1x8x8xf32>
    %cst_52 = arith.constant dense<0.000000e+00> : vector<1x8xf32>
    %148 = vector.multi_reduction <add>, %147, %cst_52 [2] : vector<1x8x8xf32> to vector<1x8xf32>
    %149 = vector.shape_cast %148 : vector<1x8xf32> to vector<1x8x1xf32>
    %150 = tpu.reciprocal %149 {approx = true} : vector<1x8x1xf32> -> vector<1x8x1xf32>
    %151 = vector.broadcast %150 : vector<1x8x1xf32> to vector<1x8x8xf32>
    %152 = arith.mulf %147, %151 : vector<1x8x8xf32>
    "tpu.trace_start"() <{level = 10 : i32, message = "bij,bjd->bid"}> : () -> ()
    %cst_53 = arith.constant dense<0.000000e+00> : vector<1x8x8xf32>
    %153 = tpu.matmul %152, %133, %cst_53 {dimension_numbers = #tpu.dot_dimension_numbers<[2], [1], [1], [2], [0, 0, 0, 1, 1, 2], [0], [0]>} : vector<1x8x8xf32>, vector<1x8x8xf32>, vector<1x8x8xf32> -> vector<1x8x8xf32>
    "tpu.trace_stop"() : () -> ()
    %154 = tpu.concatenate %90, %111, %132, %153 in 2 : vector<1x8x8xf32>, vector<1x8x8xf32>, vector<1x8x8xf32>, vector<1x8x8xf32> -> vector<1x8x32xf32>
    %155 = arith.addf %66, %154 : vector<1x8x32xf32>
    %156 = vector.shape_cast %155 : vector<1x8x32xf32> to vector<8x32xf32>
    %157 = vector.extract_strided_slice %0 {offsets = [10, 0], sizes = [1, 32], strides = [1, 1]} : vector<56x128xf32> to vector<1x32xf32>
    %158 = vector.extract_strided_slice %0 {offsets = [11, 0], sizes = [1, 32], strides = [1, 1]} : vector<56x128xf32> to vector<1x32xf32>
    %cst_54 = arith.constant dense<0.000000e+00> : vector<8xf32>
    %159 = vector.multi_reduction <add>, %156, %cst_54 [1] : vector<8x32xf32> to vector<8xf32>
    %160 = vector.shape_cast %159 : vector<8xf32> to vector<8x1xf32>
    %cst_55 = arith.constant 3.200000e+01 : f32
    %161 = vector.broadcast %cst_55 : f32 to vector<8x1xf32>
    %162 = arith.divf %160, %161 : vector<8x1xf32>
    %163 = vector.broadcast %162 : vector<8x1xf32> to vector<8x32xf32>
    %164 = arith.subf %156, %163 : vector<8x32xf32>
    %165 = arith.mulf %164, %164 : vector<8x32xf32>
    %cst_56 = arith.constant dense<0.000000e+00> : vector<8xf32>
    %166 = vector.multi_reduction <add>, %165, %cst_56 [1] : vector<8x32xf32> to vector<8xf32>
    %167 = vector.shape_cast %166 : vector<8xf32> to vector<8x1xf32>
    %cst_57 = arith.constant 3.200000e+01 : f32
    %168 = vector.broadcast %cst_57 : f32 to vector<8x1xf32>
    %169 = arith.divf %167, %168 : vector<8x1xf32>
    %170 = vector.broadcast %162 : vector<8x1xf32> to vector<8x32xf32>
    %171 = arith.subf %156, %170 : vector<8x32xf32>
    %cst_58 = arith.constant 9.99999974E-6 : f32
    %172 = vector.broadcast %cst_58 : f32 to vector<8x1xf32>
    %173 = arith.addf %169, %172 : vector<8x1xf32>
    %174 = math.rsqrt %173 : vector<8x1xf32>
    %175 = vector.broadcast %174 : vector<8x1xf32> to vector<8x32xf32>
    %176 = arith.mulf %171, %175 : vector<8x32xf32>
    %177 = vector.broadcast %157 : vector<1x32xf32> to vector<8x32xf32>
    %178 = arith.mulf %176, %177 : vector<8x32xf32>
    %179 = vector.broadcast %158 : vector<1x32xf32> to vector<8x32xf32>
    %180 = arith.addf %178, %179 : vector<8x32xf32>
    %181 = arith.truncf %180 : vector<8x32xf32> to vector<8x32xbf16>
    %cst_59 = arith.constant dense<0.000000e+00> : vector<8x64xf32>
    %182 = tpu.matmul %181, %67, %cst_59 {dimension_numbers = #tpu.dot_dimension_numbers<[1], [0], [0], [1], [0, 0, 1, 1], [], []>} : vector<8x32xbf16>, vector<32x64xbf16>, vector<8x64xf32> -> vector<8x64xf32>
    %183 = vector.extract_strided_slice %0 {offsets = [8, 0], sizes = [1, 64], strides = [1, 1]} : vector<56x128xf32> to vector<1x64xf32>
    %184 = vector.broadcast %183 : vector<1x64xf32> to vector<8x64xf32>
    %185 = arith.addf %182, %184 : vector<8x64xf32>
    %cst_60 = arith.constant 0.000000e+00 : f32
    %186 = vector.broadcast %cst_60 : f32 to vector<8x64xf32>
    %187 = arith.cmpf oge, %185, %186 : vector<8x64xf32>
    %cst_61 = arith.constant 0.00999999977 : f32
    %188 = vector.broadcast %cst_61 : f32 to vector<8x64xf32>
    %189 = arith.mulf %188, %185 : vector<8x64xf32>
    %190 = arith.select %187, %185, %189 : vector<8x64xi1>, vector<8x64xf32>
    %191 = arith.truncf %190 : vector<8x64xf32> to vector<8x64xbf16>
    %cst_62 = arith.constant dense<0.000000e+00> : vector<8x32xf32>
    %192 = tpu.matmul %191, %68, %cst_62 {dimension_numbers = #tpu.dot_dimension_numbers<[1], [0], [0], [1], [0, 0, 1, 1], [], []>} : vector<8x64xbf16>, vector<64x32xbf16>, vector<8x32xf32> -> vector<8x32xf32>
    %193 = vector.extract_strided_slice %0 {offsets = [9, 0], sizes = [1, 32], strides = [1, 1]} : vector<56x128xf32> to vector<1x32xf32>
    %194 = vector.broadcast %193 : vector<1x32xf32> to vector<8x32xf32>
    %195 = arith.addf %192, %194 : vector<8x32xf32>
    %196 = arith.addf %180, %195 : vector<8x32xf32>
    %197 = vector.extract_strided_slice %0 {offsets = [12, 0], sizes = [1, 32], strides = [1, 1]} : vector<56x128xf32> to vector<1x32xf32>
    %198 = vector.extract_strided_slice %0 {offsets = [13, 0], sizes = [1, 32], strides = [1, 1]} : vector<56x128xf32> to vector<1x32xf32>
    %cst_63 = arith.constant dense<0.000000e+00> : vector<8xf32>
    %199 = vector.multi_reduction <add>, %196, %cst_63 [1] : vector<8x32xf32> to vector<8xf32>
    %200 = vector.shape_cast %199 : vector<8xf32> to vector<8x1xf32>
    %cst_64 = arith.constant 3.200000e+01 : f32
    %201 = vector.broadcast %cst_64 : f32 to vector<8x1xf32>
    %202 = arith.divf %200, %201 : vector<8x1xf32>
    %203 = vector.broadcast %202 : vector<8x1xf32> to vector<8x32xf32>
    %204 = arith.subf %196, %203 : vector<8x32xf32>
    %205 = arith.mulf %204, %204 : vector<8x32xf32>
    %cst_65 = arith.constant dense<0.000000e+00> : vector<8xf32>
    %206 = vector.multi_reduction <add>, %205, %cst_65 [1] : vector<8x32xf32> to vector<8xf32>
    %207 = vector.shape_cast %206 : vector<8xf32> to vector<8x1xf32>
    %cst_66 = arith.constant 3.200000e+01 : f32
    %208 = vector.broadcast %cst_66 : f32 to vector<8x1xf32>
    %209 = arith.divf %207, %208 : vector<8x1xf32>
    %210 = vector.broadcast %202 : vector<8x1xf32> to vector<8x32xf32>
    %211 = arith.subf %196, %210 : vector<8x32xf32>
    %cst_67 = arith.constant 9.99999974E-6 : f32
    %212 = vector.broadcast %cst_67 : f32 to vector<8x1xf32>
    %213 = arith.addf %209, %212 : vector<8x1xf32>
    %214 = math.rsqrt %213 : vector<8x1xf32>
    %215 = vector.broadcast %214 : vector<8x1xf32> to vector<8x32xf32>
    %216 = arith.mulf %211, %215 : vector<8x32xf32>
    %217 = vector.broadcast %197 : vector<1x32xf32> to vector<8x32xf32>
    %218 = arith.mulf %216, %217 : vector<8x32xf32>
    %219 = vector.broadcast %198 : vector<1x32xf32> to vector<8x32xf32>
    %220 = arith.addf %218, %219 : vector<8x32xf32>
    %221 = vector.shape_cast %220 : vector<8x32xf32> to vector<1x8x32xf32>
    %c0_68 = arith.constant 0 : index
    %c0_69 = arith.constant 0 : index
    %222 = vector.load %arg28[%c0_68, %c0_69] : memref<32x64xbf16, #tpu.memory_space<vmem>>, vector<32x64xbf16>
    %c0_70 = arith.constant 0 : index
    %c0_71 = arith.constant 0 : index
    %223 = vector.load %arg29[%c0_70, %c0_71] : memref<64x32xbf16, #tpu.memory_space<vmem>>, vector<64x32xbf16>
    %c0_72 = arith.constant 0 : index
    %c0_73 = arith.constant 0 : index
    %c0_74 = arith.constant 0 : index
    %c0_75 = arith.constant 0 : index
    %224 = vector.load %arg4[%c0_72, %c0_73, %c0_74, %c0_75] : memref<1x8x8x32xf32, #tpu.memory_space<vmem>>, vector<1x8x8x32xf32>
    %225 = vector.extract_strided_slice %221 {offsets = [0, 0, 0], sizes = [1, 8, 8], strides = [1, 1, 1]} : vector<1x8x32xf32> to vector<1x8x8xf32>
    %226 = vector.extract_strided_slice %224 {offsets = [0, 0, 0, 0], sizes = [1, 8, 8, 8], strides = [1, 1, 1, 1]} : vector<1x8x8x32xf32> to vector<1x8x8x8xf32>
    %227 = vector.shape_cast %225 : vector<1x8x8xf32> to vector<1x8x1x8xf32>
    %228 = vector.broadcast %227 : vector<1x8x1x8xf32> to vector<1x8x8x8xf32>
    %229 = arith.mulf %228, %226 : vector<1x8x8x8xf32>
    %cst_76 = arith.constant dense<0.000000e+00> : vector<1x8x8xf32>
    %230 = vector.multi_reduction <add>, %229, %cst_76 [3] : vector<1x8x8x8xf32> to vector<1x8x8xf32>
    "tpu.trace_start"() <{level = 10 : i32, message = "bid,bjd->bij"}> : () -> ()
    %cst_77 = arith.constant dense<0.000000e+00> : vector<1x8x8xf32>
    %231 = tpu.matmul %225, %225, %cst_77 {dimension_numbers = #tpu.dot_dimension_numbers<[2], [2], [1], [1], [0, 0, 0, 1, 1, 1], [0], [0]>} : vector<1x8x8xf32>, vector<1x8x8xf32>, vector<1x8x8xf32> -> vector<1x8x8xf32>
    "tpu.trace_stop"() : () -> ()
    %cst_78 = arith.constant 0.353553385 : f32
    %232 = vector.broadcast %cst_78 : f32 to vector<1x8x8xf32>
    %233 = arith.mulf %231, %232 : vector<1x8x8xf32>
    %234 = arith.addf %233, %230 : vector<1x8x8xf32>
    %cst_79 = arith.constant dense<0xFF800000> : vector<1x8xf32>
    %235 = vector.multi_reduction <maximumf>, %234, %cst_79 [2] : vector<1x8x8xf32> to vector<1x8xf32>
    %236 = vector.shape_cast %235 : vector<1x8xf32> to vector<1x8x1xf32>
    %237 = vector.broadcast %236 : vector<1x8x1xf32> to vector<1x8x8xf32>
    %238 = arith.subf %234, %237 : vector<1x8x8xf32>
    %239 = math.exp %238 : vector<1x8x8xf32>
    %cst_80 = arith.constant dense<0.000000e+00> : vector<1x8xf32>
    %240 = vector.multi_reduction <add>, %239, %cst_80 [2] : vector<1x8x8xf32> to vector<1x8xf32>
    %241 = vector.shape_cast %240 : vector<1x8xf32> to vector<1x8x1xf32>
    %242 = tpu.reciprocal %241 {approx = true} : vector<1x8x1xf32> -> vector<1x8x1xf32>
    %243 = vector.broadcast %242 : vector<1x8x1xf32> to vector<1x8x8xf32>
    %244 = arith.mulf %239, %243 : vector<1x8x8xf32>
    "tpu.trace_start"() <{level = 10 : i32, message = "bij,bjd->bid"}> : () -> ()
    %cst_81 = arith.constant dense<0.000000e+00> : vector<1x8x8xf32>
    %245 = tpu.matmul %244, %225, %cst_81 {dimension_numbers = #tpu.dot_dimension_numbers<[2], [1], [1], [2], [0, 0, 0, 1, 1, 2], [0], [0]>} : vector<1x8x8xf32>, vector<1x8x8xf32>, vector<1x8x8xf32> -> vector<1x8x8xf32>
    "tpu.trace_stop"() : () -> ()
    %246 = vector.extract_strided_slice %221 {offsets = [0, 0, 8], sizes = [1, 8, 8], strides = [1, 1, 1]} : vector<1x8x32xf32> to vector<1x8x8xf32>
    %247 = vector.extract_strided_slice %224 {offsets = [0, 0, 0, 8], sizes = [1, 8, 8, 8], strides = [1, 1, 1, 1]} : vector<1x8x8x32xf32> to vector<1x8x8x8xf32>
    %248 = vector.shape_cast %246 : vector<1x8x8xf32> to vector<1x8x1x8xf32>
    %249 = vector.broadcast %248 : vector<1x8x1x8xf32> to vector<1x8x8x8xf32>
    %250 = arith.mulf %249, %247 : vector<1x8x8x8xf32>
    %cst_82 = arith.constant dense<0.000000e+00> : vector<1x8x8xf32>
    %251 = vector.multi_reduction <add>, %250, %cst_82 [3] : vector<1x8x8x8xf32> to vector<1x8x8xf32>
    "tpu.trace_start"() <{level = 10 : i32, message = "bid,bjd->bij"}> : () -> ()
    %cst_83 = arith.constant dense<0.000000e+00> : vector<1x8x8xf32>
    %252 = tpu.matmul %246, %246, %cst_83 {dimension_numbers = #tpu.dot_dimension_numbers<[2], [2], [1], [1], [0, 0, 0, 1, 1, 1], [0], [0]>} : vector<1x8x8xf32>, vector<1x8x8xf32>, vector<1x8x8xf32> -> vector<1x8x8xf32>
    "tpu.trace_stop"() : () -> ()
    %cst_84 = arith.constant 0.353553385 : f32
    %253 = vector.broadcast %cst_84 : f32 to vector<1x8x8xf32>
    %254 = arith.mulf %252, %253 : vector<1x8x8xf32>
    %255 = arith.addf %254, %251 : vector<1x8x8xf32>
    %cst_85 = arith.constant dense<0xFF800000> : vector<1x8xf32>
    %256 = vector.multi_reduction <maximumf>, %255, %cst_85 [2] : vector<1x8x8xf32> to vector<1x8xf32>
    %257 = vector.shape_cast %256 : vector<1x8xf32> to vector<1x8x1xf32>
    %258 = vector.broadcast %257 : vector<1x8x1xf32> to vector<1x8x8xf32>
    %259 = arith.subf %255, %258 : vector<1x8x8xf32>
    %260 = math.exp %259 : vector<1x8x8xf32>
    %cst_86 = arith.constant dense<0.000000e+00> : vector<1x8xf32>
    %261 = vector.multi_reduction <add>, %260, %cst_86 [2] : vector<1x8x8xf32> to vector<1x8xf32>
    %262 = vector.shape_cast %261 : vector<1x8xf32> to vector<1x8x1xf32>
    %263 = tpu.reciprocal %262 {approx = true} : vector<1x8x1xf32> -> vector<1x8x1xf32>
    %264 = vector.broadcast %263 : vector<1x8x1xf32> to vector<1x8x8xf32>
    %265 = arith.mulf %260, %264 : vector<1x8x8xf32>
    "tpu.trace_start"() <{level = 10 : i32, message = "bij,bjd->bid"}> : () -> ()
    %cst_87 = arith.constant dense<0.000000e+00> : vector<1x8x8xf32>
    %266 = tpu.matmul %265, %246, %cst_87 {dimension_numbers = #tpu.dot_dimension_numbers<[2], [1], [1], [2], [0, 0, 0, 1, 1, 2], [0], [0]>} : vector<1x8x8xf32>, vector<1x8x8xf32>, vector<1x8x8xf32> -> vector<1x8x8xf32>
    "tpu.trace_stop"() : () -> ()
    %267 = vector.extract_strided_slice %221 {offsets = [0, 0, 16], sizes = [1, 8, 8], strides = [1, 1, 1]} : vector<1x8x32xf32> to vector<1x8x8xf32>
    %268 = vector.extract_strided_slice %224 {offsets = [0, 0, 0, 16], sizes = [1, 8, 8, 8], strides = [1, 1, 1, 1]} : vector<1x8x8x32xf32> to vector<1x8x8x8xf32>
    %269 = vector.shape_cast %267 : vector<1x8x8xf32> to vector<1x8x1x8xf32>
    %270 = vector.broadcast %269 : vector<1x8x1x8xf32> to vector<1x8x8x8xf32>
    %271 = arith.mulf %270, %268 : vector<1x8x8x8xf32>
    %cst_88 = arith.constant dense<0.000000e+00> : vector<1x8x8xf32>
    %272 = vector.multi_reduction <add>, %271, %cst_88 [3] : vector<1x8x8x8xf32> to vector<1x8x8xf32>
    "tpu.trace_start"() <{level = 10 : i32, message = "bid,bjd->bij"}> : () -> ()
    %cst_89 = arith.constant dense<0.000000e+00> : vector<1x8x8xf32>
    %273 = tpu.matmul %267, %267, %cst_89 {dimension_numbers = #tpu.dot_dimension_numbers<[2], [2], [1], [1], [0, 0, 0, 1, 1, 1], [0], [0]>} : vector<1x8x8xf32>, vector<1x8x8xf32>, vector<1x8x8xf32> -> vector<1x8x8xf32>
    "tpu.trace_stop"() : () -> ()
    %cst_90 = arith.constant 0.353553385 : f32
    %274 = vector.broadcast %cst_90 : f32 to vector<1x8x8xf32>
    %275 = arith.mulf %273, %274 : vector<1x8x8xf32>
    %276 = arith.addf %275, %272 : vector<1x8x8xf32>
    %cst_91 = arith.constant dense<0xFF800000> : vector<1x8xf32>
    %277 = vector.multi_reduction <maximumf>, %276, %cst_91 [2] : vector<1x8x8xf32> to vector<1x8xf32>
    %278 = vector.shape_cast %277 : vector<1x8xf32> to vector<1x8x1xf32>
    %279 = vector.broadcast %278 : vector<1x8x1xf32> to vector<1x8x8xf32>
    %280 = arith.subf %276, %279 : vector<1x8x8xf32>
    %281 = math.exp %280 : vector<1x8x8xf32>
    %cst_92 = arith.constant dense<0.000000e+00> : vector<1x8xf32>
    %282 = vector.multi_reduction <add>, %281, %cst_92 [2] : vector<1x8x8xf32> to vector<1x8xf32>
    %283 = vector.shape_cast %282 : vector<1x8xf32> to vector<1x8x1xf32>
    %284 = tpu.reciprocal %283 {approx = true} : vector<1x8x1xf32> -> vector<1x8x1xf32>
    %285 = vector.broadcast %284 : vector<1x8x1xf32> to vector<1x8x8xf32>
    %286 = arith.mulf %281, %285 : vector<1x8x8xf32>
    "tpu.trace_start"() <{level = 10 : i32, message = "bij,bjd->bid"}> : () -> ()
    %cst_93 = arith.constant dense<0.000000e+00> : vector<1x8x8xf32>
    %287 = tpu.matmul %286, %267, %cst_93 {dimension_numbers = #tpu.dot_dimension_numbers<[2], [1], [1], [2], [0, 0, 0, 1, 1, 2], [0], [0]>} : vector<1x8x8xf32>, vector<1x8x8xf32>, vector<1x8x8xf32> -> vector<1x8x8xf32>
    "tpu.trace_stop"() : () -> ()
    %288 = vector.extract_strided_slice %221 {offsets = [0, 0, 24], sizes = [1, 8, 8], strides = [1, 1, 1]} : vector<1x8x32xf32> to vector<1x8x8xf32>
    %289 = vector.extract_strided_slice %224 {offsets = [0, 0, 0, 24], sizes = [1, 8, 8, 8], strides = [1, 1, 1, 1]} : vector<1x8x8x32xf32> to vector<1x8x8x8xf32>
    %290 = vector.shape_cast %288 : vector<1x8x8xf32> to vector<1x8x1x8xf32>
    %291 = vector.broadcast %290 : vector<1x8x1x8xf32> to vector<1x8x8x8xf32>
    %292 = arith.mulf %291, %289 : vector<1x8x8x8xf32>
    %cst_94 = arith.constant dense<0.000000e+00> : vector<1x8x8xf32>
    %293 = vector.multi_reduction <add>, %292, %cst_94 [3] : vector<1x8x8x8xf32> to vector<1x8x8xf32>
    "tpu.trace_start"() <{level = 10 : i32, message = "bid,bjd->bij"}> : () -> ()
    %cst_95 = arith.constant dense<0.000000e+00> : vector<1x8x8xf32>
    %294 = tpu.matmul %288, %288, %cst_95 {dimension_numbers = #tpu.dot_dimension_numbers<[2], [2], [1], [1], [0, 0, 0, 1, 1, 1], [0], [0]>} : vector<1x8x8xf32>, vector<1x8x8xf32>, vector<1x8x8xf32> -> vector<1x8x8xf32>
    "tpu.trace_stop"() : () -> ()
    %cst_96 = arith.constant 0.353553385 : f32
    %295 = vector.broadcast %cst_96 : f32 to vector<1x8x8xf32>
    %296 = arith.mulf %294, %295 : vector<1x8x8xf32>
    %297 = arith.addf %296, %293 : vector<1x8x8xf32>
    %cst_97 = arith.constant dense<0xFF800000> : vector<1x8xf32>
    %298 = vector.multi_reduction <maximumf>, %297, %cst_97 [2] : vector<1x8x8xf32> to vector<1x8xf32>
    %299 = vector.shape_cast %298 : vector<1x8xf32> to vector<1x8x1xf32>
    %300 = vector.broadcast %299 : vector<1x8x1xf32> to vector<1x8x8xf32>
    %301 = arith.subf %297, %300 : vector<1x8x8xf32>
    %302 = math.exp %301 : vector<1x8x8xf32>
    %cst_98 = arith.constant dense<0.000000e+00> : vector<1x8xf32>
    %303 = vector.multi_reduction <add>, %302, %cst_98 [2] : vector<1x8x8xf32> to vector<1x8xf32>
    %304 = vector.shape_cast %303 : vector<1x8xf32> to vector<1x8x1xf32>
    %305 = tpu.reciprocal %304 {approx = true} : vector<1x8x1xf32> -> vector<1x8x1xf32>
    %306 = vector.broadcast %305 : vector<1x8x1xf32> to vector<1x8x8xf32>
    %307 = arith.mulf %302, %306 : vector<1x8x8xf32>
    "tpu.trace_start"() <{level = 10 : i32, message = "bij,bjd->bid"}> : () -> ()
    %cst_99 = arith.constant dense<0.000000e+00> : vector<1x8x8xf32>
    %308 = tpu.matmul %307, %288, %cst_99 {dimension_numbers = #tpu.dot_dimension_numbers<[2], [1], [1], [2], [0, 0, 0, 1, 1, 2], [0], [0]>} : vector<1x8x8xf32>, vector<1x8x8xf32>, vector<1x8x8xf32> -> vector<1x8x8xf32>
    "tpu.trace_stop"() : () -> ()
    %309 = tpu.concatenate %245, %266, %287, %308 in 2 : vector<1x8x8xf32>, vector<1x8x8xf32>, vector<1x8x8xf32>, vector<1x8x8xf32> -> vector<1x8x32xf32>
    %310 = arith.addf %221, %309 : vector<1x8x32xf32>
    %311 = vector.shape_cast %310 : vector<1x8x32xf32> to vector<8x32xf32>
    %312 = vector.extract_strided_slice %0 {offsets = [16, 0], sizes = [1, 32], strides = [1, 1]} : vector<56x128xf32> to vector<1x32xf32>
    %313 = vector.extract_strided_slice %0 {offsets = [17, 0], sizes = [1, 32], strides = [1, 1]} : vector<56x128xf32> to vector<1x32xf32>
    %cst_100 = arith.constant dense<0.000000e+00> : vector<8xf32>
    %314 = vector.multi_reduction <add>, %311, %cst_100 [1] : vector<8x32xf32> to vector<8xf32>
    %315 = vector.shape_cast %314 : vector<8xf32> to vector<8x1xf32>
    %cst_101 = arith.constant 3.200000e+01 : f32
    %316 = vector.broadcast %cst_101 : f32 to vector<8x1xf32>
    %317 = arith.divf %315, %316 : vector<8x1xf32>
    %318 = vector.broadcast %317 : vector<8x1xf32> to vector<8x32xf32>
    %319 = arith.subf %311, %318 : vector<8x32xf32>
    %320 = arith.mulf %319, %319 : vector<8x32xf32>
    %cst_102 = arith.constant dense<0.000000e+00> : vector<8xf32>
    %321 = vector.multi_reduction <add>, %320, %cst_102 [1] : vector<8x32xf32> to vector<8xf32>
    %322 = vector.shape_cast %321 : vector<8xf32> to vector<8x1xf32>
    %cst_103 = arith.constant 3.200000e+01 : f32
    %323 = vector.broadcast %cst_103 : f32 to vector<8x1xf32>
    %324 = arith.divf %322, %323 : vector<8x1xf32>
    %325 = vector.broadcast %317 : vector<8x1xf32> to vector<8x32xf32>
    %326 = arith.subf %311, %325 : vector<8x32xf32>
    %cst_104 = arith.constant 9.99999974E-6 : f32
    %327 = vector.broadcast %cst_104 : f32 to vector<8x1xf32>
    %328 = arith.addf %324, %327 : vector<8x1xf32>
    %329 = math.rsqrt %328 : vector<8x1xf32>
    %330 = vector.broadcast %329 : vector<8x1xf32> to vector<8x32xf32>
    %331 = arith.mulf %326, %330 : vector<8x32xf32>
    %332 = vector.broadcast %312 : vector<1x32xf32> to vector<8x32xf32>
    %333 = arith.mulf %331, %332 : vector<8x32xf32>
    %334 = vector.broadcast %313 : vector<1x32xf32> to vector<8x32xf32>
    %335 = arith.addf %333, %334 : vector<8x32xf32>
    %336 = arith.truncf %335 : vector<8x32xf32> to vector<8x32xbf16>
    %cst_105 = arith.constant dense<0.000000e+00> : vector<8x64xf32>
    %337 = tpu.matmul %336, %222, %cst_105 {dimension_numbers = #tpu.dot_dimension_numbers<[1], [0], [0], [1], [0, 0, 1, 1], [], []>} : vector<8x32xbf16>, vector<32x64xbf16>, vector<8x64xf32> -> vector<8x64xf32>
    %338 = vector.extract_strided_slice %0 {offsets = [14, 0], sizes = [1, 64], strides = [1, 1]} : vector<56x128xf32> to vector<1x64xf32>
    %339 = vector.broadcast %338 : vector<1x64xf32> to vector<8x64xf32>
    %340 = arith.addf %337, %339 : vector<8x64xf32>
    %cst_106 = arith.constant 0.000000e+00 : f32
    %341 = vector.broadcast %cst_106 : f32 to vector<8x64xf32>
    %342 = arith.cmpf oge, %340, %341 : vector<8x64xf32>
    %cst_107 = arith.constant 0.00999999977 : f32
    %343 = vector.broadcast %cst_107 : f32 to vector<8x64xf32>
    %344 = arith.mulf %343, %340 : vector<8x64xf32>
    %345 = arith.select %342, %340, %344 : vector<8x64xi1>, vector<8x64xf32>
    %346 = arith.truncf %345 : vector<8x64xf32> to vector<8x64xbf16>
    %cst_108 = arith.constant dense<0.000000e+00> : vector<8x32xf32>
    %347 = tpu.matmul %346, %223, %cst_108 {dimension_numbers = #tpu.dot_dimension_numbers<[1], [0], [0], [1], [0, 0, 1, 1], [], []>} : vector<8x64xbf16>, vector<64x32xbf16>, vector<8x32xf32> -> vector<8x32xf32>
    %348 = vector.extract_strided_slice %0 {offsets = [15, 0], sizes = [1, 32], strides = [1, 1]} : vector<56x128xf32> to vector<1x32xf32>
    %349 = vector.broadcast %348 : vector<1x32xf32> to vector<8x32xf32>
    %350 = arith.addf %347, %349 : vector<8x32xf32>
    %351 = arith.addf %335, %350 : vector<8x32xf32>
    %352 = vector.extract_strided_slice %0 {offsets = [18, 0], sizes = [1, 32], strides = [1, 1]} : vector<56x128xf32> to vector<1x32xf32>
    %353 = vector.extract_strided_slice %0 {offsets = [19, 0], sizes = [1, 32], strides = [1, 1]} : vector<56x128xf32> to vector<1x32xf32>
    %cst_109 = arith.constant dense<0.000000e+00> : vector<8xf32>
    %354 = vector.multi_reduction <add>, %351, %cst_109 [1] : vector<8x32xf32> to vector<8xf32>
    %355 = vector.shape_cast %354 : vector<8xf32> to vector<8x1xf32>
    %cst_110 = arith.constant 3.200000e+01 : f32
    %356 = vector.broadcast %cst_110 : f32 to vector<8x1xf32>
    %357 = arith.divf %355, %356 : vector<8x1xf32>
    %358 = vector.broadcast %357 : vector<8x1xf32> to vector<8x32xf32>
    %359 = arith.subf %351, %358 : vector<8x32xf32>
    %360 = arith.mulf %359, %359 : vector<8x32xf32>
    %cst_111 = arith.constant dense<0.000000e+00> : vector<8xf32>
    %361 = vector.multi_reduction <add>, %360, %cst_111 [1] : vector<8x32xf32> to vector<8xf32>
    %362 = vector.shape_cast %361 : vector<8xf32> to vector<8x1xf32>
    %cst_112 = arith.constant 3.200000e+01 : f32
    %363 = vector.broadcast %cst_112 : f32 to vector<8x1xf32>
    %364 = arith.divf %362, %363 : vector<8x1xf32>
    %365 = vector.broadcast %357 : vector<8x1xf32> to vector<8x32xf32>
    %366 = arith.subf %351, %365 : vector<8x32xf32>
    %cst_113 = arith.constant 9.99999974E-6 : f32
    %367 = vector.broadcast %cst_113 : f32 to vector<8x1xf32>
    %368 = arith.addf %364, %367 : vector<8x1xf32>
    %369 = math.rsqrt %368 : vector<8x1xf32>
    %370 = vector.broadcast %369 : vector<8x1xf32> to vector<8x32xf32>
    %371 = arith.mulf %366, %370 : vector<8x32xf32>
    %372 = vector.broadcast %352 : vector<1x32xf32> to vector<8x32xf32>
    %373 = arith.mulf %371, %372 : vector<8x32xf32>
    %374 = vector.broadcast %353 : vector<1x32xf32> to vector<8x32xf32>
    %375 = arith.addf %373, %374 : vector<8x32xf32>
    %376 = vector.shape_cast %375 : vector<8x32xf32> to vector<1x8x32xf32>
    %c0_114 = arith.constant 0 : index
    %c0_115 = arith.constant 0 : index
    %c0_116 = arith.constant 0 : index
    %377 = vector.load %arg5[%c0_114, %c0_115, %c0_116] : memref<1x1x8xf32, #tpu.memory_space<vmem>>, vector<1x1x8xf32>
    %c0_117 = arith.constant 0 : index
    %c0_118 = arith.constant 0 : index
    %378 = vector.load %arg32[%c0_117, %c0_118] : memref<8x32xf32, #tpu.memory_space<vmem>>, vector<8x32xf32>
    %379 = vector.shape_cast %378 : vector<8x32xf32> to vector<1x8x32xf32>
    %c0_119 = arith.constant 0 : index
    %c0_120 = arith.constant 0 : index
    %380 = vector.load %arg18[%c0_119, %c0_120] : memref<32x96xbf16, #tpu.memory_space<vmem>>, vector<32x96xbf16>
    %c0_121 = arith.constant 0 : index
    %c0_122 = arith.constant 0 : index
    %381 = vector.load %arg17[%c0_121, %c0_122] : memref<32x32xbf16, #tpu.memory_space<vmem>>, vector<32x32xbf16>
    %c0_123 = arith.constant 0 : index
    %c0_124 = arith.constant 0 : index
    %382 = vector.load %arg14[%c0_123, %c0_124] : memref<32x32xbf16, #tpu.memory_space<vmem>>, vector<32x32xbf16>
    %c0_125 = arith.constant 0 : index
    %c0_126 = arith.constant 0 : index
    %383 = vector.load %arg12[%c0_125, %c0_126] : memref<32x64xbf16, #tpu.memory_space<vmem>>, vector<32x64xbf16>
    %c0_127 = arith.constant 0 : index
    %c0_128 = arith.constant 0 : index
    %384 = vector.load %arg13[%c0_127, %c0_128] : memref<32x32xbf16, #tpu.memory_space<vmem>>, vector<32x32xbf16>
    %c0_129 = arith.constant 0 : index
    %c0_130 = arith.constant 0 : index
    %385 = vector.load %arg15[%c0_129, %c0_130] : memref<32x64xbf16, #tpu.memory_space<vmem>>, vector<32x64xbf16>
    %c0_131 = arith.constant 0 : index
    %c0_132 = arith.constant 0 : index
    %386 = vector.load %arg16[%c0_131, %c0_132] : memref<64x32xbf16, #tpu.memory_space<vmem>>, vector<64x32xbf16>
    %387 = vector.shape_cast %379 : vector<1x8x32xf32> to vector<8x32xf32>
    %388 = arith.truncf %387 : vector<8x32xf32> to vector<8x32xbf16>
    %cst_133 = arith.constant dense<0.000000e+00> : vector<8x96xf32>
    %389 = tpu.matmul %388, %380, %cst_133 {dimension_numbers = #tpu.dot_dimension_numbers<[1], [0], [0], [1], [0, 0, 1, 1], [], []>} : vector<8x32xbf16>, vector<32x96xbf16>, vector<8x96xf32> -> vector<8x96xf32>
    %390 = vector.extract_strided_slice %0 {offsets = [20, 0], sizes = [1, 96], strides = [1, 1]} : vector<56x128xf32> to vector<1x96xf32>
    %391 = vector.broadcast %390 : vector<1x96xf32> to vector<8x96xf32>
    %392 = arith.addf %389, %391 : vector<8x96xf32>
    %393 = vector.extract_strided_slice %392 {offsets = [0, 0], sizes = [8, 32], strides = [1, 1]} : vector<8x96xf32> to vector<8x32xf32>
    %394 = vector.shape_cast %393 : vector<8x32xf32> to vector<1x8x32xf32>
    %395 = vector.extract_strided_slice %392 {offsets = [0, 32], sizes = [8, 32], strides = [1, 1]} : vector<8x96xf32> to vector<8x32xf32>
    %396 = vector.shape_cast %395 : vector<8x32xf32> to vector<1x8x32xf32>
    %397 = vector.extract_strided_slice %392 {offsets = [0, 64], sizes = [8, 32], strides = [1, 1]} : vector<8x96xf32> to vector<8x32xf32>
    %398 = vector.shape_cast %397 : vector<8x32xf32> to vector<1x8x32xf32>
    %399 = vector.extract_strided_slice %394 {offsets = [0, 0, 0], sizes = [1, 8, 8], strides = [1, 1, 1]} : vector<1x8x32xf32> to vector<1x8x8xf32>
    %400 = vector.extract_strided_slice %396 {offsets = [0, 0, 0], sizes = [1, 8, 8], strides = [1, 1, 1]} : vector<1x8x32xf32> to vector<1x8x8xf32>
    %401 = vector.extract_strided_slice %398 {offsets = [0, 0, 0], sizes = [1, 8, 8], strides = [1, 1, 1]} : vector<1x8x32xf32> to vector<1x8x8xf32>
    "tpu.trace_start"() <{level = 10 : i32, message = "bqd,bkd->bqk"}> : () -> ()
    %cst_134 = arith.constant dense<0.000000e+00> : vector<1x8x8xf32>
    %402 = tpu.matmul %399, %400, %cst_134 {dimension_numbers = #tpu.dot_dimension_numbers<[2], [2], [1], [1], [0, 0, 0, 1, 1, 1], [0], [0]>} : vector<1x8x8xf32>, vector<1x8x8xf32>, vector<1x8x8xf32> -> vector<1x8x8xf32>
    "tpu.trace_stop"() : () -> ()
    %cst_135 = arith.constant dense<0xFF800000> : vector<1x8xf32>
    %403 = vector.multi_reduction <maximumf>, %402, %cst_135 [2] : vector<1x8x8xf32> to vector<1x8xf32>
    %404 = vector.shape_cast %403 : vector<1x8xf32> to vector<1x8x1xf32>
    %405 = vector.broadcast %404 : vector<1x8x1xf32> to vector<1x8x8xf32>
    %406 = arith.subf %402, %405 : vector<1x8x8xf32>
    %407 = math.exp %406 : vector<1x8x8xf32>
    %cst_136 = arith.constant dense<0.000000e+00> : vector<1x8xf32>
    %408 = vector.multi_reduction <add>, %407, %cst_136 [2] : vector<1x8x8xf32> to vector<1x8xf32>
    %409 = vector.shape_cast %408 : vector<1x8xf32> to vector<1x8x1xf32>
    %410 = tpu.reciprocal %409 {approx = true} : vector<1x8x1xf32> -> vector<1x8x1xf32>
    %411 = vector.broadcast %410 : vector<1x8x1xf32> to vector<1x8x8xf32>
    %412 = arith.mulf %407, %411 : vector<1x8x8xf32>
    "tpu.trace_start"() <{level = 10 : i32, message = "bqk,bkd->bqd"}> : () -> ()
    %cst_137 = arith.constant dense<0.000000e+00> : vector<1x8x8xf32>
    %413 = tpu.matmul %412, %401, %cst_137 {dimension_numbers = #tpu.dot_dimension_numbers<[2], [1], [1], [2], [0, 0, 0, 1, 1, 2], [0], [0]>} : vector<1x8x8xf32>, vector<1x8x8xf32>, vector<1x8x8xf32> -> vector<1x8x8xf32>
    "tpu.trace_stop"() : () -> ()
    %414 = vector.extract_strided_slice %394 {offsets = [0, 0, 8], sizes = [1, 8, 8], strides = [1, 1, 1]} : vector<1x8x32xf32> to vector<1x8x8xf32>
    %415 = vector.extract_strided_slice %396 {offsets = [0, 0, 8], sizes = [1, 8, 8], strides = [1, 1, 1]} : vector<1x8x32xf32> to vector<1x8x8xf32>
    %416 = vector.extract_strided_slice %398 {offsets = [0, 0, 8], sizes = [1, 8, 8], strides = [1, 1, 1]} : vector<1x8x32xf32> to vector<1x8x8xf32>
    "tpu.trace_start"() <{level = 10 : i32, message = "bqd,bkd->bqk"}> : () -> ()
    %cst_138 = arith.constant dense<0.000000e+00> : vector<1x8x8xf32>
    %417 = tpu.matmul %414, %415, %cst_138 {dimension_numbers = #tpu.dot_dimension_numbers<[2], [2], [1], [1], [0, 0, 0, 1, 1, 1], [0], [0]>} : vector<1x8x8xf32>, vector<1x8x8xf32>, vector<1x8x8xf32> -> vector<1x8x8xf32>
    "tpu.trace_stop"() : () -> ()
    %cst_139 = arith.constant dense<0xFF800000> : vector<1x8xf32>
    %418 = vector.multi_reduction <maximumf>, %417, %cst_139 [2] : vector<1x8x8xf32> to vector<1x8xf32>
    %419 = vector.shape_cast %418 : vector<1x8xf32> to vector<1x8x1xf32>
    %420 = vector.broadcast %419 : vector<1x8x1xf32> to vector<1x8x8xf32>
    %421 = arith.subf %417, %420 : vector<1x8x8xf32>
    %422 = math.exp %421 : vector<1x8x8xf32>
    %cst_140 = arith.constant dense<0.000000e+00> : vector<1x8xf32>
    %423 = vector.multi_reduction <add>, %422, %cst_140 [2] : vector<1x8x8xf32> to vector<1x8xf32>
    %424 = vector.shape_cast %423 : vector<1x8xf32> to vector<1x8x1xf32>
    %425 = tpu.reciprocal %424 {approx = true} : vector<1x8x1xf32> -> vector<1x8x1xf32>
    %426 = vector.broadcast %425 : vector<1x8x1xf32> to vector<1x8x8xf32>
    %427 = arith.mulf %422, %426 : vector<1x8x8xf32>
    "tpu.trace_start"() <{level = 10 : i32, message = "bqk,bkd->bqd"}> : () -> ()
    %cst_141 = arith.constant dense<0.000000e+00> : vector<1x8x8xf32>
    %428 = tpu.matmul %427, %416, %cst_141 {dimension_numbers = #tpu.dot_dimension_numbers<[2], [1], [1], [2], [0, 0, 0, 1, 1, 2], [0], [0]>} : vector<1x8x8xf32>, vector<1x8x8xf32>, vector<1x8x8xf32> -> vector<1x8x8xf32>
    "tpu.trace_stop"() : () -> ()
    %429 = vector.extract_strided_slice %394 {offsets = [0, 0, 16], sizes = [1, 8, 8], strides = [1, 1, 1]} : vector<1x8x32xf32> to vector<1x8x8xf32>
    %430 = vector.extract_strided_slice %396 {offsets = [0, 0, 16], sizes = [1, 8, 8], strides = [1, 1, 1]} : vector<1x8x32xf32> to vector<1x8x8xf32>
    %431 = vector.extract_strided_slice %398 {offsets = [0, 0, 16], sizes = [1, 8, 8], strides = [1, 1, 1]} : vector<1x8x32xf32> to vector<1x8x8xf32>
    "tpu.trace_start"() <{level = 10 : i32, message = "bqd,bkd->bqk"}> : () -> ()
    %cst_142 = arith.constant dense<0.000000e+00> : vector<1x8x8xf32>
    %432 = tpu.matmul %429, %430, %cst_142 {dimension_numbers = #tpu.dot_dimension_numbers<[2], [2], [1], [1], [0, 0, 0, 1, 1, 1], [0], [0]>} : vector<1x8x8xf32>, vector<1x8x8xf32>, vector<1x8x8xf32> -> vector<1x8x8xf32>
    "tpu.trace_stop"() : () -> ()
    %cst_143 = arith.constant dense<0xFF800000> : vector<1x8xf32>
    %433 = vector.multi_reduction <maximumf>, %432, %cst_143 [2] : vector<1x8x8xf32> to vector<1x8xf32>
    %434 = vector.shape_cast %433 : vector<1x8xf32> to vector<1x8x1xf32>
    %435 = vector.broadcast %434 : vector<1x8x1xf32> to vector<1x8x8xf32>
    %436 = arith.subf %432, %435 : vector<1x8x8xf32>
    %437 = math.exp %436 : vector<1x8x8xf32>
    %cst_144 = arith.constant dense<0.000000e+00> : vector<1x8xf32>
    %438 = vector.multi_reduction <add>, %437, %cst_144 [2] : vector<1x8x8xf32> to vector<1x8xf32>
    %439 = vector.shape_cast %438 : vector<1x8xf32> to vector<1x8x1xf32>
    %440 = tpu.reciprocal %439 {approx = true} : vector<1x8x1xf32> -> vector<1x8x1xf32>
    %441 = vector.broadcast %440 : vector<1x8x1xf32> to vector<1x8x8xf32>
    %442 = arith.mulf %437, %441 : vector<1x8x8xf32>
    "tpu.trace_start"() <{level = 10 : i32, message = "bqk,bkd->bqd"}> : () -> ()
    %cst_145 = arith.constant dense<0.000000e+00> : vector<1x8x8xf32>
    %443 = tpu.matmul %442, %431, %cst_145 {dimension_numbers = #tpu.dot_dimension_numbers<[2], [1], [1], [2], [0, 0, 0, 1, 1, 2], [0], [0]>} : vector<1x8x8xf32>, vector<1x8x8xf32>, vector<1x8x8xf32> -> vector<1x8x8xf32>
    "tpu.trace_stop"() : () -> ()
    %444 = vector.extract_strided_slice %394 {offsets = [0, 0, 24], sizes = [1, 8, 8], strides = [1, 1, 1]} : vector<1x8x32xf32> to vector<1x8x8xf32>
    %445 = vector.extract_strided_slice %396 {offsets = [0, 0, 24], sizes = [1, 8, 8], strides = [1, 1, 1]} : vector<1x8x32xf32> to vector<1x8x8xf32>
    %446 = vector.extract_strided_slice %398 {offsets = [0, 0, 24], sizes = [1, 8, 8], strides = [1, 1, 1]} : vector<1x8x32xf32> to vector<1x8x8xf32>
    "tpu.trace_start"() <{level = 10 : i32, message = "bqd,bkd->bqk"}> : () -> ()
    %cst_146 = arith.constant dense<0.000000e+00> : vector<1x8x8xf32>
    %447 = tpu.matmul %444, %445, %cst_146 {dimension_numbers = #tpu.dot_dimension_numbers<[2], [2], [1], [1], [0, 0, 0, 1, 1, 1], [0], [0]>} : vector<1x8x8xf32>, vector<1x8x8xf32>, vector<1x8x8xf32> -> vector<1x8x8xf32>
    "tpu.trace_stop"() : () -> ()
    %cst_147 = arith.constant dense<0xFF800000> : vector<1x8xf32>
    %448 = vector.multi_reduction <maximumf>, %447, %cst_147 [2] : vector<1x8x8xf32> to vector<1x8xf32>
    %449 = vector.shape_cast %448 : vector<1x8xf32> to vector<1x8x1xf32>
    %450 = vector.broadcast %449 : vector<1x8x1xf32> to vector<1x8x8xf32>
    %451 = arith.subf %447, %450 : vector<1x8x8xf32>
    %452 = math.exp %451 : vector<1x8x8xf32>
    %cst_148 = arith.constant dense<0.000000e+00> : vector<1x8xf32>
    %453 = vector.multi_reduction <add>, %452, %cst_148 [2] : vector<1x8x8xf32> to vector<1x8xf32>
    %454 = vector.shape_cast %453 : vector<1x8xf32> to vector<1x8x1xf32>
    %455 = tpu.reciprocal %454 {approx = true} : vector<1x8x1xf32> -> vector<1x8x1xf32>
    %456 = vector.broadcast %455 : vector<1x8x1xf32> to vector<1x8x8xf32>
    %457 = arith.mulf %452, %456 : vector<1x8x8xf32>
    "tpu.trace_start"() <{level = 10 : i32, message = "bqk,bkd->bqd"}> : () -> ()
    %cst_149 = arith.constant dense<0.000000e+00> : vector<1x8x8xf32>
    %458 = tpu.matmul %457, %446, %cst_149 {dimension_numbers = #tpu.dot_dimension_numbers<[2], [1], [1], [2], [0, 0, 0, 1, 1, 2], [0], [0]>} : vector<1x8x8xf32>, vector<1x8x8xf32>, vector<1x8x8xf32> -> vector<1x8x8xf32>
    "tpu.trace_stop"() : () -> ()
    %459 = tpu.concatenate %413, %428, %443, %458 in 2 : vector<1x8x8xf32>, vector<1x8x8xf32>, vector<1x8x8xf32>, vector<1x8x8xf32> -> vector<1x8x32xf32>
    %460 = vector.shape_cast %459 : vector<1x8x32xf32> to vector<8x32xf32>
    %461 = arith.truncf %460 : vector<8x32xf32> to vector<8x32xbf16>
    %cst_150 = arith.constant dense<0.000000e+00> : vector<8x32xf32>
    %462 = tpu.matmul %461, %381, %cst_150 {dimension_numbers = #tpu.dot_dimension_numbers<[1], [0], [0], [1], [0, 0, 1, 1], [], []>} : vector<8x32xbf16>, vector<32x32xbf16>, vector<8x32xf32> -> vector<8x32xf32>
    %463 = vector.extract_strided_slice %0 {offsets = [21, 0], sizes = [1, 32], strides = [1, 1]} : vector<56x128xf32> to vector<1x32xf32>
    %464 = vector.broadcast %463 : vector<1x32xf32> to vector<8x32xf32>
    %465 = arith.addf %462, %464 : vector<8x32xf32>
    %466 = arith.addf %387, %465 : vector<8x32xf32>
    %467 = vector.extract_strided_slice %0 {offsets = [27, 0], sizes = [1, 32], strides = [1, 1]} : vector<56x128xf32> to vector<1x32xf32>
    %468 = vector.extract_strided_slice %0 {offsets = [28, 0], sizes = [1, 32], strides = [1, 1]} : vector<56x128xf32> to vector<1x32xf32>
    %cst_151 = arith.constant dense<0.000000e+00> : vector<8xf32>
    %469 = vector.multi_reduction <add>, %466, %cst_151 [1] : vector<8x32xf32> to vector<8xf32>
    %470 = vector.shape_cast %469 : vector<8xf32> to vector<8x1xf32>
    %cst_152 = arith.constant 3.200000e+01 : f32
    %471 = vector.broadcast %cst_152 : f32 to vector<8x1xf32>
    %472 = arith.divf %470, %471 : vector<8x1xf32>
    %473 = vector.broadcast %472 : vector<8x1xf32> to vector<8x32xf32>
    %474 = arith.subf %466, %473 : vector<8x32xf32>
    %475 = arith.mulf %474, %474 : vector<8x32xf32>
    %cst_153 = arith.constant dense<0.000000e+00> : vector<8xf32>
    %476 = vector.multi_reduction <add>, %475, %cst_153 [1] : vector<8x32xf32> to vector<8xf32>
    %477 = vector.shape_cast %476 : vector<8xf32> to vector<8x1xf32>
    %cst_154 = arith.constant 3.200000e+01 : f32
    %478 = vector.broadcast %cst_154 : f32 to vector<8x1xf32>
    %479 = arith.divf %477, %478 : vector<8x1xf32>
    %480 = vector.broadcast %472 : vector<8x1xf32> to vector<8x32xf32>
    %481 = arith.subf %466, %480 : vector<8x32xf32>
    %cst_155 = arith.constant 9.99999974E-6 : f32
    %482 = vector.broadcast %cst_155 : f32 to vector<8x1xf32>
    %483 = arith.addf %479, %482 : vector<8x1xf32>
    %484 = math.rsqrt %483 : vector<8x1xf32>
    %485 = vector.broadcast %484 : vector<8x1xf32> to vector<8x32xf32>
    %486 = arith.mulf %481, %485 : vector<8x32xf32>
    %487 = vector.broadcast %467 : vector<1x32xf32> to vector<8x32xf32>
    %488 = arith.mulf %486, %487 : vector<8x32xf32>
    %489 = vector.broadcast %468 : vector<1x32xf32> to vector<8x32xf32>
    %490 = arith.addf %488, %489 : vector<8x32xf32>
    %491 = arith.truncf %490 : vector<8x32xf32> to vector<8x32xbf16>
    %cst_156 = arith.constant dense<0.000000e+00> : vector<8x32xf32>
    %492 = tpu.matmul %491, %382, %cst_156 {dimension_numbers = #tpu.dot_dimension_numbers<[1], [0], [0], [1], [0, 0, 1, 1], [], []>} : vector<8x32xbf16>, vector<32x32xbf16>, vector<8x32xf32> -> vector<8x32xf32>
    %493 = vector.extract_strided_slice %0 {offsets = [22, 0], sizes = [1, 32], strides = [1, 1]} : vector<56x128xf32> to vector<1x32xf32>
    %494 = vector.broadcast %493 : vector<1x32xf32> to vector<8x32xf32>
    %495 = arith.addf %492, %494 : vector<8x32xf32>
    %496 = vector.shape_cast %376 : vector<1x8x32xf32> to vector<8x32xf32>
    %497 = arith.truncf %496 : vector<8x32xf32> to vector<8x32xbf16>
    %cst_157 = arith.constant dense<0.000000e+00> : vector<8x64xf32>
    %498 = tpu.matmul %497, %383, %cst_157 {dimension_numbers = #tpu.dot_dimension_numbers<[1], [0], [0], [1], [0, 0, 1, 1], [], []>} : vector<8x32xbf16>, vector<32x64xbf16>, vector<8x64xf32> -> vector<8x64xf32>
    %499 = vector.extract_strided_slice %0 {offsets = [23, 0], sizes = [1, 64], strides = [1, 1]} : vector<56x128xf32> to vector<1x64xf32>
    %500 = vector.broadcast %499 : vector<1x64xf32> to vector<8x64xf32>
    %501 = arith.addf %498, %500 : vector<8x64xf32>
    %502 = vector.extract_strided_slice %501 {offsets = [0, 0], sizes = [8, 32], strides = [1, 1]} : vector<8x64xf32> to vector<8x32xf32>
    %503 = vector.shape_cast %502 : vector<8x32xf32> to vector<1x8x32xf32>
    %504 = vector.extract_strided_slice %501 {offsets = [0, 32], sizes = [8, 32], strides = [1, 1]} : vector<8x64xf32> to vector<8x32xf32>
    %505 = vector.shape_cast %504 : vector<8x32xf32> to vector<1x8x32xf32>
    %506 = vector.shape_cast %495 : vector<8x32xf32> to vector<1x8x32xf32>
    %507 = vector.extract_strided_slice %506 {offsets = [0, 0, 0], sizes = [1, 8, 8], strides = [1, 1, 1]} : vector<1x8x32xf32> to vector<1x8x8xf32>
    %508 = vector.extract_strided_slice %503 {offsets = [0, 0, 0], sizes = [1, 8, 8], strides = [1, 1, 1]} : vector<1x8x32xf32> to vector<1x8x8xf32>
    %509 = vector.extract_strided_slice %505 {offsets = [0, 0, 0], sizes = [1, 8, 8], strides = [1, 1, 1]} : vector<1x8x32xf32> to vector<1x8x8xf32>
    "tpu.trace_start"() <{level = 10 : i32, message = "bqd,bkd->bqk"}> : () -> ()
    %cst_158 = arith.constant dense<0.000000e+00> : vector<1x8x8xf32>
    %510 = tpu.matmul %507, %508, %cst_158 {dimension_numbers = #tpu.dot_dimension_numbers<[2], [2], [1], [1], [0, 0, 0, 1, 1, 1], [0], [0]>} : vector<1x8x8xf32>, vector<1x8x8xf32>, vector<1x8x8xf32> -> vector<1x8x8xf32>
    "tpu.trace_stop"() : () -> ()
    %511 = vector.broadcast %377 : vector<1x1x8xf32> to vector<1x8x8xf32>
    %512 = arith.addf %510, %511 : vector<1x8x8xf32>
    %cst_159 = arith.constant dense<0xFF800000> : vector<1x8xf32>
    %513 = vector.multi_reduction <maximumf>, %512, %cst_159 [2] : vector<1x8x8xf32> to vector<1x8xf32>
    %514 = vector.shape_cast %513 : vector<1x8xf32> to vector<1x8x1xf32>
    %515 = vector.broadcast %514 : vector<1x8x1xf32> to vector<1x8x8xf32>
    %516 = arith.subf %512, %515 : vector<1x8x8xf32>
    %517 = math.exp %516 : vector<1x8x8xf32>
    %cst_160 = arith.constant dense<0.000000e+00> : vector<1x8xf32>
    %518 = vector.multi_reduction <add>, %517, %cst_160 [2] : vector<1x8x8xf32> to vector<1x8xf32>
    %519 = vector.shape_cast %518 : vector<1x8xf32> to vector<1x8x1xf32>
    %520 = tpu.reciprocal %519 {approx = true} : vector<1x8x1xf32> -> vector<1x8x1xf32>
    %521 = vector.broadcast %520 : vector<1x8x1xf32> to vector<1x8x8xf32>
    %522 = arith.mulf %517, %521 : vector<1x8x8xf32>
    "tpu.trace_start"() <{level = 10 : i32, message = "bqk,bkd->bqd"}> : () -> ()
    %cst_161 = arith.constant dense<0.000000e+00> : vector<1x8x8xf32>
    %523 = tpu.matmul %522, %509, %cst_161 {dimension_numbers = #tpu.dot_dimension_numbers<[2], [1], [1], [2], [0, 0, 0, 1, 1, 2], [0], [0]>} : vector<1x8x8xf32>, vector<1x8x8xf32>, vector<1x8x8xf32> -> vector<1x8x8xf32>
    "tpu.trace_stop"() : () -> ()
    %524 = vector.extract_strided_slice %506 {offsets = [0, 0, 8], sizes = [1, 8, 8], strides = [1, 1, 1]} : vector<1x8x32xf32> to vector<1x8x8xf32>
    %525 = vector.extract_strided_slice %503 {offsets = [0, 0, 8], sizes = [1, 8, 8], strides = [1, 1, 1]} : vector<1x8x32xf32> to vector<1x8x8xf32>
    %526 = vector.extract_strided_slice %505 {offsets = [0, 0, 8], sizes = [1, 8, 8], strides = [1, 1, 1]} : vector<1x8x32xf32> to vector<1x8x8xf32>
    "tpu.trace_start"() <{level = 10 : i32, message = "bqd,bkd->bqk"}> : () -> ()
    %cst_162 = arith.constant dense<0.000000e+00> : vector<1x8x8xf32>
    %527 = tpu.matmul %524, %525, %cst_162 {dimension_numbers = #tpu.dot_dimension_numbers<[2], [2], [1], [1], [0, 0, 0, 1, 1, 1], [0], [0]>} : vector<1x8x8xf32>, vector<1x8x8xf32>, vector<1x8x8xf32> -> vector<1x8x8xf32>
    "tpu.trace_stop"() : () -> ()
    %528 = vector.broadcast %377 : vector<1x1x8xf32> to vector<1x8x8xf32>
    %529 = arith.addf %527, %528 : vector<1x8x8xf32>
    %cst_163 = arith.constant dense<0xFF800000> : vector<1x8xf32>
    %530 = vector.multi_reduction <maximumf>, %529, %cst_163 [2] : vector<1x8x8xf32> to vector<1x8xf32>
    %531 = vector.shape_cast %530 : vector<1x8xf32> to vector<1x8x1xf32>
    %532 = vector.broadcast %531 : vector<1x8x1xf32> to vector<1x8x8xf32>
    %533 = arith.subf %529, %532 : vector<1x8x8xf32>
    %534 = math.exp %533 : vector<1x8x8xf32>
    %cst_164 = arith.constant dense<0.000000e+00> : vector<1x8xf32>
    %535 = vector.multi_reduction <add>, %534, %cst_164 [2] : vector<1x8x8xf32> to vector<1x8xf32>
    %536 = vector.shape_cast %535 : vector<1x8xf32> to vector<1x8x1xf32>
    %537 = tpu.reciprocal %536 {approx = true} : vector<1x8x1xf32> -> vector<1x8x1xf32>
    %538 = vector.broadcast %537 : vector<1x8x1xf32> to vector<1x8x8xf32>
    %539 = arith.mulf %534, %538 : vector<1x8x8xf32>
    "tpu.trace_start"() <{level = 10 : i32, message = "bqk,bkd->bqd"}> : () -> ()
    %cst_165 = arith.constant dense<0.000000e+00> : vector<1x8x8xf32>
    %540 = tpu.matmul %539, %526, %cst_165 {dimension_numbers = #tpu.dot_dimension_numbers<[2], [1], [1], [2], [0, 0, 0, 1, 1, 2], [0], [0]>} : vector<1x8x8xf32>, vector<1x8x8xf32>, vector<1x8x8xf32> -> vector<1x8x8xf32>
    "tpu.trace_stop"() : () -> ()
    %541 = vector.extract_strided_slice %506 {offsets = [0, 0, 16], sizes = [1, 8, 8], strides = [1, 1, 1]} : vector<1x8x32xf32> to vector<1x8x8xf32>
    %542 = vector.extract_strided_slice %503 {offsets = [0, 0, 16], sizes = [1, 8, 8], strides = [1, 1, 1]} : vector<1x8x32xf32> to vector<1x8x8xf32>
    %543 = vector.extract_strided_slice %505 {offsets = [0, 0, 16], sizes = [1, 8, 8], strides = [1, 1, 1]} : vector<1x8x32xf32> to vector<1x8x8xf32>
    "tpu.trace_start"() <{level = 10 : i32, message = "bqd,bkd->bqk"}> : () -> ()
    %cst_166 = arith.constant dense<0.000000e+00> : vector<1x8x8xf32>
    %544 = tpu.matmul %541, %542, %cst_166 {dimension_numbers = #tpu.dot_dimension_numbers<[2], [2], [1], [1], [0, 0, 0, 1, 1, 1], [0], [0]>} : vector<1x8x8xf32>, vector<1x8x8xf32>, vector<1x8x8xf32> -> vector<1x8x8xf32>
    "tpu.trace_stop"() : () -> ()
    %545 = vector.broadcast %377 : vector<1x1x8xf32> to vector<1x8x8xf32>
    %546 = arith.addf %544, %545 : vector<1x8x8xf32>
    %cst_167 = arith.constant dense<0xFF800000> : vector<1x8xf32>
    %547 = vector.multi_reduction <maximumf>, %546, %cst_167 [2] : vector<1x8x8xf32> to vector<1x8xf32>
    %548 = vector.shape_cast %547 : vector<1x8xf32> to vector<1x8x1xf32>
    %549 = vector.broadcast %548 : vector<1x8x1xf32> to vector<1x8x8xf32>
    %550 = arith.subf %546, %549 : vector<1x8x8xf32>
    %551 = math.exp %550 : vector<1x8x8xf32>
    %cst_168 = arith.constant dense<0.000000e+00> : vector<1x8xf32>
    %552 = vector.multi_reduction <add>, %551, %cst_168 [2] : vector<1x8x8xf32> to vector<1x8xf32>
    %553 = vector.shape_cast %552 : vector<1x8xf32> to vector<1x8x1xf32>
    %554 = tpu.reciprocal %553 {approx = true} : vector<1x8x1xf32> -> vector<1x8x1xf32>
    %555 = vector.broadcast %554 : vector<1x8x1xf32> to vector<1x8x8xf32>
    %556 = arith.mulf %551, %555 : vector<1x8x8xf32>
    "tpu.trace_start"() <{level = 10 : i32, message = "bqk,bkd->bqd"}> : () -> ()
    %cst_169 = arith.constant dense<0.000000e+00> : vector<1x8x8xf32>
    %557 = tpu.matmul %556, %543, %cst_169 {dimension_numbers = #tpu.dot_dimension_numbers<[2], [1], [1], [2], [0, 0, 0, 1, 1, 2], [0], [0]>} : vector<1x8x8xf32>, vector<1x8x8xf32>, vector<1x8x8xf32> -> vector<1x8x8xf32>
    "tpu.trace_stop"() : () -> ()
    %558 = vector.extract_strided_slice %506 {offsets = [0, 0, 24], sizes = [1, 8, 8], strides = [1, 1, 1]} : vector<1x8x32xf32> to vector<1x8x8xf32>
    %559 = vector.extract_strided_slice %503 {offsets = [0, 0, 24], sizes = [1, 8, 8], strides = [1, 1, 1]} : vector<1x8x32xf32> to vector<1x8x8xf32>
    %560 = vector.extract_strided_slice %505 {offsets = [0, 0, 24], sizes = [1, 8, 8], strides = [1, 1, 1]} : vector<1x8x32xf32> to vector<1x8x8xf32>
    "tpu.trace_start"() <{level = 10 : i32, message = "bqd,bkd->bqk"}> : () -> ()
    %cst_170 = arith.constant dense<0.000000e+00> : vector<1x8x8xf32>
    %561 = tpu.matmul %558, %559, %cst_170 {dimension_numbers = #tpu.dot_dimension_numbers<[2], [2], [1], [1], [0, 0, 0, 1, 1, 1], [0], [0]>} : vector<1x8x8xf32>, vector<1x8x8xf32>, vector<1x8x8xf32> -> vector<1x8x8xf32>
    "tpu.trace_stop"() : () -> ()
    %562 = vector.broadcast %377 : vector<1x1x8xf32> to vector<1x8x8xf32>
    %563 = arith.addf %561, %562 : vector<1x8x8xf32>
    %cst_171 = arith.constant dense<0xFF800000> : vector<1x8xf32>
    %564 = vector.multi_reduction <maximumf>, %563, %cst_171 [2] : vector<1x8x8xf32> to vector<1x8xf32>
    %565 = vector.shape_cast %564 : vector<1x8xf32> to vector<1x8x1xf32>
    %566 = vector.broadcast %565 : vector<1x8x1xf32> to vector<1x8x8xf32>
    %567 = arith.subf %563, %566 : vector<1x8x8xf32>
    %568 = math.exp %567 : vector<1x8x8xf32>
    %cst_172 = arith.constant dense<0.000000e+00> : vector<1x8xf32>
    %569 = vector.multi_reduction <add>, %568, %cst_172 [2] : vector<1x8x8xf32> to vector<1x8xf32>
    %570 = vector.shape_cast %569 : vector<1x8xf32> to vector<1x8x1xf32>
    %571 = tpu.reciprocal %570 {approx = true} : vector<1x8x1xf32> -> vector<1x8x1xf32>
    %572 = vector.broadcast %571 : vector<1x8x1xf32> to vector<1x8x8xf32>
    %573 = arith.mulf %568, %572 : vector<1x8x8xf32>
    "tpu.trace_start"() <{level = 10 : i32, message = "bqk,bkd->bqd"}> : () -> ()
    %cst_173 = arith.constant dense<0.000000e+00> : vector<1x8x8xf32>
    %574 = tpu.matmul %573, %560, %cst_173 {dimension_numbers = #tpu.dot_dimension_numbers<[2], [1], [1], [2], [0, 0, 0, 1, 1, 2], [0], [0]>} : vector<1x8x8xf32>, vector<1x8x8xf32>, vector<1x8x8xf32> -> vector<1x8x8xf32>
    "tpu.trace_stop"() : () -> ()
    %575 = tpu.concatenate %523, %540, %557, %574 in 2 : vector<1x8x8xf32>, vector<1x8x8xf32>, vector<1x8x8xf32>, vector<1x8x8xf32> -> vector<1x8x32xf32>
    %576 = vector.shape_cast %575 : vector<1x8x32xf32> to vector<8x32xf32>
    %577 = arith.truncf %576 : vector<8x32xf32> to vector<8x32xbf16>
    %cst_174 = arith.constant dense<0.000000e+00> : vector<8x32xf32>
    %578 = tpu.matmul %577, %384, %cst_174 {dimension_numbers = #tpu.dot_dimension_numbers<[1], [0], [0], [1], [0, 0, 1, 1], [], []>} : vector<8x32xbf16>, vector<32x32xbf16>, vector<8x32xf32> -> vector<8x32xf32>
    %579 = vector.extract_strided_slice %0 {offsets = [24, 0], sizes = [1, 32], strides = [1, 1]} : vector<56x128xf32> to vector<1x32xf32>
    %580 = vector.broadcast %579 : vector<1x32xf32> to vector<8x32xf32>
    %581 = arith.addf %578, %580 : vector<8x32xf32>
    %582 = arith.addf %490, %581 : vector<8x32xf32>
    %583 = vector.extract_strided_slice %0 {offsets = [29, 0], sizes = [1, 32], strides = [1, 1]} : vector<56x128xf32> to vector<1x32xf32>
    %584 = vector.extract_strided_slice %0 {offsets = [30, 0], sizes = [1, 32], strides = [1, 1]} : vector<56x128xf32> to vector<1x32xf32>
    %cst_175 = arith.constant dense<0.000000e+00> : vector<8xf32>
    %585 = vector.multi_reduction <add>, %582, %cst_175 [1] : vector<8x32xf32> to vector<8xf32>
    %586 = vector.shape_cast %585 : vector<8xf32> to vector<8x1xf32>
    %cst_176 = arith.constant 3.200000e+01 : f32
    %587 = vector.broadcast %cst_176 : f32 to vector<8x1xf32>
    %588 = arith.divf %586, %587 : vector<8x1xf32>
    %589 = vector.broadcast %588 : vector<8x1xf32> to vector<8x32xf32>
    %590 = arith.subf %582, %589 : vector<8x32xf32>
    %591 = arith.mulf %590, %590 : vector<8x32xf32>
    %cst_177 = arith.constant dense<0.000000e+00> : vector<8xf32>
    %592 = vector.multi_reduction <add>, %591, %cst_177 [1] : vector<8x32xf32> to vector<8xf32>
    %593 = vector.shape_cast %592 : vector<8xf32> to vector<8x1xf32>
    %cst_178 = arith.constant 3.200000e+01 : f32
    %594 = vector.broadcast %cst_178 : f32 to vector<8x1xf32>
    %595 = arith.divf %593, %594 : vector<8x1xf32>
    %596 = vector.broadcast %588 : vector<8x1xf32> to vector<8x32xf32>
    %597 = arith.subf %582, %596 : vector<8x32xf32>
    %cst_179 = arith.constant 9.99999974E-6 : f32
    %598 = vector.broadcast %cst_179 : f32 to vector<8x1xf32>
    %599 = arith.addf %595, %598 : vector<8x1xf32>
    %600 = math.rsqrt %599 : vector<8x1xf32>
    %601 = vector.broadcast %600 : vector<8x1xf32> to vector<8x32xf32>
    %602 = arith.mulf %597, %601 : vector<8x32xf32>
    %603 = vector.broadcast %583 : vector<1x32xf32> to vector<8x32xf32>
    %604 = arith.mulf %602, %603 : vector<8x32xf32>
    %605 = vector.broadcast %584 : vector<1x32xf32> to vector<8x32xf32>
    %606 = arith.addf %604, %605 : vector<8x32xf32>
    %607 = arith.truncf %606 : vector<8x32xf32> to vector<8x32xbf16>
    %cst_180 = arith.constant dense<0.000000e+00> : vector<8x64xf32>
    %608 = tpu.matmul %607, %385, %cst_180 {dimension_numbers = #tpu.dot_dimension_numbers<[1], [0], [0], [1], [0, 0, 1, 1], [], []>} : vector<8x32xbf16>, vector<32x64xbf16>, vector<8x64xf32> -> vector<8x64xf32>
    %609 = vector.extract_strided_slice %0 {offsets = [25, 0], sizes = [1, 64], strides = [1, 1]} : vector<56x128xf32> to vector<1x64xf32>
    %610 = vector.broadcast %609 : vector<1x64xf32> to vector<8x64xf32>
    %611 = arith.addf %608, %610 : vector<8x64xf32>
    %cst_181 = arith.constant 0.000000e+00 : f32
    %612 = vector.broadcast %cst_181 : f32 to vector<8x64xf32>
    %613 = arith.cmpf oge, %611, %612 : vector<8x64xf32>
    %cst_182 = arith.constant 0.00999999977 : f32
    %614 = vector.broadcast %cst_182 : f32 to vector<8x64xf32>
    %615 = arith.mulf %614, %611 : vector<8x64xf32>
    %616 = arith.select %613, %611, %615 : vector<8x64xi1>, vector<8x64xf32>
    %617 = arith.truncf %616 : vector<8x64xf32> to vector<8x64xbf16>
    %cst_183 = arith.constant dense<0.000000e+00> : vector<8x32xf32>
    %618 = tpu.matmul %617, %386, %cst_183 {dimension_numbers = #tpu.dot_dimension_numbers<[1], [0], [0], [1], [0, 0, 1, 1], [], []>} : vector<8x64xbf16>, vector<64x32xbf16>, vector<8x32xf32> -> vector<8x32xf32>
    %619 = vector.extract_strided_slice %0 {offsets = [26, 0], sizes = [1, 32], strides = [1, 1]} : vector<56x128xf32> to vector<1x32xf32>
    %620 = vector.broadcast %619 : vector<1x32xf32> to vector<8x32xf32>
    %621 = arith.addf %618, %620 : vector<8x32xf32>
    %622 = arith.addf %606, %621 : vector<8x32xf32>
    %623 = vector.extract_strided_slice %0 {offsets = [31, 0], sizes = [1, 32], strides = [1, 1]} : vector<56x128xf32> to vector<1x32xf32>
    %624 = vector.extract_strided_slice %0 {offsets = [32, 0], sizes = [1, 32], strides = [1, 1]} : vector<56x128xf32> to vector<1x32xf32>
    %cst_184 = arith.constant dense<0.000000e+00> : vector<8xf32>
    %625 = vector.multi_reduction <add>, %622, %cst_184 [1] : vector<8x32xf32> to vector<8xf32>
    %626 = vector.shape_cast %625 : vector<8xf32> to vector<8x1xf32>
    %cst_185 = arith.constant 3.200000e+01 : f32
    %627 = vector.broadcast %cst_185 : f32 to vector<8x1xf32>
    %628 = arith.divf %626, %627 : vector<8x1xf32>
    %629 = vector.broadcast %628 : vector<8x1xf32> to vector<8x32xf32>
    %630 = arith.subf %622, %629 : vector<8x32xf32>
    %631 = arith.mulf %630, %630 : vector<8x32xf32>
    %cst_186 = arith.constant dense<0.000000e+00> : vector<8xf32>
    %632 = vector.multi_reduction <add>, %631, %cst_186 [1] : vector<8x32xf32> to vector<8xf32>
    %633 = vector.shape_cast %632 : vector<8xf32> to vector<8x1xf32>
    %cst_187 = arith.constant 3.200000e+01 : f32
    %634 = vector.broadcast %cst_187 : f32 to vector<8x1xf32>
    %635 = arith.divf %633, %634 : vector<8x1xf32>
    %636 = vector.broadcast %628 : vector<8x1xf32> to vector<8x32xf32>
    %637 = arith.subf %622, %636 : vector<8x32xf32>
    %cst_188 = arith.constant 9.99999974E-6 : f32
    %638 = vector.broadcast %cst_188 : f32 to vector<8x1xf32>
    %639 = arith.addf %635, %638 : vector<8x1xf32>
    %640 = math.rsqrt %639 : vector<8x1xf32>
    %641 = vector.broadcast %640 : vector<8x1xf32> to vector<8x32xf32>
    %642 = arith.mulf %637, %641 : vector<8x32xf32>
    %643 = vector.broadcast %623 : vector<1x32xf32> to vector<8x32xf32>
    %644 = arith.mulf %642, %643 : vector<8x32xf32>
    %645 = vector.broadcast %624 : vector<1x32xf32> to vector<8x32xf32>
    %646 = arith.addf %644, %645 : vector<8x32xf32>
    %647 = vector.shape_cast %646 : vector<8x32xf32> to vector<1x8x32xf32>
    %c0_189 = arith.constant 0 : index
    %c0_190 = arith.constant 0 : index
    %648 = vector.load %arg25[%c0_189, %c0_190] : memref<32x96xbf16, #tpu.memory_space<vmem>>, vector<32x96xbf16>
    %c0_191 = arith.constant 0 : index
    %c0_192 = arith.constant 0 : index
    %649 = vector.load %arg24[%c0_191, %c0_192] : memref<32x32xbf16, #tpu.memory_space<vmem>>, vector<32x32xbf16>
    %c0_193 = arith.constant 0 : index
    %c0_194 = arith.constant 0 : index
    %650 = vector.load %arg21[%c0_193, %c0_194] : memref<32x32xbf16, #tpu.memory_space<vmem>>, vector<32x32xbf16>
    %c0_195 = arith.constant 0 : index
    %c0_196 = arith.constant 0 : index
    %651 = vector.load %arg19[%c0_195, %c0_196] : memref<32x64xbf16, #tpu.memory_space<vmem>>, vector<32x64xbf16>
    %c0_197 = arith.constant 0 : index
    %c0_198 = arith.constant 0 : index
    %652 = vector.load %arg20[%c0_197, %c0_198] : memref<32x32xbf16, #tpu.memory_space<vmem>>, vector<32x32xbf16>
    %c0_199 = arith.constant 0 : index
    %c0_200 = arith.constant 0 : index
    %653 = vector.load %arg22[%c0_199, %c0_200] : memref<32x64xbf16, #tpu.memory_space<vmem>>, vector<32x64xbf16>
    %c0_201 = arith.constant 0 : index
    %c0_202 = arith.constant 0 : index
    %654 = vector.load %arg23[%c0_201, %c0_202] : memref<64x32xbf16, #tpu.memory_space<vmem>>, vector<64x32xbf16>
    %655 = vector.shape_cast %647 : vector<1x8x32xf32> to vector<8x32xf32>
    %656 = arith.truncf %655 : vector<8x32xf32> to vector<8x32xbf16>
    %cst_203 = arith.constant dense<0.000000e+00> : vector<8x96xf32>
    %657 = tpu.matmul %656, %648, %cst_203 {dimension_numbers = #tpu.dot_dimension_numbers<[1], [0], [0], [1], [0, 0, 1, 1], [], []>} : vector<8x32xbf16>, vector<32x96xbf16>, vector<8x96xf32> -> vector<8x96xf32>
    %658 = vector.extract_strided_slice %0 {offsets = [33, 0], sizes = [1, 96], strides = [1, 1]} : vector<56x128xf32> to vector<1x96xf32>
    %659 = vector.broadcast %658 : vector<1x96xf32> to vector<8x96xf32>
    %660 = arith.addf %657, %659 : vector<8x96xf32>
    %661 = vector.extract_strided_slice %660 {offsets = [0, 0], sizes = [8, 32], strides = [1, 1]} : vector<8x96xf32> to vector<8x32xf32>
    %662 = vector.shape_cast %661 : vector<8x32xf32> to vector<1x8x32xf32>
    %663 = vector.extract_strided_slice %660 {offsets = [0, 32], sizes = [8, 32], strides = [1, 1]} : vector<8x96xf32> to vector<8x32xf32>
    %664 = vector.shape_cast %663 : vector<8x32xf32> to vector<1x8x32xf32>
    %665 = vector.extract_strided_slice %660 {offsets = [0, 64], sizes = [8, 32], strides = [1, 1]} : vector<8x96xf32> to vector<8x32xf32>
    %666 = vector.shape_cast %665 : vector<8x32xf32> to vector<1x8x32xf32>
    %667 = vector.extract_strided_slice %662 {offsets = [0, 0, 0], sizes = [1, 8, 8], strides = [1, 1, 1]} : vector<1x8x32xf32> to vector<1x8x8xf32>
    %668 = vector.extract_strided_slice %664 {offsets = [0, 0, 0], sizes = [1, 8, 8], strides = [1, 1, 1]} : vector<1x8x32xf32> to vector<1x8x8xf32>
    %669 = vector.extract_strided_slice %666 {offsets = [0, 0, 0], sizes = [1, 8, 8], strides = [1, 1, 1]} : vector<1x8x32xf32> to vector<1x8x8xf32>
    "tpu.trace_start"() <{level = 10 : i32, message = "bqd,bkd->bqk"}> : () -> ()
    %cst_204 = arith.constant dense<0.000000e+00> : vector<1x8x8xf32>
    %670 = tpu.matmul %667, %668, %cst_204 {dimension_numbers = #tpu.dot_dimension_numbers<[2], [2], [1], [1], [0, 0, 0, 1, 1, 1], [0], [0]>} : vector<1x8x8xf32>, vector<1x8x8xf32>, vector<1x8x8xf32> -> vector<1x8x8xf32>
    "tpu.trace_stop"() : () -> ()
    %cst_205 = arith.constant dense<0xFF800000> : vector<1x8xf32>
    %671 = vector.multi_reduction <maximumf>, %670, %cst_205 [2] : vector<1x8x8xf32> to vector<1x8xf32>
    %672 = vector.shape_cast %671 : vector<1x8xf32> to vector<1x8x1xf32>
    %673 = vector.broadcast %672 : vector<1x8x1xf32> to vector<1x8x8xf32>
    %674 = arith.subf %670, %673 : vector<1x8x8xf32>
    %675 = math.exp %674 : vector<1x8x8xf32>
    %cst_206 = arith.constant dense<0.000000e+00> : vector<1x8xf32>
    %676 = vector.multi_reduction <add>, %675, %cst_206 [2] : vector<1x8x8xf32> to vector<1x8xf32>
    %677 = vector.shape_cast %676 : vector<1x8xf32> to vector<1x8x1xf32>
    %678 = tpu.reciprocal %677 {approx = true} : vector<1x8x1xf32> -> vector<1x8x1xf32>
    %679 = vector.broadcast %678 : vector<1x8x1xf32> to vector<1x8x8xf32>
    %680 = arith.mulf %675, %679 : vector<1x8x8xf32>
    "tpu.trace_start"() <{level = 10 : i32, message = "bqk,bkd->bqd"}> : () -> ()
    %cst_207 = arith.constant dense<0.000000e+00> : vector<1x8x8xf32>
    %681 = tpu.matmul %680, %669, %cst_207 {dimension_numbers = #tpu.dot_dimension_numbers<[2], [1], [1], [2], [0, 0, 0, 1, 1, 2], [0], [0]>} : vector<1x8x8xf32>, vector<1x8x8xf32>, vector<1x8x8xf32> -> vector<1x8x8xf32>
    "tpu.trace_stop"() : () -> ()
    %682 = vector.extract_strided_slice %662 {offsets = [0, 0, 8], sizes = [1, 8, 8], strides = [1, 1, 1]} : vector<1x8x32xf32> to vector<1x8x8xf32>
    %683 = vector.extract_strided_slice %664 {offsets = [0, 0, 8], sizes = [1, 8, 8], strides = [1, 1, 1]} : vector<1x8x32xf32> to vector<1x8x8xf32>
    %684 = vector.extract_strided_slice %666 {offsets = [0, 0, 8], sizes = [1, 8, 8], strides = [1, 1, 1]} : vector<1x8x32xf32> to vector<1x8x8xf32>
    "tpu.trace_start"() <{level = 10 : i32, message = "bqd,bkd->bqk"}> : () -> ()
    %cst_208 = arith.constant dense<0.000000e+00> : vector<1x8x8xf32>
    %685 = tpu.matmul %682, %683, %cst_208 {dimension_numbers = #tpu.dot_dimension_numbers<[2], [2], [1], [1], [0, 0, 0, 1, 1, 1], [0], [0]>} : vector<1x8x8xf32>, vector<1x8x8xf32>, vector<1x8x8xf32> -> vector<1x8x8xf32>
    "tpu.trace_stop"() : () -> ()
    %cst_209 = arith.constant dense<0xFF800000> : vector<1x8xf32>
    %686 = vector.multi_reduction <maximumf>, %685, %cst_209 [2] : vector<1x8x8xf32> to vector<1x8xf32>
    %687 = vector.shape_cast %686 : vector<1x8xf32> to vector<1x8x1xf32>
    %688 = vector.broadcast %687 : vector<1x8x1xf32> to vector<1x8x8xf32>
    %689 = arith.subf %685, %688 : vector<1x8x8xf32>
    %690 = math.exp %689 : vector<1x8x8xf32>
    %cst_210 = arith.constant dense<0.000000e+00> : vector<1x8xf32>
    %691 = vector.multi_reduction <add>, %690, %cst_210 [2] : vector<1x8x8xf32> to vector<1x8xf32>
    %692 = vector.shape_cast %691 : vector<1x8xf32> to vector<1x8x1xf32>
    %693 = tpu.reciprocal %692 {approx = true} : vector<1x8x1xf32> -> vector<1x8x1xf32>
    %694 = vector.broadcast %693 : vector<1x8x1xf32> to vector<1x8x8xf32>
    %695 = arith.mulf %690, %694 : vector<1x8x8xf32>
    "tpu.trace_start"() <{level = 10 : i32, message = "bqk,bkd->bqd"}> : () -> ()
    %cst_211 = arith.constant dense<0.000000e+00> : vector<1x8x8xf32>
    %696 = tpu.matmul %695, %684, %cst_211 {dimension_numbers = #tpu.dot_dimension_numbers<[2], [1], [1], [2], [0, 0, 0, 1, 1, 2], [0], [0]>} : vector<1x8x8xf32>, vector<1x8x8xf32>, vector<1x8x8xf32> -> vector<1x8x8xf32>
    "tpu.trace_stop"() : () -> ()
    %697 = vector.extract_strided_slice %662 {offsets = [0, 0, 16], sizes = [1, 8, 8], strides = [1, 1, 1]} : vector<1x8x32xf32> to vector<1x8x8xf32>
    %698 = vector.extract_strided_slice %664 {offsets = [0, 0, 16], sizes = [1, 8, 8], strides = [1, 1, 1]} : vector<1x8x32xf32> to vector<1x8x8xf32>
    %699 = vector.extract_strided_slice %666 {offsets = [0, 0, 16], sizes = [1, 8, 8], strides = [1, 1, 1]} : vector<1x8x32xf32> to vector<1x8x8xf32>
    "tpu.trace_start"() <{level = 10 : i32, message = "bqd,bkd->bqk"}> : () -> ()
    %cst_212 = arith.constant dense<0.000000e+00> : vector<1x8x8xf32>
    %700 = tpu.matmul %697, %698, %cst_212 {dimension_numbers = #tpu.dot_dimension_numbers<[2], [2], [1], [1], [0, 0, 0, 1, 1, 1], [0], [0]>} : vector<1x8x8xf32>, vector<1x8x8xf32>, vector<1x8x8xf32> -> vector<1x8x8xf32>
    "tpu.trace_stop"() : () -> ()
    %cst_213 = arith.constant dense<0xFF800000> : vector<1x8xf32>
    %701 = vector.multi_reduction <maximumf>, %700, %cst_213 [2] : vector<1x8x8xf32> to vector<1x8xf32>
    %702 = vector.shape_cast %701 : vector<1x8xf32> to vector<1x8x1xf32>
    %703 = vector.broadcast %702 : vector<1x8x1xf32> to vector<1x8x8xf32>
    %704 = arith.subf %700, %703 : vector<1x8x8xf32>
    %705 = math.exp %704 : vector<1x8x8xf32>
    %cst_214 = arith.constant dense<0.000000e+00> : vector<1x8xf32>
    %706 = vector.multi_reduction <add>, %705, %cst_214 [2] : vector<1x8x8xf32> to vector<1x8xf32>
    %707 = vector.shape_cast %706 : vector<1x8xf32> to vector<1x8x1xf32>
    %708 = tpu.reciprocal %707 {approx = true} : vector<1x8x1xf32> -> vector<1x8x1xf32>
    %709 = vector.broadcast %708 : vector<1x8x1xf32> to vector<1x8x8xf32>
    %710 = arith.mulf %705, %709 : vector<1x8x8xf32>
    "tpu.trace_start"() <{level = 10 : i32, message = "bqk,bkd->bqd"}> : () -> ()
    %cst_215 = arith.constant dense<0.000000e+00> : vector<1x8x8xf32>
    %711 = tpu.matmul %710, %699, %cst_215 {dimension_numbers = #tpu.dot_dimension_numbers<[2], [1], [1], [2], [0, 0, 0, 1, 1, 2], [0], [0]>} : vector<1x8x8xf32>, vector<1x8x8xf32>, vector<1x8x8xf32> -> vector<1x8x8xf32>
    "tpu.trace_stop"() : () -> ()
    %712 = vector.extract_strided_slice %662 {offsets = [0, 0, 24], sizes = [1, 8, 8], strides = [1, 1, 1]} : vector<1x8x32xf32> to vector<1x8x8xf32>
    %713 = vector.extract_strided_slice %664 {offsets = [0, 0, 24], sizes = [1, 8, 8], strides = [1, 1, 1]} : vector<1x8x32xf32> to vector<1x8x8xf32>
    %714 = vector.extract_strided_slice %666 {offsets = [0, 0, 24], sizes = [1, 8, 8], strides = [1, 1, 1]} : vector<1x8x32xf32> to vector<1x8x8xf32>
    "tpu.trace_start"() <{level = 10 : i32, message = "bqd,bkd->bqk"}> : () -> ()
    %cst_216 = arith.constant dense<0.000000e+00> : vector<1x8x8xf32>
    %715 = tpu.matmul %712, %713, %cst_216 {dimension_numbers = #tpu.dot_dimension_numbers<[2], [2], [1], [1], [0, 0, 0, 1, 1, 1], [0], [0]>} : vector<1x8x8xf32>, vector<1x8x8xf32>, vector<1x8x8xf32> -> vector<1x8x8xf32>
    "tpu.trace_stop"() : () -> ()
    %cst_217 = arith.constant dense<0xFF800000> : vector<1x8xf32>
    %716 = vector.multi_reduction <maximumf>, %715, %cst_217 [2] : vector<1x8x8xf32> to vector<1x8xf32>
    %717 = vector.shape_cast %716 : vector<1x8xf32> to vector<1x8x1xf32>
    %718 = vector.broadcast %717 : vector<1x8x1xf32> to vector<1x8x8xf32>
    %719 = arith.subf %715, %718 : vector<1x8x8xf32>
    %720 = math.exp %719 : vector<1x8x8xf32>
    %cst_218 = arith.constant dense<0.000000e+00> : vector<1x8xf32>
    %721 = vector.multi_reduction <add>, %720, %cst_218 [2] : vector<1x8x8xf32> to vector<1x8xf32>
    %722 = vector.shape_cast %721 : vector<1x8xf32> to vector<1x8x1xf32>
    %723 = tpu.reciprocal %722 {approx = true} : vector<1x8x1xf32> -> vector<1x8x1xf32>
    %724 = vector.broadcast %723 : vector<1x8x1xf32> to vector<1x8x8xf32>
    %725 = arith.mulf %720, %724 : vector<1x8x8xf32>
    "tpu.trace_start"() <{level = 10 : i32, message = "bqk,bkd->bqd"}> : () -> ()
    %cst_219 = arith.constant dense<0.000000e+00> : vector<1x8x8xf32>
    %726 = tpu.matmul %725, %714, %cst_219 {dimension_numbers = #tpu.dot_dimension_numbers<[2], [1], [1], [2], [0, 0, 0, 1, 1, 2], [0], [0]>} : vector<1x8x8xf32>, vector<1x8x8xf32>, vector<1x8x8xf32> -> vector<1x8x8xf32>
    "tpu.trace_stop"() : () -> ()
    %727 = tpu.concatenate %681, %696, %711, %726 in 2 : vector<1x8x8xf32>, vector<1x8x8xf32>, vector<1x8x8xf32>, vector<1x8x8xf32> -> vector<1x8x32xf32>
    %728 = vector.shape_cast %727 : vector<1x8x32xf32> to vector<8x32xf32>
    %729 = arith.truncf %728 : vector<8x32xf32> to vector<8x32xbf16>
    %cst_220 = arith.constant dense<0.000000e+00> : vector<8x32xf32>
    %730 = tpu.matmul %729, %649, %cst_220 {dimension_numbers = #tpu.dot_dimension_numbers<[1], [0], [0], [1], [0, 0, 1, 1], [], []>} : vector<8x32xbf16>, vector<32x32xbf16>, vector<8x32xf32> -> vector<8x32xf32>
    %731 = vector.extract_strided_slice %0 {offsets = [34, 0], sizes = [1, 32], strides = [1, 1]} : vector<56x128xf32> to vector<1x32xf32>
    %732 = vector.broadcast %731 : vector<1x32xf32> to vector<8x32xf32>
    %733 = arith.addf %730, %732 : vector<8x32xf32>
    %734 = arith.addf %655, %733 : vector<8x32xf32>
    %735 = vector.extract_strided_slice %0 {offsets = [40, 0], sizes = [1, 32], strides = [1, 1]} : vector<56x128xf32> to vector<1x32xf32>
    %736 = vector.extract_strided_slice %0 {offsets = [41, 0], sizes = [1, 32], strides = [1, 1]} : vector<56x128xf32> to vector<1x32xf32>
    %cst_221 = arith.constant dense<0.000000e+00> : vector<8xf32>
    %737 = vector.multi_reduction <add>, %734, %cst_221 [1] : vector<8x32xf32> to vector<8xf32>
    %738 = vector.shape_cast %737 : vector<8xf32> to vector<8x1xf32>
    %cst_222 = arith.constant 3.200000e+01 : f32
    %739 = vector.broadcast %cst_222 : f32 to vector<8x1xf32>
    %740 = arith.divf %738, %739 : vector<8x1xf32>
    %741 = vector.broadcast %740 : vector<8x1xf32> to vector<8x32xf32>
    %742 = arith.subf %734, %741 : vector<8x32xf32>
    %743 = arith.mulf %742, %742 : vector<8x32xf32>
    %cst_223 = arith.constant dense<0.000000e+00> : vector<8xf32>
    %744 = vector.multi_reduction <add>, %743, %cst_223 [1] : vector<8x32xf32> to vector<8xf32>
    %745 = vector.shape_cast %744 : vector<8xf32> to vector<8x1xf32>
    %cst_224 = arith.constant 3.200000e+01 : f32
    %746 = vector.broadcast %cst_224 : f32 to vector<8x1xf32>
    %747 = arith.divf %745, %746 : vector<8x1xf32>
    %748 = vector.broadcast %740 : vector<8x1xf32> to vector<8x32xf32>
    %749 = arith.subf %734, %748 : vector<8x32xf32>
    %cst_225 = arith.constant 9.99999974E-6 : f32
    %750 = vector.broadcast %cst_225 : f32 to vector<8x1xf32>
    %751 = arith.addf %747, %750 : vector<8x1xf32>
    %752 = math.rsqrt %751 : vector<8x1xf32>
    %753 = vector.broadcast %752 : vector<8x1xf32> to vector<8x32xf32>
    %754 = arith.mulf %749, %753 : vector<8x32xf32>
    %755 = vector.broadcast %735 : vector<1x32xf32> to vector<8x32xf32>
    %756 = arith.mulf %754, %755 : vector<8x32xf32>
    %757 = vector.broadcast %736 : vector<1x32xf32> to vector<8x32xf32>
    %758 = arith.addf %756, %757 : vector<8x32xf32>
    %759 = arith.truncf %758 : vector<8x32xf32> to vector<8x32xbf16>
    %cst_226 = arith.constant dense<0.000000e+00> : vector<8x32xf32>
    %760 = tpu.matmul %759, %650, %cst_226 {dimension_numbers = #tpu.dot_dimension_numbers<[1], [0], [0], [1], [0, 0, 1, 1], [], []>} : vector<8x32xbf16>, vector<32x32xbf16>, vector<8x32xf32> -> vector<8x32xf32>
    %761 = vector.extract_strided_slice %0 {offsets = [35, 0], sizes = [1, 32], strides = [1, 1]} : vector<56x128xf32> to vector<1x32xf32>
    %762 = vector.broadcast %761 : vector<1x32xf32> to vector<8x32xf32>
    %763 = arith.addf %760, %762 : vector<8x32xf32>
    %764 = vector.shape_cast %376 : vector<1x8x32xf32> to vector<8x32xf32>
    %765 = arith.truncf %764 : vector<8x32xf32> to vector<8x32xbf16>
    %cst_227 = arith.constant dense<0.000000e+00> : vector<8x64xf32>
    %766 = tpu.matmul %765, %651, %cst_227 {dimension_numbers = #tpu.dot_dimension_numbers<[1], [0], [0], [1], [0, 0, 1, 1], [], []>} : vector<8x32xbf16>, vector<32x64xbf16>, vector<8x64xf32> -> vector<8x64xf32>
    %767 = vector.extract_strided_slice %0 {offsets = [36, 0], sizes = [1, 64], strides = [1, 1]} : vector<56x128xf32> to vector<1x64xf32>
    %768 = vector.broadcast %767 : vector<1x64xf32> to vector<8x64xf32>
    %769 = arith.addf %766, %768 : vector<8x64xf32>
    %770 = vector.extract_strided_slice %769 {offsets = [0, 0], sizes = [8, 32], strides = [1, 1]} : vector<8x64xf32> to vector<8x32xf32>
    %771 = vector.shape_cast %770 : vector<8x32xf32> to vector<1x8x32xf32>
    %772 = vector.extract_strided_slice %769 {offsets = [0, 32], sizes = [8, 32], strides = [1, 1]} : vector<8x64xf32> to vector<8x32xf32>
    %773 = vector.shape_cast %772 : vector<8x32xf32> to vector<1x8x32xf32>
    %774 = vector.shape_cast %763 : vector<8x32xf32> to vector<1x8x32xf32>
    %775 = vector.extract_strided_slice %774 {offsets = [0, 0, 0], sizes = [1, 8, 8], strides = [1, 1, 1]} : vector<1x8x32xf32> to vector<1x8x8xf32>
    %776 = vector.extract_strided_slice %771 {offsets = [0, 0, 0], sizes = [1, 8, 8], strides = [1, 1, 1]} : vector<1x8x32xf32> to vector<1x8x8xf32>
    %777 = vector.extract_strided_slice %773 {offsets = [0, 0, 0], sizes = [1, 8, 8], strides = [1, 1, 1]} : vector<1x8x32xf32> to vector<1x8x8xf32>
    "tpu.trace_start"() <{level = 10 : i32, message = "bqd,bkd->bqk"}> : () -> ()
    %cst_228 = arith.constant dense<0.000000e+00> : vector<1x8x8xf32>
    %778 = tpu.matmul %775, %776, %cst_228 {dimension_numbers = #tpu.dot_dimension_numbers<[2], [2], [1], [1], [0, 0, 0, 1, 1, 1], [0], [0]>} : vector<1x8x8xf32>, vector<1x8x8xf32>, vector<1x8x8xf32> -> vector<1x8x8xf32>
    "tpu.trace_stop"() : () -> ()
    %779 = vector.broadcast %377 : vector<1x1x8xf32> to vector<1x8x8xf32>
    %780 = arith.addf %778, %779 : vector<1x8x8xf32>
    %cst_229 = arith.constant dense<0xFF800000> : vector<1x8xf32>
    %781 = vector.multi_reduction <maximumf>, %780, %cst_229 [2] : vector<1x8x8xf32> to vector<1x8xf32>
    %782 = vector.shape_cast %781 : vector<1x8xf32> to vector<1x8x1xf32>
    %783 = vector.broadcast %782 : vector<1x8x1xf32> to vector<1x8x8xf32>
    %784 = arith.subf %780, %783 : vector<1x8x8xf32>
    %785 = math.exp %784 : vector<1x8x8xf32>
    %cst_230 = arith.constant dense<0.000000e+00> : vector<1x8xf32>
    %786 = vector.multi_reduction <add>, %785, %cst_230 [2] : vector<1x8x8xf32> to vector<1x8xf32>
    %787 = vector.shape_cast %786 : vector<1x8xf32> to vector<1x8x1xf32>
    %788 = vector.broadcast %787 : vector<1x8x1xf32> to vector<1x8x8xf32>
    %789 = arith.divf %785, %788 : vector<1x8x8xf32>
    "tpu.trace_start"() <{level = 10 : i32, message = "bqk,bkd->bqd"}> : () -> ()
    %cst_231 = arith.constant dense<0.000000e+00> : vector<1x8x8xf32>
    %790 = tpu.matmul %789, %777, %cst_231 {dimension_numbers = #tpu.dot_dimension_numbers<[2], [1], [1], [2], [0, 0, 0, 1, 1, 2], [0], [0]>} : vector<1x8x8xf32>, vector<1x8x8xf32>, vector<1x8x8xf32> -> vector<1x8x8xf32>
    "tpu.trace_stop"() : () -> ()
    %791 = vector.extract_strided_slice %774 {offsets = [0, 0, 8], sizes = [1, 8, 8], strides = [1, 1, 1]} : vector<1x8x32xf32> to vector<1x8x8xf32>
    %792 = vector.extract_strided_slice %771 {offsets = [0, 0, 8], sizes = [1, 8, 8], strides = [1, 1, 1]} : vector<1x8x32xf32> to vector<1x8x8xf32>
    %793 = vector.extract_strided_slice %773 {offsets = [0, 0, 8], sizes = [1, 8, 8], strides = [1, 1, 1]} : vector<1x8x32xf32> to vector<1x8x8xf32>
    "tpu.trace_start"() <{level = 10 : i32, message = "bqd,bkd->bqk"}> : () -> ()
    %cst_232 = arith.constant dense<0.000000e+00> : vector<1x8x8xf32>
    %794 = tpu.matmul %791, %792, %cst_232 {dimension_numbers = #tpu.dot_dimension_numbers<[2], [2], [1], [1], [0, 0, 0, 1, 1, 1], [0], [0]>} : vector<1x8x8xf32>, vector<1x8x8xf32>, vector<1x8x8xf32> -> vector<1x8x8xf32>
    "tpu.trace_stop"() : () -> ()
    %795 = vector.broadcast %377 : vector<1x1x8xf32> to vector<1x8x8xf32>
    %796 = arith.addf %794, %795 : vector<1x8x8xf32>
    %cst_233 = arith.constant dense<0xFF800000> : vector<1x8xf32>
    %797 = vector.multi_reduction <maximumf>, %796, %cst_233 [2] : vector<1x8x8xf32> to vector<1x8xf32>
    %798 = vector.shape_cast %797 : vector<1x8xf32> to vector<1x8x1xf32>
    %799 = vector.broadcast %798 : vector<1x8x1xf32> to vector<1x8x8xf32>
    %800 = arith.subf %796, %799 : vector<1x8x8xf32>
    %801 = math.exp %800 : vector<1x8x8xf32>
    %cst_234 = arith.constant dense<0.000000e+00> : vector<1x8xf32>
    %802 = vector.multi_reduction <add>, %801, %cst_234 [2] : vector<1x8x8xf32> to vector<1x8xf32>
    %803 = vector.shape_cast %802 : vector<1x8xf32> to vector<1x8x1xf32>
    %804 = vector.broadcast %803 : vector<1x8x1xf32> to vector<1x8x8xf32>
    %805 = arith.divf %801, %804 : vector<1x8x8xf32>
    "tpu.trace_start"() <{level = 10 : i32, message = "bqk,bkd->bqd"}> : () -> ()
    %cst_235 = arith.constant dense<0.000000e+00> : vector<1x8x8xf32>
    %806 = tpu.matmul %805, %793, %cst_235 {dimension_numbers = #tpu.dot_dimension_numbers<[2], [1], [1], [2], [0, 0, 0, 1, 1, 2], [0], [0]>} : vector<1x8x8xf32>, vector<1x8x8xf32>, vector<1x8x8xf32> -> vector<1x8x8xf32>
    "tpu.trace_stop"() : () -> ()
    %807 = arith.addf %789, %805 : vector<1x8x8xf32>
    %808 = vector.extract_strided_slice %774 {offsets = [0, 0, 16], sizes = [1, 8, 8], strides = [1, 1, 1]} : vector<1x8x32xf32> to vector<1x8x8xf32>
    %809 = vector.extract_strided_slice %771 {offsets = [0, 0, 16], sizes = [1, 8, 8], strides = [1, 1, 1]} : vector<1x8x32xf32> to vector<1x8x8xf32>
    %810 = vector.extract_strided_slice %773 {offsets = [0, 0, 16], sizes = [1, 8, 8], strides = [1, 1, 1]} : vector<1x8x32xf32> to vector<1x8x8xf32>
    "tpu.trace_start"() <{level = 10 : i32, message = "bqd,bkd->bqk"}> : () -> ()
    %cst_236 = arith.constant dense<0.000000e+00> : vector<1x8x8xf32>
    %811 = tpu.matmul %808, %809, %cst_236 {dimension_numbers = #tpu.dot_dimension_numbers<[2], [2], [1], [1], [0, 0, 0, 1, 1, 1], [0], [0]>} : vector<1x8x8xf32>, vector<1x8x8xf32>, vector<1x8x8xf32> -> vector<1x8x8xf32>
    "tpu.trace_stop"() : () -> ()
    %812 = vector.broadcast %377 : vector<1x1x8xf32> to vector<1x8x8xf32>
    %813 = arith.addf %811, %812 : vector<1x8x8xf32>
    %cst_237 = arith.constant dense<0xFF800000> : vector<1x8xf32>
    %814 = vector.multi_reduction <maximumf>, %813, %cst_237 [2] : vector<1x8x8xf32> to vector<1x8xf32>
    %815 = vector.shape_cast %814 : vector<1x8xf32> to vector<1x8x1xf32>
    %816 = vector.broadcast %815 : vector<1x8x1xf32> to vector<1x8x8xf32>
    %817 = arith.subf %813, %816 : vector<1x8x8xf32>
    %818 = math.exp %817 : vector<1x8x8xf32>
    %cst_238 = arith.constant dense<0.000000e+00> : vector<1x8xf32>
    %819 = vector.multi_reduction <add>, %818, %cst_238 [2] : vector<1x8x8xf32> to vector<1x8xf32>
    %820 = vector.shape_cast %819 : vector<1x8xf32> to vector<1x8x1xf32>
    %821 = vector.broadcast %820 : vector<1x8x1xf32> to vector<1x8x8xf32>
    %822 = arith.divf %818, %821 : vector<1x8x8xf32>
    "tpu.trace_start"() <{level = 10 : i32, message = "bqk,bkd->bqd"}> : () -> ()
    %cst_239 = arith.constant dense<0.000000e+00> : vector<1x8x8xf32>
    %823 = tpu.matmul %822, %810, %cst_239 {dimension_numbers = #tpu.dot_dimension_numbers<[2], [1], [1], [2], [0, 0, 0, 1, 1, 2], [0], [0]>} : vector<1x8x8xf32>, vector<1x8x8xf32>, vector<1x8x8xf32> -> vector<1x8x8xf32>
    "tpu.trace_stop"() : () -> ()
    %824 = arith.addf %807, %822 : vector<1x8x8xf32>
    %825 = vector.extract_strided_slice %774 {offsets = [0, 0, 24], sizes = [1, 8, 8], strides = [1, 1, 1]} : vector<1x8x32xf32> to vector<1x8x8xf32>
    %826 = vector.extract_strided_slice %771 {offsets = [0, 0, 24], sizes = [1, 8, 8], strides = [1, 1, 1]} : vector<1x8x32xf32> to vector<1x8x8xf32>
    %827 = vector.extract_strided_slice %773 {offsets = [0, 0, 24], sizes = [1, 8, 8], strides = [1, 1, 1]} : vector<1x8x32xf32> to vector<1x8x8xf32>
    "tpu.trace_start"() <{level = 10 : i32, message = "bqd,bkd->bqk"}> : () -> ()
    %cst_240 = arith.constant dense<0.000000e+00> : vector<1x8x8xf32>
    %828 = tpu.matmul %825, %826, %cst_240 {dimension_numbers = #tpu.dot_dimension_numbers<[2], [2], [1], [1], [0, 0, 0, 1, 1, 1], [0], [0]>} : vector<1x8x8xf32>, vector<1x8x8xf32>, vector<1x8x8xf32> -> vector<1x8x8xf32>
    "tpu.trace_stop"() : () -> ()
    %829 = vector.broadcast %377 : vector<1x1x8xf32> to vector<1x8x8xf32>
    %830 = arith.addf %828, %829 : vector<1x8x8xf32>
    %cst_241 = arith.constant dense<0xFF800000> : vector<1x8xf32>
    %831 = vector.multi_reduction <maximumf>, %830, %cst_241 [2] : vector<1x8x8xf32> to vector<1x8xf32>
    %832 = vector.shape_cast %831 : vector<1x8xf32> to vector<1x8x1xf32>
    %833 = vector.broadcast %832 : vector<1x8x1xf32> to vector<1x8x8xf32>
    %834 = arith.subf %830, %833 : vector<1x8x8xf32>
    %835 = math.exp %834 : vector<1x8x8xf32>
    %cst_242 = arith.constant dense<0.000000e+00> : vector<1x8xf32>
    %836 = vector.multi_reduction <add>, %835, %cst_242 [2] : vector<1x8x8xf32> to vector<1x8xf32>
    %837 = vector.shape_cast %836 : vector<1x8xf32> to vector<1x8x1xf32>
    %838 = vector.broadcast %837 : vector<1x8x1xf32> to vector<1x8x8xf32>
    %839 = arith.divf %835, %838 : vector<1x8x8xf32>
    "tpu.trace_start"() <{level = 10 : i32, message = "bqk,bkd->bqd"}> : () -> ()
    %cst_243 = arith.constant dense<0.000000e+00> : vector<1x8x8xf32>
    %840 = tpu.matmul %839, %827, %cst_243 {dimension_numbers = #tpu.dot_dimension_numbers<[2], [1], [1], [2], [0, 0, 0, 1, 1, 2], [0], [0]>} : vector<1x8x8xf32>, vector<1x8x8xf32>, vector<1x8x8xf32> -> vector<1x8x8xf32>
    "tpu.trace_stop"() : () -> ()
    %841 = arith.addf %824, %839 : vector<1x8x8xf32>
    %842 = tpu.concatenate %790, %806, %823, %840 in 2 : vector<1x8x8xf32>, vector<1x8x8xf32>, vector<1x8x8xf32>, vector<1x8x8xf32> -> vector<1x8x32xf32>
    %cst_244 = arith.constant 2.500000e-01 : f32
    %843 = vector.broadcast %cst_244 : f32 to vector<1x8x8xf32>
    %844 = arith.mulf %841, %843 : vector<1x8x8xf32>
    %845 = vector.shape_cast %842 : vector<1x8x32xf32> to vector<8x32xf32>
    %846 = arith.truncf %845 : vector<8x32xf32> to vector<8x32xbf16>
    %cst_245 = arith.constant dense<0.000000e+00> : vector<8x32xf32>
    %847 = tpu.matmul %846, %652, %cst_245 {dimension_numbers = #tpu.dot_dimension_numbers<[1], [0], [0], [1], [0, 0, 1, 1], [], []>} : vector<8x32xbf16>, vector<32x32xbf16>, vector<8x32xf32> -> vector<8x32xf32>
    %848 = vector.extract_strided_slice %0 {offsets = [37, 0], sizes = [1, 32], strides = [1, 1]} : vector<56x128xf32> to vector<1x32xf32>
    %849 = vector.broadcast %848 : vector<1x32xf32> to vector<8x32xf32>
    %850 = arith.addf %847, %849 : vector<8x32xf32>
    %851 = arith.addf %758, %850 : vector<8x32xf32>
    %852 = vector.extract_strided_slice %0 {offsets = [42, 0], sizes = [1, 32], strides = [1, 1]} : vector<56x128xf32> to vector<1x32xf32>
    %853 = vector.extract_strided_slice %0 {offsets = [43, 0], sizes = [1, 32], strides = [1, 1]} : vector<56x128xf32> to vector<1x32xf32>
    %cst_246 = arith.constant dense<0.000000e+00> : vector<8xf32>
    %854 = vector.multi_reduction <add>, %851, %cst_246 [1] : vector<8x32xf32> to vector<8xf32>
    %855 = vector.shape_cast %854 : vector<8xf32> to vector<8x1xf32>
    %cst_247 = arith.constant 3.200000e+01 : f32
    %856 = vector.broadcast %cst_247 : f32 to vector<8x1xf32>
    %857 = arith.divf %855, %856 : vector<8x1xf32>
    %858 = vector.broadcast %857 : vector<8x1xf32> to vector<8x32xf32>
    %859 = arith.subf %851, %858 : vector<8x32xf32>
    %860 = arith.mulf %859, %859 : vector<8x32xf32>
    %cst_248 = arith.constant dense<0.000000e+00> : vector<8xf32>
    %861 = vector.multi_reduction <add>, %860, %cst_248 [1] : vector<8x32xf32> to vector<8xf32>
    %862 = vector.shape_cast %861 : vector<8xf32> to vector<8x1xf32>
    %cst_249 = arith.constant 3.200000e+01 : f32
    %863 = vector.broadcast %cst_249 : f32 to vector<8x1xf32>
    %864 = arith.divf %862, %863 : vector<8x1xf32>
    %865 = vector.broadcast %857 : vector<8x1xf32> to vector<8x32xf32>
    %866 = arith.subf %851, %865 : vector<8x32xf32>
    %cst_250 = arith.constant 9.99999974E-6 : f32
    %867 = vector.broadcast %cst_250 : f32 to vector<8x1xf32>
    %868 = arith.addf %864, %867 : vector<8x1xf32>
    %869 = math.rsqrt %868 : vector<8x1xf32>
    %870 = vector.broadcast %869 : vector<8x1xf32> to vector<8x32xf32>
    %871 = arith.mulf %866, %870 : vector<8x32xf32>
    %872 = vector.broadcast %852 : vector<1x32xf32> to vector<8x32xf32>
    %873 = arith.mulf %871, %872 : vector<8x32xf32>
    %874 = vector.broadcast %853 : vector<1x32xf32> to vector<8x32xf32>
    %875 = arith.addf %873, %874 : vector<8x32xf32>
    %876 = arith.truncf %875 : vector<8x32xf32> to vector<8x32xbf16>
    %cst_251 = arith.constant dense<0.000000e+00> : vector<8x64xf32>
    %877 = tpu.matmul %876, %653, %cst_251 {dimension_numbers = #tpu.dot_dimension_numbers<[1], [0], [0], [1], [0, 0, 1, 1], [], []>} : vector<8x32xbf16>, vector<32x64xbf16>, vector<8x64xf32> -> vector<8x64xf32>
    %878 = vector.extract_strided_slice %0 {offsets = [38, 0], sizes = [1, 64], strides = [1, 1]} : vector<56x128xf32> to vector<1x64xf32>
    %879 = vector.broadcast %878 : vector<1x64xf32> to vector<8x64xf32>
    %880 = arith.addf %877, %879 : vector<8x64xf32>
    %cst_252 = arith.constant 0.000000e+00 : f32
    %881 = vector.broadcast %cst_252 : f32 to vector<8x64xf32>
    %882 = arith.cmpf oge, %880, %881 : vector<8x64xf32>
    %cst_253 = arith.constant 0.00999999977 : f32
    %883 = vector.broadcast %cst_253 : f32 to vector<8x64xf32>
    %884 = arith.mulf %883, %880 : vector<8x64xf32>
    %885 = arith.select %882, %880, %884 : vector<8x64xi1>, vector<8x64xf32>
    %886 = arith.truncf %885 : vector<8x64xf32> to vector<8x64xbf16>
    %cst_254 = arith.constant dense<0.000000e+00> : vector<8x32xf32>
    %887 = tpu.matmul %886, %654, %cst_254 {dimension_numbers = #tpu.dot_dimension_numbers<[1], [0], [0], [1], [0, 0, 1, 1], [], []>} : vector<8x64xbf16>, vector<64x32xbf16>, vector<8x32xf32> -> vector<8x32xf32>
    %888 = vector.extract_strided_slice %0 {offsets = [39, 0], sizes = [1, 32], strides = [1, 1]} : vector<56x128xf32> to vector<1x32xf32>
    %889 = vector.broadcast %888 : vector<1x32xf32> to vector<8x32xf32>
    %890 = arith.addf %887, %889 : vector<8x32xf32>
    %891 = arith.addf %875, %890 : vector<8x32xf32>
    %892 = vector.extract_strided_slice %0 {offsets = [44, 0], sizes = [1, 32], strides = [1, 1]} : vector<56x128xf32> to vector<1x32xf32>
    %893 = vector.extract_strided_slice %0 {offsets = [45, 0], sizes = [1, 32], strides = [1, 1]} : vector<56x128xf32> to vector<1x32xf32>
    %cst_255 = arith.constant dense<0.000000e+00> : vector<8xf32>
    %894 = vector.multi_reduction <add>, %891, %cst_255 [1] : vector<8x32xf32> to vector<8xf32>
    %895 = vector.shape_cast %894 : vector<8xf32> to vector<8x1xf32>
    %cst_256 = arith.constant 3.200000e+01 : f32
    %896 = vector.broadcast %cst_256 : f32 to vector<8x1xf32>
    %897 = arith.divf %895, %896 : vector<8x1xf32>
    %898 = vector.broadcast %897 : vector<8x1xf32> to vector<8x32xf32>
    %899 = arith.subf %891, %898 : vector<8x32xf32>
    %900 = arith.mulf %899, %899 : vector<8x32xf32>
    %cst_257 = arith.constant dense<0.000000e+00> : vector<8xf32>
    %901 = vector.multi_reduction <add>, %900, %cst_257 [1] : vector<8x32xf32> to vector<8xf32>
    %902 = vector.shape_cast %901 : vector<8xf32> to vector<8x1xf32>
    %cst_258 = arith.constant 3.200000e+01 : f32
    %903 = vector.broadcast %cst_258 : f32 to vector<8x1xf32>
    %904 = arith.divf %902, %903 : vector<8x1xf32>
    %905 = vector.broadcast %897 : vector<8x1xf32> to vector<8x32xf32>
    %906 = arith.subf %891, %905 : vector<8x32xf32>
    %cst_259 = arith.constant 9.99999974E-6 : f32
    %907 = vector.broadcast %cst_259 : f32 to vector<8x1xf32>
    %908 = arith.addf %904, %907 : vector<8x1xf32>
    %909 = math.rsqrt %908 : vector<8x1xf32>
    %910 = vector.broadcast %909 : vector<8x1xf32> to vector<8x32xf32>
    %911 = arith.mulf %906, %910 : vector<8x32xf32>
    %912 = vector.broadcast %892 : vector<1x32xf32> to vector<8x32xf32>
    %913 = arith.mulf %911, %912 : vector<8x32xf32>
    %914 = vector.broadcast %893 : vector<1x32xf32> to vector<8x32xf32>
    %915 = arith.addf %913, %914 : vector<8x32xf32>
    %916 = vector.shape_cast %915 : vector<8x32xf32> to vector<1x8x32xf32>
    %917 = vector.shape_cast %916 : vector<1x8x32xf32> to vector<8x32xf32>
    %918 = vector.extract_strided_slice %0 {offsets = [6, 0], sizes = [1, 32], strides = [1, 1]} : vector<56x128xf32> to vector<1x32xf32>
    %919 = vector.extract_strided_slice %0 {offsets = [7, 0], sizes = [1, 32], strides = [1, 1]} : vector<56x128xf32> to vector<1x32xf32>
    %cst_260 = arith.constant dense<0.000000e+00> : vector<8xf32>
    %920 = vector.multi_reduction <add>, %917, %cst_260 [1] : vector<8x32xf32> to vector<8xf32>
    %921 = vector.shape_cast %920 : vector<8xf32> to vector<8x1xf32>
    %cst_261 = arith.constant 3.200000e+01 : f32
    %922 = vector.broadcast %cst_261 : f32 to vector<8x1xf32>
    %923 = arith.divf %921, %922 : vector<8x1xf32>
    %924 = vector.broadcast %923 : vector<8x1xf32> to vector<8x32xf32>
    %925 = arith.subf %917, %924 : vector<8x32xf32>
    %926 = arith.mulf %925, %925 : vector<8x32xf32>
    %cst_262 = arith.constant dense<0.000000e+00> : vector<8xf32>
    %927 = vector.multi_reduction <add>, %926, %cst_262 [1] : vector<8x32xf32> to vector<8xf32>
    %928 = vector.shape_cast %927 : vector<8xf32> to vector<8x1xf32>
    %cst_263 = arith.constant 3.200000e+01 : f32
    %929 = vector.broadcast %cst_263 : f32 to vector<8x1xf32>
    %930 = arith.divf %928, %929 : vector<8x1xf32>
    %931 = vector.broadcast %923 : vector<8x1xf32> to vector<8x32xf32>
    %932 = arith.subf %917, %931 : vector<8x32xf32>
    %cst_264 = arith.constant 9.99999974E-6 : f32
    %933 = vector.broadcast %cst_264 : f32 to vector<8x1xf32>
    %934 = arith.addf %930, %933 : vector<8x1xf32>
    %935 = math.rsqrt %934 : vector<8x1xf32>
    %936 = vector.broadcast %935 : vector<8x1xf32> to vector<8x32xf32>
    %937 = arith.mulf %932, %936 : vector<8x32xf32>
    %938 = vector.broadcast %918 : vector<1x32xf32> to vector<8x32xf32>
    %939 = arith.mulf %937, %938 : vector<8x32xf32>
    %940 = vector.broadcast %919 : vector<1x32xf32> to vector<8x32xf32>
    %941 = arith.addf %939, %940 : vector<8x32xf32>
    %942 = vector.shape_cast %941 : vector<8x32xf32> to vector<1x8x32xf32>
    %c0_265 = arith.constant 0 : index
    %c0_266 = arith.constant 0 : index
    %943 = vector.load %arg6[%c0_265, %c0_266] : memref<32x288xbf16, #tpu.memory_space<vmem>>, vector<32x288xbf16>
    %c0_267 = arith.constant 0 : index
    %c0_268 = arith.constant 0 : index
    %944 = vector.load %arg7[%c0_267, %c0_268] : memref<96x288xbf16, #tpu.memory_space<vmem>>, vector<96x288xbf16>
    %c0_269 = arith.constant 0 : index
    %c0_270 = arith.constant 0 : index
    %945 = vector.load %arg8[%c0_269, %c0_270] : memref<96x288xbf16, #tpu.memory_space<vmem>>, vector<96x288xbf16>
    %c0_271 = arith.constant 0 : index
    %c0_272 = arith.constant 0 : index
    %946 = vector.load %arg9[%c0_271, %c0_272] : memref<96x288xbf16, #tpu.memory_space<vmem>>, vector<96x288xbf16>
    %c0_273 = arith.constant 0 : index
    %c0_274 = arith.constant 0 : index
    %947 = vector.load %arg10[%c0_273, %c0_274] : memref<96x288xbf16, #tpu.memory_space<vmem>>, vector<96x288xbf16>
    %c0_275 = arith.constant 0 : index
    %c0_276 = arith.constant 0 : index
    %948 = vector.load %arg11[%c0_275, %c0_276] : memref<96x3xbf16, #tpu.memory_space<vmem>>, vector<96x3xbf16>
    %949 = vector.shape_cast %942 : vector<1x8x32xf32> to vector<8x32xf32>
    %950 = arith.truncf %949 : vector<8x32xf32> to vector<8x32xbf16>
    %cst_277 = arith.constant dense<0.000000e+00> : vector<8x288xf32>
    %951 = tpu.matmul %950, %943, %cst_277 {dimension_numbers = #tpu.dot_dimension_numbers<[1], [0], [0], [1], [0, 0, 1, 1], [], []>} : vector<8x32xbf16>, vector<32x288xbf16>, vector<8x288xf32> -> vector<8x288xf32>
    %952 = vector.shape_cast %951 : vector<8x288xf32> to vector<1x8x288xf32>
    %953 = vector.extract_strided_slice %952 {offsets = [0, 0, 0], sizes = [1, 8, 96], strides = [1, 1, 1]} : vector<1x8x288xf32> to vector<1x8x96xf32>
    %954 = vector.extract_strided_slice %952 {offsets = [0, 0, 96], sizes = [1, 8, 96], strides = [1, 1, 1]} : vector<1x8x288xf32> to vector<1x8x96xf32>
    %955 = vector.extract_strided_slice %952 {offsets = [0, 0, 192], sizes = [1, 8, 96], strides = [1, 1, 1]} : vector<1x8x288xf32> to vector<1x8x96xf32>
    %cst_278 = arith.constant 0.000000e+00 : f32
    %956 = vector.broadcast %cst_278 : f32 to vector<1x1x96xf32>
    %957 = vector.extract_strided_slice %953 {offsets = [0, 0, 0], sizes = [1, 7, 96], strides = [1, 1, 1]} : vector<1x8x96xf32> to vector<1x7x96xf32>
    %958 = tpu.concatenate %956, %957 in 1 : vector<1x1x96xf32>, vector<1x7x96xf32> -> vector<1x8x96xf32>
    %959 = arith.addf %958, %954 : vector<1x8x96xf32>
    %960 = vector.extract_strided_slice %955 {offsets = [0, 1, 0], sizes = [1, 7, 96], strides = [1, 1, 1]} : vector<1x8x96xf32> to vector<1x7x96xf32>
    %961 = tpu.concatenate %960, %956 in 1 : vector<1x7x96xf32>, vector<1x1x96xf32> -> vector<1x8x96xf32>
    %962 = arith.addf %959, %961 : vector<1x8x96xf32>
    %963 = vector.extract_strided_slice %0 {offsets = [46, 0], sizes = [1, 96], strides = [1, 1]} : vector<56x128xf32> to vector<1x96xf32>
    %964 = vector.shape_cast %963 : vector<1x96xf32> to vector<1x1x96xf32>
    %965 = vector.broadcast %964 : vector<1x1x96xf32> to vector<1x8x96xf32>
    %966 = arith.addf %962, %965 : vector<1x8x96xf32>
    %cst_279 = arith.constant 0.000000e+00 : f32
    %967 = vector.broadcast %cst_279 : f32 to vector<1x8x96xf32>
    %968 = arith.maximumf %966, %967 : vector<1x8x96xf32>
    %969 = vector.shape_cast %968 : vector<1x8x96xf32> to vector<8x96xf32>
    %970 = arith.truncf %969 : vector<8x96xf32> to vector<8x96xbf16>
    %cst_280 = arith.constant dense<0.000000e+00> : vector<8x288xf32>
    %971 = tpu.matmul %970, %944, %cst_280 {dimension_numbers = #tpu.dot_dimension_numbers<[1], [0], [0], [1], [0, 0, 1, 1], [], []>} : vector<8x96xbf16>, vector<96x288xbf16>, vector<8x288xf32> -> vector<8x288xf32>
    %972 = vector.shape_cast %971 : vector<8x288xf32> to vector<1x8x288xf32>
    %973 = vector.extract_strided_slice %972 {offsets = [0, 0, 0], sizes = [1, 8, 96], strides = [1, 1, 1]} : vector<1x8x288xf32> to vector<1x8x96xf32>
    %974 = vector.extract_strided_slice %972 {offsets = [0, 0, 96], sizes = [1, 8, 96], strides = [1, 1, 1]} : vector<1x8x288xf32> to vector<1x8x96xf32>
    %975 = vector.extract_strided_slice %972 {offsets = [0, 0, 192], sizes = [1, 8, 96], strides = [1, 1, 1]} : vector<1x8x288xf32> to vector<1x8x96xf32>
    %cst_281 = arith.constant 0.000000e+00 : f32
    %976 = vector.broadcast %cst_281 : f32 to vector<1x1x96xf32>
    %977 = vector.extract_strided_slice %973 {offsets = [0, 0, 0], sizes = [1, 7, 96], strides = [1, 1, 1]} : vector<1x8x96xf32> to vector<1x7x96xf32>
    %978 = tpu.concatenate %976, %977 in 1 : vector<1x1x96xf32>, vector<1x7x96xf32> -> vector<1x8x96xf32>
    %979 = arith.addf %978, %974 : vector<1x8x96xf32>
    %980 = vector.extract_strided_slice %975 {offsets = [0, 1, 0], sizes = [1, 7, 96], strides = [1, 1, 1]} : vector<1x8x96xf32> to vector<1x7x96xf32>
    %981 = tpu.concatenate %980, %976 in 1 : vector<1x7x96xf32>, vector<1x1x96xf32> -> vector<1x8x96xf32>
    %982 = arith.addf %979, %981 : vector<1x8x96xf32>
    %983 = vector.extract_strided_slice %0 {offsets = [47, 0], sizes = [1, 96], strides = [1, 1]} : vector<56x128xf32> to vector<1x96xf32>
    %984 = vector.shape_cast %983 : vector<1x96xf32> to vector<1x1x96xf32>
    %985 = vector.broadcast %984 : vector<1x1x96xf32> to vector<1x8x96xf32>
    %986 = arith.addf %982, %985 : vector<1x8x96xf32>
    %cst_282 = arith.constant 0.000000e+00 : f32
    %987 = vector.broadcast %cst_282 : f32 to vector<1x8x96xf32>
    %988 = arith.maximumf %986, %987 : vector<1x8x96xf32>
    %989 = vector.shape_cast %988 : vector<1x8x96xf32> to vector<8x96xf32>
    %990 = arith.truncf %989 : vector<8x96xf32> to vector<8x96xbf16>
    %cst_283 = arith.constant dense<0.000000e+00> : vector<8x288xf32>
    %991 = tpu.matmul %990, %945, %cst_283 {dimension_numbers = #tpu.dot_dimension_numbers<[1], [0], [0], [1], [0, 0, 1, 1], [], []>} : vector<8x96xbf16>, vector<96x288xbf16>, vector<8x288xf32> -> vector<8x288xf32>
    %992 = vector.shape_cast %991 : vector<8x288xf32> to vector<1x8x288xf32>
    %993 = vector.extract_strided_slice %992 {offsets = [0, 0, 0], sizes = [1, 8, 96], strides = [1, 1, 1]} : vector<1x8x288xf32> to vector<1x8x96xf32>
    %994 = vector.extract_strided_slice %992 {offsets = [0, 0, 96], sizes = [1, 8, 96], strides = [1, 1, 1]} : vector<1x8x288xf32> to vector<1x8x96xf32>
    %995 = vector.extract_strided_slice %992 {offsets = [0, 0, 192], sizes = [1, 8, 96], strides = [1, 1, 1]} : vector<1x8x288xf32> to vector<1x8x96xf32>
    %cst_284 = arith.constant 0.000000e+00 : f32
    %996 = vector.broadcast %cst_284 : f32 to vector<1x1x96xf32>
    %997 = vector.extract_strided_slice %993 {offsets = [0, 0, 0], sizes = [1, 7, 96], strides = [1, 1, 1]} : vector<1x8x96xf32> to vector<1x7x96xf32>
    %998 = tpu.concatenate %996, %997 in 1 : vector<1x1x96xf32>, vector<1x7x96xf32> -> vector<1x8x96xf32>
    %999 = arith.addf %998, %994 : vector<1x8x96xf32>
    %1000 = vector.extract_strided_slice %995 {offsets = [0, 1, 0], sizes = [1, 7, 96], strides = [1, 1, 1]} : vector<1x8x96xf32> to vector<1x7x96xf32>
    %1001 = tpu.concatenate %1000, %996 in 1 : vector<1x7x96xf32>, vector<1x1x96xf32> -> vector<1x8x96xf32>
    %1002 = arith.addf %999, %1001 : vector<1x8x96xf32>
    %1003 = vector.extract_strided_slice %0 {offsets = [48, 0], sizes = [1, 96], strides = [1, 1]} : vector<56x128xf32> to vector<1x96xf32>
    %1004 = vector.shape_cast %1003 : vector<1x96xf32> to vector<1x1x96xf32>
    %1005 = vector.broadcast %1004 : vector<1x1x96xf32> to vector<1x8x96xf32>
    %1006 = arith.addf %1002, %1005 : vector<1x8x96xf32>
    %cst_285 = arith.constant 0.000000e+00 : f32
    %1007 = vector.broadcast %cst_285 : f32 to vector<1x8x96xf32>
    %1008 = arith.maximumf %1006, %1007 : vector<1x8x96xf32>
    %1009 = vector.shape_cast %1008 : vector<1x8x96xf32> to vector<8x96xf32>
    %1010 = arith.truncf %1009 : vector<8x96xf32> to vector<8x96xbf16>
    %cst_286 = arith.constant dense<0.000000e+00> : vector<8x288xf32>
    %1011 = tpu.matmul %1010, %946, %cst_286 {dimension_numbers = #tpu.dot_dimension_numbers<[1], [0], [0], [1], [0, 0, 1, 1], [], []>} : vector<8x96xbf16>, vector<96x288xbf16>, vector<8x288xf32> -> vector<8x288xf32>
    %1012 = vector.shape_cast %1011 : vector<8x288xf32> to vector<1x8x288xf32>
    %1013 = vector.extract_strided_slice %1012 {offsets = [0, 0, 0], sizes = [1, 8, 96], strides = [1, 1, 1]} : vector<1x8x288xf32> to vector<1x8x96xf32>
    %1014 = vector.extract_strided_slice %1012 {offsets = [0, 0, 96], sizes = [1, 8, 96], strides = [1, 1, 1]} : vector<1x8x288xf32> to vector<1x8x96xf32>
    %1015 = vector.extract_strided_slice %1012 {offsets = [0, 0, 192], sizes = [1, 8, 96], strides = [1, 1, 1]} : vector<1x8x288xf32> to vector<1x8x96xf32>
    %cst_287 = arith.constant 0.000000e+00 : f32
    %1016 = vector.broadcast %cst_287 : f32 to vector<1x1x96xf32>
    %1017 = vector.extract_strided_slice %1013 {offsets = [0, 0, 0], sizes = [1, 7, 96], strides = [1, 1, 1]} : vector<1x8x96xf32> to vector<1x7x96xf32>
    %1018 = tpu.concatenate %1016, %1017 in 1 : vector<1x1x96xf32>, vector<1x7x96xf32> -> vector<1x8x96xf32>
    %1019 = arith.addf %1018, %1014 : vector<1x8x96xf32>
    %1020 = vector.extract_strided_slice %1015 {offsets = [0, 1, 0], sizes = [1, 7, 96], strides = [1, 1, 1]} : vector<1x8x96xf32> to vector<1x7x96xf32>
    %1021 = tpu.concatenate %1020, %1016 in 1 : vector<1x7x96xf32>, vector<1x1x96xf32> -> vector<1x8x96xf32>
    %1022 = arith.addf %1019, %1021 : vector<1x8x96xf32>
    %1023 = vector.extract_strided_slice %0 {offsets = [49, 0], sizes = [1, 96], strides = [1, 1]} : vector<56x128xf32> to vector<1x96xf32>
    %1024 = vector.shape_cast %1023 : vector<1x96xf32> to vector<1x1x96xf32>
    %1025 = vector.broadcast %1024 : vector<1x1x96xf32> to vector<1x8x96xf32>
    %1026 = arith.addf %1022, %1025 : vector<1x8x96xf32>
    %cst_288 = arith.constant 0.000000e+00 : f32
    %1027 = vector.broadcast %cst_288 : f32 to vector<1x8x96xf32>
    %1028 = arith.maximumf %1026, %1027 : vector<1x8x96xf32>
    %1029 = vector.shape_cast %1028 : vector<1x8x96xf32> to vector<8x96xf32>
    %1030 = arith.truncf %1029 : vector<8x96xf32> to vector<8x96xbf16>
    %cst_289 = arith.constant dense<0.000000e+00> : vector<8x288xf32>
    %1031 = tpu.matmul %1030, %947, %cst_289 {dimension_numbers = #tpu.dot_dimension_numbers<[1], [0], [0], [1], [0, 0, 1, 1], [], []>} : vector<8x96xbf16>, vector<96x288xbf16>, vector<8x288xf32> -> vector<8x288xf32>
    %1032 = vector.shape_cast %1031 : vector<8x288xf32> to vector<1x8x288xf32>
    %1033 = vector.extract_strided_slice %1032 {offsets = [0, 0, 0], sizes = [1, 8, 96], strides = [1, 1, 1]} : vector<1x8x288xf32> to vector<1x8x96xf32>
    %1034 = vector.extract_strided_slice %1032 {offsets = [0, 0, 96], sizes = [1, 8, 96], strides = [1, 1, 1]} : vector<1x8x288xf32> to vector<1x8x96xf32>
    %1035 = vector.extract_strided_slice %1032 {offsets = [0, 0, 192], sizes = [1, 8, 96], strides = [1, 1, 1]} : vector<1x8x288xf32> to vector<1x8x96xf32>
    %cst_290 = arith.constant 0.000000e+00 : f32
    %1036 = vector.broadcast %cst_290 : f32 to vector<1x1x96xf32>
    %1037 = vector.extract_strided_slice %1033 {offsets = [0, 0, 0], sizes = [1, 7, 96], strides = [1, 1, 1]} : vector<1x8x96xf32> to vector<1x7x96xf32>
    %1038 = tpu.concatenate %1036, %1037 in 1 : vector<1x1x96xf32>, vector<1x7x96xf32> -> vector<1x8x96xf32>
    %1039 = arith.addf %1038, %1034 : vector<1x8x96xf32>
    %1040 = vector.extract_strided_slice %1035 {offsets = [0, 1, 0], sizes = [1, 7, 96], strides = [1, 1, 1]} : vector<1x8x96xf32> to vector<1x7x96xf32>
    %1041 = tpu.concatenate %1040, %1036 in 1 : vector<1x7x96xf32>, vector<1x1x96xf32> -> vector<1x8x96xf32>
    %1042 = arith.addf %1039, %1041 : vector<1x8x96xf32>
    %1043 = vector.extract_strided_slice %0 {offsets = [50, 0], sizes = [1, 96], strides = [1, 1]} : vector<56x128xf32> to vector<1x96xf32>
    %1044 = vector.shape_cast %1043 : vector<1x96xf32> to vector<1x1x96xf32>
    %1045 = vector.broadcast %1044 : vector<1x1x96xf32> to vector<1x8x96xf32>
    %1046 = arith.addf %1042, %1045 : vector<1x8x96xf32>
    %cst_291 = arith.constant 0.000000e+00 : f32
    %1047 = vector.broadcast %cst_291 : f32 to vector<1x8x96xf32>
    %1048 = arith.maximumf %1046, %1047 : vector<1x8x96xf32>
    %1049 = vector.shape_cast %1048 : vector<1x8x96xf32> to vector<8x96xf32>
    %1050 = arith.truncf %1049 : vector<8x96xf32> to vector<8x96xbf16>
    %cst_292 = arith.constant dense<0.000000e+00> : vector<8x3xf32>
    %1051 = tpu.matmul %1050, %948, %cst_292 {dimension_numbers = #tpu.dot_dimension_numbers<[1], [0], [0], [1], [0, 0, 1, 1], [], []>} : vector<8x96xbf16>, vector<96x3xbf16>, vector<8x3xf32> -> vector<8x3xf32>
    %1052 = vector.shape_cast %1051 : vector<8x3xf32> to vector<1x8x3xf32>
    %1053 = vector.extract_strided_slice %1052 {offsets = [0, 0, 0], sizes = [1, 8, 1], strides = [1, 1, 1]} : vector<1x8x3xf32> to vector<1x8x1xf32>
    %1054 = vector.extract_strided_slice %1052 {offsets = [0, 0, 1], sizes = [1, 8, 1], strides = [1, 1, 1]} : vector<1x8x3xf32> to vector<1x8x1xf32>
    %1055 = vector.extract_strided_slice %1052 {offsets = [0, 0, 2], sizes = [1, 8, 1], strides = [1, 1, 1]} : vector<1x8x3xf32> to vector<1x8x1xf32>
    %cst_293 = arith.constant 0.000000e+00 : f32
    %1056 = vector.broadcast %cst_293 : f32 to vector<1x1x1xf32>
    %1057 = vector.extract_strided_slice %1053 {offsets = [0, 0, 0], sizes = [1, 7, 1], strides = [1, 1, 1]} : vector<1x8x1xf32> to vector<1x7x1xf32>
    %1058 = tpu.concatenate %1056, %1057 in 1 : vector<1x1x1xf32>, vector<1x7x1xf32> -> vector<1x8x1xf32>
    %1059 = arith.addf %1058, %1054 : vector<1x8x1xf32>
    %1060 = vector.extract_strided_slice %1055 {offsets = [0, 1, 0], sizes = [1, 7, 1], strides = [1, 1, 1]} : vector<1x8x1xf32> to vector<1x7x1xf32>
    %1061 = tpu.concatenate %1060, %1056 in 1 : vector<1x7x1xf32>, vector<1x1x1xf32> -> vector<1x8x1xf32>
    %1062 = arith.addf %1059, %1061 : vector<1x8x1xf32>
    %1063 = vector.extract_strided_slice %0 {offsets = [51, 0], sizes = [1, 1], strides = [1, 1]} : vector<56x128xf32> to vector<1x1xf32>
    %1064 = vector.shape_cast %1063 : vector<1x1xf32> to vector<1x1x1xf32>
    %1065 = vector.broadcast %1064 : vector<1x1x1xf32> to vector<1x8x1xf32>
    %1066 = arith.addf %1062, %1065 : vector<1x8x1xf32>
    %1067 = vector.shape_cast %1066 : vector<1x8x1xf32> to vector<8x1xf32>
    %1068 = vector.shape_cast %844 : vector<1x8x8xf32> to vector<8x8xf32>
    %cst_294 = arith.constant 0.000000e+00 : f32
    %1069 = vector.broadcast %cst_294 : f32 to vector<8x119xf32>
    %1070 = tpu.concatenate %1067, %1068, %1069 in 1 : vector<8x1xf32>, vector<8x8xf32>, vector<8x119xf32> -> vector<8x128xf32>
    %1071 = vector.shape_cast %1070 : vector<8x128xf32> to vector<1x8x128xf32>
    %c0_295 = arith.constant 0 : index
    %c0_296 = arith.constant 0 : index
    %c0_297 = arith.constant 0 : index
    %1072 = vector.load %arg34[%c0_295, %c0_296, %c0_297] : memref<1x8x128xf32, #tpu.memory_space<vmem>>, vector<1x8x128xf32>
    tpu.vector_store %arg34[%c0_295, %c0_296, %c0_297], %1071 {strides = array<i32>} : memref<1x8x128xf32, #tpu.memory_space<vmem>>, vector<1x8x128xf32>,
    return
  }
  func.func @transform_0(%arg0: i32) -> (i32, i32, i32) {
    %c0_i32 = arith.constant 0 : i32
    %c0_i32_0 = arith.constant 0 : i32
    %c0_i32_1 = arith.constant 0 : i32
    return %arg0, %c0_i32, %c0_i32_0 : i32, i32, i32
  }
  func.func @transform_1(%arg0: i32) -> (i32, i32, i32) {
    %c0_i32 = arith.constant 0 : i32
    %c0_i32_0 = arith.constant 0 : i32
    %c0_i32_1 = arith.constant 0 : i32
    return %arg0, %c0_i32, %c0_i32_0 : i32, i32, i32
  }
  func.func @transform_2(%arg0: i32) -> (i32, i32, i32, i32) {
    %c0_i32 = arith.constant 0 : i32
    %c0_i32_0 = arith.constant 0 : i32
    %c0_i32_1 = arith.constant 0 : i32
    %c0_i32_2 = arith.constant 0 : i32
    return %arg0, %c0_i32, %c0_i32_0, %c0_i32_1 : i32, i32, i32, i32
  }
  func.func @transform_3(%arg0: i32) -> (i32, i32, i32, i32) {
    %c0_i32 = arith.constant 0 : i32
    %c0_i32_0 = arith.constant 0 : i32
    %c0_i32_1 = arith.constant 0 : i32
    %c0_i32_2 = arith.constant 0 : i32
    return %arg0, %c0_i32, %c0_i32_0, %c0_i32_1 : i32, i32, i32, i32
  }
  func.func @transform_4(%arg0: i32) -> (i32, i32, i32) {
    %c0_i32 = arith.constant 0 : i32
    %c0_i32_0 = arith.constant 0 : i32
    %c0_i32_1 = arith.constant 0 : i32
    return %arg0, %c0_i32, %c0_i32_0 : i32, i32, i32
  }
  func.func @transform_5(%arg0: i32) -> (i32, i32) {
    %c0_i32 = arith.constant 0 : i32
    %c0_i32_0 = arith.constant 0 : i32
    %c0_i32_1 = arith.constant 0 : i32
    return %c0_i32, %c0_i32_0 : i32, i32
  }
  func.func @transform_6(%arg0: i32) -> (i32, i32) {
    %c0_i32 = arith.constant 0 : i32
    %c0_i32_0 = arith.constant 0 : i32
    %c0_i32_1 = arith.constant 0 : i32
    return %c0_i32, %c0_i32_0 : i32, i32
  }
  func.func @transform_7(%arg0: i32) -> (i32, i32) {
    %c0_i32 = arith.constant 0 : i32
    %c0_i32_0 = arith.constant 0 : i32
    %c0_i32_1 = arith.constant 0 : i32
    return %c0_i32, %c0_i32_0 : i32, i32
  }
  func.func @transform_8(%arg0: i32) -> (i32, i32) {
    %c0_i32 = arith.constant 0 : i32
    %c0_i32_0 = arith.constant 0 : i32
    %c0_i32_1 = arith.constant 0 : i32
    return %c0_i32, %c0_i32_0 : i32, i32
  }
  func.func @transform_9(%arg0: i32) -> (i32, i32) {
    %c0_i32 = arith.constant 0 : i32
    %c0_i32_0 = arith.constant 0 : i32
    %c0_i32_1 = arith.constant 0 : i32
    return %c0_i32, %c0_i32_0 : i32, i32
  }
  func.func @transform_10(%arg0: i32) -> (i32, i32) {
    %c0_i32 = arith.constant 0 : i32
    %c0_i32_0 = arith.constant 0 : i32
    %c0_i32_1 = arith.constant 0 : i32
    return %c0_i32, %c0_i32_0 : i32, i32
  }
  func.func @transform_11(%arg0: i32) -> (i32, i32) {
    %c0_i32 = arith.constant 0 : i32
    %c0_i32_0 = arith.constant 0 : i32
    %c0_i32_1 = arith.constant 0 : i32
    return %c0_i32, %c0_i32_0 : i32, i32
  }
  func.func @transform_12(%arg0: i32) -> (i32, i32) {
    %c0_i32 = arith.constant 0 : i32
    %c0_i32_0 = arith.constant 0 : i32
    %c0_i32_1 = arith.constant 0 : i32
    return %c0_i32, %c0_i32_0 : i32, i32
  }
  func.func @transform_13(%arg0: i32) -> (i32, i32) {
    %c0_i32 = arith.constant 0 : i32
    %c0_i32_0 = arith.constant 0 : i32
    %c0_i32_1 = arith.constant 0 : i32
    return %c0_i32, %c0_i32_0 : i32, i32
  }
  func.func @transform_14(%arg0: i32) -> (i32, i32) {
    %c0_i32 = arith.constant 0 : i32
    %c0_i32_0 = arith.constant 0 : i32
    %c0_i32_1 = arith.constant 0 : i32
    return %c0_i32, %c0_i32_0 : i32, i32
  }
  func.func @transform_15(%arg0: i32) -> (i32, i32) {
    %c0_i32 = arith.constant 0 : i32
    %c0_i32_0 = arith.constant 0 : i32
    %c0_i32_1 = arith.constant 0 : i32
    return %c0_i32, %c0_i32_0 : i32, i32
  }
  func.func @transform_16(%arg0: i32) -> (i32, i32) {
    %c0_i32 = arith.constant 0 : i32
    %c0_i32_0 = arith.constant 0 : i32
    %c0_i32_1 = arith.constant 0 : i32
    return %c0_i32, %c0_i32_0 : i32, i32
  }
  func.func @transform_17(%arg0: i32) -> (i32, i32) {
    %c0_i32 = arith.constant 0 : i32
    %c0_i32_0 = arith.constant 0 : i32
    %c0_i32_1 = arith.constant 0 : i32
    return %c0_i32, %c0_i32_0 : i32, i32
  }
  func.func @transform_18(%arg0: i32) -> (i32, i32) {
    %c0_i32 = arith.constant 0 : i32
    %c0_i32_0 = arith.constant 0 : i32
    %c0_i32_1 = arith.constant 0 : i32
    return %c0_i32, %c0_i32_0 : i32, i32
  }
  func.func @transform_19(%arg0: i32) -> (i32, i32) {
    %c0_i32 = arith.constant 0 : i32
    %c0_i32_0 = arith.constant 0 : i32
    %c0_i32_1 = arith.constant 0 : i32
    return %c0_i32, %c0_i32_0 : i32, i32
  }
  func.func @transform_20(%arg0: i32) -> (i32, i32) {
    %c0_i32 = arith.constant 0 : i32
    %c0_i32_0 = arith.constant 0 : i32
    %c0_i32_1 = arith.constant 0 : i32
    return %c0_i32, %c0_i32_0 : i32, i32
  }
  func.func @transform_21(%arg0: i32) -> (i32, i32) {
    %c0_i32 = arith.constant 0 : i32
    %c0_i32_0 = arith.constant 0 : i32
    %c0_i32_1 = arith.constant 0 : i32
    return %c0_i32, %c0_i32_0 : i32, i32
  }
  func.func @transform_22(%arg0: i32) -> (i32, i32) {
    %c0_i32 = arith.constant 0 : i32
    %c0_i32_0 = arith.constant 0 : i32
    %c0_i32_1 = arith.constant 0 : i32
    return %c0_i32, %c0_i32_0 : i32, i32
  }
  func.func @transform_23(%arg0: i32) -> (i32, i32) {
    %c0_i32 = arith.constant 0 : i32
    %c0_i32_0 = arith.constant 0 : i32
    %c0_i32_1 = arith.constant 0 : i32
    return %c0_i32, %c0_i32_0 : i32, i32
  }
  func.func @transform_24(%arg0: i32) -> (i32, i32) {
    %c0_i32 = arith.constant 0 : i32
    %c0_i32_0 = arith.constant 0 : i32
    %c0_i32_1 = arith.constant 0 : i32
    return %c0_i32, %c0_i32_0 : i32, i32
  }
  func.func @transform_25(%arg0: i32) -> (i32, i32) {
    %c0_i32 = arith.constant 0 : i32
    %c0_i32_0 = arith.constant 0 : i32
    %c0_i32_1 = arith.constant 0 : i32
    return %c0_i32, %c0_i32_0 : i32, i32
  }
  func.func @transform_26(%arg0: i32) -> (i32, i32) {
    %c0_i32 = arith.constant 0 : i32
    %c0_i32_0 = arith.constant 0 : i32
    %c0_i32_1 = arith.constant 0 : i32
    return %c0_i32, %c0_i32_0 : i32, i32
  }
  func.func @transform_27(%arg0: i32) -> (i32, i32) {
    %c0_i32 = arith.constant 0 : i32
    %c0_i32_0 = arith.constant 0 : i32
    %c0_i32_1 = arith.constant 0 : i32
    return %c0_i32, %c0_i32_0 : i32, i32
  }
  func.func @transform_28(%arg0: i32) -> (i32, i32) {
    %c0_i32 = arith.constant 0 : i32
    %c0_i32_0 = arith.constant 0 : i32
    %c0_i32_1 = arith.constant 0 : i32
    return %c0_i32, %c0_i32_0 : i32, i32
  }
  func.func @transform_29(%arg0: i32) -> (i32, i32) {
    %c0_i32 = arith.constant 0 : i32
    %c0_i32_0 = arith.constant 0 : i32
    %c0_i32_1 = arith.constant 0 : i32
    return %c0_i32, %c0_i32_0 : i32, i32
  }
  func.func @transform_30(%arg0: i32) -> (i32, i32) {
    %c0_i32 = arith.constant 0 : i32
    %c0_i32_0 = arith.constant 0 : i32
    %c0_i32_1 = arith.constant 0 : i32
    return %c0_i32, %c0_i32_0 : i32, i32
  }
  func.func @transform_31(%arg0: i32) -> (i32, i32) {
    %c0_i32 = arith.constant 0 : i32
    %c0_i32_0 = arith.constant 0 : i32
    %c0_i32_1 = arith.constant 0 : i32
    return %c0_i32, %c0_i32_0 : i32, i32
  }
  func.func @transform_32(%arg0: i32) -> (i32, i32) {
    %c0_i32 = arith.constant 0 : i32
    %c0_i32_0 = arith.constant 0 : i32
    %c0_i32_1 = arith.constant 0 : i32
    return %c0_i32, %c0_i32_0 : i32, i32
  }
  func.func @transform_33(%arg0: i32) -> (i32, i32, i32) {
    %c0_i32 = arith.constant 0 : i32
    %c0_i32_0 = arith.constant 0 : i32
    %c0_i32_1 = arith.constant 0 : i32
    return %arg0, %c0_i32, %c0_i32_0 : i32, i32, i32
  }
}

</mosaic_0001>

<llo_original>
// kernel: transformer_forward.1
$region0: #{transformer_forward.1}
  #allocation0 [shape = 'u32[]', space=smem, size = 0x4, offset = 0x4, fixed_abs, tag = 'smem constant byte address 0x4 - core index']
  #allocation1 [shape = 'u32[144,128]{1,0:T(1,128)}', space=vmem, size = 0x12000, scoped, tag = 'internal scratch']
  %s0 = inlined_call_operand.smem [shape: u32[34], index: -1, kind: input, shape index: {}]
  %s1 = sld [smem:[%s0]]
  %s2 = scalar_lea.smem %s0, 1
  %s3 = sld [smem:[%s2]]
  %s4 = scalar_lea.smem %s0, 2
  %s5 = sld [smem:[%s4]]
  %s6 = scalar_lea.smem %s0, 3
  %s7 = sld [smem:[%s6]]
  %s8 = scalar_lea.smem %s0, 4
  %s9 = sld [smem:[%s8]]
  %s10 = scalar_lea.smem %s0, 5
  %s11 = sld [smem:[%s10]]
  %s12 = scalar_lea.smem %s0, 6
  %s13 = sld [smem:[%s12]]
  %s14 = scalar_lea.smem %s0, 7
  %s15 = sld [smem:[%s14]]
  %s16 = scalar_lea.smem %s0, 8
  %s17 = sld [smem:[%s16]]
  %s18 = scalar_lea.smem %s0, 9
  %s19 = sld [smem:[%s18]]
  %s20 = scalar_lea.smem %s0, 10
  %s21 = sld [smem:[%s20]]
  %s22 = scalar_lea.smem %s0, 11
  %s23 = sld [smem:[%s22]]
  %s24 = scalar_lea.smem %s0, 12
  %s25 = sld [smem:[%s24]]
  %s26 = scalar_lea.smem %s0, 13
  %s27 = sld [smem:[%s26]]
  %s28 = scalar_lea.smem %s0, 14
  %s29 = sld [smem:[%s28]]
  %s30 = scalar_lea.smem %s0, 15
  %s31 = sld [smem:[%s30]]
  %s32 = scalar_lea.smem %s0, 16
  %s33 = sld [smem:[%s32]]
  %s34 = scalar_lea.smem %s0, 17
  %s35 = sld [smem:[%s34]]
  %s36 = scalar_lea.smem %s0, 18
  %s37 = sld [smem:[%s36]]
  %s38 = scalar_lea.smem %s0, 19
  %s39 = sld [smem:[%s38]]
  %s40 = scalar_lea.smem %s0, 20
  %s41 = sld [smem:[%s40]]
  %s42 = scalar_lea.smem %s0, 21
  %s43 = sld [smem:[%s42]]
  %s44 = scalar_lea.smem %s0, 22
  %s45 = sld [smem:[%s44]]
  %s46 = scalar_lea.smem %s0, 23
  %s47 = sld [smem:[%s46]]
  %s48 = scalar_lea.smem %s0, 24
  %s49 = sld [smem:[%s48]]
  %s50 = scalar_lea.smem %s0, 25
  %s51 = sld [smem:[%s50]]
  %s52 = scalar_lea.smem %s0, 26
  %s53 = sld [smem:[%s52]]
  %s54 = scalar_lea.smem %s0, 27
  %s55 = sld [smem:[%s54]]
  %s56 = scalar_lea.smem %s0, 28
  %s57 = sld [smem:[%s56]]
  %s58 = scalar_lea.smem %s0, 29
  %s59 = sld [smem:[%s58]]
  %s60 = scalar_lea.smem %s0, 30
  %s61 = sld [smem:[%s60]]
  %s62 = scalar_lea.smem %s0, 31
  %s63 = sld [smem:[%s62]]
  %s64 = scalar_lea.smem %s0, 32
  %s65 = sld [smem:[%s64]]
  %s66 = scalar_lea.smem %s0, 33
  %s67 = sld [smem:[%s66]]
  %s68 = sld [smem:[#allocation0]]
  $region165: #{transformer_forward.1} parent=0
    _
  %s70 = ssub.s32 1, %s68
  %s71 = scalar_select 0, %s70, %s68
  loop: start=0, step=1, limit=4
  $region2: #{transformer_forward.1} parent=0 // loop_pre_header
    _
  $region3: #{transformer_forward.1} parent=0 // loop_header
    %s73 = sphi 0, %s77
    %p74 = scmp.ge.s32.totalorder %s73, 4
    %s83 = sphi 0, %s85
    %s86 = sphi 0, %s83
    %s87 = sphi 0, %s86
    %s103 = sphi 0, %s87
    %s109 = sphi 0, %s111
    %s112 = sphi 0, %s109
    %s113 = sphi 0, %s112
    %s129 = sphi 0, %s113
    %s135 = sphi 0, %s137
    %s138 = sphi 0, %s135
    %s139 = sphi 0, %s138
    %s155 = sphi 0, %s139
    %s161 = sphi 0, %s163
    %s164 = sphi 0, %s161
    %s165 = sphi 0, %s164
    %s181 = sphi 0, %s165
    %s187 = sphi 0, %s189
    %s190 = sphi 0, %s187
    %s191 = sphi 0, %s190
    %s207 = sphi 0, %s191
    %s211 = sphi 0, %s211
    %s213 = sphi 0, %s211
    %s214 = sphi 0, %s213
    %s228 = sphi 0, %s214
    %s232 = sphi 0, %s232
    %s234 = sphi 0, %s232
    %s235 = sphi 0, %s234
    %s249 = sphi 0, %s235
    %s253 = sphi 0, %s253
    %s255 = sphi 0, %s253
    %s256 = sphi 0, %s255
    %s270 = sphi 0, %s256
    %s274 = sphi 0, %s274
    %s276 = sphi 0, %s274
    %s277 = sphi 0, %s276
    %s291 = sphi 0, %s277
    %s295 = sphi 0, %s295
    %s297 = sphi 0, %s295
    %s298 = sphi 0, %s297
    %s312 = sphi 0, %s298
    %s316 = sphi 0, %s316
    %s318 = sphi 0, %s316
    %s319 = sphi 0, %s318
    %s333 = sphi 0, %s319
    %s337 = sphi 0, %s337
    %s339 = sphi 0, %s337
    %s340 = sphi 0, %s339
    %s354 = sphi 0, %s340
    %s358 = sphi 0, %s358
    %s360 = sphi 0, %s358
    %s361 = sphi 0, %s360
    %s375 = sphi 0, %s361
    %s379 = sphi 0, %s379
    %s381 = sphi 0, %s379
    %s382 = sphi 0, %s381
    %s396 = sphi 0, %s382
    %s400 = sphi 0, %s400
    %s402 = sphi 0, %s400
    %s403 = sphi 0, %s402
    %s417 = sphi 0, %s403
    %s421 = sphi 0, %s421
    %s423 = sphi 0, %s421
    %s424 = sphi 0, %s423
    %s438 = sphi 0, %s424
    %s442 = sphi 0, %s442
    %s444 = sphi 0, %s442
    %s445 = sphi 0, %s444
    %s459 = sphi 0, %s445
    %s463 = sphi 0, %s463
    %s465 = sphi 0, %s463
    %s466 = sphi 0, %s465
    %s480 = sphi 0, %s466
    %s484 = sphi 0, %s484
    %s486 = sphi 0, %s484
    %s487 = sphi 0, %s486
    %s501 = sphi 0, %s487
    %s505 = sphi 0, %s505
    %s507 = sphi 0, %s505
    %s508 = sphi 0, %s507
    %s522 = sphi 0, %s508
    %s526 = sphi 0, %s526
    %s528 = sphi 0, %s526
    %s529 = sphi 0, %s528
    %s543 = sphi 0, %s529
    %s547 = sphi 0, %s547
    %s549 = sphi 0, %s547
    %s550 = sphi 0, %s549
    %s564 = sphi 0, %s550
    %s568 = sphi 0, %s568
    %s570 = sphi 0, %s568
    %s571 = sphi 0, %s570
    %s585 = sphi 0, %s571
    %s589 = sphi 0, %s589
    %s591 = sphi 0, %s589
    %s592 = sphi 0, %s591
    %s606 = sphi 0, %s592
    %s610 = sphi 0, %s610
    %s612 = sphi 0, %s610
    %s613 = sphi 0, %s612
    %s627 = sphi 0, %s613
    %s631 = sphi 0, %s631
    %s633 = sphi 0, %s631
    %s634 = sphi 0, %s633
    %s648 = sphi 0, %s634
    %s652 = sphi 0, %s652
    %s654 = sphi 0, %s652
    %s655 = sphi 0, %s654
    %s669 = sphi 0, %s655
    %s673 = sphi 0, %s673
    %s675 = sphi 0, %s673
    %s676 = sphi 0, %s675
    %s690 = sphi 0, %s676
    %s694 = sphi 0, %s694
    %s696 = sphi 0, %s694
    %s697 = sphi 0, %s696
    %s711 = sphi 0, %s697
    %s715 = sphi 0, %s715
    %s717 = sphi 0, %s715
    %s718 = sphi 0, %s717
    %s732 = sphi 0, %s718
    %s736 = sphi 0, %s736
    %s738 = sphi 0, %s736
    %s739 = sphi 0, %s738
    %s753 = sphi 0, %s739
    %s757 = sphi 0, %s757
    %s759 = sphi 0, %s757
    %s760 = sphi 0, %s759
    %s774 = sphi 0, %s760
    %s778 = sphi 0, %s778
    %s780 = sphi 0, %s778
    %s781 = sphi 0, %s780
    %s795 = sphi 0, %s781
    %s801 = sphi 0, %s803
    %s804 = sphi 0, %s801
    %s805 = sphi 0, %s804
    %s821 = sphi 0, %s805
  $region4: #{transformer_forward.1} parent=0 // loop_header_branch
    %76 = sbr.rel (%p74) target = $region8
  $region5: #{transformer_forward.1} parent=0 // loop_body
    %s78 = ssub.s32 %s73, 1
    %s79 = ssub.s32 %s73, 2
    %s80 = sadd.s32 %s73, 1
    %s81 = ssub.s32 %s73, %s80
    %p82 = scmp.eq.s32.totalorder %s81, 0
    %s84 = sadd.s32 %s83, 1
    %s85 = scalar_select %p82, %s83, %s84
    %p88 = pneg %p82
    %p89 = scmp.eq.s32.totalorder %s73, 1
    %p90 = por %p88, %p89
    %p91 = scmp.ne.s32.totalorder %s83, %s86
    %p92 = scmp.eq.s32.totalorder %s73, 0
    %p93 = por %p91, %p92
    %p94 = scmp.ne.s32.totalorder %s83, %s86
    %p95 = scmp.eq.s32.totalorder %s78, 1
    %p96 = por %p94, %p95
    %p97 = scmp.ne.s32.totalorder %s86, %s87
    %p98 = scmp.eq.s32.totalorder %s78, 0
    %p99 = por %p97, %p98
    %p100 = scmp.ne.s32.totalorder %s86, %s87
    %p101 = scmp.eq.s32.totalorder %s79, 1
    %p102 = por %p100, %p101
    %p104 = scmp.ne.s32.totalorder %s87, %s103
    %p105 = scmp.eq.s32.totalorder %s79, 0
    %p106 = por %p104, %p105
    %s107 = ssub.s32 %s73, %s80
    %p108 = scmp.eq.s32.totalorder %s107, 0
    %s110 = sadd.s32 %s109, 1
    %s111 = scalar_select %p108, %s109, %s110
    %p114 = pneg %p108
    %p115 = scmp.eq.s32.totalorder %s73, 1
    %p116 = por %p114, %p115
    %p117 = scmp.ne.s32.totalorder %s109, %s112
    %p118 = scmp.eq.s32.totalorder %s73, 0
    %p119 = por %p117, %p118
    %p120 = scmp.ne.s32.totalorder %s109, %s112
    %p121 = scmp.eq.s32.totalorder %s78, 1
    %p122 = por %p120, %p121
    %p123 = scmp.ne.s32.totalorder %s112, %s113
    %p124 = scmp.eq.s32.totalorder %s78, 0
    %p125 = por %p123, %p124
    %p126 = scmp.ne.s32.totalorder %s112, %s113
    %p127 = scmp.eq.s32.totalorder %s79, 1
    %p128 = por %p126, %p127
    %p130 = scmp.ne.s32.totalorder %s113, %s129
    %p131 = scmp.eq.s32.totalorder %s79, 0
    %p132 = por %p130, %p131
    %s133 = ssub.s32 %s73, %s80
    %p134 = scmp.eq.s32.totalorder %s133, 0
    %s136 = sadd.s32 %s135, 1
    %s137 = scalar_select %p134, %s135, %s136
    %p140 = pneg %p134
    %p141 = scmp.eq.s32.totalorder %s73, 1
    %p142 = por %p140, %p141
    %p143 = scmp.ne.s32.totalorder %s135, %s138
    %p144 = scmp.eq.s32.totalorder %s73, 0
    %p145 = por %p143, %p144
    %p146 = scmp.ne.s32.totalorder %s135, %s138
    %p147 = scmp.eq.s32.totalorder %s78, 1
    %p148 = por %p146, %p147
    %p149 = scmp.ne.s32.totalorder %s138, %s139
    %p150 = scmp.eq.s32.totalorder %s78, 0
    %p151 = por %p149, %p150
    %p152 = scmp.ne.s32.totalorder %s138, %s139
    %p153 = scmp.eq.s32.totalorder %s79, 1
    %p154 = por %p152, %p153
    %p156 = scmp.ne.s32.totalorder %s139, %s155
    %p157 = scmp.eq.s32.totalorder %s79, 0
    %p158 = por %p156, %p157
    %s159 = ssub.s32 %s73, %s80
    %p160 = scmp.eq.s32.totalorder %s159, 0
    %s162 = sadd.s32 %s161, 1
    %s163 = scalar_select %p160, %s161, %s162
    %p166 = pneg %p160
    %p167 = scmp.eq.s32.totalorder %s73, 1
    %p168 = por %p166, %p167
    %p169 = scmp.ne.s32.totalorder %s161, %s164
    %p170 = scmp.eq.s32.totalorder %s73, 0
    %p171 = por %p169, %p170
    %p172 = scmp.ne.s32.totalorder %s161, %s164
    %p173 = scmp.eq.s32.totalorder %s78, 1
    %p174 = por %p172, %p173
    %p175 = scmp.ne.s32.totalorder %s164, %s165
    %p176 = scmp.eq.s32.totalorder %s78, 0
    %p177 = por %p175, %p176
    %p178 = scmp.ne.s32.totalorder %s164, %s165
    %p179 = scmp.eq.s32.totalorder %s79, 1
    %p180 = por %p178, %p179
    %p182 = scmp.ne.s32.totalorder %s165, %s181
    %p183 = scmp.eq.s32.totalorder %s79, 0
    %p184 = por %p182, %p183
    %s185 = ssub.s32 %s73, %s80
    %p186 = scmp.eq.s32.totalorder %s185, 0
    %s188 = sadd.s32 %s187, 1
    %s189 = scalar_select %p186, %s187, %s188
    %p192 = pneg %p186
    %p193 = scmp.eq.s32.totalorder %s73, 1
    %p194 = por %p192, %p193
    %p195 = scmp.ne.s32.totalorder %s187, %s190
    %p196 = scmp.eq.s32.totalorder %s73, 0
    %p197 = por %p195, %p196
    %p198 = scmp.ne.s32.totalorder %s187, %s190
    %p199 = scmp.eq.s32.totalorder %s78, 1
    %p200 = por %p198, %p199
    %p201 = scmp.ne.s32.totalorder %s190, %s191
    %p202 = scmp.eq.s32.totalorder %s78, 0
    %p203 = por %p201, %p202
    %p204 = scmp.ne.s32.totalorder %s190, %s191
    %p205 = scmp.eq.s32.totalorder %s79, 1
    %p206 = por %p204, %p205
    %p208 = scmp.ne.s32.totalorder %s191, %s207
    %p209 = scmp.eq.s32.totalorder %s79, 0
    %p210 = por %p208, %p209
    %s212 = sadd.s32 %s211, 1
    %p215 = scmp.eq.s32.totalorder %s73, 1
    %p216 = scmp.ne.s32.totalorder %s211, %s213
    %p217 = scmp.eq.s32.totalorder %s73, 0
    %p218 = por %p216, %p217
    %p219 = scmp.ne.s32.totalorder %s211, %s213
    %p220 = scmp.eq.s32.totalorder %s78, 1
    %p221 = por %p219, %p220
    %p222 = scmp.ne.s32.totalorder %s213, %s214
    %p223 = scmp.eq.s32.totalorder %s78, 0
    %p224 = por %p222, %p223
    %p225 = scmp.ne.s32.totalorder %s213, %s214
    %p226 = scmp.eq.s32.totalorder %s79, 1
    %p227 = por %p225, %p226
    %p229 = scmp.ne.s32.totalorder %s214, %s228
    %p230 = scmp.eq.s32.totalorder %s79, 0
    %p231 = por %p229, %p230
    %s233 = sadd.s32 %s232, 1
    %p236 = scmp.eq.s32.totalorder %s73, 1
    %p237 = scmp.ne.s32.totalorder %s232, %s234
    %p238 = scmp.eq.s32.totalorder %s73, 0
    %p239 = por %p237, %p238
    %p240 = scmp.ne.s32.totalorder %s232, %s234
    %p241 = scmp.eq.s32.totalorder %s78, 1
    %p242 = por %p240, %p241
    %p243 = scmp.ne.s32.totalorder %s234, %s235
    %p244 = scmp.eq.s32.totalorder %s78, 0
    %p245 = por %p243, %p244
    %p246 = scmp.ne.s32.totalorder %s234, %s235
    %p247 = scmp.eq.s32.totalorder %s79, 1
    %p248 = por %p246, %p247
    %p250 = scmp.ne.s32.totalorder %s235, %s249
    %p251 = scmp.eq.s32.totalorder %s79, 0
    %p252 = por %p250, %p251
    %s254 = sadd.s32 %s253, 1
    %p257 = scmp.eq.s32.totalorder %s73, 1
    %p258 = scmp.ne.s32.totalorder %s253, %s255
    %p259 = scmp.eq.s32.totalorder %s73, 0
    %p260 = por %p258, %p259
    %p261 = scmp.ne.s32.totalorder %s253, %s255
    %p262 = scmp.eq.s32.totalorder %s78, 1
    %p263 = por %p261, %p262
    %p264 = scmp.ne.s32.totalorder %s255, %s256
    %p265 = scmp.eq.s32.totalorder %s78, 0
    %p266 = por %p264, %p265
    %p267 = scmp.ne.s32.totalorder %s255, %s256
    %p268 = scmp.eq.s32.totalorder %s79, 1
    %p269 = por %p267, %p268
    %p271 = scmp.ne.s32.totalorder %s256, %s270
    %p272 = scmp.eq.s32.totalorder %s79, 0
    %p273 = por %p271, %p272
    %s275 = sadd.s32 %s274, 1
    %p278 = scmp.eq.s32.totalorder %s73, 1
    %p279 = scmp.ne.s32.totalorder %s274, %s276
    %p280 = scmp.eq.s32.totalorder %s73, 0
    %p281 = por %p279, %p280
    %p282 = scmp.ne.s32.totalorder %s274, %s276
    %p283 = scmp.eq.s32.totalorder %s78, 1
    %p284 = por %p282, %p283
    %p285 = scmp.ne.s32.totalorder %s276, %s277
    %p286 = scmp.eq.s32.totalorder %s78, 0
    %p287 = por %p285, %p286
    %p288 = scmp.ne.s32.totalorder %s276, %s277
    %p289 = scmp.eq.s32.totalorder %s79, 1
    %p290 = por %p288, %p289
    %p292 = scmp.ne.s32.totalorder %s277, %s291
    %p293 = scmp.eq.s32.totalorder %s79, 0
    %p294 = por %p292, %p293
    %s296 = sadd.s32 %s295, 1
    %p299 = scmp.eq.s32.totalorder %s73, 1
    %p300 = scmp.ne.s32.totalorder %s295, %s297
    %p301 = scmp.eq.s32.totalorder %s73, 0
    %p302 = por %p300, %p301
    %p303 = scmp.ne.s32.totalorder %s295, %s297
    %p304 = scmp.eq.s32.totalorder %s78, 1
    %p305 = por %p303, %p304
    %p306 = scmp.ne.s32.totalorder %s297, %s298
    %p307 = scmp.eq.s32.totalorder %s78, 0
    %p308 = por %p306, %p307
    %p309 = scmp.ne.s32.totalorder %s297, %s298
    %p310 = scmp.eq.s32.totalorder %s79, 1
    %p311 = por %p309, %p310
    %p313 = scmp.ne.s32.totalorder %s298, %s312
    %p314 = scmp.eq.s32.totalorder %s79, 0
    %p315 = por %p313, %p314
    %s317 = sadd.s32 %s316, 1
    %p320 = scmp.eq.s32.totalorder %s73, 1
    %p321 = scmp.ne.s32.totalorder %s316, %s318
    %p322 = scmp.eq.s32.totalorder %s73, 0
    %p323 = por %p321, %p322
    %p324 = scmp.ne.s32.totalorder %s316, %s318
    %p325 = scmp.eq.s32.totalorder %s78, 1
    %p326 = por %p324, %p325
    %p327 = scmp.ne.s32.totalorder %s318, %s319
    %p328 = scmp.eq.s32.totalorder %s78, 0
    %p329 = por %p327, %p328
    %p330 = scmp.ne.s32.totalorder %s318, %s319
    %p331 = scmp.eq.s32.totalorder %s79, 1
    %p332 = por %p330, %p331
    %p334 = scmp.ne.s32.totalorder %s319, %s333
    %p335 = scmp.eq.s32.totalorder %s79, 0
    %p336 = por %p334, %p335
    %s338 = sadd.s32 %s337, 1
    %p341 = scmp.eq.s32.totalorder %s73, 1
    %p342 = scmp.ne.s32.totalorder %s337, %s339
    %p343 = scmp.eq.s32.totalorder %s73, 0
    %p344 = por %p342, %p343
    %p345 = scmp.ne.s32.totalorder %s337, %s339
    %p346 = scmp.eq.s32.totalorder %s78, 1
    %p347 = por %p345, %p346
    %p348 = scmp.ne.s32.totalorder %s339, %s340
    %p349 = scmp.eq.s32.totalorder %s78, 0
    %p350 = por %p348, %p349
    %p351 = scmp.ne.s32.totalorder %s339, %s340
    %p352 = scmp.eq.s32.totalorder %s79, 1
    %p353 = por %p351, %p352
    %p355 = scmp.ne.s32.totalorder %s340, %s354
    %p356 = scmp.eq.s32.totalorder %s79, 0
    %p357 = por %p355, %p356
    %s359 = sadd.s32 %s358, 1
    %p362 = scmp.eq.s32.totalorder %s73, 1
    %p363 = scmp.ne.s32.totalorder %s358, %s360
    %p364 = scmp.eq.s32.totalorder %s73, 0
    %p365 = por %p363, %p364
    %p366 = scmp.ne.s32.totalorder %s358, %s360
    %p367 = scmp.eq.s32.totalorder %s78, 1
    %p368 = por %p366, %p367
    %p369 = scmp.ne.s32.totalorder %s360, %s361
    %p370 = scmp.eq.s32.totalorder %s78, 0
    %p371 = por %p369, %p370
    %p372 = scmp.ne.s32.totalorder %s360, %s361
    %p373 = scmp.eq.s32.totalorder %s79, 1
    %p374 = por %p372, %p373
    %p376 = scmp.ne.s32.totalorder %s361, %s375
    %p377 = scmp.eq.s32.totalorder %s79, 0
    %p378 = por %p376, %p377
    %s380 = sadd.s32 %s379, 1
    %p383 = scmp.eq.s32.totalorder %s73, 1
    %p384 = scmp.ne.s32.totalorder %s379, %s381
    %p385 = scmp.eq.s32.totalorder %s73, 0
    %p386 = por %p384, %p385
    %p387 = scmp.ne.s32.totalorder %s379, %s381
    %p388 = scmp.eq.s32.totalorder %s78, 1
    %p389 = por %p387, %p388
    %p390 = scmp.ne.s32.totalorder %s381, %s382
    %p391 = scmp.eq.s32.totalorder %s78, 0
    %p392 = por %p390, %p391
    %p393 = scmp.ne.s32.totalorder %s381, %s382
    %p394 = scmp.eq.s32.totalorder %s79, 1
    %p395 = por %p393, %p394
    %p397 = scmp.ne.s32.totalorder %s382, %s396
    %p398 = scmp.eq.s32.totalorder %s79, 0
    %p399 = por %p397, %p398
    %s401 = sadd.s32 %s400, 1
    %p404 = scmp.eq.s32.totalorder %s73, 1
    %p405 = scmp.ne.s32.totalorder %s400, %s402
    %p406 = scmp.eq.s32.totalorder %s73, 0
    %p407 = por %p405, %p406
    %p408 = scmp.ne.s32.totalorder %s400, %s402
    %p409 = scmp.eq.s32.totalorder %s78, 1
    %p410 = por %p408, %p409
    %p411 = scmp.ne.s32.totalorder %s402, %s403
    %p412 = scmp.eq.s32.totalorder %s78, 0
    %p413 = por %p411, %p412
    %p414 = scmp.ne.s32.totalorder %s402, %s403
    %p415 = scmp.eq.s32.totalorder %s79, 1
    %p416 = por %p414, %p415
    %p418 = scmp.ne.s32.totalorder %s403, %s417
    %p419 = scmp.eq.s32.totalorder %s79, 0
    %p420 = por %p418, %p419
    %s422 = sadd.s32 %s421, 1
    %p425 = scmp.eq.s32.totalorder %s73, 1
    %p426 = scmp.ne.s32.totalorder %s421, %s423
    %p427 = scmp.eq.s32.totalorder %s73, 0
    %p428 = por %p426, %p427
    %p429 = scmp.ne.s32.totalorder %s421, %s423
    %p430 = scmp.eq.s32.totalorder %s78, 1
    %p431 = por %p429, %p430
    %p432 = scmp.ne.s32.totalorder %s423, %s424
    %p433 = scmp.eq.s32.totalorder %s78, 0
    %p434 = por %p432, %p433
    %p435 = scmp.ne.s32.totalorder %s423, %s424
    %p436 = scmp.eq.s32.totalorder %s79, 1
    %p437 = por %p435, %p436
    %p439 = scmp.ne.s32.totalorder %s424, %s438
    %p440 = scmp.eq.s32.totalorder %s79, 0
    %p441 = por %p439, %p440
    %s443 = sadd.s32 %s442, 1
    %p446 = scmp.eq.s32.totalorder %s73, 1
    %p447 = scmp.ne.s32.totalorder %s442, %s444
    %p448 = scmp.eq.s32.totalorder %s73, 0
    %p449 = por %p447, %p448
    %p450 = scmp.ne.s32.totalorder %s442, %s444
    %p451 = scmp.eq.s32.totalorder %s78, 1
    %p452 = por %p450, %p451
    %p453 = scmp.ne.s32.totalorder %s444, %s445
    %p454 = scmp.eq.s32.totalorder %s78, 0
    %p455 = por %p453, %p454
    %p456 = scmp.ne.s32.totalorder %s444, %s445
    %p457 = scmp.eq.s32.totalorder %s79, 1
    %p458 = por %p456, %p457
    %p460 = scmp.ne.s32.totalorder %s445, %s459
    %p461 = scmp.eq.s32.totalorder %s79, 0
    %p462 = por %p460, %p461
    %s464 = sadd.s32 %s463, 1
    %p467 = scmp.eq.s32.totalorder %s73, 1
    %p468 = scmp.ne.s32.totalorder %s463, %s465
    %p469 = scmp.eq.s32.totalorder %s73, 0
    %p470 = por %p468, %p469
    %p471 = scmp.ne.s32.totalorder %s463, %s465
    %p472 = scmp.eq.s32.totalorder %s78, 1
    %p473 = por %p471, %p472
    %p474 = scmp.ne.s32.totalorder %s465, %s466
    %p475 = scmp.eq.s32.totalorder %s78, 0
    %p476 = por %p474, %p475
    %p477 = scmp.ne.s32.totalorder %s465, %s466
    %p478 = scmp.eq.s32.totalorder %s79, 1
    %p479 = por %p477, %p478
    %p481 = scmp.ne.s32.totalorder %s466, %s480
    %p482 = scmp.eq.s32.totalorder %s79, 0
    %p483 = por %p481, %p482
    %s485 = sadd.s32 %s484, 1
    %p488 = scmp.eq.s32.totalorder %s73, 1
    %p489 = scmp.ne.s32.totalorder %s484, %s486
    %p490 = scmp.eq.s32.totalorder %s73, 0
    %p491 = por %p489, %p490
    %p492 = scmp.ne.s32.totalorder %s484, %s486
    %p493 = scmp.eq.s32.totalorder %s78, 1
    %p494 = por %p492, %p493
    %p495 = scmp.ne.s32.totalorder %s486, %s487
    %p496 = scmp.eq.s32.totalorder %s78, 0
    %p497 = por %p495, %p496
    %p498 = scmp.ne.s32.totalorder %s486, %s487
    %p499 = scmp.eq.s32.totalorder %s79, 1
    %p500 = por %p498, %p499
    %p502 = scmp.ne.s32.totalorder %s487, %s501
    %p503 = scmp.eq.s32.totalorder %s79, 0
    %p504 = por %p502, %p503
    %s506 = sadd.s32 %s505, 1
    %p509 = scmp.eq.s32.totalorder %s73, 1
    %p510 = scmp.ne.s32.totalorder %s505, %s507
    %p511 = scmp.eq.s32.totalorder %s73, 0
    %p512 = por %p510, %p511
    %p513 = scmp.ne.s32.totalorder %s505, %s507
    %p514 = scmp.eq.s32.totalorder %s78, 1
    %p515 = por %p513, %p514
    %p516 = scmp.ne.s32.totalorder %s507, %s508
    %p517 = scmp.eq.s32.totalorder %s78, 0
    %p518 = por %p516, %p517
    %p519 = scmp.ne.s32.totalorder %s507, %s508
    %p520 = scmp.eq.s32.totalorder %s79, 1
    %p521 = por %p519, %p520
    %p523 = scmp.ne.s32.totalorder %s508, %s522
    %p524 = scmp.eq.s32.totalorder %s79, 0
    %p525 = por %p523, %p524
    %s527 = sadd.s32 %s526, 1
    %p530 = scmp.eq.s32.totalorder %s73, 1
    %p531 = scmp.ne.s32.totalorder %s526, %s528
    %p532 = scmp.eq.s32.totalorder %s73, 0
    %p533 = por %p531, %p532
    %p534 = scmp.ne.s32.totalorder %s526, %s528
    %p535 = scmp.eq.s32.totalorder %s78, 1
    %p536 = por %p534, %p535
    %p537 = scmp.ne.s32.totalorder %s528, %s529
    %p538 = scmp.eq.s32.totalorder %s78, 0
    %p539 = por %p537, %p538
    %p540 = scmp.ne.s32.totalorder %s528, %s529
    %p541 = scmp.eq.s32.totalorder %s79, 1
    %p542 = por %p540, %p541
    %p544 = scmp.ne.s32.totalorder %s529, %s543
    %p545 = scmp.eq.s32.totalorder %s79, 0
    %p546 = por %p544, %p545
    %s548 = sadd.s32 %s547, 1
    %p551 = scmp.eq.s32.totalorder %s73, 1
    %p552 = scmp.ne.s32.totalorder %s547, %s549
    %p553 = scmp.eq.s32.totalorder %s73, 0
    %p554 = por %p552, %p553
    %p555 = scmp.ne.s32.totalorder %s547, %s549
    %p556 = scmp.eq.s32.totalorder %s78, 1
    %p557 = por %p555, %p556
    %p558 = scmp.ne.s32.totalorder %s549, %s550
    %p559 = scmp.eq.s32.totalorder %s78, 0
    %p560 = por %p558, %p559
    %p561 = scmp.ne.s32.totalorder %s549, %s550
    %p562 = scmp.eq.s32.totalorder %s79, 1
    %p563 = por %p561, %p562
    %p565 = scmp.ne.s32.totalorder %s550, %s564
    %p566 = scmp.eq.s32.totalorder %s79, 0
    %p567 = por %p565, %p566
    %s569 = sadd.s32 %s568, 1
    %p572 = scmp.eq.s32.totalorder %s73, 1
    %p573 = scmp.ne.s32.totalorder %s568, %s570
    %p574 = scmp.eq.s32.totalorder %s73, 0
    %p575 = por %p573, %p574
    %p576 = scmp.ne.s32.totalorder %s568, %s570
    %p577 = scmp.eq.s32.totalorder %s78, 1
    %p578 = por %p576, %p577
    %p579 = scmp.ne.s32.totalorder %s570, %s571
    %p580 = scmp.eq.s32.totalorder %s78, 0
    %p581 = por %p579, %p580
    %p582 = scmp.ne.s32.totalorder %s570, %s571
    %p583 = scmp.eq.s32.totalorder %s79, 1
    %p584 = por %p582, %p583
    %p586 = scmp.ne.s32.totalorder %s571, %s585
    %p587 = scmp.eq.s32.totalorder %s79, 0
    %p588 = por %p586, %p587
    %s590 = sadd.s32 %s589, 1
    %p593 = scmp.eq.s32.totalorder %s73, 1
    %p594 = scmp.ne.s32.totalorder %s589, %s591
    %p595 = scmp.eq.s32.totalorder %s73, 0
    %p596 = por %p594, %p595
    %p597 = scmp.ne.s32.totalorder %s589, %s591
    %p598 = scmp.eq.s32.totalorder %s78, 1
    %p599 = por %p597, %p598
    %p600 = scmp.ne.s32.totalorder %s591, %s592
    %p601 = scmp.eq.s32.totalorder %s78, 0
    %p602 = por %p600, %p601
    %p603 = scmp.ne.s32.totalorder %s591, %s592
    %p604 = scmp.eq.s32.totalorder %s79, 1
    %p605 = por %p603, %p604
    %p607 = scmp.ne.s32.totalorder %s592, %s606
    %p608 = scmp.eq.s32.totalorder %s79, 0
    %p609 = por %p607, %p608
    %s611 = sadd.s32 %s610, 1
    %p614 = scmp.eq.s32.totalorder %s73, 1
    %p615 = scmp.ne.s32.totalorder %s610, %s612
    %p616 = scmp.eq.s32.totalorder %s73, 0
    %p617 = por %p615, %p616
    %p618 = scmp.ne.s32.totalorder %s610, %s612
    %p619 = scmp.eq.s32.totalorder %s78, 1
    %p620 = por %p618, %p619
    %p621 = scmp.ne.s32.totalorder %s612, %s613
    %p622 = scmp.eq.s32.totalorder %s78, 0
    %p623 = por %p621, %p622
    %p624 = scmp.ne.s32.totalorder %s612, %s613
    %p625 = scmp.eq.s32.totalorder %s79, 1
    %p626 = por %p624, %p625
    %p628 = scmp.ne.s32.totalorder %s613, %s627
    %p629 = scmp.eq.s32.totalorder %s79, 0
    %p630 = por %p628, %p629
    %s632 = sadd.s32 %s631, 1
    %p635 = scmp.eq.s32.totalorder %s73, 1
    %p636 = scmp.ne.s32.totalorder %s631, %s633
    %p637 = scmp.eq.s32.totalorder %s73, 0
    %p638 = por %p636, %p637
    %p639 = scmp.ne.s32.totalorder %s631, %s633
    %p640 = scmp.eq.s32.totalorder %s78, 1
    %p641 = por %p639, %p640
    %p642 = scmp.ne.s32.totalorder %s633, %s634
    %p643 = scmp.eq.s32.totalorder %s78, 0
    %p644 = por %p642, %p643
    %p645 = scmp.ne.s32.totalorder %s633, %s634
    %p646 = scmp.eq.s32.totalorder %s79, 1
    %p647 = por %p645, %p646
    %p649 = scmp.ne.s32.totalorder %s634, %s648
    %p650 = scmp.eq.s32.totalorder %s79, 0
    %p651 = por %p649, %p650
    %s653 = sadd.s32 %s652, 1
    %p656 = scmp.eq.s32.totalorder %s73, 1
    %p657 = scmp.ne.s32.totalorder %s652, %s654
    %p658 = scmp.eq.s32.totalorder %s73, 0
    %p659 = por %p657, %p658
    %p660 = scmp.ne.s32.totalorder %s652, %s654
    %p661 = scmp.eq.s32.totalorder %s78, 1
    %p662 = por %p660, %p661
    %p663 = scmp.ne.s32.totalorder %s654, %s655
    %p664 = scmp.eq.s32.totalorder %s78, 0
    %p665 = por %p663, %p664
    %p666 = scmp.ne.s32.totalorder %s654, %s655
    %p667 = scmp.eq.s32.totalorder %s79, 1
    %p668 = por %p666, %p667
    %p670 = scmp.ne.s32.totalorder %s655, %s669
    %p671 = scmp.eq.s32.totalorder %s79, 0
    %p672 = por %p670, %p671
    %s674 = sadd.s32 %s673, 1
    %p677 = scmp.eq.s32.totalorder %s73, 1
    %p678 = scmp.ne.s32.totalorder %s673, %s675
    %p679 = scmp.eq.s32.totalorder %s73, 0
    %p680 = por %p678, %p679
    %p681 = scmp.ne.s32.totalorder %s673, %s675
    %p682 = scmp.eq.s32.totalorder %s78, 1
    %p683 = por %p681, %p682
    %p684 = scmp.ne.s32.totalorder %s675, %s676
    %p685 = scmp.eq.s32.totalorder %s78, 0
    %p686 = por %p684, %p685
    %p687 = scmp.ne.s32.totalorder %s675, %s676
    %p688 = scmp.eq.s32.totalorder %s79, 1
    %p689 = por %p687, %p688
    %p691 = scmp.ne.s32.totalorder %s676, %s690
    %p692 = scmp.eq.s32.totalorder %s79, 0
    %p693 = por %p691, %p692
    %s695 = sadd.s32 %s694, 1
    %p698 = scmp.eq.s32.totalorder %s73, 1
    %p699 = scmp.ne.s32.totalorder %s694, %s696
    %p700 = scmp.eq.s32.totalorder %s73, 0
    %p701 = por %p699, %p700
    %p702 = scmp.ne.s32.totalorder %s694, %s696
    %p703 = scmp.eq.s32.totalorder %s78, 1
    %p704 = por %p702, %p703
    %p705 = scmp.ne.s32.totalorder %s696, %s697
    %p706 = scmp.eq.s32.totalorder %s78, 0
    %p707 = por %p705, %p706
    %p708 = scmp.ne.s32.totalorder %s696, %s697
    %p709 = scmp.eq.s32.totalorder %s79, 1
    %p710 = por %p708, %p709
    %p712 = scmp.ne.s32.totalorder %s697, %s711
    %p713 = scmp.eq.s32.totalorder %s79, 0
    %p714 = por %p712, %p713
    %s716 = sadd.s32 %s715, 1
    %p719 = scmp.eq.s32.totalorder %s73, 1
    %p720 = scmp.ne.s32.totalorder %s715, %s717
    %p721 = scmp.eq.s32.totalorder %s73, 0
    %p722 = por %p720, %p721
    %p723 = scmp.ne.s32.totalorder %s715, %s717
    %p724 = scmp.eq.s32.totalorder %s78, 1
    %p725 = por %p723, %p724
    %p726 = scmp.ne.s32.totalorder %s717, %s718
    %p727 = scmp.eq.s32.totalorder %s78, 0
    %p728 = por %p726, %p727
    %p729 = scmp.ne.s32.totalorder %s717, %s718
    %p730 = scmp.eq.s32.totalorder %s79, 1
    %p731 = por %p729, %p730
    %p733 = scmp.ne.s32.totalorder %s718, %s732
    %p734 = scmp.eq.s32.totalorder %s79, 0
    %p735 = por %p733, %p734
    %s737 = sadd.s32 %s736, 1
    %p740 = scmp.eq.s32.totalorder %s73, 1
    %p741 = scmp.ne.s32.totalorder %s736, %s738
    %p742 = scmp.eq.s32.totalorder %s73, 0
    %p743 = por %p741, %p742
    %p744 = scmp.ne.s32.totalorder %s736, %s738
    %p745 = scmp.eq.s32.totalorder %s78, 1
    %p746 = por %p744, %p745
    %p747 = scmp.ne.s32.totalorder %s738, %s739
    %p748 = scmp.eq.s32.totalorder %s78, 0
    %p749 = por %p747, %p748
    %p750 = scmp.ne.s32.totalorder %s738, %s739
    %p751 = scmp.eq.s32.totalorder %s79, 1
    %p752 = por %p750, %p751
    %p754 = scmp.ne.s32.totalorder %s739, %s753
    %p755 = scmp.eq.s32.totalorder %s79, 0
    %p756 = por %p754, %p755
    %s758 = sadd.s32 %s757, 1
    %p761 = scmp.eq.s32.totalorder %s73, 1
    %p762 = scmp.ne.s32.totalorder %s757, %s759
    %p763 = scmp.eq.s32.totalorder %s73, 0
    %p764 = por %p762, %p763
    %p765 = scmp.ne.s32.totalorder %s757, %s759
    %p766 = scmp.eq.s32.totalorder %s78, 1
    %p767 = por %p765, %p766
    %p768 = scmp.ne.s32.totalorder %s759, %s760
    %p769 = scmp.eq.s32.totalorder %s78, 0
    %p770 = por %p768, %p769
    %p771 = scmp.ne.s32.totalorder %s759, %s760
    %p772 = scmp.eq.s32.totalorder %s79, 1
    %p773 = por %p771, %p772
    %p775 = scmp.ne.s32.totalorder %s760, %s774
    %p776 = scmp.eq.s32.totalorder %s79, 0
    %p777 = por %p775, %p776
    %s779 = sadd.s32 %s778, 1
    %p782 = scmp.eq.s32.totalorder %s73, 1
    %p783 = scmp.ne.s32.totalorder %s778, %s780
    %p784 = scmp.eq.s32.totalorder %s73, 0
    %p785 = por %p783, %p784
    %p786 = scmp.ne.s32.totalorder %s778, %s780
    %p787 = scmp.eq.s32.totalorder %s78, 1
    %p788 = por %p786, %p787
    %p789 = scmp.ne.s32.totalorder %s780, %s781
    %p790 = scmp.eq.s32.totalorder %s78, 0
    %p791 = por %p789, %p790
    %p792 = scmp.ne.s32.totalorder %s780, %s781
    %p793 = scmp.eq.s32.totalorder %s79, 1
    %p794 = por %p792, %p793
    %p796 = scmp.ne.s32.totalorder %s781, %s795
    %p797 = scmp.eq.s32.totalorder %s79, 0
    %p798 = por %p796, %p797
    %s799 = ssub.s32 %s73, %s80
    %p800 = scmp.eq.s32.totalorder %s799, 0
    %s802 = sadd.s32 %s801, 1
    %s803 = scalar_select %p800, %s801, %s802
    %p806 = pneg %p800
    %p807 = scmp.eq.s32.totalorder %s73, 1
    %p808 = por %p806, %p807
    %p809 = scmp.ne.s32.totalorder %s801, %s804
    %p810 = scmp.eq.s32.totalorder %s73, 0
    %p811 = por %p809, %p810
    %p812 = scmp.ne.s32.totalorder %s801, %s804
    %p813 = scmp.eq.s32.totalorder %s78, 1
    %p814 = por %p812, %p813
    %p815 = scmp.ne.s32.totalorder %s804, %s805
    %p816 = scmp.eq.s32.totalorder %s78, 0
    %p817 = por %p815, %p816
    %p818 = scmp.ne.s32.totalorder %s804, %s805
    %p819 = scmp.eq.s32.totalorder %s79, 1
    %p820 = por %p818, %p819
    %p822 = scmp.ne.s32.totalorder %s805, %s821
    %p823 = scmp.eq.s32.totalorder %s79, 0
    %p824 = por %p822, %p823
    %p825 = scmp.le.s32.totalorder 1, %s73
    %p826 = scmp.lt.s32.totalorder %s73, 3
    %p827 = pnand %p825, %p826
    %p828 = pneg %p827
    // Predicated region
    $region9: #{transformer_forward.1} parent=5 // pred_check
      _
    $region10: #{transformer_forward.1} parent=5 // pred_check_branch
      %830 = sbr.rel (%p827) target = $region12
    $region11: #{transformer_forward.1} parent=5 // pred_region
      %s831 = ssub.s32 %s73, 1
      // Predicated region
      $region13: #{transformer_forward.1} parent=11 // pred_check
        %p832 = pneg %p224
      $region14: #{transformer_forward.1} parent=11 // pred_check_branch
        %834 = sbr.rel (%p832) target = $region16
      $region15: #{transformer_forward.1} parent=11 // pred_region
        _
      $region16: #{transformer_forward.1} parent=11 // pred_fallthru
        _
      // Predicated region
      $region17: #{transformer_forward.1} parent=11 // pred_check
        %p835 = pneg %p245
      $region18: #{transformer_forward.1} parent=11 // pred_check_branch
        %837 = sbr.rel (%p835) target = $region20
      $region19: #{transformer_forward.1} parent=11 // pred_region
        _
      $region20: #{transformer_forward.1} parent=11 // pred_fallthru
        _
      // Predicated region
      $region21: #{transformer_forward.1} parent=11 // pred_check
        %p838 = pneg %p266
      $region22: #{transformer_forward.1} parent=11 // pred_check_branch
        %840 = sbr.rel (%p838) target = $region24
      $region23: #{transformer_forward.1} parent=11 // pred_region
        _
      $region24: #{transformer_forward.1} parent=11 // pred_fallthru
        _
      // Predicated region
      $region25: #{transformer_forward.1} parent=11 // pred_check
        %p841 = pneg %p287
      $region26: #{transformer_forward.1} parent=11 // pred_check_branch
        %843 = sbr.rel (%p841) target = $region28
      $region27: #{transformer_forward.1} parent=11 // pred_region
        _
      $region28: #{transformer_forward.1} parent=11 // pred_fallthru
        _
      // Predicated region
      $region29: #{transformer_forward.1} parent=11 // pred_check
        %p844 = pneg %p308
      $region30: #{transformer_forward.1} parent=11 // pred_check_branch
        %846 = sbr.rel (%p844) target = $region32
      $region31: #{transformer_forward.1} parent=11 // pred_region
        _
      $region32: #{transformer_forward.1} parent=11 // pred_fallthru
        _
      // Predicated region
      $region33: #{transformer_forward.1} parent=11 // pred_check
        %p847 = pneg %p329
      $region34: #{transformer_forward.1} parent=11 // pred_check_branch
        %849 = sbr.rel (%p847) target = $region36
      $region35: #{transformer_forward.1} parent=11 // pred_region
        _
      $region36: #{transformer_forward.1} parent=11 // pred_fallthru
        _
      // Predicated region
      $region37: #{transformer_forward.1} parent=11 // pred_check
        %p850 = pneg %p350
      $region38: #{transformer_forward.1} parent=11 // pred_check_branch
        %852 = sbr.rel (%p850) target = $region40
      $region39: #{transformer_forward.1} parent=11 // pred_region
        _
      $region40: #{transformer_forward.1} parent=11 // pred_fallthru
        _
      // Predicated region
      $region41: #{transformer_forward.1} parent=11 // pred_check
        %p853 = pneg %p371
      $region42: #{transformer_forward.1} parent=11 // pred_check_branch
        %855 = sbr.rel (%p853) target = $region44
      $region43: #{transformer_forward.1} parent=11 // pred_region
        _
      $region44: #{transformer_forward.1} parent=11 // pred_fallthru
        _
      // Predicated region
      $region45: #{transformer_forward.1} parent=11 // pred_check
        %p856 = pneg %p392
      $region46: #{transformer_forward.1} parent=11 // pred_check_branch
        %858 = sbr.rel (%p856) target = $region48
      $region47: #{transformer_forward.1} parent=11 // pred_region
        _
      $region48: #{transformer_forward.1} parent=11 // pred_fallthru
        _
      // Predicated region
      $region49: #{transformer_forward.1} parent=11 // pred_check
        %p859 = pneg %p413
      $region50: #{transformer_forward.1} parent=11 // pred_check_branch
        %861 = sbr.rel (%p859) target = $region52
      $region51: #{transformer_forward.1} parent=11 // pred_region
        _
      $region52: #{transformer_forward.1} parent=11 // pred_fallthru
        _
      // Predicated region
      $region53: #{transformer_forward.1} parent=11 // pred_check
        %p862 = pneg %p434
      $region54: #{transformer_forward.1} parent=11 // pred_check_branch
        %864 = sbr.rel (%p862) target = $region56
      $region55: #{transformer_forward.1} parent=11 // pred_region
        _
      $region56: #{transformer_forward.1} parent=11 // pred_fallthru
        _
      // Predicated region
      $region57: #{transformer_forward.1} parent=11 // pred_check
        %p865 = pneg %p455
      $region58: #{transformer_forward.1} parent=11 // pred_check_branch
        %867 = sbr.rel (%p865) target = $region60
      $region59: #{transformer_forward.1} parent=11 // pred_region
        _
      $region60: #{transformer_forward.1} parent=11 // pred_fallthru
        _
      // Predicated region
      $region61: #{transformer_forward.1} parent=11 // pred_check
        %p868 = pneg %p476
      $region62: #{transformer_forward.1} parent=11 // pred_check_branch
        %870 = sbr.rel (%p868) target = $region64
      $region63: #{transformer_forward.1} parent=11 // pred_region
        _
      $region64: #{transformer_forward.1} parent=11 // pred_fallthru
        _
      // Predicated region
      $region65: #{transformer_forward.1} parent=11 // pred_check
        %p871 = pneg %p497
      $region66: #{transformer_forward.1} parent=11 // pred_check_branch
        %873 = sbr.rel (%p871) target = $region68
      $region67: #{transformer_forward.1} parent=11 // pred_region
        _
      $region68: #{transformer_forward.1} parent=11 // pred_fallthru
        _
      // Predicated region
      $region69: #{transformer_forward.1} parent=11 // pred_check
        %p874 = pneg %p518
      $region70: #{transformer_forward.1} parent=11 // pred_check_branch
        %876 = sbr.rel (%p874) target = $region72
      $region71: #{transformer_forward.1} parent=11 // pred_region
        _
      $region72: #{transformer_forward.1} parent=11 // pred_fallthru
        _
      // Predicated region
      $region73: #{transformer_forward.1} parent=11 // pred_check
        %p877 = pneg %p539
      $region74: #{transformer_forward.1} parent=11 // pred_check_branch
        %879 = sbr.rel (%p877) target = $region76
      $region75: #{transformer_forward.1} parent=11 // pred_region
        _
      $region76: #{transformer_forward.1} parent=11 // pred_fallthru
        _
      // Predicated region
      $region77: #{transformer_forward.1} parent=11 // pred_check
        %p880 = pneg %p560
      $region78: #{transformer_forward.1} parent=11 // pred_check_branch
        %882 = sbr.rel (%p880) target = $region80
      $region79: #{transformer_forward.1} parent=11 // pred_region
        _
      $region80: #{transformer_forward.1} parent=11 // pred_fallthru
        _
      // Predicated region
      $region81: #{transformer_forward.1} parent=11 // pred_check
        %p883 = pneg %p581
      $region82: #{transformer_forward.1} parent=11 // pred_check_branch
        %885 = sbr.rel (%p883) target = $region84
      $region83: #{transformer_forward.1} parent=11 // pred_region
        _
      $region84: #{transformer_forward.1} parent=11 // pred_fallthru
        _
      // Predicated region
      $region85: #{transformer_forward.1} parent=11 // pred_check
        %p886 = pneg %p602
      $region86: #{transformer_forward.1} parent=11 // pred_check_branch
        %888 = sbr.rel (%p886) target = $region88
      $region87: #{transformer_forward.1} parent=11 // pred_region
        _
      $region88: #{transformer_forward.1} parent=11 // pred_fallthru
        _
      // Predicated region
      $region89: #{transformer_forward.1} parent=11 // pred_check
        %p889 = pneg %p623
      $region90: #{transformer_forward.1} parent=11 // pred_check_branch
        %891 = sbr.rel (%p889) target = $region92
      $region91: #{transformer_forward.1} parent=11 // pred_region
        _
      $region92: #{transformer_forward.1} parent=11 // pred_fallthru
        _
      // Predicated region
      $region93: #{transformer_forward.1} parent=11 // pred_check
        %p892 = pneg %p644
      $region94: #{transformer_forward.1} parent=11 // pred_check_branch
        %894 = sbr.rel (%p892) target = $region96
      $region95: #{transformer_forward.1} parent=11 // pred_region
        _
      $region96: #{transformer_forward.1} parent=11 // pred_fallthru
        _
      // Predicated region
      $region97: #{transformer_forward.1} parent=11 // pred_check
        %p895 = pneg %p665
      $region98: #{transformer_forward.1} parent=11 // pred_check_branch
        %897 = sbr.rel (%p895) target = $region100
      $region99: #{transformer_forward.1} parent=11 // pred_region
        _
      $region100: #{transformer_forward.1} parent=11 // pred_fallthru
        _
      // Predicated region
      $region101: #{transformer_forward.1} parent=11 // pred_check
        %p898 = pneg %p686
      $region102: #{transformer_forward.1} parent=11 // pred_check_branch
        %900 = sbr.rel (%p898) target = $region104
      $region103: #{transformer_forward.1} parent=11 // pred_region
        _
      $region104: #{transformer_forward.1} parent=11 // pred_fallthru
        _
      // Predicated region
      $region105: #{transformer_forward.1} parent=11 // pred_check
        %p901 = pneg %p707
      $region106: #{transformer_forward.1} parent=11 // pred_check_branch
        %903 = sbr.rel (%p901) target = $region108
      $region107: #{transformer_forward.1} parent=11 // pred_region
        _
      $region108: #{transformer_forward.1} parent=11 // pred_fallthru
        _
      // Predicated region
      $region109: #{transformer_forward.1} parent=11 // pred_check
        %p904 = pneg %p728
      $region110: #{transformer_forward.1} parent=11 // pred_check_branch
        %906 = sbr.rel (%p904) target = $region112
      $region111: #{transformer_forward.1} parent=11 // pred_region
        _
      $region112: #{transformer_forward.1} parent=11 // pred_fallthru
        _
      // Predicated region
      $region113: #{transformer_forward.1} parent=11 // pred_check
        %p907 = pneg %p749
      $region114: #{transformer_forward.1} parent=11 // pred_check_branch
        %909 = sbr.rel (%p907) target = $region116
      $region115: #{transformer_forward.1} parent=11 // pred_region
        _
      $region116: #{transformer_forward.1} parent=11 // pred_fallthru
        _
      // Predicated region
      $region117: #{transformer_forward.1} parent=11 // pred_check
        %p910 = pneg %p770
      $region118: #{transformer_forward.1} parent=11 // pred_check_branch
        %912 = sbr.rel (%p910) target = $region120
      $region119: #{transformer_forward.1} parent=11 // pred_region
        _
      $region120: #{transformer_forward.1} parent=11 // pred_fallthru
        _
      // Predicated region
      $region121: #{transformer_forward.1} parent=11 // pred_check
        %p913 = pneg %p791
      $region122: #{transformer_forward.1} parent=11 // pred_check_branch
        %915 = sbr.rel (%p913) target = $region124
      $region123: #{transformer_forward.1} parent=11 // pred_region
        _
      $region124: #{transformer_forward.1} parent=11 // pred_fallthru
        _
    $region12: #{transformer_forward.1} parent=5 // pred_fallthru
      _
    %p916 = scmp.lt.s32.totalorder %s73, 2
    // Predicated region
    $region125: #{transformer_forward.1} parent=5 // pred_check
      %p917 = pneg %p916
    $region126: #{transformer_forward.1} parent=5 // pred_check_branch
      %919 = sbr.rel (%p917) target = $region128
    $region127: #{transformer_forward.1} parent=5 // pred_region
      // Predicated region
      $region129: #{transformer_forward.1} parent=127 // pred_check
        %p920 = pneg %p93
      $region130: #{transformer_forward.1} parent=127 // pred_check_branch
        %922 = sbr.rel (%p920) target = $region132
      $region131: #{transformer_forward.1} parent=127 // pred_region
        %p923 = scmp.lt.s32.totalorder %s73, 1
        %s924 = scalar_select %p923, %s73, 1
        %s925 = smul.addr %s924, 8
        %s926 = scalar_lea.vmem %s1, %s925
      $region132: #{transformer_forward.1} parent=127 // pred_fallthru
        _
      // Predicated region
      $region133: #{transformer_forward.1} parent=127 // pred_check
        %p927 = pneg %p119
      $region134: #{transformer_forward.1} parent=127 // pred_check_branch
        %929 = sbr.rel (%p927) target = $region136
      $region135: #{transformer_forward.1} parent=127 // pred_region
        %p930 = scmp.lt.s32.totalorder %s73, 1
        %s931 = scalar_select %p930, %s73, 1
        %s932 = smul.addr %s931, 8
        %s933 = scalar_lea.vmem %s3, %s932
      $region136: #{transformer_forward.1} parent=127 // pred_fallthru
        _
      // Predicated region
      $region137: #{transformer_forward.1} parent=127 // pred_check
        %p934 = pneg %p145
      $region138: #{transformer_forward.1} parent=127 // pred_check_branch
        %936 = sbr.rel (%p934) target = $region140
      $region139: #{transformer_forward.1} parent=127 // pred_region
        %p937 = scmp.lt.s32.totalorder %s73, 1
        %s938 = scalar_select %p937, %s73, 1
        %s939 = smul.addr %s938, 8
        %s940 = smul.addr %s939, 8
        %s941 = scalar_lea.vmem %s5, %s940
      $region140: #{transformer_forward.1} parent=127 // pred_fallthru
        _
      // Predicated region
      $region141: #{transformer_forward.1} parent=127 // pred_check
        %p942 = pneg %p171
      $region142: #{transformer_forward.1} parent=127 // pred_check_branch
        %944 = sbr.rel (%p942) target = $region144
      $region143: #{transformer_forward.1} parent=127 // pred_region
        %p945 = scmp.lt.s32.totalorder %s73, 1
        %s946 = scalar_select %p945, %s73, 1
        %s947 = smul.addr %s946, 8
        %s948 = smul.addr %s947, 8
        %s949 = scalar_lea.vmem %s7, %s948
      $region144: #{transformer_forward.1} parent=127 // pred_fallthru
        _
      // Predicated region
      $region145: #{transformer_forward.1} parent=127 // pred_check
        %p950 = pneg %p197
      $region146: #{transformer_forward.1} parent=127 // pred_check_branch
        %952 = sbr.rel (%p950) target = $region148
      $region147: #{transformer_forward.1} parent=127 // pred_region
        %p953 = scmp.lt.s32.totalorder %s73, 1
        %s954 = scalar_select %p953, %s73, 1
        %s955 = scalar_lea.vmem %s9, %s954
      $region148: #{transformer_forward.1} parent=127 // pred_fallthru
        _
    $region128: #{transformer_forward.1} parent=5 // pred_fallthru
      _
    %p956 = scmp.le.s32.totalorder 1, %s73
    %p957 = scmp.lt.s32.totalorder %s73, 3
    %p958 = pnand %p956, %p957
    %p959 = pneg %p958
    // Predicated region
    $region149: #{transformer_forward.1} parent=5 // pred_check
      _
    $region150: #{transformer_forward.1} parent=5 // pred_check_branch
      %961 = sbr.rel (%p958) target = $region152
    $region151: #{transformer_forward.1} parent=5 // pred_region
      %s962 = ssub.s32 %s73, 1
      %p963 = scmp.lt.s32.totalorder %s78, 1
      %s964 = scalar_select %p963, %s78, 1
      %s965 = smul.addr %s964, 8
      %s966 = scalar_lea.vmem %s1, %s965
      %p967 = pneg %p99
      %p968 = pneg %p96
      %p969 = scmp.lt.s32.totalorder %s78, 1
      %s970 = scalar_select %p969, %s78, 1
      %s971 = smul.addr %s970, 8
      %s972 = scalar_lea.vmem %s3, %s971
      %p973 = pneg %p125
      %p974 = pneg %p122
      %p975 = scmp.lt.s32.totalorder %s78, 1
      %s976 = scalar_select %p975, %s78, 1
      %s977 = smul.addr %s976, 8
      %s978 = smul.addr %s977, 8
      %s979 = scalar_lea.vmem %s5, %s978
      %p980 = pneg %p151
      %p981 = pneg %p148
      %p982 = scmp.lt.s32.totalorder %s78, 1
      %s983 = scalar_select %p982, %s78, 1
      %s984 = smul.addr %s983, 8
      %s985 = smul.addr %s984, 8
      %s986 = scalar_lea.vmem %s7, %s985
      %p987 = pneg %p177
      %p988 = pneg %p174
      %p989 = scmp.lt.s32.totalorder %s78, 1
      %s990 = scalar_select %p989, %s78, 1
      %s991 = scalar_lea.vmem %s9, %s990
      %p992 = pneg %p203
      %p993 = pneg %p200
      %p994 = pneg %p224
      %p995 = pneg %p221
      %p996 = pneg %p245
      %p997 = pneg %p242
      %p998 = pneg %p266
      %p999 = pneg %p263
      %p1000 = pneg %p287
      %p1001 = pneg %p284
      %p1002 = pneg %p308
      %p1003 = pneg %p305
      %p1004 = pneg %p329
      %p1005 = pneg %p326
      %p1006 = pneg %p350
      %p1007 = pneg %p347
      %p1008 = pneg %p371
      %p1009 = pneg %p368
      %p1010 = pneg %p392
      %p1011 = pneg %p389
      %p1012 = pneg %p413
      %p1013 = pneg %p410
      %p1014 = pneg %p434
      %p1015 = pneg %p431
      %p1016 = pneg %p455
      %p1017 = pneg %p452
      %p1018 = pneg %p476
      %p1019 = pneg %p473
      %p1020 = pneg %p497
      %p1021 = pneg %p494
      %p1022 = pneg %p518
      %p1023 = pneg %p515
      %p1024 = pneg %p539
      %p1025 = pneg %p536
      %p1026 = pneg %p560
      %p1027 = pneg %p557
      %p1028 = pneg %p581
      %p1029 = pneg %p578
      %p1030 = pneg %p602
      %p1031 = pneg %p599
      %p1032 = pneg %p623
      %p1033 = pneg %p620
      %p1034 = pneg %p644
      %p1035 = pneg %p641
      %p1036 = pneg %p665
      %p1037 = pneg %p662
      %p1038 = pneg %p686
      %p1039 = pneg %p683
      %p1040 = pneg %p707
      %p1041 = pneg %p704
      %p1042 = pneg %p728
      %p1043 = pneg %p725
      %p1044 = pneg %p749
      %p1045 = pneg %p746
      %p1046 = pneg %p770
      %p1047 = pneg %p767
      %p1048 = pneg %p791
      %p1049 = pneg %p788
      %p1050 = pneg %p817
      %p1051 = pneg %p814
      %p1052 = scmp.lt.s32.totalorder %s78, 1
      %s1053 = scalar_select %p1052, %s78, 1
      %s1054 = smul.addr %s1053, 8
      %s1055 = scalar_lea.vmem %s67, %s1054
      %p1056 = scmp.lt.s32.totalorder %s78, 1
      %s1057 = scalar_select %p1056, %s78, 1
      %s1058 = smul.addr %s1057, 8
      %s1059 = scalar_lea.vmem %s1, %s1058
      %p1060 = scmp.lt.s32.totalorder %s78, 1
      %s1061 = scalar_select %p1060, %s78, 1
      %s1062 = smul.addr %s1061, 8
      %s1063 = scalar_lea.vmem %s3, %s1062
      %p1064 = scmp.lt.s32.totalorder %s78, 1
      %s1065 = scalar_select %p1064, %s78, 1
      %s1066 = smul.addr %s1065, 8
      %s1067 = smul.addr %s1066, 8
      %s1068 = scalar_lea.vmem %s5, %s1067
      %p1069 = scmp.lt.s32.totalorder %s78, 1
      %s1070 = scalar_select %p1069, %s78, 1
      %s1071 = smul.addr %s1070, 8
      %s1072 = smul.addr %s1071, 8
      %s1073 = scalar_lea.vmem %s7, %s1072
      %p1074 = scmp.lt.s32.totalorder %s78, 1
      %s1075 = scalar_select %p1074, %s78, 1
      %s1076 = scalar_lea.vmem %s9, %s1075
      %p1077 = scmp.lt.s32.totalorder %s78, 1
      %s1078 = scalar_select %p1077, %s78, 1
      %s1079 = smul.addr %s1078, 8
      %s1080 = scalar_lea.vmem %s67, %s1079
      %v1082 = vld [vmem:[%s65] sm:$0xff]
      %v1083 = vld [vmem:[%s65 + $0x8] sm:$0xff]
      %v1084 = vld [vmem:[%s65 + $0x10] sm:$0xff]
      %v1085 = vld [vmem:[%s65 + $0x18] sm:$0xff]
      %v1086 = vld [vmem:[%s65 + $0x20] sm:$0xff]
      %v1087 = vld [vmem:[%s65 + $0x28] sm:$0xff]
      %v1088 = vld [vmem:[%s65 + $0x30] sm:$0xff]
      %v1089 = vld [vmem:[%s1059] sm:$0xff]
      %vm1090 = vcmask 261120
      %v1091 = vsel %vm1090, %v1089, 0.0
      %1092 = vadd.xlane.f32.xlu0 %v1091
      %v1093 = vpop.xlane.xlu0 %1092
      %v1094 = vrcp.pop 32.0
      %v1095 = vmul.f32 %v1093, %v1094
      %v1096 = vsub.f32 %v1089, %v1095
      %v1097 = vmul.f32 %v1096, %v1096
      %v1098 = vsel %vm1090, %v1097, 0.0
      %1099 = vadd.xlane.f32.xlu0 %v1098
      %v1100 = vpop.xlane.xlu0 %1099
      %v1101 = vmul.f32 %v1100, %v1094
      %v1102 = vadd.f32 %v1101, 1e-05
      %v1103 = vrsqrt.pop %v1102
      %v1104 = vmul.f32 %v1096, %v1103
      %v1105 = vlaneseq
      %v1106 = vshrl.u32 %v1105, 7
      %v1107 = vsub.s32 0, %v1106
      %v1108 = vrot.slane %v1082, %v1107
      %v1109 = vmul.f32 %v1104, %v1108
      %v1110 = vlaneseq
      %v1111 = vshrl.u32 %v1110, 7
      %v1112 = vsub.s32 1, %v1111
      %v1113 = vrot.slane %v1082, %v1112
      %v1114 = vadd.f32 %v1109, %v1113
      %v1115 = vld [vmem:[%s1063] sm:$0xff]
      %v1116 = vld [vmem:[%s61] sm:$0xf]
      %v1117 = vpack.c.bf16 %v1115, %v1115
      %v1118 = vlaneseq
      %v1119 = vshrl.u32 %v1118, 7
      %v1120 = vsub.s32 2, %v1119
      %v1121 = vrot.slane %v1082, %v1120
      %vm1122 = vcmask 64512
      %v1124 = vsel %vm1122, %v1117, 0
      %vm1126 = vcmask 1043456
      %v1128 = vsel %vm1126, %v1116, 0
      %1130 = vmatprep.subr.bf16.mxu0 0
      %1131 = vmatpush1.bf16.msra.mxu0 %v1128
      %1132 = vmatprep.subr.bf16.mxu0 0
      %1133 = vmatpush1.bf16.msra.mxu0 0
      %1134 = vmatprep.subr.bf16.mxu0 0
      %1135 = vmatpush1.bf16.msra.mxu0 0
      %1136 = vmatprep.subr.bf16.mxu0 0
      %1137 = vmatpush1.bf16.msra.mxu0 0
      %1138 = vmatprep.subr.bf16.mxu0 0
      %1139 = vmatpush1.bf16.msra.mxu0 0
      %1140 = vmatprep.subr.bf16.mxu0 0
      %1141 = vmatpush1.bf16.msra.mxu0 0
      %1142 = vmatprep.subr.bf16.mxu0 0
      %1143 = vmatpush1.bf16.msra.mxu0 0
      %1144 = vmatprep.subr.bf16.mxu0 0
      %1145 = vmatpush1.bf16.msra.mxu0 0
      %1146 = vmatprep.subr.bf16.mxu0 0
      %1147 = vmatpush1.bf16.msra.mxu0 0
      %1148 = vmatprep.subr.bf16.mxu0 0
      %1149 = vmatpush1.bf16.msra.mxu0 0
      %1150 = vmatprep.subr.bf16.mxu0 0
      %1151 = vmatpush1.bf16.msra.mxu0 0
      %1152 = vmatprep.subr.bf16.mxu0 0
      %1153 = vmatpush1.bf16.msra.mxu0 0
      %1154 = vmatprep.subr.bf16.mxu0 0
      %1155 = vmatpush1.bf16.msra.mxu0 0
      %1156 = vmatprep.subr.bf16.mxu0 0
      %1157 = vmatpush1.bf16.msra.mxu0 0
      %1158 = vmatprep.subr.bf16.mxu0 0
      %1159 = vmatpush1.bf16.msra.mxu0 0
      %1160 = vmatprep.subr.bf16.mxu0 0
      %1161 = vmatpush1.bf16.msra.mxu0 0
      %1162 = vmatprep.mubr.bf16.mxu0 0
      %1163 = vmatmul.mubr.bf16.gmra.mrb[0].mxu0 %v1124
      %v1164 = vpop.f32.mrb[0].mxu0
      %v1165 = vadd.f32 %v1121, %v1164
      %v1166 = vpop.f32.mrb[0].mxu0
      %v1167 = vpop.f32.mrb[0].mxu0
      %v1168 = vpop.f32.mrb[0].mxu0
      %1169 = vdwg.mxu0
      %v1170 = vsel %vm1090, %v1165, 0.0
      %1171 = vadd.xlane.f32.xlu0 %v1170
      %v1172 = vpop.xlane.xlu0 %1171
      %v1173 = vmul.f32 %v1172, %v1094
      %v1174 = vsub.f32 %v1165, %v1173
      %v1175 = vmul.f32 %v1174, %v1174
      %v1176 = vsel %vm1090, %v1175, 0.0
      %1177 = vadd.xlane.f32.xlu0 %v1176
      %v1178 = vpop.xlane.xlu0 %1177
      %v1179 = vmul.f32 %v1178, %v1094
      %v1180 = vadd.f32 %v1179, 1e-05
      %v1181 = vrsqrt.pop %v1180
      %v1182 = vmul.f32 %v1174, %v1181
      %v1183 = vlaneseq
      %v1184 = vshrl.u32 %v1183, 7
      %v1185 = vsub.s32 3, %v1184
      %v1186 = vrot.slane %v1082, %v1185
      %v1187 = vmul.f32 %v1182, %v1186
      %v1188 = vlaneseq
      %v1189 = vshrl.u32 %v1188, 7
      %v1190 = vsub.s32 4, %v1189
      %v1191 = vrot.slane %v1082, %v1190
      %v1192 = vadd.f32 %v1187, %v1191
      %1194 = vrot.lane.b32.xlu0 %v1192, 32
      %v1195 = vpop.permute.xlu0 %1194
      %v1197 = vsel %vm1090, %v1114, %v1195
      %v1198 = vld [vmem:[%s59] sm:$0xf]
      %v1199 = vld [vmem:[%s59 + $0x4] sm:$0xf]
      %v1200 = vld [vmem:[%s59 + $0x8] sm:$0xf]
      %v1201 = vld [vmem:[%s59 + $0xc] sm:$0xf]
      %v1202 = vld [vmem:[%s59 + $0x10] sm:$0xf]
      %v1203 = vld [vmem:[%s59 + $0x14] sm:$0xf]
      %v1204 = vld [vmem:[%s59 + $0x18] sm:$0xf]
      %v1205 = vld [vmem:[%s59 + $0x1c] sm:$0xf]
      %v1206 = vpack.c.bf16 %v1197, %v1197
      %v1207 = vlaneseq
      %v1208 = vshrl.u32 %v1207, 7
      %v1209 = vsub.s32 5, %v1208
      %v1210 = vrot.slane %v1082, %v1209
      %v1219 = vunpack.c.l.b16 %v1198
      %v1220 = vunpack.c.l.b16 %v1199
      %v1221 = vunpack.c.l.b16 %v1200
      %v1222 = vunpack.c.l.b16 %v1201
      %v1223 = vunpack.c.l.b16 %v1202
      %v1224 = vunpack.c.l.b16 %v1203
      %v1225 = vunpack.c.l.b16 %v1204
      %v1226 = vunpack.c.l.b16 %v1205
      %v1227 = vpack.c.b16 %v1220, %v1219
      %v1228 = vpack.c.b16 %v1222, %v1221
      %v1229 = vpack.c.b16 %v1224, %v1223
      %v1230 = vpack.c.b16 %v1226, %v1225
      %vm1235 = vcmask 523264
      %v1237 = vsel %vm1235, %v1206, 0
      %1239 = vmatprep.subr.bf16.mxu0 0
      %1240 = vmatpush1.bf16.msra.mxu0 %v1227
      %1241 = vmatprep.subr.bf16.mxu0 0
      %1242 = vmatpush1.bf16.msra.mxu0 %v1228
      %1243 = vmatprep.subr.bf16.mxu0 0
      %1244 = vmatpush1.bf16.msra.mxu0 %v1229
      %1245 = vmatprep.subr.bf16.mxu0 0
      %1246 = vmatpush1.bf16.msra.mxu0 %v1230
      %1247 = vmatprep.subr.bf16.mxu0 0
      %1248 = vmatpush1.bf16.msra.mxu0 0
      %1249 = vmatprep.subr.bf16.mxu0 0
      %1250 = vmatpush1.bf16.msra.mxu0 0
      %1251 = vmatprep.subr.bf16.mxu0 0
      %1252 = vmatpush1.bf16.msra.mxu0 0
      %1253 = vmatprep.subr.bf16.mxu0 0
      %1254 = vmatpush1.bf16.msra.mxu0 0
      %1255 = vmatprep.subr.bf16.mxu0 0
      %1256 = vmatpush1.bf16.msra.mxu0 0
      %1257 = vmatprep.subr.bf16.mxu0 0
      %1258 = vmatpush1.bf16.msra.mxu0 0
      %1259 = vmatprep.subr.bf16.mxu0 0
      %1260 = vmatpush1.bf16.msra.mxu0 0
      %1261 = vmatprep.subr.bf16.mxu0 0
      %1262 = vmatpush1.bf16.msra.mxu0 0
      %1263 = vmatprep.subr.bf16.mxu0 0
      %1264 = vmatpush1.bf16.msra.mxu0 0
      %1265 = vmatprep.subr.bf16.mxu0 0
      %1266 = vmatpush1.bf16.msra.mxu0 0
      %1267 = vmatprep.subr.bf16.mxu0 0
      %1268 = vmatpush1.bf16.msra.mxu0 0
      %1269 = vmatprep.subr.bf16.mxu0 0
      %1270 = vmatpush1.bf16.msra.mxu0 0
      %1271 = vmatprep.mubr.bf16.mxu0 0
      %1272 = vmatmul.mubr.bf16.gmra.mrb[0].mxu0 %v1237
      %v1273 = vpop.f32.mrb[0].mxu0
      %v1274 = vadd.f32 %v1210, %v1273
      %v1275 = vpop.f32.mrb[0].mxu0
      %v1276 = vpop.f32.mrb[0].mxu0
      %v1277 = vpop.f32.mrb[0].mxu0
      %1278 = vdwg.mxu0
      %v1279 = vld [vmem:[%s51] sm:$0xf]
      %v1280 = vld [vmem:[%s51 + $0x4] sm:$0xf]
      %v1281 = vld [vmem:[%s51 + $0x8] sm:$0xf]
      %v1282 = vld [vmem:[%s51 + $0xc] sm:$0xf]
      %v1283 = vld [vmem:[%s53] sm:$0xf]
      %v1284 = vld [vmem:[%s53 + $0x4] sm:$0xf]
      %v1285 = vld [vmem:[%s53 + $0x8] sm:$0xf]
      %v1286 = vld [vmem:[%s53 + $0xc] sm:$0xf]
      %v1287 = vld [vmem:[%s53 + $0x10] sm:$0xf]
      %v1288 = vld [vmem:[%s53 + $0x14] sm:$0xf]
      %v1289 = vld [vmem:[%s53 + $0x18] sm:$0xf]
      %v1290 = vld [vmem:[%s53 + $0x1c] sm:$0xf]
      %v1291 = vld [vmem:[%s1068] sm:$0xff]
      %v1292 = vld [vmem:[%s1068 + $0x8] sm:$0xff]
      %v1293 = vld [vmem:[%s1068 + $0x10] sm:$0xff]
      %v1294 = vld [vmem:[%s1068 + $0x18] sm:$0xff]
      %v1295 = vld [vmem:[%s1068 + $0x20] sm:$0xff]
      %v1296 = vld [vmem:[%s1068 + $0x28] sm:$0xff]
      %v1297 = vld [vmem:[%s1068 + $0x30] sm:$0xff]
      %v1298 = vld [vmem:[%s1068 + $0x38] sm:$0xff]
      %v1300 = vcombine.high %v1274, %v1274
      %v1302 = vunpack.c.l.s4 1966171168
      %v1303 = vunpack.c.0.s8 %v1302
      %v1304 = vlaneseq
      %v1305 = vshrl.u32 %v1304, 7
      %v1306 = vsub.s32 %v1303, %v1305
      %v1307 = vrot.slane %v1274, %v1306
      %v1309 = vunpack.c.l.s4 1966171168
      %v1310 = vunpack.c.0.s8 %v1309
      %v1311 = vlaneseq
      %v1312 = vshrl.u32 %v1311, 7
      %v1313 = vsub.s32 %v1310, %v1312
      %v1314 = vrot.slane %v1300, %v1313
      %v1315 = vcombine.high %v1307, %v1307
      %v1316 = vcombine.high %v1314, %v1314
      %v1318 = vunpack.c.l.s4 1966171168
      %v1319 = vunpack.c.0.s8 %v1318
      %v1320 = vlaneseq
      %v1321 = vshrl.u32 %v1320, 7
      %v1322 = vsub.s32 %v1319, %v1321
      %v1323 = vrot.slane %v1307, %v1322
      %v1325 = vunpack.c.l.s4 1966171168
      %v1326 = vunpack.c.0.s8 %v1325
      %v1327 = vlaneseq
      %v1328 = vshrl.u32 %v1327, 7
      %v1329 = vsub.s32 %v1326, %v1328
      %v1330 = vrot.slane %v1314, %v1329
      %v1332 = vunpack.c.l.s4 1966171168
      %v1333 = vunpack.c.0.s8 %v1332
      %v1334 = vlaneseq
      %v1335 = vshrl.u32 %v1334, 7
      %v1336 = vsub.s32 %v1333, %v1335
      %v1337 = vrot.slane %v1315, %v1336
      %v1339 = vunpack.c.l.s4 1966171168
      %v1340 = vunpack.c.0.s8 %v1339
      %v1341 = vlaneseq
      %v1342 = vshrl.u32 %v1341, 7
      %v1343 = vsub.s32 %v1340, %v1342
      %v1344 = vrot.slane %v1316, %v1343
      %v1345 = vcombine.high %v1323, %v1323
      %v1346 = vcombine.high %v1330, %v1330
      %v1347 = vcombine.high %v1337, %v1337
      %v1348 = vcombine.high %v1344, %v1344
      %v1349 = vlaneseq
      %v1350 = vshrl.u32 %v1349, 7
      %v1351 = vsub.s32 0, %v1350
      %v1352 = vrot.slane %v1323, %v1351
      %v1353 = vlaneseq
      %v1354 = vshrl.u32 %v1353, 7
      %v1355 = vsub.s32 0, %v1354
      %v1356 = vrot.slane %v1337, %v1355
      %v1357 = vlaneseq
      %v1358 = vshrl.u32 %v1357, 7
      %v1359 = vsub.s32 0, %v1358
      %v1360 = vrot.slane %v1345, %v1359
      %v1361 = vlaneseq
      %v1362 = vshrl.u32 %v1361, 7
      %v1363 = vsub.s32 0, %v1362
      %v1364 = vrot.slane %v1347, %v1363
      %v1365 = vlaneseq
      %v1366 = vshrl.u32 %v1365, 7
      %v1367 = vsub.s32 0, %v1366
      %v1368 = vrot.slane %v1330, %v1367
      %v1369 = vlaneseq
      %v1370 = vshrl.u32 %v1369, 7
      %v1371 = vsub.s32 0, %v1370
      %v1372 = vrot.slane %v1344, %v1371
      %v1373 = vlaneseq
      %v1374 = vshrl.u32 %v1373, 7
      %v1375 = vsub.s32 0, %v1374
      %v1376 = vrot.slane %v1346, %v1375
      %v1377 = vlaneseq
      %v1378 = vshrl.u32 %v1377, 7
      %v1379 = vsub.s32 0, %v1378
      %v1380 = vrot.slane %v1348, %v1379
      %v1389 = vmul.f32 %v1352, %v1291
      %v1390 = vmul.f32 %v1356, %v1292
      %v1391 = vmul.f32 %v1360, %v1293
      %v1392 = vmul.f32 %v1364, %v1294
      %v1393 = vmul.f32 %v1368, %v1295
      %v1394 = vmul.f32 %v1372, %v1296
      %v1395 = vmul.f32 %v1376, %v1297
      %v1396 = vmul.f32 %v1380, %v1298
      %v1397 = vsel %vm1122, %v1389, 0.0
      %1398 = vadd.xlane.f32.xlu0 %v1397
      %v1399 = vpop.xlane.xlu0 %1398
      %v1400 = vsel %vm1122, %v1390, 0.0
      %1401 = vadd.xlane.f32.xlu0 %v1400
      %v1402 = vpop.xlane.xlu0 %1401
      %v1403 = vsel %vm1122, %v1391, 0.0
      %1404 = vadd.xlane.f32.xlu0 %v1403
      %v1405 = vpop.xlane.xlu0 %1404
      %v1406 = vsel %vm1122, %v1392, 0.0
      %1407 = vadd.xlane.f32.xlu0 %v1406
      %v1408 = vpop.xlane.xlu0 %1407
      %v1409 = vsel %vm1122, %v1393, 0.0
      %1410 = vadd.xlane.f32.xlu0 %v1409
      %v1411 = vpop.xlane.xlu0 %1410
      %v1412 = vsel %vm1122, %v1394, 0.0
      %1413 = vadd.xlane.f32.xlu0 %v1412
      %v1414 = vpop.xlane.xlu0 %1413
      %v1415 = vsel %vm1122, %v1395, 0.0
      %1416 = vadd.xlane.f32.xlu0 %v1415
      %v1417 = vpop.xlane.xlu0 %1416
      %v1418 = vsel %vm1122, %v1396, 0.0
      %1419 = vadd.xlane.f32.xlu0 %v1418
      %v1420 = vpop.xlane.xlu0 %1419
      %v1421 = vsel %vm1122, %v1274, 0
      %1423 = vmatprep.subr.mxu0 0.0
      %1424 = vmatpush1.xpose.msra.mxu0 %v1421
      %1425 = vmatprep.subr.mxu0 0.0
      %1426 = vmatpush1.xpose.msra.mxu0 0.0
      %1427 = vmatprep.subr.mxu0 0.0
      %1428 = vmatpush1.xpose.msra.mxu0 0.0
      %1429 = vmatprep.subr.mxu0 0.0
      %1430 = vmatpush1.xpose.msra.mxu0 0.0
      %1431 = vmatprep.subr.mxu0 0.0
      %1432 = vmatpush1.xpose.msra.mxu0 0.0
      %1433 = vmatprep.subr.mxu0 0.0
      %1434 = vmatpush1.xpose.msra.mxu0 0.0
      %1435 = vmatprep.subr.mxu0 0.0
      %1436 = vmatpush1.xpose.msra.mxu0 0.0
      %1437 = vmatprep.subr.mxu0 0.0
      %1438 = vmatpush1.xpose.msra.mxu0 0.0
      %1439 = vmatprep.subr.mxu0 0.0
      %1440 = vmatpush1.xpose.msra.mxu0 0.0
      %1441 = vmatprep.subr.mxu0 0.0
      %1442 = vmatpush1.xpose.msra.mxu0 0.0
      %1443 = vmatprep.subr.mxu0 0.0
      %1444 = vmatpush1.xpose.msra.mxu0 0.0
      %1445 = vmatprep.subr.mxu0 0.0
      %1446 = vmatpush1.xpose.msra.mxu0 0.0
      %1447 = vmatprep.subr.mxu0 0.0
      %1448 = vmatpush1.xpose.msra.mxu0 0.0
      %1449 = vmatprep.subr.mxu0 0.0
      %1450 = vmatpush1.xpose.msra.mxu0 0.0
      %1451 = vmatprep.subr.mxu0 0.0
      %1452 = vmatpush1.xpose.msra.mxu0 0.0
      %1453 = vmatprep.subr.mxu0 0.0
      %1454 = vmatpush1.xpose.msra.mxu0 0.0
      %1455 = vmatprep.subr.mxu0 0.0
      %1456 = vmatpush1.xpose.msra.mxu0 0.0
      %1457 = vmatprep.subr.mxu0 0.0
      %1458 = vmatpush1.xpose.msra.mxu0 0.0
      %1459 = vmatprep.subr.mxu0 0.0
      %1460 = vmatpush1.xpose.msra.mxu0 0.0
      %1461 = vmatprep.subr.mxu0 0.0
      %1462 = vmatpush1.xpose.msra.mxu0 0.0
      %1463 = vmatprep.subr.mxu0 0.0
      %1464 = vmatpush1.xpose.msra.mxu0 0.0
      %1465 = vmatprep.subr.mxu0 0.0
      %1466 = vmatpush1.xpose.msra.mxu0 0.0
      %1467 = vmatprep.subr.mxu0 0.0
      %1468 = vmatpush1.xpose.msra.mxu0 0.0
      %1469 = vmatprep.subr.mxu0 0.0
      %1470 = vmatpush1.xpose.msra.mxu0 0.0
      %1471 = vmatprep.subr.mxu0 0.0
      %1472 = vmatpush1.xpose.msra.mxu0 0.0
      %1473 = vmatprep.subr.mxu0 0.0
      %1474 = vmatpush1.xpose.msra.mxu0 0.0
      %1475 = vmatprep.subr.mxu0 0.0
      %1476 = vmatpush1.xpose.msra.mxu0 0.0
      %1477 = vmatprep.subr.mxu0 0.0
      %1478 = vmatpush1.xpose.msra.mxu0 0.0
      %1479 = vmatprep.subr.mxu0 0.0
      %1480 = vmatpush1.xpose.msra.mxu0 0.0
      %1481 = vmatprep.subr.mxu0 0.0
      %1482 = vmatpush1.xpose.msra.mxu0 0.0
      %1483 = vmatprep.subr.mxu0 0.0
      %1484 = vmatpush1.xpose.msra.mxu0 0.0
      %1485 = vmatprep.subr.mxu0 0.0
      %1486 = vmatpush1.xpose.msra.mxu0 0.0
      %1487 = vmatprep.mubr.f32.mxu0 0.0
      %1488 = vmatmul.mubr.f32.gmra.mrb[0].mxu0 %v1421
      %v1489 = vpop.f32.mrb[0].mxu0
      %v1490 = vadd.f32 0.0, %v1489
      %v1491 = vpop.f32.mrb[0].mxu0
      %1492 = vdwg.mxu0
      %v1493 = vmul.f32 %v1490, 0.35355338
      %v1502 = vlaneseq
      %v1503 = vand.u32 %v1502, 127
      %v1504 = vlaneseq
      %v1505 = vshrl.u32 %v1504, 7
      %v1506 = vsub.s32 %v1503, %v1505
      %v1507 = vrot.slane %v1399, %v1506
      %v1508 = vlaneseq
      %v1509 = vshrl.u32 %v1508, 7
      %v1510 = vsub.s32 %v1503, %v1509
      %v1511 = vrot.slane %v1402, %v1510
      %v1512 = vlaneseq
      %v1513 = vshrl.u32 %v1512, 7
      %v1514 = vsub.s32 %v1503, %v1513
      %v1515 = vrot.slane %v1405, %v1514
      %v1516 = vlaneseq
      %v1517 = vshrl.u32 %v1516, 7
      %v1518 = vsub.s32 %v1503, %v1517
      %v1519 = vrot.slane %v1408, %v1518
      %v1520 = vlaneseq
      %v1521 = vshrl.u32 %v1520, 7
      %v1522 = vsub.s32 %v1503, %v1521
      %v1523 = vrot.slane %v1411, %v1522
      %v1524 = vlaneseq
      %v1525 = vshrl.u32 %v1524, 7
      %v1526 = vsub.s32 %v1503, %v1525
      %v1527 = vrot.slane %v1414, %v1526
      %v1528 = vlaneseq
      %v1529 = vshrl.u32 %v1528, 7
      %v1530 = vsub.s32 %v1503, %v1529
      %v1531 = vrot.slane %v1417, %v1530
      %v1532 = vlaneseq
      %v1533 = vshrl.u32 %v1532, 7
      %v1534 = vsub.s32 %v1503, %v1533
      %v1535 = vrot.slane %v1420, %v1534
      %vm1536 = vcmask 1041409
      %v1537 = vsel %vm1536, %v1511, %v1507
      %vm1538 = vcmask 1042434
      %v1539 = vsel %vm1538, %v1515, %v1537
      %vm1540 = vcmask 1043459
      %v1541 = vsel %vm1540, %v1519, %v1539
      %vm1542 = vcmask 1044484
      %v1543 = vsel %vm1542, %v1523, %v1541
      %vm1544 = vcmask 1045509
      %v1545 = vsel %vm1544, %v1527, %v1543
      %vm1546 = vcmask 1046534
      %v1547 = vsel %vm1546, %v1531, %v1545
      %vm1548 = vcmask 1047559
      %v1549 = vsel %vm1548, %v1535, %v1547
      %v1551 = vadd.f32 %v1493, %v1549
      %v1552 = vsel %vm1122, %v1551, -inf
      %1553 = vmax.xlane.f32.xlu0 %v1552
      %v1554 = vpop.xlane.xlu0 %1553
      %v1555 = vsub.f32 %v1551, %v1554
      %v1556 = vmul.f32 %v1555, 1.442695
      %v1557 = vpow.pop %v1556
      %v1558 = vsel %vm1122, %v1557, 0.0
      %1559 = vadd.xlane.f32.xlu0 %v1558
      %v1560 = vpop.xlane.xlu0 %1559
      %v1561 = vrcp.pop %v1560
      %v1562 = vmul.f32 %v1557, %v1561
      %v1564 = vsel %vm1122, %v1562, 0
      %1566 = vmatprep.subr.mxu0 0.0
      %1567 = vmatpush1.msra.mxu0 %v1274
      %1568 = vmatprep.subr.mxu0 0.0
      %1569 = vmatpush1.msra.mxu0 0.0
      %1570 = vmatprep.subr.mxu0 0.0
      %1571 = vmatpush1.msra.mxu0 0.0
      %1572 = vmatprep.subr.mxu0 0.0
      %1573 = vmatpush1.msra.mxu0 0.0
      %1574 = vmatprep.subr.mxu0 0.0
      %1575 = vmatpush1.msra.mxu0 0.0
      %1576 = vmatprep.subr.mxu0 0.0
      %1577 = vmatpush1.msra.mxu0 0.0
      %1578 = vmatprep.subr.mxu0 0.0
      %1579 = vmatpush1.msra.mxu0 0.0
      %1580 = vmatprep.subr.mxu0 0.0
      %1581 = vmatpush1.msra.mxu0 0.0
      %1582 = vmatprep.subr.mxu0 0.0
      %1583 = vmatpush1.msra.mxu0 0.0
      %1584 = vmatprep.subr.mxu0 0.0
      %1585 = vmatpush1.msra.mxu0 0.0
      %1586 = vmatprep.subr.mxu0 0.0
      %1587 = vmatpush1.msra.mxu0 0.0
      %1588 = vmatprep.subr.mxu0 0.0
      %1589 = vmatpush1.msra.mxu0 0.0
      %1590 = vmatprep.subr.mxu0 0.0
      %1591 = vmatpush1.msra.mxu0 0.0
      %1592 = vmatprep.subr.mxu0 0.0
      %1593 = vmatpush1.msra.mxu0 0.0
      %1594 = vmatprep.subr.mxu0 0.0
      %1595 = vmatpush1.msra.mxu0 0.0
      %1596 = vmatprep.subr.mxu0 0.0
      %1597 = vmatpush1.msra.mxu0 0.0
      %1598 = vmatprep.subr.mxu0 0.0
      %1599 = vmatpush1.msra.mxu0 0.0
      %1600 = vmatprep.subr.mxu0 0.0
      %1601 = vmatpush1.msra.mxu0 0.0
      %1602 = vmatprep.subr.mxu0 0.0
      %1603 = vmatpush1.msra.mxu0 0.0
      %1604 = vmatprep.subr.mxu0 0.0
      %1605 = vmatpush1.msra.mxu0 0.0
      %1606 = vmatprep.subr.mxu0 0.0
      %1607 = vmatpush1.msra.mxu0 0.0
      %1608 = vmatprep.subr.mxu0 0.0
      %1609 = vmatpush1.msra.mxu0 0.0
      %1610 = vmatprep.subr.mxu0 0.0
      %1611 = vmatpush1.msra.mxu0 0.0
      %1612 = vmatprep.subr.mxu0 0.0
      %1613 = vmatpush1.msra.mxu0 0.0
      %1614 = vmatprep.subr.mxu0 0.0
      %1615 = vmatpush1.msra.mxu0 0.0
      %1616 = vmatprep.subr.mxu0 0.0
      %1617 = vmatpush1.msra.mxu0 0.0
      %1618 = vmatprep.subr.mxu0 0.0
      %1619 = vmatpush1.msra.mxu0 0.0
      %1620 = vmatprep.subr.mxu0 0.0
      %1621 = vmatpush1.msra.mxu0 0.0
      %1622 = vmatprep.subr.mxu0 0.0
      %1623 = vmatpush1.msra.mxu0 0.0
      %1624 = vmatprep.subr.mxu0 0.0
      %1625 = vmatpush1.msra.mxu0 0.0
      %1626 = vmatprep.subr.mxu0 0.0
      %1627 = vmatpush1.msra.mxu0 0.0
      %1628 = vmatprep.subr.mxu0 0.0
      %1629 = vmatpush1.msra.mxu0 0.0
      %1630 = vmatprep.mubr.f32.mxu0 0.0
      %1631 = vmatmul.mubr.f32.gmra.mrb[0].mxu0 %v1564
      %v1632 = vpop.f32.mrb[0].mxu0
      %v1633 = vadd.f32 0.0, %v1632
      %v1634 = vpop.f32.mrb[0].mxu0
      %1635 = vdwg.mxu0
      %1644 = vrot.lane.b32.xlu0 %v1389, 120
      %v1645 = vpop.permute.xlu0 %1644
      %1646 = vrot.lane.b32.xlu0 %v1390, 120
      %v1647 = vpop.permute.xlu0 %1646
      %1648 = vrot.lane.b32.xlu0 %v1391, 120
      %v1649 = vpop.permute.xlu0 %1648
      %1650 = vrot.lane.b32.xlu0 %v1392, 120
      %v1651 = vpop.permute.xlu0 %1650
      %1652 = vrot.lane.b32.xlu0 %v1393, 120
      %v1653 = vpop.permute.xlu0 %1652
      %1654 = vrot.lane.b32.xlu0 %v1394, 120
      %v1655 = vpop.permute.xlu0 %1654
      %1656 = vrot.lane.b32.xlu0 %v1395, 120
      %v1657 = vpop.permute.xlu0 %1656
      %1658 = vrot.lane.b32.xlu0 %v1396, 120
      %v1659 = vpop.permute.xlu0 %1658
      %v1668 = vsel %vm1122, %v1645, 0.0
      %1669 = vadd.xlane.f32.xlu0 %v1668
      %v1670 = vpop.xlane.xlu0 %1669
      %v1671 = vsel %vm1122, %v1647, 0.0
      %1672 = vadd.xlane.f32.xlu0 %v1671
      %v1673 = vpop.xlane.xlu0 %1672
      %v1674 = vsel %vm1122, %v1649, 0.0
      %1675 = vadd.xlane.f32.xlu0 %v1674
      %v1676 = vpop.xlane.xlu0 %1675
      %v1677 = vsel %vm1122, %v1651, 0.0
      %1678 = vadd.xlane.f32.xlu0 %v1677
      %v1679 = vpop.xlane.xlu0 %1678
      %v1680 = vsel %vm1122, %v1653, 0.0
      %1681 = vadd.xlane.f32.xlu0 %v1680
      %v1682 = vpop.xlane.xlu0 %1681
      %v1683 = vsel %vm1122, %v1655, 0.0
      %1684 = vadd.xlane.f32.xlu0 %v1683
      %v1685 = vpop.xlane.xlu0 %1684
      %v1686 = vsel %vm1122, %v1657, 0.0
      %1687 = vadd.xlane.f32.xlu0 %v1686
      %v1688 = vpop.xlane.xlu0 %1687
      %v1689 = vsel %vm1122, %v1659, 0.0
      %1690 = vadd.xlane.f32.xlu0 %v1689
      %v1691 = vpop.xlane.xlu0 %1690
      %1692 = vrot.lane.b32.xlu0 %v1274, 120
      %v1693 = vpop.permute.xlu0 %1692
      %v1694 = vsel %vm1122, %v1693, 0
      %1696 = vmatprep.subr.mxu0 0.0
      %1697 = vmatpush1.xpose.msra.mxu0 %v1694
      %1698 = vmatprep.subr.mxu0 0.0
      %1699 = vmatpush1.xpose.msra.mxu0 0.0
      %1700 = vmatprep.subr.mxu0 0.0
      %1701 = vmatpush1.xpose.msra.mxu0 0.0
      %1702 = vmatprep.subr.mxu0 0.0
      %1703 = vmatpush1.xpose.msra.mxu0 0.0
      %1704 = vmatprep.subr.mxu0 0.0
      %1705 = vmatpush1.xpose.msra.mxu0 0.0
      %1706 = vmatprep.subr.mxu0 0.0
      %1707 = vmatpush1.xpose.msra.mxu0 0.0
      %1708 = vmatprep.subr.mxu0 0.0
      %1709 = vmatpush1.xpose.msra.mxu0 0.0
      %1710 = vmatprep.subr.mxu0 0.0
      %1711 = vmatpush1.xpose.msra.mxu0 0.0
      %1712 = vmatprep.subr.mxu0 0.0
      %1713 = vmatpush1.xpose.msra.mxu0 0.0
      %1714 = vmatprep.subr.mxu0 0.0
      %1715 = vmatpush1.xpose.msra.mxu0 0.0
      %1716 = vmatprep.subr.mxu0 0.0
      %1717 = vmatpush1.xpose.msra.mxu0 0.0
      %1718 = vmatprep.subr.mxu0 0.0
      %1719 = vmatpush1.xpose.msra.mxu0 0.0
      %1720 = vmatprep.subr.mxu0 0.0
      %1721 = vmatpush1.xpose.msra.mxu0 0.0
      %1722 = vmatprep.subr.mxu0 0.0
      %1723 = vmatpush1.xpose.msra.mxu0 0.0
      %1724 = vmatprep.subr.mxu0 0.0
      %1725 = vmatpush1.xpose.msra.mxu0 0.0
      %1726 = vmatprep.subr.mxu0 0.0
      %1727 = vmatpush1.xpose.msra.mxu0 0.0
      %1728 = vmatprep.subr.mxu0 0.0
      %1729 = vmatpush1.xpose.msra.mxu0 0.0
      %1730 = vmatprep.subr.mxu0 0.0
      %1731 = vmatpush1.xpose.msra.mxu0 0.0
      %1732 = vmatprep.subr.mxu0 0.0
      %1733 = vmatpush1.xpose.msra.mxu0 0.0
      %1734 = vmatprep.subr.mxu0 0.0
      %1735 = vmatpush1.xpose.msra.mxu0 0.0
      %1736 = vmatprep.subr.mxu0 0.0
      %1737 = vmatpush1.xpose.msra.mxu0 0.0
      %1738 = vmatprep.subr.mxu0 0.0
      %1739 = vmatpush1.xpose.msra.mxu0 0.0
      %1740 = vmatprep.subr.mxu0 0.0
      %1741 = vmatpush1.xpose.msra.mxu0 0.0
      %1742 = vmatprep.subr.mxu0 0.0
      %1743 = vmatpush1.xpose.msra.mxu0 0.0
      %1744 = vmatprep.subr.mxu0 0.0
      %1745 = vmatpush1.xpose.msra.mxu0 0.0
      %1746 = vmatprep.subr.mxu0 0.0
      %1747 = vmatpush1.xpose.msra.mxu0 0.0
      %1748 = vmatprep.subr.mxu0 0.0
      %1749 = vmatpush1.xpose.msra.mxu0 0.0
      %1750 = vmatprep.subr.mxu0 0.0
      %1751 = vmatpush1.xpose.msra.mxu0 0.0
      %1752 = vmatprep.subr.mxu0 0.0
      %1753 = vmatpush1.xpose.msra.mxu0 0.0
      %1754 = vmatprep.subr.mxu0 0.0
      %1755 = vmatpush1.xpose.msra.mxu0 0.0
      %1756 = vmatprep.subr.mxu0 0.0
      %1757 = vmatpush1.xpose.msra.mxu0 0.0
      %1758 = vmatprep.subr.mxu0 0.0
      %1759 = vmatpush1.xpose.msra.mxu0 0.0
      %1760 = vmatprep.mubr.f32.mxu0 0.0
      %1761 = vmatmul.mubr.f32.gmra.mrb[0].mxu0 %v1694
      %v1762 = vpop.f32.mrb[0].mxu0
      %v1763 = vadd.f32 0.0, %v1762
      %v1764 = vpop.f32.mrb[0].mxu0
      %1765 = vdwg.mxu0
      %v1766 = vmul.f32 %v1763, 0.35355338
      %v1775 = vlaneseq
      %v1776 = vshrl.u32 %v1775, 7
      %v1777 = vsub.s32 %v1503, %v1776
      %v1778 = vrot.slane %v1670, %v1777
      %v1779 = vlaneseq
      %v1780 = vshrl.u32 %v1779, 7
      %v1781 = vsub.s32 %v1503, %v1780
      %v1782 = vrot.slane %v1673, %v1781
      %v1783 = vlaneseq
      %v1784 = vshrl.u32 %v1783, 7
      %v1785 = vsub.s32 %v1503, %v1784
      %v1786 = vrot.slane %v1676, %v1785
      %v1787 = vlaneseq
      %v1788 = vshrl.u32 %v1787, 7
      %v1789 = vsub.s32 %v1503, %v1788
      %v1790 = vrot.slane %v1679, %v1789
      %v1791 = vlaneseq
      %v1792 = vshrl.u32 %v1791, 7
      %v1793 = vsub.s32 %v1503, %v1792
      %v1794 = vrot.slane %v1682, %v1793
      %v1795 = vlaneseq
      %v1796 = vshrl.u32 %v1795, 7
      %v1797 = vsub.s32 %v1503, %v1796
      %v1798 = vrot.slane %v1685, %v1797
      %v1799 = vlaneseq
      %v1800 = vshrl.u32 %v1799, 7
      %v1801 = vsub.s32 %v1503, %v1800
      %v1802 = vrot.slane %v1688, %v1801
      %v1803 = vlaneseq
      %v1804 = vshrl.u32 %v1803, 7
      %v1805 = vsub.s32 %v1503, %v1804
      %v1806 = vrot.slane %v1691, %v1805
      %v1807 = vsel %vm1536, %v1782, %v1778
      %v1808 = vsel %vm1538, %v1786, %v1807
      %v1809 = vsel %vm1540, %v1790, %v1808
      %v1810 = vsel %vm1542, %v1794, %v1809
      %v1811 = vsel %vm1544, %v1798, %v1810
      %v1812 = vsel %vm1546, %v1802, %v1811
      %v1813 = vsel %vm1548, %v1806, %v1812
      %v1815 = vadd.f32 %v1766, %v1813
      %v1816 = vsel %vm1122, %v1815, -inf
      %1817 = vmax.xlane.f32.xlu0 %v1816
      %v1818 = vpop.xlane.xlu0 %1817
      %v1819 = vsub.f32 %v1815, %v1818
      %v1820 = vmul.f32 %v1819, 1.442695
      %v1821 = vpow.pop %v1820
      %v1822 = vsel %vm1122, %v1821, 0.0
      %1823 = vadd.xlane.f32.xlu0 %v1822
      %v1824 = vpop.xlane.xlu0 %1823
      %v1825 = vrcp.pop %v1824
      %v1826 = vmul.f32 %v1821, %v1825
      %v1829 = vsel %vm1122, %v1826, 0
      %1831 = vmatprep.subr.mxu0 0.0
      %1832 = vmatpush1.msra.mxu0 %v1693
      %1833 = vmatprep.subr.mxu0 0.0
      %1834 = vmatpush1.msra.mxu0 0.0
      %1835 = vmatprep.subr.mxu0 0.0
      %1836 = vmatpush1.msra.mxu0 0.0
      %1837 = vmatprep.subr.mxu0 0.0
      %1838 = vmatpush1.msra.mxu0 0.0
      %1839 = vmatprep.subr.mxu0 0.0
      %1840 = vmatpush1.msra.mxu0 0.0
      %1841 = vmatprep.subr.mxu0 0.0
      %1842 = vmatpush1.msra.mxu0 0.0
      %1843 = vmatprep.subr.mxu0 0.0
      %1844 = vmatpush1.msra.mxu0 0.0
      %1845 = vmatprep.subr.mxu0 0.0
      %1846 = vmatpush1.msra.mxu0 0.0
      %1847 = vmatprep.subr.mxu0 0.0
      %1848 = vmatpush1.msra.mxu0 0.0
      %1849 = vmatprep.subr.mxu0 0.0
      %1850 = vmatpush1.msra.mxu0 0.0
      %1851 = vmatprep.subr.mxu0 0.0
      %1852 = vmatpush1.msra.mxu0 0.0
      %1853 = vmatprep.subr.mxu0 0.0
      %1854 = vmatpush1.msra.mxu0 0.0
      %1855 = vmatprep.subr.mxu0 0.0
      %1856 = vmatpush1.msra.mxu0 0.0
      %1857 = vmatprep.subr.mxu0 0.0
      %1858 = vmatpush1.msra.mxu0 0.0
      %1859 = vmatprep.subr.mxu0 0.0
      %1860 = vmatpush1.msra.mxu0 0.0
      %1861 = vmatprep.subr.mxu0 0.0
      %1862 = vmatpush1.msra.mxu0 0.0
      %1863 = vmatprep.subr.mxu0 0.0
      %1864 = vmatpush1.msra.mxu0 0.0
      %1865 = vmatprep.subr.mxu0 0.0
      %1866 = vmatpush1.msra.mxu0 0.0
      %1867 = vmatprep.subr.mxu0 0.0
      %1868 = vmatpush1.msra.mxu0 0.0
      %1869 = vmatprep.subr.mxu0 0.0
      %1870 = vmatpush1.msra.mxu0 0.0
      %1871 = vmatprep.subr.mxu0 0.0
      %1872 = vmatpush1.msra.mxu0 0.0
      %1873 = vmatprep.subr.mxu0 0.0
      %1874 = vmatpush1.msra.mxu0 0.0
      %1875 = vmatprep.subr.mxu0 0.0
      %1876 = vmatpush1.msra.mxu0 0.0
      %1877 = vmatprep.subr.mxu0 0.0
      %1878 = vmatpush1.msra.mxu0 0.0
      %1879 = vmatprep.subr.mxu0 0.0
      %1880 = vmatpush1.msra.mxu0 0.0
      %1881 = vmatprep.subr.mxu0 0.0
      %1882 = vmatpush1.msra.mxu0 0.0
      %1883 = vmatprep.subr.mxu0 0.0
      %1884 = vmatpush1.msra.mxu0 0.0
      %1885 = vmatprep.subr.mxu0 0.0
      %1886 = vmatpush1.msra.mxu0 0.0
      %1887 = vmatprep.subr.mxu0 0.0
      %1888 = vmatpush1.msra.mxu0 0.0
      %1889 = vmatprep.subr.mxu0 0.0
      %1890 = vmatpush1.msra.mxu0 0.0
      %1891 = vmatprep.subr.mxu0 0.0
      %1892 = vmatpush1.msra.mxu0 0.0
      %1893 = vmatprep.subr.mxu0 0.0
      %1894 = vmatpush1.msra.mxu0 0.0
      %1895 = vmatprep.mubr.f32.mxu0 0.0
      %1896 = vmatmul.mubr.f32.gmra.mrb[0].mxu0 %v1829
      %v1897 = vpop.f32.mrb[0].mxu0
      %v1898 = vadd.f32 0.0, %v1897
      %v1899 = vpop.f32.mrb[0].mxu0
      %1900 = vdwg.mxu0
      %1901 = vrot.lane.b32.xlu0 %v1389, 112
      %v1902 = vpop.permute.xlu0 %1901
      %1903 = vrot.lane.b32.xlu0 %v1390, 112
      %v1904 = vpop.permute.xlu0 %1903
      %1905 = vrot.lane.b32.xlu0 %v1391, 112
      %v1906 = vpop.permute.xlu0 %1905
      %1907 = vrot.lane.b32.xlu0 %v1392, 112
      %v1908 = vpop.permute.xlu0 %1907
      %1909 = vrot.lane.b32.xlu0 %v1393, 112
      %v1910 = vpop.permute.xlu0 %1909
      %1911 = vrot.lane.b32.xlu0 %v1394, 112
      %v1912 = vpop.permute.xlu0 %1911
      %1913 = vrot.lane.b32.xlu0 %v1395, 112
      %v1914 = vpop.permute.xlu0 %1913
      %1915 = vrot.lane.b32.xlu0 %v1396, 112
      %v1916 = vpop.permute.xlu0 %1915
      %v1925 = vsel %vm1122, %v1902, 0.0
      %1926 = vadd.xlane.f32.xlu0 %v1925
      %v1927 = vpop.xlane.xlu0 %1926
      %v1928 = vsel %vm1122, %v1904, 0.0
      %1929 = vadd.xlane.f32.xlu0 %v1928
      %v1930 = vpop.xlane.xlu0 %1929
      %v1931 = vsel %vm1122, %v1906, 0.0
      %1932 = vadd.xlane.f32.xlu0 %v1931
      %v1933 = vpop.xlane.xlu0 %1932
      %v1934 = vsel %vm1122, %v1908, 0.0
      %1935 = vadd.xlane.f32.xlu0 %v1934
      %v1936 = vpop.xlane.xlu0 %1935
      %v1937 = vsel %vm1122, %v1910, 0.0
      %1938 = vadd.xlane.f32.xlu0 %v1937
      %v1939 = vpop.xlane.xlu0 %1938
      %v1940 = vsel %vm1122, %v1912, 0.0
      %1941 = vadd.xlane.f32.xlu0 %v1940
      %v1942 = vpop.xlane.xlu0 %1941
      %v1943 = vsel %vm1122, %v1914, 0.0
      %1944 = vadd.xlane.f32.xlu0 %v1943
      %v1945 = vpop.xlane.xlu0 %1944
      %v1946 = vsel %vm1122, %v1916, 0.0
      %1947 = vadd.xlane.f32.xlu0 %v1946
      %v1948 = vpop.xlane.xlu0 %1947
      %1949 = vrot.lane.b32.xlu0 %v1274, 112
      %v1950 = vpop.permute.xlu0 %1949
      %v1951 = vsel %vm1122, %v1950, 0
      %1953 = vmatprep.subr.mxu0 0.0
      %1954 = vmatpush1.xpose.msra.mxu0 %v1951
      %1955 = vmatprep.subr.mxu0 0.0
      %1956 = vmatpush1.xpose.msra.mxu0 0.0
      %1957 = vmatprep.subr.mxu0 0.0
      %1958 = vmatpush1.xpose.msra.mxu0 0.0
      %1959 = vmatprep.subr.mxu0 0.0
      %1960 = vmatpush1.xpose.msra.mxu0 0.0
      %1961 = vmatprep.subr.mxu0 0.0
      %1962 = vmatpush1.xpose.msra.mxu0 0.0
      %1963 = vmatprep.subr.mxu0 0.0
      %1964 = vmatpush1.xpose.msra.mxu0 0.0
      %1965 = vmatprep.subr.mxu0 0.0
      %1966 = vmatpush1.xpose.msra.mxu0 0.0
      %1967 = vmatprep.subr.mxu0 0.0
      %1968 = vmatpush1.xpose.msra.mxu0 0.0
      %1969 = vmatprep.subr.mxu0 0.0
      %1970 = vmatpush1.xpose.msra.mxu0 0.0
      %1971 = vmatprep.subr.mxu0 0.0
      %1972 = vmatpush1.xpose.msra.mxu0 0.0
      %1973 = vmatprep.subr.mxu0 0.0
      %1974 = vmatpush1.xpose.msra.mxu0 0.0
      %1975 = vmatprep.subr.mxu0 0.0
      %1976 = vmatpush1.xpose.msra.mxu0 0.0
      %1977 = vmatprep.subr.mxu0 0.0
      %1978 = vmatpush1.xpose.msra.mxu0 0.0
      %1979 = vmatprep.subr.mxu0 0.0
      %1980 = vmatpush1.xpose.msra.mxu0 0.0
      %1981 = vmatprep.subr.mxu0 0.0
      %1982 = vmatpush1.xpose.msra.mxu0 0.0
      %1983 = vmatprep.subr.mxu0 0.0
      %1984 = vmatpush1.xpose.msra.mxu0 0.0
      %1985 = vmatprep.subr.mxu0 0.0
      %1986 = vmatpush1.xpose.msra.mxu0 0.0
      %1987 = vmatprep.subr.mxu0 0.0
      %1988 = vmatpush1.xpose.msra.mxu0 0.0
      %1989 = vmatprep.subr.mxu0 0.0
      %1990 = vmatpush1.xpose.msra.mxu0 0.0
      %1991 = vmatprep.subr.mxu0 0.0
      %1992 = vmatpush1.xpose.msra.mxu0 0.0
      %1993 = vmatprep.subr.mxu0 0.0
      %1994 = vmatpush1.xpose.msra.mxu0 0.0
      %1995 = vmatprep.subr.mxu0 0.0
      %1996 = vmatpush1.xpose.msra.mxu0 0.0
      %1997 = vmatprep.subr.mxu0 0.0
      %1998 = vmatpush1.xpose.msra.mxu0 0.0
      %1999 = vmatprep.subr.mxu0 0.0
      %2000 = vmatpush1.xpose.msra.mxu0 0.0
      %2001 = vmatprep.subr.mxu0 0.0
      %2002 = vmatpush1.xpose.msra.mxu0 0.0
      %2003 = vmatprep.subr.mxu0 0.0
      %2004 = vmatpush1.xpose.msra.mxu0 0.0
      %2005 = vmatprep.subr.mxu0 0.0
      %2006 = vmatpush1.xpose.msra.mxu0 0.0
      %2007 = vmatprep.subr.mxu0 0.0
      %2008 = vmatpush1.xpose.msra.mxu0 0.0
      %2009 = vmatprep.subr.mxu0 0.0
      %2010 = vmatpush1.xpose.msra.mxu0 0.0
      %2011 = vmatprep.subr.mxu0 0.0
      %2012 = vmatpush1.xpose.msra.mxu0 0.0
      %2013 = vmatprep.subr.mxu0 0.0
      %2014 = vmatpush1.xpose.msra.mxu0 0.0
      %2015 = vmatprep.subr.mxu0 0.0
      %2016 = vmatpush1.xpose.msra.mxu0 0.0
      %2017 = vmatprep.mubr.f32.mxu0 0.0
      %2018 = vmatmul.mubr.f32.gmra.mrb[0].mxu0 %v1951
      %v2019 = vpop.f32.mrb[0].mxu0
      %v2020 = vadd.f32 0.0, %v2019
      %v2021 = vpop.f32.mrb[0].mxu0
      %2022 = vdwg.mxu0
      %v2023 = vmul.f32 %v2020, 0.35355338
      %v2032 = vlaneseq
      %v2033 = vshrl.u32 %v2032, 7
      %v2034 = vsub.s32 %v1503, %v2033
      %v2035 = vrot.slane %v1927, %v2034
      %v2036 = vlaneseq
      %v2037 = vshrl.u32 %v2036, 7
      %v2038 = vsub.s32 %v1503, %v2037
      %v2039 = vrot.slane %v1930, %v2038
      %v2040 = vlaneseq
      %v2041 = vshrl.u32 %v2040, 7
      %v2042 = vsub.s32 %v1503, %v2041
      %v2043 = vrot.slane %v1933, %v2042
      %v2044 = vlaneseq
      %v2045 = vshrl.u32 %v2044, 7
      %v2046 = vsub.s32 %v1503, %v2045
      %v2047 = vrot.slane %v1936, %v2046
      %v2048 = vlaneseq
      %v2049 = vshrl.u32 %v2048, 7
      %v2050 = vsub.s32 %v1503, %v2049
      %v2051 = vrot.slane %v1939, %v2050
      %v2052 = vlaneseq
      %v2053 = vshrl.u32 %v2052, 7
      %v2054 = vsub.s32 %v1503, %v2053
      %v2055 = vrot.slane %v1942, %v2054
      %v2056 = vlaneseq
      %v2057 = vshrl.u32 %v2056, 7
      %v2058 = vsub.s32 %v1503, %v2057
      %v2059 = vrot.slane %v1945, %v2058
      %v2060 = vlaneseq
      %v2061 = vshrl.u32 %v2060, 7
      %v2062 = vsub.s32 %v1503, %v2061
      %v2063 = vrot.slane %v1948, %v2062
      %v2064 = vsel %vm1536, %v2039, %v2035
      %v2065 = vsel %vm1538, %v2043, %v2064
      %v2066 = vsel %vm1540, %v2047, %v2065
      %v2067 = vsel %vm1542, %v2051, %v2066
      %v2068 = vsel %vm1544, %v2055, %v2067
      %v2069 = vsel %vm1546, %v2059, %v2068
      %v2070 = vsel %vm1548, %v2063, %v2069
      %v2072 = vadd.f32 %v2023, %v2070
      %v2073 = vsel %vm1122, %v2072, -inf
      %2074 = vmax.xlane.f32.xlu0 %v2073
      %v2075 = vpop.xlane.xlu0 %2074
      %v2076 = vsub.f32 %v2072, %v2075
      %v2077 = vmul.f32 %v2076, 1.442695
      %v2078 = vpow.pop %v2077
      %v2079 = vsel %vm1122, %v2078, 0.0
      %2080 = vadd.xlane.f32.xlu0 %v2079
      %v2081 = vpop.xlane.xlu0 %2080
      %v2082 = vrcp.pop %v2081
      %v2083 = vmul.f32 %v2078, %v2082
      %v2086 = vsel %vm1122, %v2083, 0
      %2088 = vmatprep.subr.mxu0 0.0
      %2089 = vmatpush1.msra.mxu0 %v1950
      %2090 = vmatprep.subr.mxu0 0.0
      %2091 = vmatpush1.msra.mxu0 0.0
      %2092 = vmatprep.subr.mxu0 0.0
      %2093 = vmatpush1.msra.mxu0 0.0
      %2094 = vmatprep.subr.mxu0 0.0
      %2095 = vmatpush1.msra.mxu0 0.0
      %2096 = vmatprep.subr.mxu0 0.0
      %2097 = vmatpush1.msra.mxu0 0.0
      %2098 = vmatprep.subr.mxu0 0.0
      %2099 = vmatpush1.msra.mxu0 0.0
      %2100 = vmatprep.subr.mxu0 0.0
      %2101 = vmatpush1.msra.mxu0 0.0
      %2102 = vmatprep.subr.mxu0 0.0
      %2103 = vmatpush1.msra.mxu0 0.0
      %2104 = vmatprep.subr.mxu0 0.0
      %2105 = vmatpush1.msra.mxu0 0.0
      %2106 = vmatprep.subr.mxu0 0.0
      %2107 = vmatpush1.msra.mxu0 0.0
      %2108 = vmatprep.subr.mxu0 0.0
      %2109 = vmatpush1.msra.mxu0 0.0
      %2110 = vmatprep.subr.mxu0 0.0
      %2111 = vmatpush1.msra.mxu0 0.0
      %2112 = vmatprep.subr.mxu0 0.0
      %2113 = vmatpush1.msra.mxu0 0.0
      %2114 = vmatprep.subr.mxu0 0.0
      %2115 = vmatpush1.msra.mxu0 0.0
      %2116 = vmatprep.subr.mxu0 0.0
      %2117 = vmatpush1.msra.mxu0 0.0
      %2118 = vmatprep.subr.mxu0 0.0
      %2119 = vmatpush1.msra.mxu0 0.0
      %2120 = vmatprep.subr.mxu0 0.0
      %2121 = vmatpush1.msra.mxu0 0.0
      %2122 = vmatprep.subr.mxu0 0.0
      %2123 = vmatpush1.msra.mxu0 0.0
      %2124 = vmatprep.subr.mxu0 0.0
      %2125 = vmatpush1.msra.mxu0 0.0
      %2126 = vmatprep.subr.mxu0 0.0
      %2127 = vmatpush1.msra.mxu0 0.0
      %2128 = vmatprep.subr.mxu0 0.0
      %2129 = vmatpush1.msra.mxu0 0.0
      %2130 = vmatprep.subr.mxu0 0.0
      %2131 = vmatpush1.msra.mxu0 0.0
      %2132 = vmatprep.subr.mxu0 0.0
      %2133 = vmatpush1.msra.mxu0 0.0
      %2134 = vmatprep.subr.mxu0 0.0
      %2135 = vmatpush1.msra.mxu0 0.0
      %2136 = vmatprep.subr.mxu0 0.0
      %2137 = vmatpush1.msra.mxu0 0.0
      %2138 = vmatprep.subr.mxu0 0.0
      %2139 = vmatpush1.msra.mxu0 0.0
      %2140 = vmatprep.subr.mxu0 0.0
      %2141 = vmatpush1.msra.mxu0 0.0
      %2142 = vmatprep.subr.mxu0 0.0
      %2143 = vmatpush1.msra.mxu0 0.0
      %2144 = vmatprep.subr.mxu0 0.0
      %2145 = vmatpush1.msra.mxu0 0.0
      %2146 = vmatprep.subr.mxu0 0.0
      %2147 = vmatpush1.msra.mxu0 0.0
      %2148 = vmatprep.subr.mxu0 0.0
      %2149 = vmatpush1.msra.mxu0 0.0
      %2150 = vmatprep.subr.mxu0 0.0
      %2151 = vmatpush1.msra.mxu0 0.0
      %2152 = vmatprep.mubr.f32.mxu0 0.0
      %2153 = vmatmul.mubr.f32.gmra.mrb[0].mxu0 %v2086
      %v2154 = vpop.f32.mrb[0].mxu0
      %v2155 = vadd.f32 0.0, %v2154
      %v2156 = vpop.f32.mrb[0].mxu0
      %2157 = vdwg.mxu0
      %2158 = vrot.lane.b32.xlu0 %v1389, 104
      %v2159 = vpop.permute.xlu0 %2158
      %2160 = vrot.lane.b32.xlu0 %v1390, 104
      %v2161 = vpop.permute.xlu0 %2160
      %2162 = vrot.lane.b32.xlu0 %v1391, 104
      %v2163 = vpop.permute.xlu0 %2162
      %2164 = vrot.lane.b32.xlu0 %v1392, 104
      %v2165 = vpop.permute.xlu0 %2164
      %2166 = vrot.lane.b32.xlu0 %v1393, 104
      %v2167 = vpop.permute.xlu0 %2166
      %2168 = vrot.lane.b32.xlu0 %v1394, 104
      %v2169 = vpop.permute.xlu0 %2168
      %2170 = vrot.lane.b32.xlu0 %v1395, 104
      %v2171 = vpop.permute.xlu0 %2170
      %2172 = vrot.lane.b32.xlu0 %v1396, 104
      %v2173 = vpop.permute.xlu0 %2172
      %v2182 = vsel %vm1122, %v2159, 0.0
      %2183 = vadd.xlane.f32.xlu0 %v2182
      %v2184 = vpop.xlane.xlu0 %2183
      %v2185 = vsel %vm1122, %v2161, 0.0
      %2186 = vadd.xlane.f32.xlu0 %v2185
      %v2187 = vpop.xlane.xlu0 %2186
      %v2188 = vsel %vm1122, %v2163, 0.0
      %2189 = vadd.xlane.f32.xlu0 %v2188
      %v2190 = vpop.xlane.xlu0 %2189
      %v2191 = vsel %vm1122, %v2165, 0.0
      %2192 = vadd.xlane.f32.xlu0 %v2191
      %v2193 = vpop.xlane.xlu0 %2192
      %v2194 = vsel %vm1122, %v2167, 0.0
      %2195 = vadd.xlane.f32.xlu0 %v2194
      %v2196 = vpop.xlane.xlu0 %2195
      %v2197 = vsel %vm1122, %v2169, 0.0
      %2198 = vadd.xlane.f32.xlu0 %v2197
      %v2199 = vpop.xlane.xlu0 %2198
      %v2200 = vsel %vm1122, %v2171, 0.0
      %2201 = vadd.xlane.f32.xlu0 %v2200
      %v2202 = vpop.xlane.xlu0 %2201
      %v2203 = vsel %vm1122, %v2173, 0.0
      %2204 = vadd.xlane.f32.xlu0 %v2203
      %v2205 = vpop.xlane.xlu0 %2204
      %2206 = vrot.lane.b32.xlu0 %v1274, 104
      %v2207 = vpop.permute.xlu0 %2206
      %v2208 = vsel %vm1122, %v2207, 0
      %2210 = vmatprep.subr.mxu0 0.0
      %2211 = vmatpush1.xpose.msra.mxu0 %v2208
      %2212 = vmatprep.subr.mxu0 0.0
      %2213 = vmatpush1.xpose.msra.mxu0 0.0
      %2214 = vmatprep.subr.mxu0 0.0
      %2215 = vmatpush1.xpose.msra.mxu0 0.0
      %2216 = vmatprep.subr.mxu0 0.0
      %2217 = vmatpush1.xpose.msra.mxu0 0.0
      %2218 = vmatprep.subr.mxu0 0.0
      %2219 = vmatpush1.xpose.msra.mxu0 0.0
      %2220 = vmatprep.subr.mxu0 0.0
      %2221 = vmatpush1.xpose.msra.mxu0 0.0
      %2222 = vmatprep.subr.mxu0 0.0
      %2223 = vmatpush1.xpose.msra.mxu0 0.0
      %2224 = vmatprep.subr.mxu0 0.0
      %2225 = vmatpush1.xpose.msra.mxu0 0.0
      %2226 = vmatprep.subr.mxu0 0.0
      %2227 = vmatpush1.xpose.msra.mxu0 0.0
      %2228 = vmatprep.subr.mxu0 0.0
      %2229 = vmatpush1.xpose.msra.mxu0 0.0
      %2230 = vmatprep.subr.mxu0 0.0
      %2231 = vmatpush1.xpose.msra.mxu0 0.0
      %2232 = vmatprep.subr.mxu0 0.0
      %2233 = vmatpush1.xpose.msra.mxu0 0.0
      %2234 = vmatprep.subr.mxu0 0.0
      %2235 = vmatpush1.xpose.msra.mxu0 0.0
      %2236 = vmatprep.subr.mxu0 0.0
      %2237 = vmatpush1.xpose.msra.mxu0 0.0
      %2238 = vmatprep.subr.mxu0 0.0
      %2239 = vmatpush1.xpose.msra.mxu0 0.0
      %2240 = vmatprep.subr.mxu0 0.0
      %2241 = vmatpush1.xpose.msra.mxu0 0.0
      %2242 = vmatprep.subr.mxu0 0.0
      %2243 = vmatpush1.xpose.msra.mxu0 0.0
      %2244 = vmatprep.subr.mxu0 0.0
      %2245 = vmatpush1.xpose.msra.mxu0 0.0
      %2246 = vmatprep.subr.mxu0 0.0
      %2247 = vmatpush1.xpose.msra.mxu0 0.0
      %2248 = vmatprep.subr.mxu0 0.0
      %2249 = vmatpush1.xpose.msra.mxu0 0.0
      %2250 = vmatprep.subr.mxu0 0.0
      %2251 = vmatpush1.xpose.msra.mxu0 0.0
      %2252 = vmatprep.subr.mxu0 0.0
      %2253 = vmatpush1.xpose.msra.mxu0 0.0
      %2254 = vmatprep.subr.mxu0 0.0
      %2255 = vmatpush1.xpose.msra.mxu0 0.0
      %2256 = vmatprep.subr.mxu0 0.0
      %2257 = vmatpush1.xpose.msra.mxu0 0.0
      %2258 = vmatprep.subr.mxu0 0.0
      %2259 = vmatpush1.xpose.msra.mxu0 0.0
      %2260 = vmatprep.subr.mxu0 0.0
      %2261 = vmatpush1.xpose.msra.mxu0 0.0
      %2262 = vmatprep.subr.mxu0 0.0
      %2263 = vmatpush1.xpose.msra.mxu0 0.0
      %2264 = vmatprep.subr.mxu0 0.0
      %2265 = vmatpush1.xpose.msra.mxu0 0.0
      %2266 = vmatprep.subr.mxu0 0.0
      %2267 = vmatpush1.xpose.msra.mxu0 0.0
      %2268 = vmatprep.subr.mxu0 0.0
      %2269 = vmatpush1.xpose.msra.mxu0 0.0
      %2270 = vmatprep.subr.mxu0 0.0
      %2271 = vmatpush1.xpose.msra.mxu0 0.0
      %2272 = vmatprep.subr.mxu0 0.0
      %2273 = vmatpush1.xpose.msra.mxu0 0.0
      %2274 = vmatprep.mubr.f32.mxu0 0.0
      %2275 = vmatmul.mubr.f32.gmra.mrb[0].mxu0 %v2208
      %v2276 = vpop.f32.mrb[0].mxu0
      %v2277 = vadd.f32 0.0, %v2276
      %v2278 = vpop.f32.mrb[0].mxu0
      %2279 = vdwg.mxu0
      %v2280 = vmul.f32 %v2277, 0.35355338
      %v2289 = vlaneseq
      %v2290 = vshrl.u32 %v2289, 7
      %v2291 = vsub.s32 %v1503, %v2290
      %v2292 = vrot.slane %v2184, %v2291
      %v2293 = vlaneseq
      %v2294 = vshrl.u32 %v2293, 7
      %v2295 = vsub.s32 %v1503, %v2294
      %v2296 = vrot.slane %v2187, %v2295
      %v2297 = vlaneseq
      %v2298 = vshrl.u32 %v2297, 7
      %v2299 = vsub.s32 %v1503, %v2298
      %v2300 = vrot.slane %v2190, %v2299
      %v2301 = vlaneseq
      %v2302 = vshrl.u32 %v2301, 7
      %v2303 = vsub.s32 %v1503, %v2302
      %v2304 = vrot.slane %v2193, %v2303
      %v2305 = vlaneseq
      %v2306 = vshrl.u32 %v2305, 7
      %v2307 = vsub.s32 %v1503, %v2306
      %v2308 = vrot.slane %v2196, %v2307
      %v2309 = vlaneseq
      %v2310 = vshrl.u32 %v2309, 7
      %v2311 = vsub.s32 %v1503, %v2310
      %v2312 = vrot.slane %v2199, %v2311
      %v2313 = vlaneseq
      %v2314 = vshrl.u32 %v2313, 7
      %v2315 = vsub.s32 %v1503, %v2314
      %v2316 = vrot.slane %v2202, %v2315
      %v2317 = vlaneseq
      %v2318 = vshrl.u32 %v2317, 7
      %v2319 = vsub.s32 %v1503, %v2318
      %v2320 = vrot.slane %v2205, %v2319
      %v2321 = vsel %vm1536, %v2296, %v2292
      %v2322 = vsel %vm1538, %v2300, %v2321
      %v2323 = vsel %vm1540, %v2304, %v2322
      %v2324 = vsel %vm1542, %v2308, %v2323
      %v2325 = vsel %vm1544, %v2312, %v2324
      %v2326 = vsel %vm1546, %v2316, %v2325
      %v2327 = vsel %vm1548, %v2320, %v2326
      %v2329 = vadd.f32 %v2280, %v2327
      %v2330 = vsel %vm1122, %v2329, -inf
      %2331 = vmax.xlane.f32.xlu0 %v2330
      %v2332 = vpop.xlane.xlu0 %2331
      %v2333 = vsub.f32 %v2329, %v2332
      %v2334 = vmul.f32 %v2333, 1.442695
      %v2335 = vpow.pop %v2334
      %v2336 = vsel %vm1122, %v2335, 0.0
      %2337 = vadd.xlane.f32.xlu0 %v2336
      %v2338 = vpop.xlane.xlu0 %2337
      %v2339 = vrcp.pop %v2338
      %v2340 = vmul.f32 %v2335, %v2339
      %v2343 = vsel %vm1122, %v2340, 0
      %2345 = vmatprep.subr.mxu0 0.0
      %2346 = vmatpush1.msra.mxu0 %v2207
      %2347 = vmatprep.subr.mxu0 0.0
      %2348 = vmatpush1.msra.mxu0 0.0
      %2349 = vmatprep.subr.mxu0 0.0
      %2350 = vmatpush1.msra.mxu0 0.0
      %2351 = vmatprep.subr.mxu0 0.0
      %2352 = vmatpush1.msra.mxu0 0.0
      %2353 = vmatprep.subr.mxu0 0.0
      %2354 = vmatpush1.msra.mxu0 0.0
      %2355 = vmatprep.subr.mxu0 0.0
      %2356 = vmatpush1.msra.mxu0 0.0
      %2357 = vmatprep.subr.mxu0 0.0
      %2358 = vmatpush1.msra.mxu0 0.0
      %2359 = vmatprep.subr.mxu0 0.0
      %2360 = vmatpush1.msra.mxu0 0.0
      %2361 = vmatprep.subr.mxu0 0.0
      %2362 = vmatpush1.msra.mxu0 0.0
      %2363 = vmatprep.subr.mxu0 0.0
      %2364 = vmatpush1.msra.mxu0 0.0
      %2365 = vmatprep.subr.mxu0 0.0
      %2366 = vmatpush1.msra.mxu0 0.0
      %2367 = vmatprep.subr.mxu0 0.0
      %2368 = vmatpush1.msra.mxu0 0.0
      %2369 = vmatprep.subr.mxu0 0.0
      %2370 = vmatpush1.msra.mxu0 0.0
      %2371 = vmatprep.subr.mxu0 0.0
      %2372 = vmatpush1.msra.mxu0 0.0
      %2373 = vmatprep.subr.mxu0 0.0
      %2374 = vmatpush1.msra.mxu0 0.0
      %2375 = vmatprep.subr.mxu0 0.0
      %2376 = vmatpush1.msra.mxu0 0.0
      %2377 = vmatprep.subr.mxu0 0.0
      %2378 = vmatpush1.msra.mxu0 0.0
      %2379 = vmatprep.subr.mxu0 0.0
      %2380 = vmatpush1.msra.mxu0 0.0
      %2381 = vmatprep.subr.mxu0 0.0
      %2382 = vmatpush1.msra.mxu0 0.0
      %2383 = vmatprep.subr.mxu0 0.0
      %2384 = vmatpush1.msra.mxu0 0.0
      %2385 = vmatprep.subr.mxu0 0.0
      %2386 = vmatpush1.msra.mxu0 0.0
      %2387 = vmatprep.subr.mxu0 0.0
      %2388 = vmatpush1.msra.mxu0 0.0
      %2389 = vmatprep.subr.mxu0 0.0
      %2390 = vmatpush1.msra.mxu0 0.0
      %2391 = vmatprep.subr.mxu0 0.0
      %2392 = vmatpush1.msra.mxu0 0.0
      %2393 = vmatprep.subr.mxu0 0.0
      %2394 = vmatpush1.msra.mxu0 0.0
      %2395 = vmatprep.subr.mxu0 0.0
      %2396 = vmatpush1.msra.mxu0 0.0
      %2397 = vmatprep.subr.mxu0 0.0
      %2398 = vmatpush1.msra.mxu0 0.0
      %2399 = vmatprep.subr.mxu0 0.0
      %2400 = vmatpush1.msra.mxu0 0.0
      %2401 = vmatprep.subr.mxu0 0.0
      %2402 = vmatpush1.msra.mxu0 0.0
      %2403 = vmatprep.subr.mxu0 0.0
      %2404 = vmatpush1.msra.mxu0 0.0
      %2405 = vmatprep.subr.mxu0 0.0
      %2406 = vmatpush1.msra.mxu0 0.0
      %2407 = vmatprep.subr.mxu0 0.0
      %2408 = vmatpush1.msra.mxu0 0.0
      %2409 = vmatprep.mubr.f32.mxu0 0.0
      %2410 = vmatmul.mubr.f32.gmra.mrb[0].mxu0 %v2343
      %v2411 = vpop.f32.mrb[0].mxu0
      %v2412 = vadd.f32 0.0, %v2411
      %v2413 = vpop.f32.mrb[0].mxu0
      %2414 = vdwg.mxu0
      %2416 = vrot.lane.b32.xlu0 %v1898, 8
      %v2417 = vpop.permute.xlu0 %2416
      %2420 = vrot.lane.b32.xlu0 %v2155, 16
      %v2421 = vpop.permute.xlu0 %2420
      %2424 = vrot.lane.b32.xlu0 %v2412, 24
      %v2425 = vpop.permute.xlu0 %2424
      %v2427 = vsel %vm1122, %v1633, %v2417
      %vm2428 = vcmask 130048
      %v2429 = vsel %vm2428, %v2427, %v2421
      %vm2430 = vcmask 195584
      %v2431 = vsel %vm2430, %v2429, %v2425
      %v2432 = vadd.f32 %v1274, %v2431
      %v2433 = vsel %vm1090, %v2432, 0.0
      %2434 = vadd.xlane.f32.xlu0 %v2433
      %v2435 = vpop.xlane.xlu0 %2434
      %v2436 = vmul.f32 %v2435, %v1094
      %v2437 = vsub.f32 %v2432, %v2436
      %v2438 = vmul.f32 %v2437, %v2437
      %v2439 = vsel %vm1090, %v2438, 0.0
      %2440 = vadd.xlane.f32.xlu0 %v2439
      %v2441 = vpop.xlane.xlu0 %2440
      %v2442 = vmul.f32 %v2441, %v1094
      %v2443 = vadd.f32 %v2442, 1e-05
      %v2444 = vrsqrt.pop %v2443
      %v2445 = vmul.f32 %v2437, %v2444
      %v2446 = vlaneseq
      %v2447 = vshrl.u32 %v2446, 7
      %v2448 = vsub.s32 2, %v2447
      %v2449 = vrot.slane %v1083, %v2448
      %v2450 = vmul.f32 %v2445, %v2449
      %v2451 = vlaneseq
      %v2452 = vshrl.u32 %v2451, 7
      %v2453 = vsub.s32 3, %v2452
      %v2454 = vrot.slane %v1083, %v2453
      %v2455 = vadd.f32 %v2450, %v2454
      %v2456 = vpack.c.bf16 %v2455, %v2455
      %v2457 = vlaneseq
      %v2458 = vshrl.u32 %v2457, 7
      %v2459 = vsub.s32 0, %v2458
      %v2460 = vrot.slane %v1083, %v2459
      %v2465 = vunpack.c.l.b16 %v1279
      %v2466 = vunpack.c.l.b16 %v1280
      %v2467 = vunpack.c.l.b16 %v1281
      %v2468 = vunpack.c.l.b16 %v1282
      %v2469 = vpack.c.b16 %v2466, %v2465
      %v2470 = vpack.c.b16 %v2468, %v2467
      %v2474 = vsel %vm1090, %v2456, 0
      %2476 = vmatprep.subr.bf16.mxu0 0
      %2477 = vmatpush1.bf16.msra.mxu0 %v2469
      %2478 = vmatprep.subr.bf16.mxu0 0
      %2479 = vmatpush1.bf16.msra.mxu0 %v2470
      %2480 = vmatprep.subr.bf16.mxu0 0
      %2481 = vmatpush1.bf16.msra.mxu0 0
      %2482 = vmatprep.subr.bf16.mxu0 0
      %2483 = vmatpush1.bf16.msra.mxu0 0
      %2484 = vmatprep.subr.bf16.mxu0 0
      %2485 = vmatpush1.bf16.msra.mxu0 0
      %2486 = vmatprep.subr.bf16.mxu0 0
      %2487 = vmatpush1.bf16.msra.mxu0 0
      %2488 = vmatprep.subr.bf16.mxu0 0
      %2489 = vmatpush1.bf16.msra.mxu0 0
      %2490 = vmatprep.subr.bf16.mxu0 0
      %2491 = vmatpush1.bf16.msra.mxu0 0
      %2492 = vmatprep.subr.bf16.mxu0 0
      %2493 = vmatpush1.bf16.msra.mxu0 0
      %2494 = vmatprep.subr.bf16.mxu0 0
      %2495 = vmatpush1.bf16.msra.mxu0 0
      %2496 = vmatprep.subr.bf16.mxu0 0
      %2497 = vmatpush1.bf16.msra.mxu0 0
      %2498 = vmatprep.subr.bf16.mxu0 0
      %2499 = vmatpush1.bf16.msra.mxu0 0
      %2500 = vmatprep.subr.bf16.mxu0 0
      %2501 = vmatpush1.bf16.msra.mxu0 0
      %2502 = vmatprep.subr.bf16.mxu0 0
      %2503 = vmatpush1.bf16.msra.mxu0 0
      %2504 = vmatprep.subr.bf16.mxu0 0
      %2505 = vmatpush1.bf16.msra.mxu0 0
      %2506 = vmatprep.subr.bf16.mxu0 0
      %2507 = vmatpush1.bf16.msra.mxu0 0
      %2508 = vmatprep.mubr.bf16.mxu0 0
      %2509 = vmatmul.mubr.bf16.gmra.mrb[0].mxu0 %v2474
      %v2510 = vpop.f32.mrb[0].mxu0
      %v2511 = vadd.f32 %v2460, %v2510
      %v2512 = vpop.f32.mrb[0].mxu0
      %v2513 = vpop.f32.mrb[0].mxu0
      %v2514 = vpop.f32.mrb[0].mxu0
      %2515 = vdwg.mxu0
      %vm2516 = vcmp.ge.f32.partialorder %v2511, 0.0
      %v2517 = vmul.f32 %v2511, 0.01
      %v2518 = vsel %vm2516, %v2511, %v2517
      %v2519 = vpack.c.bf16 %v2518, %v2518
      %v2520 = vlaneseq
      %v2521 = vshrl.u32 %v2520, 7
      %v2522 = vsub.s32 1, %v2521
      %v2523 = vrot.slane %v1083, %v2522
      %v2532 = vunpack.c.l.b16 %v1283
      %v2533 = vunpack.c.l.b16 %v1284
      %v2534 = vunpack.c.l.b16 %v1285
      %v2535 = vunpack.c.l.b16 %v1286
      %v2536 = vunpack.c.l.b16 %v1287
      %v2537 = vunpack.c.l.b16 %v1288
      %v2538 = vunpack.c.l.b16 %v1289
      %v2539 = vunpack.c.l.b16 %v1290
      %v2540 = vpack.c.b16 %v2533, %v2532
      %v2541 = vpack.c.b16 %v2535, %v2534
      %v2542 = vpack.c.b16 %v2537, %v2536
      %v2543 = vpack.c.b16 %v2539, %v2538
      %v2549 = vsel %vm1235, %v2519, 0
      %2551 = vmatprep.subr.bf16.mxu0 0
      %2552 = vmatpush1.bf16.msra.mxu0 %v2540
      %2553 = vmatprep.subr.bf16.mxu0 0
      %2554 = vmatpush1.bf16.msra.mxu0 %v2541
      %2555 = vmatprep.subr.bf16.mxu0 0
      %2556 = vmatpush1.bf16.msra.mxu0 %v2542
      %2557 = vmatprep.subr.bf16.mxu0 0
      %2558 = vmatpush1.bf16.msra.mxu0 %v2543
      %2559 = vmatprep.subr.bf16.mxu0 0
      %2560 = vmatpush1.bf16.msra.mxu0 0
      %2561 = vmatprep.subr.bf16.mxu0 0
      %2562 = vmatpush1.bf16.msra.mxu0 0
      %2563 = vmatprep.subr.bf16.mxu0 0
      %2564 = vmatpush1.bf16.msra.mxu0 0
      %2565 = vmatprep.subr.bf16.mxu0 0
      %2566 = vmatpush1.bf16.msra.mxu0 0
      %2567 = vmatprep.subr.bf16.mxu0 0
      %2568 = vmatpush1.bf16.msra.mxu0 0
      %2569 = vmatprep.subr.bf16.mxu0 0
      %2570 = vmatpush1.bf16.msra.mxu0 0
      %2571 = vmatprep.subr.bf16.mxu0 0
      %2572 = vmatpush1.bf16.msra.mxu0 0
      %2573 = vmatprep.subr.bf16.mxu0 0
      %2574 = vmatpush1.bf16.msra.mxu0 0
      %2575 = vmatprep.subr.bf16.mxu0 0
      %2576 = vmatpush1.bf16.msra.mxu0 0
      %2577 = vmatprep.subr.bf16.mxu0 0
      %2578 = vmatpush1.bf16.msra.mxu0 0
      %2579 = vmatprep.subr.bf16.mxu0 0
      %2580 = vmatpush1.bf16.msra.mxu0 0
      %2581 = vmatprep.subr.bf16.mxu0 0
      %2582 = vmatpush1.bf16.msra.mxu0 0
      %2583 = vmatprep.mubr.bf16.mxu0 0
      %2584 = vmatmul.mubr.bf16.gmra.mrb[0].mxu0 %v2549
      %v2585 = vpop.f32.mrb[0].mxu0
      %v2586 = vadd.f32 %v2523, %v2585
      %v2587 = vpop.f32.mrb[0].mxu0
      %v2588 = vpop.f32.mrb[0].mxu0
      %v2589 = vpop.f32.mrb[0].mxu0
      %2590 = vdwg.mxu0
      %v2591 = vadd.f32 %v2455, %v2586
      %v2592 = vsel %vm1090, %v2591, 0.0
      %2593 = vadd.xlane.f32.xlu0 %v2592
      %v2594 = vpop.xlane.xlu0 %2593
      %v2595 = vmul.f32 %v2594, %v1094
      %v2596 = vsub.f32 %v2591, %v2595
      %v2597 = vmul.f32 %v2596, %v2596
      %v2598 = vsel %vm1090, %v2597, 0.0
      %2599 = vadd.xlane.f32.xlu0 %v2598
      %v2600 = vpop.xlane.xlu0 %2599
      %v2601 = vmul.f32 %v2600, %v1094
      %v2602 = vadd.f32 %v2601, 1e-05
      %v2603 = vrsqrt.pop %v2602
      %v2604 = vmul.f32 %v2596, %v2603
      %v2605 = vlaneseq
      %v2606 = vshrl.u32 %v2605, 7
      %v2607 = vsub.s32 4, %v2606
      %v2608 = vrot.slane %v1083, %v2607
      %v2609 = vmul.f32 %v2604, %v2608
      %v2610 = vlaneseq
      %v2611 = vshrl.u32 %v2610, 7
      %v2612 = vsub.s32 5, %v2611
      %v2613 = vrot.slane %v1083, %v2612
      %v2614 = vadd.f32 %v2609, %v2613
      %v2615 = vld [vmem:[%s55] sm:$0xf]
      %v2616 = vld [vmem:[%s55 + $0x4] sm:$0xf]
      %v2617 = vld [vmem:[%s55 + $0x8] sm:$0xf]
      %v2618 = vld [vmem:[%s55 + $0xc] sm:$0xf]
      %v2619 = vld [vmem:[%s57] sm:$0xf]
      %v2620 = vld [vmem:[%s57 + $0x4] sm:$0xf]
      %v2621 = vld [vmem:[%s57 + $0x8] sm:$0xf]
      %v2622 = vld [vmem:[%s57 + $0xc] sm:$0xf]
      %v2623 = vld [vmem:[%s57 + $0x10] sm:$0xf]
      %v2624 = vld [vmem:[%s57 + $0x14] sm:$0xf]
      %v2625 = vld [vmem:[%s57 + $0x18] sm:$0xf]
      %v2626 = vld [vmem:[%s57 + $0x1c] sm:$0xf]
      %v2627 = vld [vmem:[%s1073] sm:$0xff]
      %v2628 = vld [vmem:[%s1073 + $0x8] sm:$0xff]
      %v2629 = vld [vmem:[%s1073 + $0x10] sm:$0xff]
      %v2630 = vld [vmem:[%s1073 + $0x18] sm:$0xff]
      %v2631 = vld [vmem:[%s1073 + $0x20] sm:$0xff]
      %v2632 = vld [vmem:[%s1073 + $0x28] sm:$0xff]
      %v2633 = vld [vmem:[%s1073 + $0x30] sm:$0xff]
      %v2634 = vld [vmem:[%s1073 + $0x38] sm:$0xff]
      %v2636 = vcombine.high %v2614, %v2614
      %v2638 = vunpack.c.l.s4 1966171168
      %v2639 = vunpack.c.0.s8 %v2638
      %v2640 = vlaneseq
      %v2641 = vshrl.u32 %v2640, 7
      %v2642 = vsub.s32 %v2639, %v2641
      %v2643 = vrot.slane %v2614, %v2642
      %v2645 = vunpack.c.l.s4 1966171168
      %v2646 = vunpack.c.0.s8 %v2645
      %v2647 = vlaneseq
      %v2648 = vshrl.u32 %v2647, 7
      %v2649 = vsub.s32 %v2646, %v2648
      %v2650 = vrot.slane %v2636, %v2649
      %v2651 = vcombine.high %v2643, %v2643
      %v2652 = vcombine.high %v2650, %v2650
      %v2654 = vunpack.c.l.s4 1966171168
      %v2655 = vunpack.c.0.s8 %v2654
      %v2656 = vlaneseq
      %v2657 = vshrl.u32 %v2656, 7
      %v2658 = vsub.s32 %v2655, %v2657
      %v2659 = vrot.slane %v2643, %v2658
      %v2661 = vunpack.c.l.s4 1966171168
      %v2662 = vunpack.c.0.s8 %v2661
      %v2663 = vlaneseq
      %v2664 = vshrl.u32 %v2663, 7
      %v2665 = vsub.s32 %v2662, %v2664
      %v2666 = vrot.slane %v2650, %v2665
      %v2668 = vunpack.c.l.s4 1966171168
      %v2669 = vunpack.c.0.s8 %v2668
      %v2670 = vlaneseq
      %v2671 = vshrl.u32 %v2670, 7
      %v2672 = vsub.s32 %v2669, %v2671
      %v2673 = vrot.slane %v2651, %v2672
      %v2675 = vunpack.c.l.s4 1966171168
      %v2676 = vunpack.c.0.s8 %v2675
      %v2677 = vlaneseq
      %v2678 = vshrl.u32 %v2677, 7
      %v2679 = vsub.s32 %v2676, %v2678
      %v2680 = vrot.slane %v2652, %v2679
      %v2681 = vcombine.high %v2659, %v2659
      %v2682 = vcombine.high %v2666, %v2666
      %v2683 = vcombine.high %v2673, %v2673
      %v2684 = vcombine.high %v2680, %v2680
      %v2685 = vlaneseq
      %v2686 = vshrl.u32 %v2685, 7
      %v2687 = vsub.s32 0, %v2686
      %v2688 = vrot.slane %v2659, %v2687
      %v2689 = vlaneseq
      %v2690 = vshrl.u32 %v2689, 7
      %v2691 = vsub.s32 0, %v2690
      %v2692 = vrot.slane %v2673, %v2691
      %v2693 = vlaneseq
      %v2694 = vshrl.u32 %v2693, 7
      %v2695 = vsub.s32 0, %v2694
      %v2696 = vrot.slane %v2681, %v2695
      %v2697 = vlaneseq
      %v2698 = vshrl.u32 %v2697, 7
      %v2699 = vsub.s32 0, %v2698
      %v2700 = vrot.slane %v2683, %v2699
      %v2701 = vlaneseq
      %v2702 = vshrl.u32 %v2701, 7
      %v2703 = vsub.s32 0, %v2702
      %v2704 = vrot.slane %v2666, %v2703
      %v2705 = vlaneseq
      %v2706 = vshrl.u32 %v2705, 7
      %v2707 = vsub.s32 0, %v2706
      %v2708 = vrot.slane %v2680, %v2707
      %v2709 = vlaneseq
      %v2710 = vshrl.u32 %v2709, 7
      %v2711 = vsub.s32 0, %v2710
      %v2712 = vrot.slane %v2682, %v2711
      %v2713 = vlaneseq
      %v2714 = vshrl.u32 %v2713, 7
      %v2715 = vsub.s32 0, %v2714
      %v2716 = vrot.slane %v2684, %v2715
      %v2725 = vmul.f32 %v2688, %v2627
      %v2726 = vmul.f32 %v2692, %v2628
      %v2727 = vmul.f32 %v2696, %v2629
      %v2728 = vmul.f32 %v2700, %v2630
      %v2729 = vmul.f32 %v2704, %v2631
      %v2730 = vmul.f32 %v2708, %v2632
      %v2731 = vmul.f32 %v2712, %v2633
      %v2732 = vmul.f32 %v2716, %v2634
      %v2733 = vsel %vm1122, %v2725, 0.0
      %2734 = vadd.xlane.f32.xlu0 %v2733
      %v2735 = vpop.xlane.xlu0 %2734
      %v2736 = vsel %vm1122, %v2726, 0.0
      %2737 = vadd.xlane.f32.xlu0 %v2736
      %v2738 = vpop.xlane.xlu0 %2737
      %v2739 = vsel %vm1122, %v2727, 0.0
      %2740 = vadd.xlane.f32.xlu0 %v2739
      %v2741 = vpop.xlane.xlu0 %2740
      %v2742 = vsel %vm1122, %v2728, 0.0
      %2743 = vadd.xlane.f32.xlu0 %v2742
      %v2744 = vpop.xlane.xlu0 %2743
      %v2745 = vsel %vm1122, %v2729, 0.0
      %2746 = vadd.xlane.f32.xlu0 %v2745
      %v2747 = vpop.xlane.xlu0 %2746
      %v2748 = vsel %vm1122, %v2730, 0.0
      %2749 = vadd.xlane.f32.xlu0 %v2748
      %v2750 = vpop.xlane.xlu0 %2749
      %v2751 = vsel %vm1122, %v2731, 0.0
      %2752 = vadd.xlane.f32.xlu0 %v2751
      %v2753 = vpop.xlane.xlu0 %2752
      %v2754 = vsel %vm1122, %v2732, 0.0
      %2755 = vadd.xlane.f32.xlu0 %v2754
      %v2756 = vpop.xlane.xlu0 %2755
      %v2757 = vsel %vm1122, %v2614, 0
      %2759 = vmatprep.subr.mxu0 0.0
      %2760 = vmatpush1.xpose.msra.mxu0 %v2757
      %2761 = vmatprep.subr.mxu0 0.0
      %2762 = vmatpush1.xpose.msra.mxu0 0.0
      %2763 = vmatprep.subr.mxu0 0.0
      %2764 = vmatpush1.xpose.msra.mxu0 0.0
      %2765 = vmatprep.subr.mxu0 0.0
      %2766 = vmatpush1.xpose.msra.mxu0 0.0
      %2767 = vmatprep.subr.mxu0 0.0
      %2768 = vmatpush1.xpose.msra.mxu0 0.0
      %2769 = vmatprep.subr.mxu0 0.0
      %2770 = vmatpush1.xpose.msra.mxu0 0.0
      %2771 = vmatprep.subr.mxu0 0.0
      %2772 = vmatpush1.xpose.msra.mxu0 0.0
      %2773 = vmatprep.subr.mxu0 0.0
      %2774 = vmatpush1.xpose.msra.mxu0 0.0
      %2775 = vmatprep.subr.mxu0 0.0
      %2776 = vmatpush1.xpose.msra.mxu0 0.0
      %2777 = vmatprep.subr.mxu0 0.0
      %2778 = vmatpush1.xpose.msra.mxu0 0.0
      %2779 = vmatprep.subr.mxu0 0.0
      %2780 = vmatpush1.xpose.msra.mxu0 0.0
      %2781 = vmatprep.subr.mxu0 0.0
      %2782 = vmatpush1.xpose.msra.mxu0 0.0
      %2783 = vmatprep.subr.mxu0 0.0
      %2784 = vmatpush1.xpose.msra.mxu0 0.0
      %2785 = vmatprep.subr.mxu0 0.0
      %2786 = vmatpush1.xpose.msra.mxu0 0.0
      %2787 = vmatprep.subr.mxu0 0.0
      %2788 = vmatpush1.xpose.msra.mxu0 0.0
      %2789 = vmatprep.subr.mxu0 0.0
      %2790 = vmatpush1.xpose.msra.mxu0 0.0
      %2791 = vmatprep.subr.mxu0 0.0
      %2792 = vmatpush1.xpose.msra.mxu0 0.0
      %2793 = vmatprep.subr.mxu0 0.0
      %2794 = vmatpush1.xpose.msra.mxu0 0.0
      %2795 = vmatprep.subr.mxu0 0.0
      %2796 = vmatpush1.xpose.msra.mxu0 0.0
      %2797 = vmatprep.subr.mxu0 0.0
      %2798 = vmatpush1.xpose.msra.mxu0 0.0
      %2799 = vmatprep.subr.mxu0 0.0
      %2800 = vmatpush1.xpose.msra.mxu0 0.0
      %2801 = vmatprep.subr.mxu0 0.0
      %2802 = vmatpush1.xpose.msra.mxu0 0.0
      %2803 = vmatprep.subr.mxu0 0.0
      %2804 = vmatpush1.xpose.msra.mxu0 0.0
      %2805 = vmatprep.subr.mxu0 0.0
      %2806 = vmatpush1.xpose.msra.mxu0 0.0
      %2807 = vmatprep.subr.mxu0 0.0
      %2808 = vmatpush1.xpose.msra.mxu0 0.0
      %2809 = vmatprep.subr.mxu0 0.0
      %2810 = vmatpush1.xpose.msra.mxu0 0.0
      %2811 = vmatprep.subr.mxu0 0.0
      %2812 = vmatpush1.xpose.msra.mxu0 0.0
      %2813 = vmatprep.subr.mxu0 0.0
      %2814 = vmatpush1.xpose.msra.mxu0 0.0
      %2815 = vmatprep.subr.mxu0 0.0
      %2816 = vmatpush1.xpose.msra.mxu0 0.0
      %2817 = vmatprep.subr.mxu0 0.0
      %2818 = vmatpush1.xpose.msra.mxu0 0.0
      %2819 = vmatprep.subr.mxu0 0.0
      %2820 = vmatpush1.xpose.msra.mxu0 0.0
      %2821 = vmatprep.subr.mxu0 0.0
      %2822 = vmatpush1.xpose.msra.mxu0 0.0
      %2823 = vmatprep.mubr.f32.mxu0 0.0
      %2824 = vmatmul.mubr.f32.gmra.mrb[0].mxu0 %v2757
      %v2825 = vpop.f32.mrb[0].mxu0
      %v2826 = vadd.f32 0.0, %v2825
      %v2827 = vpop.f32.mrb[0].mxu0
      %2828 = vdwg.mxu0
      %v2829 = vmul.f32 %v2826, 0.35355338
      %v2838 = vlaneseq
      %v2839 = vshrl.u32 %v2838, 7
      %v2840 = vsub.s32 %v1503, %v2839
      %v2841 = vrot.slane %v2735, %v2840
      %v2842 = vlaneseq
      %v2843 = vshrl.u32 %v2842, 7
      %v2844 = vsub.s32 %v1503, %v2843
      %v2845 = vrot.slane %v2738, %v2844
      %v2846 = vlaneseq
      %v2847 = vshrl.u32 %v2846, 7
      %v2848 = vsub.s32 %v1503, %v2847
      %v2849 = vrot.slane %v2741, %v2848
      %v2850 = vlaneseq
      %v2851 = vshrl.u32 %v2850, 7
      %v2852 = vsub.s32 %v1503, %v2851
      %v2853 = vrot.slane %v2744, %v2852
      %v2854 = vlaneseq
      %v2855 = vshrl.u32 %v2854, 7
      %v2856 = vsub.s32 %v1503, %v2855
      %v2857 = vrot.slane %v2747, %v2856
      %v2858 = vlaneseq
      %v2859 = vshrl.u32 %v2858, 7
      %v2860 = vsub.s32 %v1503, %v2859
      %v2861 = vrot.slane %v2750, %v2860
      %v2862 = vlaneseq
      %v2863 = vshrl.u32 %v2862, 7
      %v2864 = vsub.s32 %v1503, %v2863
      %v2865 = vrot.slane %v2753, %v2864
      %v2866 = vlaneseq
      %v2867 = vshrl.u32 %v2866, 7
      %v2868 = vsub.s32 %v1503, %v2867
      %v2869 = vrot.slane %v2756, %v2868
      %v2870 = vsel %vm1536, %v2845, %v2841
      %v2871 = vsel %vm1538, %v2849, %v2870
      %v2872 = vsel %vm1540, %v2853, %v2871
      %v2873 = vsel %vm1542, %v2857, %v2872
      %v2874 = vsel %vm1544, %v2861, %v2873
      %v2875 = vsel %vm1546, %v2865, %v2874
      %v2876 = vsel %vm1548, %v2869, %v2875
      %v2878 = vadd.f32 %v2829, %v2876
      %v2879 = vsel %vm1122, %v2878, -inf
      %2880 = vmax.xlane.f32.xlu0 %v2879
      %v2881 = vpop.xlane.xlu0 %2880
      %v2882 = vsub.f32 %v2878, %v2881
      %v2883 = vmul.f32 %v2882, 1.442695
      %v2884 = vpow.pop %v2883
      %v2885 = vsel %vm1122, %v2884, 0.0
      %2886 = vadd.xlane.f32.xlu0 %v2885
      %v2887 = vpop.xlane.xlu0 %2886
      %v2888 = vrcp.pop %v2887
      %v2889 = vmul.f32 %v2884, %v2888
      %v2891 = vsel %vm1122, %v2889, 0
      %2893 = vmatprep.subr.mxu0 0.0
      %2894 = vmatpush1.msra.mxu0 %v2614
      %2895 = vmatprep.subr.mxu0 0.0
      %2896 = vmatpush1.msra.mxu0 0.0
      %2897 = vmatprep.subr.mxu0 0.0
      %2898 = vmatpush1.msra.mxu0 0.0
      %2899 = vmatprep.subr.mxu0 0.0
      %2900 = vmatpush1.msra.mxu0 0.0
      %2901 = vmatprep.subr.mxu0 0.0
      %2902 = vmatpush1.msra.mxu0 0.0
      %2903 = vmatprep.subr.mxu0 0.0
      %2904 = vmatpush1.msra.mxu0 0.0
      %2905 = vmatprep.subr.mxu0 0.0
      %2906 = vmatpush1.msra.mxu0 0.0
      %2907 = vmatprep.subr.mxu0 0.0
      %2908 = vmatpush1.msra.mxu0 0.0
      %2909 = vmatprep.subr.mxu0 0.0
      %2910 = vmatpush1.msra.mxu0 0.0
      %2911 = vmatprep.subr.mxu0 0.0
      %2912 = vmatpush1.msra.mxu0 0.0
      %2913 = vmatprep.subr.mxu0 0.0
      %2914 = vmatpush1.msra.mxu0 0.0
      %2915 = vmatprep.subr.mxu0 0.0
      %2916 = vmatpush1.msra.mxu0 0.0
      %2917 = vmatprep.subr.mxu0 0.0
      %2918 = vmatpush1.msra.mxu0 0.0
      %2919 = vmatprep.subr.mxu0 0.0
      %2920 = vmatpush1.msra.mxu0 0.0
      %2921 = vmatprep.subr.mxu0 0.0
      %2922 = vmatpush1.msra.mxu0 0.0
      %2923 = vmatprep.subr.mxu0 0.0
      %2924 = vmatpush1.msra.mxu0 0.0
      %2925 = vmatprep.subr.mxu0 0.0
      %2926 = vmatpush1.msra.mxu0 0.0
      %2927 = vmatprep.subr.mxu0 0.0
      %2928 = vmatpush1.msra.mxu0 0.0
      %2929 = vmatprep.subr.mxu0 0.0
      %2930 = vmatpush1.msra.mxu0 0.0
      %2931 = vmatprep.subr.mxu0 0.0
      %2932 = vmatpush1.msra.mxu0 0.0
      %2933 = vmatprep.subr.mxu0 0.0
      %2934 = vmatpush1.msra.mxu0 0.0
      %2935 = vmatprep.subr.mxu0 0.0
      %2936 = vmatpush1.msra.mxu0 0.0
      %2937 = vmatprep.subr.mxu0 0.0
      %2938 = vmatpush1.msra.mxu0 0.0
      %2939 = vmatprep.subr.mxu0 0.0
      %2940 = vmatpush1.msra.mxu0 0.0
      %2941 = vmatprep.subr.mxu0 0.0
      %2942 = vmatpush1.msra.mxu0 0.0
      %2943 = vmatprep.subr.mxu0 0.0
      %2944 = vmatpush1.msra.mxu0 0.0
      %2945 = vmatprep.subr.mxu0 0.0
      %2946 = vmatpush1.msra.mxu0 0.0
      %2947 = vmatprep.subr.mxu0 0.0
      %2948 = vmatpush1.msra.mxu0 0.0
      %2949 = vmatprep.subr.mxu0 0.0
      %2950 = vmatpush1.msra.mxu0 0.0
      %2951 = vmatprep.subr.mxu0 0.0
      %2952 = vmatpush1.msra.mxu0 0.0
      %2953 = vmatprep.subr.mxu0 0.0
      %2954 = vmatpush1.msra.mxu0 0.0
      %2955 = vmatprep.subr.mxu0 0.0
      %2956 = vmatpush1.msra.mxu0 0.0
      %2957 = vmatprep.mubr.f32.mxu0 0.0
      %2958 = vmatmul.mubr.f32.gmra.mrb[0].mxu0 %v2891
      %v2959 = vpop.f32.mrb[0].mxu0
      %v2960 = vadd.f32 0.0, %v2959
      %v2961 = vpop.f32.mrb[0].mxu0
      %2962 = vdwg.mxu0
      %2971 = vrot.lane.b32.xlu0 %v2725, 120
      %v2972 = vpop.permute.xlu0 %2971
      %2973 = vrot.lane.b32.xlu0 %v2726, 120
      %v2974 = vpop.permute.xlu0 %2973
      %2975 = vrot.lane.b32.xlu0 %v2727, 120
      %v2976 = vpop.permute.xlu0 %2975
      %2977 = vrot.lane.b32.xlu0 %v2728, 120
      %v2978 = vpop.permute.xlu0 %2977
      %2979 = vrot.lane.b32.xlu0 %v2729, 120
      %v2980 = vpop.permute.xlu0 %2979
      %2981 = vrot.lane.b32.xlu0 %v2730, 120
      %v2982 = vpop.permute.xlu0 %2981
      %2983 = vrot.lane.b32.xlu0 %v2731, 120
      %v2984 = vpop.permute.xlu0 %2983
      %2985 = vrot.lane.b32.xlu0 %v2732, 120
      %v2986 = vpop.permute.xlu0 %2985
      %v2995 = vsel %vm1122, %v2972, 0.0
      %2996 = vadd.xlane.f32.xlu0 %v2995
      %v2997 = vpop.xlane.xlu0 %2996
      %v2998 = vsel %vm1122, %v2974, 0.0
      %2999 = vadd.xlane.f32.xlu0 %v2998
      %v3000 = vpop.xlane.xlu0 %2999
      %v3001 = vsel %vm1122, %v2976, 0.0
      %3002 = vadd.xlane.f32.xlu0 %v3001
      %v3003 = vpop.xlane.xlu0 %3002
      %v3004 = vsel %vm1122, %v2978, 0.0
      %3005 = vadd.xlane.f32.xlu0 %v3004
      %v3006 = vpop.xlane.xlu0 %3005
      %v3007 = vsel %vm1122, %v2980, 0.0
      %3008 = vadd.xlane.f32.xlu0 %v3007
      %v3009 = vpop.xlane.xlu0 %3008
      %v3010 = vsel %vm1122, %v2982, 0.0
      %3011 = vadd.xlane.f32.xlu0 %v3010
      %v3012 = vpop.xlane.xlu0 %3011
      %v3013 = vsel %vm1122, %v2984, 0.0
      %3014 = vadd.xlane.f32.xlu0 %v3013
      %v3015 = vpop.xlane.xlu0 %3014
      %v3016 = vsel %vm1122, %v2986, 0.0
      %3017 = vadd.xlane.f32.xlu0 %v3016
      %v3018 = vpop.xlane.xlu0 %3017
      %3019 = vrot.lane.b32.xlu0 %v2614, 120
      %v3020 = vpop.permute.xlu0 %3019
      %v3021 = vsel %vm1122, %v3020, 0
      %3023 = vmatprep.subr.mxu0 0.0
      %3024 = vmatpush1.xpose.msra.mxu0 %v3021
      %3025 = vmatprep.subr.mxu0 0.0
      %3026 = vmatpush1.xpose.msra.mxu0 0.0
      %3027 = vmatprep.subr.mxu0 0.0
      %3028 = vmatpush1.xpose.msra.mxu0 0.0
      %3029 = vmatprep.subr.mxu0 0.0
      %3030 = vmatpush1.xpose.msra.mxu0 0.0
      %3031 = vmatprep.subr.mxu0 0.0
      %3032 = vmatpush1.xpose.msra.mxu0 0.0
      %3033 = vmatprep.subr.mxu0 0.0
      %3034 = vmatpush1.xpose.msra.mxu0 0.0
      %3035 = vmatprep.subr.mxu0 0.0
      %3036 = vmatpush1.xpose.msra.mxu0 0.0
      %3037 = vmatprep.subr.mxu0 0.0
      %3038 = vmatpush1.xpose.msra.mxu0 0.0
      %3039 = vmatprep.subr.mxu0 0.0
      %3040 = vmatpush1.xpose.msra.mxu0 0.0
      %3041 = vmatprep.subr.mxu0 0.0
      %3042 = vmatpush1.xpose.msra.mxu0 0.0
      %3043 = vmatprep.subr.mxu0 0.0
      %3044 = vmatpush1.xpose.msra.mxu0 0.0
      %3045 = vmatprep.subr.mxu0 0.0
      %3046 = vmatpush1.xpose.msra.mxu0 0.0
      %3047 = vmatprep.subr.mxu0 0.0
      %3048 = vmatpush1.xpose.msra.mxu0 0.0
      %3049 = vmatprep.subr.mxu0 0.0
      %3050 = vmatpush1.xpose.msra.mxu0 0.0
      %3051 = vmatprep.subr.mxu0 0.0
      %3052 = vmatpush1.xpose.msra.mxu0 0.0
      %3053 = vmatprep.subr.mxu0 0.0
      %3054 = vmatpush1.xpose.msra.mxu0 0.0
      %3055 = vmatprep.subr.mxu0 0.0
      %3056 = vmatpush1.xpose.msra.mxu0 0.0
      %3057 = vmatprep.subr.mxu0 0.0
      %3058 = vmatpush1.xpose.msra.mxu0 0.0
      %3059 = vmatprep.subr.mxu0 0.0
      %3060 = vmatpush1.xpose.msra.mxu0 0.0
      %3061 = vmatprep.subr.mxu0 0.0
      %3062 = vmatpush1.xpose.msra.mxu0 0.0
      %3063 = vmatprep.subr.mxu0 0.0
      %3064 = vmatpush1.xpose.msra.mxu0 0.0
      %3065 = vmatprep.subr.mxu0 0.0
      %3066 = vmatpush1.xpose.msra.mxu0 0.0
      %3067 = vmatprep.subr.mxu0 0.0
      %3068 = vmatpush1.xpose.msra.mxu0 0.0
      %3069 = vmatprep.subr.mxu0 0.0
      %3070 = vmatpush1.xpose.msra.mxu0 0.0
      %3071 = vmatprep.subr.mxu0 0.0
      %3072 = vmatpush1.xpose.msra.mxu0 0.0
      %3073 = vmatprep.subr.mxu0 0.0
      %3074 = vmatpush1.xpose.msra.mxu0 0.0
      %3075 = vmatprep.subr.mxu0 0.0
      %3076 = vmatpush1.xpose.msra.mxu0 0.0
      %3077 = vmatprep.subr.mxu0 0.0
      %3078 = vmatpush1.xpose.msra.mxu0 0.0
      %3079 = vmatprep.subr.mxu0 0.0
      %3080 = vmatpush1.xpose.msra.mxu0 0.0
      %3081 = vmatprep.subr.mxu0 0.0
      %3082 = vmatpush1.xpose.msra.mxu0 0.0
      %3083 = vmatprep.subr.mxu0 0.0
      %3084 = vmatpush1.xpose.msra.mxu0 0.0
      %3085 = vmatprep.subr.mxu0 0.0
      %3086 = vmatpush1.xpose.msra.mxu0 0.0
      %3087 = vmatprep.mubr.f32.mxu0 0.0
      %3088 = vmatmul.mubr.f32.gmra.mrb[0].mxu0 %v3021
      %v3089 = vpop.f32.mrb[0].mxu0
      %v3090 = vadd.f32 0.0, %v3089
      %v3091 = vpop.f32.mrb[0].mxu0
      %3092 = vdwg.mxu0
      %v3093 = vmul.f32 %v3090, 0.35355338
      %v3102 = vlaneseq
      %v3103 = vshrl.u32 %v3102, 7
      %v3104 = vsub.s32 %v1503, %v3103
      %v3105 = vrot.slane %v2997, %v3104
      %v3106 = vlaneseq
      %v3107 = vshrl.u32 %v3106, 7
      %v3108 = vsub.s32 %v1503, %v3107
      %v3109 = vrot.slane %v3000, %v3108
      %v3110 = vlaneseq
      %v3111 = vshrl.u32 %v3110, 7
      %v3112 = vsub.s32 %v1503, %v3111
      %v3113 = vrot.slane %v3003, %v3112
      %v3114 = vlaneseq
      %v3115 = vshrl.u32 %v3114, 7
      %v3116 = vsub.s32 %v1503, %v3115
      %v3117 = vrot.slane %v3006, %v3116
      %v3118 = vlaneseq
      %v3119 = vshrl.u32 %v3118, 7
      %v3120 = vsub.s32 %v1503, %v3119
      %v3121 = vrot.slane %v3009, %v3120
      %v3122 = vlaneseq
      %v3123 = vshrl.u32 %v3122, 7
      %v3124 = vsub.s32 %v1503, %v3123
      %v3125 = vrot.slane %v3012, %v3124
      %v3126 = vlaneseq
      %v3127 = vshrl.u32 %v3126, 7
      %v3128 = vsub.s32 %v1503, %v3127
      %v3129 = vrot.slane %v3015, %v3128
      %v3130 = vlaneseq
      %v3131 = vshrl.u32 %v3130, 7
      %v3132 = vsub.s32 %v1503, %v3131
      %v3133 = vrot.slane %v3018, %v3132
      %v3134 = vsel %vm1536, %v3109, %v3105
      %v3135 = vsel %vm1538, %v3113, %v3134
      %v3136 = vsel %vm1540, %v3117, %v3135
      %v3137 = vsel %vm1542, %v3121, %v3136
      %v3138 = vsel %vm1544, %v3125, %v3137
      %v3139 = vsel %vm1546, %v3129, %v3138
      %v3140 = vsel %vm1548, %v3133, %v3139
      %v3142 = vadd.f32 %v3093, %v3140
      %v3143 = vsel %vm1122, %v3142, -inf
      %3144 = vmax.xlane.f32.xlu0 %v3143
      %v3145 = vpop.xlane.xlu0 %3144
      %v3146 = vsub.f32 %v3142, %v3145
      %v3147 = vmul.f32 %v3146, 1.442695
      %v3148 = vpow.pop %v3147
      %v3149 = vsel %vm1122, %v3148, 0.0
      %3150 = vadd.xlane.f32.xlu0 %v3149
      %v3151 = vpop.xlane.xlu0 %3150
      %v3152 = vrcp.pop %v3151
      %v3153 = vmul.f32 %v3148, %v3152
      %v3156 = vsel %vm1122, %v3153, 0
      %3158 = vmatprep.subr.mxu0 0.0
      %3159 = vmatpush1.msra.mxu0 %v3020
      %3160 = vmatprep.subr.mxu0 0.0
      %3161 = vmatpush1.msra.mxu0 0.0
      %3162 = vmatprep.subr.mxu0 0.0
      %3163 = vmatpush1.msra.mxu0 0.0
      %3164 = vmatprep.subr.mxu0 0.0
      %3165 = vmatpush1.msra.mxu0 0.0
      %3166 = vmatprep.subr.mxu0 0.0
      %3167 = vmatpush1.msra.mxu0 0.0
      %3168 = vmatprep.subr.mxu0 0.0
      %3169 = vmatpush1.msra.mxu0 0.0
      %3170 = vmatprep.subr.mxu0 0.0
      %3171 = vmatpush1.msra.mxu0 0.0
      %3172 = vmatprep.subr.mxu0 0.0
      %3173 = vmatpush1.msra.mxu0 0.0
      %3174 = vmatprep.subr.mxu0 0.0
      %3175 = vmatpush1.msra.mxu0 0.0
      %3176 = vmatprep.subr.mxu0 0.0
      %3177 = vmatpush1.msra.mxu0 0.0
      %3178 = vmatprep.subr.mxu0 0.0
      %3179 = vmatpush1.msra.mxu0 0.0
      %3180 = vmatprep.subr.mxu0 0.0
      %3181 = vmatpush1.msra.mxu0 0.0
      %3182 = vmatprep.subr.mxu0 0.0
      %3183 = vmatpush1.msra.mxu0 0.0
      %3184 = vmatprep.subr.mxu0 0.0
      %3185 = vmatpush1.msra.mxu0 0.0
      %3186 = vmatprep.subr.mxu0 0.0
      %3187 = vmatpush1.msra.mxu0 0.0
      %3188 = vmatprep.subr.mxu0 0.0
      %3189 = vmatpush1.msra.mxu0 0.0
      %3190 = vmatprep.subr.mxu0 0.0
      %3191 = vmatpush1.msra.mxu0 0.0
      %3192 = vmatprep.subr.mxu0 0.0
      %3193 = vmatpush1.msra.mxu0 0.0
      %3194 = vmatprep.subr.mxu0 0.0
      %3195 = vmatpush1.msra.mxu0 0.0
      %3196 = vmatprep.subr.mxu0 0.0
      %3197 = vmatpush1.msra.mxu0 0.0
      %3198 = vmatprep.subr.mxu0 0.0
      %3199 = vmatpush1.msra.mxu0 0.0
      %3200 = vmatprep.subr.mxu0 0.0
      %3201 = vmatpush1.msra.mxu0 0.0
      %3202 = vmatprep.subr.mxu0 0.0
      %3203 = vmatpush1.msra.mxu0 0.0
      %3204 = vmatprep.subr.mxu0 0.0
      %3205 = vmatpush1.msra.mxu0 0.0
      %3206 = vmatprep.subr.mxu0 0.0
      %3207 = vmatpush1.msra.mxu0 0.0
      %3208 = vmatprep.subr.mxu0 0.0
      %3209 = vmatpush1.msra.mxu0 0.0
      %3210 = vmatprep.subr.mxu0 0.0
      %3211 = vmatpush1.msra.mxu0 0.0
      %3212 = vmatprep.subr.mxu0 0.0
      %3213 = vmatpush1.msra.mxu0 0.0
      %3214 = vmatprep.subr.mxu0 0.0
      %3215 = vmatpush1.msra.mxu0 0.0
      %3216 = vmatprep.subr.mxu0 0.0
      %3217 = vmatpush1.msra.mxu0 0.0
      %3218 = vmatprep.subr.mxu0 0.0
      %3219 = vmatpush1.msra.mxu0 0.0
      %3220 = vmatprep.subr.mxu0 0.0
      %3221 = vmatpush1.msra.mxu0 0.0
      %3222 = vmatprep.mubr.f32.mxu0 0.0
      %3223 = vmatmul.mubr.f32.gmra.mrb[0].mxu0 %v3156
      %v3224 = vpop.f32.mrb[0].mxu0
      %v3225 = vadd.f32 0.0, %v3224
      %v3226 = vpop.f32.mrb[0].mxu0
      %3227 = vdwg.mxu0
      %3228 = vrot.lane.b32.xlu0 %v2725, 112
      %v3229 = vpop.permute.xlu0 %3228
      %3230 = vrot.lane.b32.xlu0 %v2726, 112
      %v3231 = vpop.permute.xlu0 %3230
      %3232 = vrot.lane.b32.xlu0 %v2727, 112
      %v3233 = vpop.permute.xlu0 %3232
      %3234 = vrot.lane.b32.xlu0 %v2728, 112
      %v3235 = vpop.permute.xlu0 %3234
      %3236 = vrot.lane.b32.xlu0 %v2729, 112
      %v3237 = vpop.permute.xlu0 %3236
      %3238 = vrot.lane.b32.xlu0 %v2730, 112
      %v3239 = vpop.permute.xlu0 %3238
      %3240 = vrot.lane.b32.xlu0 %v2731, 112
      %v3241 = vpop.permute.xlu0 %3240
      %3242 = vrot.lane.b32.xlu0 %v2732, 112
      %v3243 = vpop.permute.xlu0 %3242
      %v3252 = vsel %vm1122, %v3229, 0.0
      %3253 = vadd.xlane.f32.xlu0 %v3252
      %v3254 = vpop.xlane.xlu0 %3253
      %v3255 = vsel %vm1122, %v3231, 0.0
      %3256 = vadd.xlane.f32.xlu0 %v3255
      %v3257 = vpop.xlane.xlu0 %3256
      %v3258 = vsel %vm1122, %v3233, 0.0
      %3259 = vadd.xlane.f32.xlu0 %v3258
      %v3260 = vpop.xlane.xlu0 %3259
      %v3261 = vsel %vm1122, %v3235, 0.0
      %3262 = vadd.xlane.f32.xlu0 %v3261
      %v3263 = vpop.xlane.xlu0 %3262
      %v3264 = vsel %vm1122, %v3237, 0.0
      %3265 = vadd.xlane.f32.xlu0 %v3264
      %v3266 = vpop.xlane.xlu0 %3265
      %v3267 = vsel %vm1122, %v3239, 0.0
      %3268 = vadd.xlane.f32.xlu0 %v3267
      %v3269 = vpop.xlane.xlu0 %3268
      %v3270 = vsel %vm1122, %v3241, 0.0
      %3271 = vadd.xlane.f32.xlu0 %v3270
      %v3272 = vpop.xlane.xlu0 %3271
      %v3273 = vsel %vm1122, %v3243, 0.0
      %3274 = vadd.xlane.f32.xlu0 %v3273
      %v3275 = vpop.xlane.xlu0 %3274
      %3276 = vrot.lane.b32.xlu0 %v2614, 112
      %v3277 = vpop.permute.xlu0 %3276
      %v3278 = vsel %vm1122, %v3277, 0
      %3280 = vmatprep.subr.mxu0 0.0
      %3281 = vmatpush1.xpose.msra.mxu0 %v3278
      %3282 = vmatprep.subr.mxu0 0.0
      %3283 = vmatpush1.xpose.msra.mxu0 0.0
      %3284 = vmatprep.subr.mxu0 0.0
      %3285 = vmatpush1.xpose.msra.mxu0 0.0
      %3286 = vmatprep.subr.mxu0 0.0
      %3287 = vmatpush1.xpose.msra.mxu0 0.0
      %3288 = vmatprep.subr.mxu0 0.0
      %3289 = vmatpush1.xpose.msra.mxu0 0.0
      %3290 = vmatprep.subr.mxu0 0.0
      %3291 = vmatpush1.xpose.msra.mxu0 0.0
      %3292 = vmatprep.subr.mxu0 0.0
      %3293 = vmatpush1.xpose.msra.mxu0 0.0
      %3294 = vmatprep.subr.mxu0 0.0
      %3295 = vmatpush1.xpose.msra.mxu0 0.0
      %3296 = vmatprep.subr.mxu0 0.0
      %3297 = vmatpush1.xpose.msra.mxu0 0.0
      %3298 = vmatprep.subr.mxu0 0.0
      %3299 = vmatpush1.xpose.msra.mxu0 0.0
      %3300 = vmatprep.subr.mxu0 0.0
      %3301 = vmatpush1.xpose.msra.mxu0 0.0
      %3302 = vmatprep.subr.mxu0 0.0
      %3303 = vmatpush1.xpose.msra.mxu0 0.0
      %3304 = vmatprep.subr.mxu0 0.0
      %3305 = vmatpush1.xpose.msra.mxu0 0.0
      %3306 = vmatprep.subr.mxu0 0.0
      %3307 = vmatpush1.xpose.msra.mxu0 0.0
      %3308 = vmatprep.subr.mxu0 0.0
      %3309 = vmatpush1.xpose.msra.mxu0 0.0
      %3310 = vmatprep.subr.mxu0 0.0
      %3311 = vmatpush1.xpose.msra.mxu0 0.0
      %3312 = vmatprep.subr.mxu0 0.0
      %3313 = vmatpush1.xpose.msra.mxu0 0.0
      %3314 = vmatprep.subr.mxu0 0.0
      %3315 = vmatpush1.xpose.msra.mxu0 0.0
      %3316 = vmatprep.subr.mxu0 0.0
      %3317 = vmatpush1.xpose.msra.mxu0 0.0
      %3318 = vmatprep.subr.mxu0 0.0
      %3319 = vmatpush1.xpose.msra.mxu0 0.0
      %3320 = vmatprep.subr.mxu0 0.0
      %3321 = vmatpush1.xpose.msra.mxu0 0.0
      %3322 = vmatprep.subr.mxu0 0.0
      %3323 = vmatpush1.xpose.msra.mxu0 0.0
      %3324 = vmatprep.subr.mxu0 0.0
      %3325 = vmatpush1.xpose.msra.mxu0 0.0
      %3326 = vmatprep.subr.mxu0 0.0
      %3327 = vmatpush1.xpose.msra.mxu0 0.0
      %3328 = vmatprep.subr.mxu0 0.0
      %3329 = vmatpush1.xpose.msra.mxu0 0.0
      %3330 = vmatprep.subr.mxu0 0.0
      %3331 = vmatpush1.xpose.msra.mxu0 0.0
      %3332 = vmatprep.subr.mxu0 0.0
      %3333 = vmatpush1.xpose.msra.mxu0 0.0
      %3334 = vmatprep.subr.mxu0 0.0
      %3335 = vmatpush1.xpose.msra.mxu0 0.0
      %3336 = vmatprep.subr.mxu0 0.0
      %3337 = vmatpush1.xpose.msra.mxu0 0.0
      %3338 = vmatprep.subr.mxu0 0.0
      %3339 = vmatpush1.xpose.msra.mxu0 0.0
      %3340 = vmatprep.subr.mxu0 0.0
      %3341 = vmatpush1.xpose.msra.mxu0 0.0
      %3342 = vmatprep.subr.mxu0 0.0
      %3343 = vmatpush1.xpose.msra.mxu0 0.0
      %3344 = vmatprep.mubr.f32.mxu0 0.0
      %3345 = vmatmul.mubr.f32.gmra.mrb[0].mxu0 %v3278
      %v3346 = vpop.f32.mrb[0].mxu0
      %v3347 = vadd.f32 0.0, %v3346
      %v3348 = vpop.f32.mrb[0].mxu0
      %3349 = vdwg.mxu0
      %v3350 = vmul.f32 %v3347, 0.35355338
      %v3359 = vlaneseq
      %v3360 = vshrl.u32 %v3359, 7
      %v3361 = vsub.s32 %v1503, %v3360
      %v3362 = vrot.slane %v3254, %v3361
      %v3363 = vlaneseq
      %v3364 = vshrl.u32 %v3363, 7
      %v3365 = vsub.s32 %v1503, %v3364
      %v3366 = vrot.slane %v3257, %v3365
      %v3367 = vlaneseq
      %v3368 = vshrl.u32 %v3367, 7
      %v3369 = vsub.s32 %v1503, %v3368
      %v3370 = vrot.slane %v3260, %v3369
      %v3371 = vlaneseq
      %v3372 = vshrl.u32 %v3371, 7
      %v3373 = vsub.s32 %v1503, %v3372
      %v3374 = vrot.slane %v3263, %v3373
      %v3375 = vlaneseq
      %v3376 = vshrl.u32 %v3375, 7
      %v3377 = vsub.s32 %v1503, %v3376
      %v3378 = vrot.slane %v3266, %v3377
      %v3379 = vlaneseq
      %v3380 = vshrl.u32 %v3379, 7
      %v3381 = vsub.s32 %v1503, %v3380
      %v3382 = vrot.slane %v3269, %v3381
      %v3383 = vlaneseq
      %v3384 = vshrl.u32 %v3383, 7
      %v3385 = vsub.s32 %v1503, %v3384
      %v3386 = vrot.slane %v3272, %v3385
      %v3387 = vlaneseq
      %v3388 = vshrl.u32 %v3387, 7
      %v3389 = vsub.s32 %v1503, %v3388
      %v3390 = vrot.slane %v3275, %v3389
      %v3391 = vsel %vm1536, %v3366, %v3362
      %v3392 = vsel %vm1538, %v3370, %v3391
      %v3393 = vsel %vm1540, %v3374, %v3392
      %v3394 = vsel %vm1542, %v3378, %v3393
      %v3395 = vsel %vm1544, %v3382, %v3394
      %v3396 = vsel %vm1546, %v3386, %v3395
      %v3397 = vsel %vm1548, %v3390, %v3396
      %v3399 = vadd.f32 %v3350, %v3397
      %v3400 = vsel %vm1122, %v3399, -inf
      %3401 = vmax.xlane.f32.xlu0 %v3400
      %v3402 = vpop.xlane.xlu0 %3401
      %v3403 = vsub.f32 %v3399, %v3402
      %v3404 = vmul.f32 %v3403, 1.442695
      %v3405 = vpow.pop %v3404
      %v3406 = vsel %vm1122, %v3405, 0.0
      %3407 = vadd.xlane.f32.xlu0 %v3406
      %v3408 = vpop.xlane.xlu0 %3407
      %v3409 = vrcp.pop %v3408
      %v3410 = vmul.f32 %v3405, %v3409
      %v3413 = vsel %vm1122, %v3410, 0
      %3415 = vmatprep.subr.mxu0 0.0
      %3416 = vmatpush1.msra.mxu0 %v3277
      %3417 = vmatprep.subr.mxu0 0.0
      %3418 = vmatpush1.msra.mxu0 0.0
      %3419 = vmatprep.subr.mxu0 0.0
      %3420 = vmatpush1.msra.mxu0 0.0
      %3421 = vmatprep.subr.mxu0 0.0
      %3422 = vmatpush1.msra.mxu0 0.0
      %3423 = vmatprep.subr.mxu0 0.0
      %3424 = vmatpush1.msra.mxu0 0.0
      %3425 = vmatprep.subr.mxu0 0.0
      %3426 = vmatpush1.msra.mxu0 0.0
      %3427 = vmatprep.subr.mxu0 0.0
      %3428 = vmatpush1.msra.mxu0 0.0
      %3429 = vmatprep.subr.mxu0 0.0
      %3430 = vmatpush1.msra.mxu0 0.0
      %3431 = vmatprep.subr.mxu0 0.0
      %3432 = vmatpush1.msra.mxu0 0.0
      %3433 = vmatprep.subr.mxu0 0.0
      %3434 = vmatpush1.msra.mxu0 0.0
      %3435 = vmatprep.subr.mxu0 0.0
      %3436 = vmatpush1.msra.mxu0 0.0
      %3437 = vmatprep.subr.mxu0 0.0
      %3438 = vmatpush1.msra.mxu0 0.0
      %3439 = vmatprep.subr.mxu0 0.0
      %3440 = vmatpush1.msra.mxu0 0.0
      %3441 = vmatprep.subr.mxu0 0.0
      %3442 = vmatpush1.msra.mxu0 0.0
      %3443 = vmatprep.subr.mxu0 0.0
      %3444 = vmatpush1.msra.mxu0 0.0
      %3445 = vmatprep.subr.mxu0 0.0
      %3446 = vmatpush1.msra.mxu0 0.0
      %3447 = vmatprep.subr.mxu0 0.0
      %3448 = vmatpush1.msra.mxu0 0.0
      %3449 = vmatprep.subr.mxu0 0.0
      %3450 = vmatpush1.msra.mxu0 0.0
      %3451 = vmatprep.subr.mxu0 0.0
      %3452 = vmatpush1.msra.mxu0 0.0
      %3453 = vmatprep.subr.mxu0 0.0
      %3454 = vmatpush1.msra.mxu0 0.0
      %3455 = vmatprep.subr.mxu0 0.0
      %3456 = vmatpush1.msra.mxu0 0.0
      %3457 = vmatprep.subr.mxu0 0.0
      %3458 = vmatpush1.msra.mxu0 0.0
      %3459 = vmatprep.subr.mxu0 0.0
      %3460 = vmatpush1.msra.mxu0 0.0
      %3461 = vmatprep.subr.mxu0 0.0
      %3462 = vmatpush1.msra.mxu0 0.0
      %3463 = vmatprep.subr.mxu0 0.0
      %3464 = vmatpush1.msra.mxu0 0.0
      %3465 = vmatprep.subr.mxu0 0.0
      %3466 = vmatpush1.msra.mxu0 0.0
      %3467 = vmatprep.subr.mxu0 0.0
      %3468 = vmatpush1.msra.mxu0 0.0
      %3469 = vmatprep.subr.mxu0 0.0
      %3470 = vmatpush1.msra.mxu0 0.0
      %3471 = vmatprep.subr.mxu0 0.0
      %3472 = vmatpush1.msra.mxu0 0.0
      %3473 = vmatprep.subr.mxu0 0.0
      %3474 = vmatpush1.msra.mxu0 0.0
      %3475 = vmatprep.subr.mxu0 0.0
      %3476 = vmatpush1.msra.mxu0 0.0
      %3477 = vmatprep.subr.mxu0 0.0
      %3478 = vmatpush1.msra.mxu0 0.0
      %3479 = vmatprep.mubr.f32.mxu0 0.0
      %3480 = vmatmul.mubr.f32.gmra.mrb[0].mxu0 %v3413
      %v3481 = vpop.f32.mrb[0].mxu0
      %v3482 = vadd.f32 0.0, %v3481
      %v3483 = vpop.f32.mrb[0].mxu0
      %3484 = vdwg.mxu0
      %3485 = vrot.lane.b32.xlu0 %v2725, 104
      %v3486 = vpop.permute.xlu0 %3485
      %3487 = vrot.lane.b32.xlu0 %v2726, 104
      %v3488 = vpop.permute.xlu0 %3487
      %3489 = vrot.lane.b32.xlu0 %v2727, 104
      %v3490 = vpop.permute.xlu0 %3489
      %3491 = vrot.lane.b32.xlu0 %v2728, 104
      %v3492 = vpop.permute.xlu0 %3491
      %3493 = vrot.lane.b32.xlu0 %v2729, 104
      %v3494 = vpop.permute.xlu0 %3493
      %3495 = vrot.lane.b32.xlu0 %v2730, 104
      %v3496 = vpop.permute.xlu0 %3495
      %3497 = vrot.lane.b32.xlu0 %v2731, 104
      %v3498 = vpop.permute.xlu0 %3497
      %3499 = vrot.lane.b32.xlu0 %v2732, 104
      %v3500 = vpop.permute.xlu0 %3499
      %v3509 = vsel %vm1122, %v3486, 0.0
      %3510 = vadd.xlane.f32.xlu0 %v3509
      %v3511 = vpop.xlane.xlu0 %3510
      %v3512 = vsel %vm1122, %v3488, 0.0
      %3513 = vadd.xlane.f32.xlu0 %v3512
      %v3514 = vpop.xlane.xlu0 %3513
      %v3515 = vsel %vm1122, %v3490, 0.0
      %3516 = vadd.xlane.f32.xlu0 %v3515
      %v3517 = vpop.xlane.xlu0 %3516
      %v3518 = vsel %vm1122, %v3492, 0.0
      %3519 = vadd.xlane.f32.xlu0 %v3518
      %v3520 = vpop.xlane.xlu0 %3519
      %v3521 = vsel %vm1122, %v3494, 0.0
      %3522 = vadd.xlane.f32.xlu0 %v3521
      %v3523 = vpop.xlane.xlu0 %3522
      %v3524 = vsel %vm1122, %v3496, 0.0
      %3525 = vadd.xlane.f32.xlu0 %v3524
      %v3526 = vpop.xlane.xlu0 %3525
      %v3527 = vsel %vm1122, %v3498, 0.0
      %3528 = vadd.xlane.f32.xlu0 %v3527
      %v3529 = vpop.xlane.xlu0 %3528
      %v3530 = vsel %vm1122, %v3500, 0.0
      %3531 = vadd.xlane.f32.xlu0 %v3530
      %v3532 = vpop.xlane.xlu0 %3531
      %3533 = vrot.lane.b32.xlu0 %v2614, 104
      %v3534 = vpop.permute.xlu0 %3533
      %v3535 = vsel %vm1122, %v3534, 0
      %3537 = vmatprep.subr.mxu0 0.0
      %3538 = vmatpush1.xpose.msra.mxu0 %v3535
      %3539 = vmatprep.subr.mxu0 0.0
      %3540 = vmatpush1.xpose.msra.mxu0 0.0
      %3541 = vmatprep.subr.mxu0 0.0
      %3542 = vmatpush1.xpose.msra.mxu0 0.0
      %3543 = vmatprep.subr.mxu0 0.0
      %3544 = vmatpush1.xpose.msra.mxu0 0.0
      %3545 = vmatprep.subr.mxu0 0.0
      %3546 = vmatpush1.xpose.msra.mxu0 0.0
      %3547 = vmatprep.subr.mxu0 0.0
      %3548 = vmatpush1.xpose.msra.mxu0 0.0
      %3549 = vmatprep.subr.mxu0 0.0
      %3550 = vmatpush1.xpose.msra.mxu0 0.0
      %3551 = vmatprep.subr.mxu0 0.0
      %3552 = vmatpush1.xpose.msra.mxu0 0.0
      %3553 = vmatprep.subr.mxu0 0.0
      %3554 = vmatpush1.xpose.msra.mxu0 0.0
      %3555 = vmatprep.subr.mxu0 0.0
      %3556 = vmatpush1.xpose.msra.mxu0 0.0
      %3557 = vmatprep.subr.mxu0 0.0
      %3558 = vmatpush1.xpose.msra.mxu0 0.0
      %3559 = vmatprep.subr.mxu0 0.0
      %3560 = vmatpush1.xpose.msra.mxu0 0.0
      %3561 = vmatprep.subr.mxu0 0.0
      %3562 = vmatpush1.xpose.msra.mxu0 0.0
      %3563 = vmatprep.subr.mxu0 0.0
      %3564 = vmatpush1.xpose.msra.mxu0 0.0
      %3565 = vmatprep.subr.mxu0 0.0
      %3566 = vmatpush1.xpose.msra.mxu0 0.0
      %3567 = vmatprep.subr.mxu0 0.0
      %3568 = vmatpush1.xpose.msra.mxu0 0.0
      %3569 = vmatprep.subr.mxu0 0.0
      %3570 = vmatpush1.xpose.msra.mxu0 0.0
      %3571 = vmatprep.subr.mxu0 0.0
      %3572 = vmatpush1.xpose.msra.mxu0 0.0
      %3573 = vmatprep.subr.mxu0 0.0
      %3574 = vmatpush1.xpose.msra.mxu0 0.0
      %3575 = vmatprep.subr.mxu0 0.0
      %3576 = vmatpush1.xpose.msra.mxu0 0.0
      %3577 = vmatprep.subr.mxu0 0.0
      %3578 = vmatpush1.xpose.msra.mxu0 0.0
      %3579 = vmatprep.subr.mxu0 0.0
      %3580 = vmatpush1.xpose.msra.mxu0 0.0
      %3581 = vmatprep.subr.mxu0 0.0
      %3582 = vmatpush1.xpose.msra.mxu0 0.0
      %3583 = vmatprep.subr.mxu0 0.0
      %3584 = vmatpush1.xpose.msra.mxu0 0.0
      %3585 = vmatprep.subr.mxu0 0.0
      %3586 = vmatpush1.xpose.msra.mxu0 0.0
      %3587 = vmatprep.subr.mxu0 0.0
      %3588 = vmatpush1.xpose.msra.mxu0 0.0
      %3589 = vmatprep.subr.mxu0 0.0
      %3590 = vmatpush1.xpose.msra.mxu0 0.0
      %3591 = vmatprep.subr.mxu0 0.0
      %3592 = vmatpush1.xpose.msra.mxu0 0.0
      %3593 = vmatprep.subr.mxu0 0.0
      %3594 = vmatpush1.xpose.msra.mxu0 0.0
      %3595 = vmatprep.subr.mxu0 0.0
      %3596 = vmatpush1.xpose.msra.mxu0 0.0
      %3597 = vmatprep.subr.mxu0 0.0
      %3598 = vmatpush1.xpose.msra.mxu0 0.0
      %3599 = vmatprep.subr.mxu0 0.0
      %3600 = vmatpush1.xpose.msra.mxu0 0.0
      %3601 = vmatprep.mubr.f32.mxu0 0.0
      %3602 = vmatmul.mubr.f32.gmra.mrb[0].mxu0 %v3535
      %v3603 = vpop.f32.mrb[0].mxu0
      %v3604 = vadd.f32 0.0, %v3603
      %v3605 = vpop.f32.mrb[0].mxu0
      %3606 = vdwg.mxu0
      %v3607 = vmul.f32 %v3604, 0.35355338
      %v3616 = vlaneseq
      %v3617 = vshrl.u32 %v3616, 7
      %v3618 = vsub.s32 %v1503, %v3617
      %v3619 = vrot.slane %v3511, %v3618
      %v3620 = vlaneseq
      %v3621 = vshrl.u32 %v3620, 7
      %v3622 = vsub.s32 %v1503, %v3621
      %v3623 = vrot.slane %v3514, %v3622
      %v3624 = vlaneseq
      %v3625 = vshrl.u32 %v3624, 7
      %v3626 = vsub.s32 %v1503, %v3625
      %v3627 = vrot.slane %v3517, %v3626
      %v3628 = vlaneseq
      %v3629 = vshrl.u32 %v3628, 7
      %v3630 = vsub.s32 %v1503, %v3629
      %v3631 = vrot.slane %v3520, %v3630
      %v3632 = vlaneseq
      %v3633 = vshrl.u32 %v3632, 7
      %v3634 = vsub.s32 %v1503, %v3633
      %v3635 = vrot.slane %v3523, %v3634
      %v3636 = vlaneseq
      %v3637 = vshrl.u32 %v3636, 7
      %v3638 = vsub.s32 %v1503, %v3637
      %v3639 = vrot.slane %v3526, %v3638
      %v3640 = vlaneseq
      %v3641 = vshrl.u32 %v3640, 7
      %v3642 = vsub.s32 %v1503, %v3641
      %v3643 = vrot.slane %v3529, %v3642
      %v3644 = vlaneseq
      %v3645 = vshrl.u32 %v3644, 7
      %v3646 = vsub.s32 %v1503, %v3645
      %v3647 = vrot.slane %v3532, %v3646
      %v3648 = vsel %vm1536, %v3623, %v3619
      %v3649 = vsel %vm1538, %v3627, %v3648
      %v3650 = vsel %vm1540, %v3631, %v3649
      %v3651 = vsel %vm1542, %v3635, %v3650
      %v3652 = vsel %vm1544, %v3639, %v3651
      %v3653 = vsel %vm1546, %v3643, %v3652
      %v3654 = vsel %vm1548, %v3647, %v3653
      %v3656 = vadd.f32 %v3607, %v3654
      %v3657 = vsel %vm1122, %v3656, -inf
      %3658 = vmax.xlane.f32.xlu0 %v3657
      %v3659 = vpop.xlane.xlu0 %3658
      %v3660 = vsub.f32 %v3656, %v3659
      %v3661 = vmul.f32 %v3660, 1.442695
      %v3662 = vpow.pop %v3661
      %v3663 = vsel %vm1122, %v3662, 0.0
      %3664 = vadd.xlane.f32.xlu0 %v3663
      %v3665 = vpop.xlane.xlu0 %3664
      %v3666 = vrcp.pop %v3665
      %v3667 = vmul.f32 %v3662, %v3666
      %v3670 = vsel %vm1122, %v3667, 0
      %3672 = vmatprep.subr.mxu0 0.0
      %3673 = vmatpush1.msra.mxu0 %v3534
      %3674 = vmatprep.subr.mxu0 0.0
      %3675 = vmatpush1.msra.mxu0 0.0
      %3676 = vmatprep.subr.mxu0 0.0
      %3677 = vmatpush1.msra.mxu0 0.0
      %3678 = vmatprep.subr.mxu0 0.0
      %3679 = vmatpush1.msra.mxu0 0.0
      %3680 = vmatprep.subr.mxu0 0.0
      %3681 = vmatpush1.msra.mxu0 0.0
      %3682 = vmatprep.subr.mxu0 0.0
      %3683 = vmatpush1.msra.mxu0 0.0
      %3684 = vmatprep.subr.mxu0 0.0
      %3685 = vmatpush1.msra.mxu0 0.0
      %3686 = vmatprep.subr.mxu0 0.0
      %3687 = vmatpush1.msra.mxu0 0.0
      %3688 = vmatprep.subr.mxu0 0.0
      %3689 = vmatpush1.msra.mxu0 0.0
      %3690 = vmatprep.subr.mxu0 0.0
      %3691 = vmatpush1.msra.mxu0 0.0
      %3692 = vmatprep.subr.mxu0 0.0
      %3693 = vmatpush1.msra.mxu0 0.0
      %3694 = vmatprep.subr.mxu0 0.0
      %3695 = vmatpush1.msra.mxu0 0.0
      %3696 = vmatprep.subr.mxu0 0.0
      %3697 = vmatpush1.msra.mxu0 0.0
      %3698 = vmatprep.subr.mxu0 0.0
      %3699 = vmatpush1.msra.mxu0 0.0
      %3700 = vmatprep.subr.mxu0 0.0
      %3701 = vmatpush1.msra.mxu0 0.0
      %3702 = vmatprep.subr.mxu0 0.0
      %3703 = vmatpush1.msra.mxu0 0.0
      %3704 = vmatprep.subr.mxu0 0.0
      %3705 = vmatpush1.msra.mxu0 0.0
      %3706 = vmatprep.subr.mxu0 0.0
      %3707 = vmatpush1.msra.mxu0 0.0
      %3708 = vmatprep.subr.mxu0 0.0
      %3709 = vmatpush1.msra.mxu0 0.0
      %3710 = vmatprep.subr.mxu0 0.0
      %3711 = vmatpush1.msra.mxu0 0.0
      %3712 = vmatprep.subr.mxu0 0.0
      %3713 = vmatpush1.msra.mxu0 0.0
      %3714 = vmatprep.subr.mxu0 0.0
      %3715 = vmatpush1.msra.mxu0 0.0
      %3716 = vmatprep.subr.mxu0 0.0
      %3717 = vmatpush1.msra.mxu0 0.0
      %3718 = vmatprep.subr.mxu0 0.0
      %3719 = vmatpush1.msra.mxu0 0.0
      %3720 = vmatprep.subr.mxu0 0.0
      %3721 = vmatpush1.msra.mxu0 0.0
      %3722 = vmatprep.subr.mxu0 0.0
      %3723 = vmatpush1.msra.mxu0 0.0
      %3724 = vmatprep.subr.mxu0 0.0
      %3725 = vmatpush1.msra.mxu0 0.0
      %3726 = vmatprep.subr.mxu0 0.0
      %3727 = vmatpush1.msra.mxu0 0.0
      %3728 = vmatprep.subr.mxu0 0.0
      %3729 = vmatpush1.msra.mxu0 0.0
      %3730 = vmatprep.subr.mxu0 0.0
      %3731 = vmatpush1.msra.mxu0 0.0
      %3732 = vmatprep.subr.mxu0 0.0
      %3733 = vmatpush1.msra.mxu0 0.0
      %3734 = vmatprep.subr.mxu0 0.0
      %3735 = vmatpush1.msra.mxu0 0.0
      %3736 = vmatprep.mubr.f32.mxu0 0.0
      %3737 = vmatmul.mubr.f32.gmra.mrb[0].mxu0 %v3670
      %v3738 = vpop.f32.mrb[0].mxu0
      %v3739 = vadd.f32 0.0, %v3738
      %v3740 = vpop.f32.mrb[0].mxu0
      %3741 = vdwg.mxu0
      %3743 = vrot.lane.b32.xlu0 %v3225, 8
      %v3744 = vpop.permute.xlu0 %3743
      %3747 = vrot.lane.b32.xlu0 %v3482, 16
      %v3748 = vpop.permute.xlu0 %3747
      %3751 = vrot.lane.b32.xlu0 %v3739, 24
      %v3752 = vpop.permute.xlu0 %3751
      %v3754 = vsel %vm1122, %v2960, %v3744
      %v3755 = vsel %vm2428, %v3754, %v3748
      %v3756 = vsel %vm2430, %v3755, %v3752
      %v3757 = vadd.f32 %v2614, %v3756
      %v3758 = vsel %vm1090, %v3757, 0.0
      %3759 = vadd.xlane.f32.xlu0 %v3758
      %v3760 = vpop.xlane.xlu0 %3759
      %v3761 = vmul.f32 %v3760, %v1094
      %v3762 = vsub.f32 %v3757, %v3761
      %v3763 = vmul.f32 %v3762, %v3762
      %v3764 = vsel %vm1090, %v3763, 0.0
      %3765 = vadd.xlane.f32.xlu0 %v3764
      %v3766 = vpop.xlane.xlu0 %3765
      %v3767 = vmul.f32 %v3766, %v1094
      %v3768 = vadd.f32 %v3767, 1e-05
      %v3769 = vrsqrt.pop %v3768
      %v3770 = vmul.f32 %v3762, %v3769
      %v3771 = vlaneseq
      %v3772 = vshrl.u32 %v3771, 7
      %v3773 = vsub.s32 0, %v3772
      %v3774 = vrot.slane %v1084, %v3773
      %v3775 = vmul.f32 %v3770, %v3774
      %v3776 = vlaneseq
      %v3777 = vshrl.u32 %v3776, 7
      %v3778 = vsub.s32 1, %v3777
      %v3779 = vrot.slane %v1084, %v3778
      %v3780 = vadd.f32 %v3775, %v3779
      %v3781 = vpack.c.bf16 %v3780, %v3780
      %v3782 = vlaneseq
      %v3783 = vshrl.u32 %v3782, 7
      %v3784 = vsub.s32 6, %v3783
      %v3785 = vrot.slane %v1083, %v3784
      %v3790 = vunpack.c.l.b16 %v2615
      %v3791 = vunpack.c.l.b16 %v2616
      %v3792 = vunpack.c.l.b16 %v2617
      %v3793 = vunpack.c.l.b16 %v2618
      %v3794 = vpack.c.b16 %v3791, %v3790
      %v3795 = vpack.c.b16 %v3793, %v3792
      %v3799 = vsel %vm1090, %v3781, 0
      %3801 = vmatprep.subr.bf16.mxu0 0
      %3802 = vmatpush1.bf16.msra.mxu0 %v3794
      %3803 = vmatprep.subr.bf16.mxu0 0
      %3804 = vmatpush1.bf16.msra.mxu0 %v3795
      %3805 = vmatprep.subr.bf16.mxu0 0
      %3806 = vmatpush1.bf16.msra.mxu0 0
      %3807 = vmatprep.subr.bf16.mxu0 0
      %3808 = vmatpush1.bf16.msra.mxu0 0
      %3809 = vmatprep.subr.bf16.mxu0 0
      %3810 = vmatpush1.bf16.msra.mxu0 0
      %3811 = vmatprep.subr.bf16.mxu0 0
      %3812 = vmatpush1.bf16.msra.mxu0 0
      %3813 = vmatprep.subr.bf16.mxu0 0
      %3814 = vmatpush1.bf16.msra.mxu0 0
      %3815 = vmatprep.subr.bf16.mxu0 0
      %3816 = vmatpush1.bf16.msra.mxu0 0
      %3817 = vmatprep.subr.bf16.mxu0 0
      %3818 = vmatpush1.bf16.msra.mxu0 0
      %3819 = vmatprep.subr.bf16.mxu0 0
      %3820 = vmatpush1.bf16.msra.mxu0 0
      %3821 = vmatprep.subr.bf16.mxu0 0
      %3822 = vmatpush1.bf16.msra.mxu0 0
      %3823 = vmatprep.subr.bf16.mxu0 0
      %3824 = vmatpush1.bf16.msra.mxu0 0
      %3825 = vmatprep.subr.bf16.mxu0 0
      %3826 = vmatpush1.bf16.msra.mxu0 0
      %3827 = vmatprep.subr.bf16.mxu0 0
      %3828 = vmatpush1.bf16.msra.mxu0 0
      %3829 = vmatprep.subr.bf16.mxu0 0
      %3830 = vmatpush1.bf16.msra.mxu0 0
      %3831 = vmatprep.subr.bf16.mxu0 0
      %3832 = vmatpush1.bf16.msra.mxu0 0
      %3833 = vmatprep.mubr.bf16.mxu0 0
      %3834 = vmatmul.mubr.bf16.gmra.mrb[0].mxu0 %v3799
      %v3835 = vpop.f32.mrb[0].mxu0
      %v3836 = vadd.f32 %v3785, %v3835
      %v3837 = vpop.f32.mrb[0].mxu0
      %v3838 = vpop.f32.mrb[0].mxu0
      %v3839 = vpop.f32.mrb[0].mxu0
      %3840 = vdwg.mxu0
      %vm3841 = vcmp.ge.f32.partialorder %v3836, 0.0
      %v3842 = vmul.f32 %v3836, 0.01
      %v3843 = vsel %vm3841, %v3836, %v3842
      %v3844 = vpack.c.bf16 %v3843, %v3843
      %v3845 = vlaneseq
      %v3846 = vshrl.u32 %v3845, 7
      %v3847 = vsub.s32 7, %v3846
      %v3848 = vrot.slane %v1083, %v3847
      %v3857 = vunpack.c.l.b16 %v2619
      %v3858 = vunpack.c.l.b16 %v2620
      %v3859 = vunpack.c.l.b16 %v2621
      %v3860 = vunpack.c.l.b16 %v2622
      %v3861 = vunpack.c.l.b16 %v2623
      %v3862 = vunpack.c.l.b16 %v2624
      %v3863 = vunpack.c.l.b16 %v2625
      %v3864 = vunpack.c.l.b16 %v2626
      %v3865 = vpack.c.b16 %v3858, %v3857
      %v3866 = vpack.c.b16 %v3860, %v3859
      %v3867 = vpack.c.b16 %v3862, %v3861
      %v3868 = vpack.c.b16 %v3864, %v3863
      %v3874 = vsel %vm1235, %v3844, 0
      %3876 = vmatprep.subr.bf16.mxu0 0
      %3877 = vmatpush1.bf16.msra.mxu0 %v3865
      %3878 = vmatprep.subr.bf16.mxu0 0
      %3879 = vmatpush1.bf16.msra.mxu0 %v3866
      %3880 = vmatprep.subr.bf16.mxu0 0
      %3881 = vmatpush1.bf16.msra.mxu0 %v3867
      %3882 = vmatprep.subr.bf16.mxu0 0
      %3883 = vmatpush1.bf16.msra.mxu0 %v3868
      %3884 = vmatprep.subr.bf16.mxu0 0
      %3885 = vmatpush1.bf16.msra.mxu0 0
      %3886 = vmatprep.subr.bf16.mxu0 0
      %3887 = vmatpush1.bf16.msra.mxu0 0
      %3888 = vmatprep.subr.bf16.mxu0 0
      %3889 = vmatpush1.bf16.msra.mxu0 0
      %3890 = vmatprep.subr.bf16.mxu0 0
      %3891 = vmatpush1.bf16.msra.mxu0 0
      %3892 = vmatprep.subr.bf16.mxu0 0
      %3893 = vmatpush1.bf16.msra.mxu0 0
      %3894 = vmatprep.subr.bf16.mxu0 0
      %3895 = vmatpush1.bf16.msra.mxu0 0
      %3896 = vmatprep.subr.bf16.mxu0 0
      %3897 = vmatpush1.bf16.msra.mxu0 0
      %3898 = vmatprep.subr.bf16.mxu0 0
      %3899 = vmatpush1.bf16.msra.mxu0 0
      %3900 = vmatprep.subr.bf16.mxu0 0
      %3901 = vmatpush1.bf16.msra.mxu0 0
      %3902 = vmatprep.subr.bf16.mxu0 0
      %3903 = vmatpush1.bf16.msra.mxu0 0
      %3904 = vmatprep.subr.bf16.mxu0 0
      %3905 = vmatpush1.bf16.msra.mxu0 0
      %3906 = vmatprep.subr.bf16.mxu0 0
      %3907 = vmatpush1.bf16.msra.mxu0 0
      %3908 = vmatprep.mubr.bf16.mxu0 0
      %3909 = vmatmul.mubr.bf16.gmra.mrb[0].mxu0 %v3874
      %v3910 = vpop.f32.mrb[0].mxu0
      %v3911 = vadd.f32 %v3848, %v3910
      %v3912 = vpop.f32.mrb[0].mxu0
      %v3913 = vpop.f32.mrb[0].mxu0
      %v3914 = vpop.f32.mrb[0].mxu0
      %3915 = vdwg.mxu0
      %v3916 = vadd.f32 %v3780, %v3911
      %v3917 = vsel %vm1090, %v3916, 0.0
      %3918 = vadd.xlane.f32.xlu0 %v3917
      %v3919 = vpop.xlane.xlu0 %3918
      %v3920 = vmul.f32 %v3919, %v1094
      %v3921 = vsub.f32 %v3916, %v3920
      %v3922 = vmul.f32 %v3921, %v3921
      %v3923 = vsel %vm1090, %v3922, 0.0
      %3924 = vadd.xlane.f32.xlu0 %v3923
      %v3925 = vpop.xlane.xlu0 %3924
      %v3926 = vmul.f32 %v3925, %v1094
      %v3927 = vadd.f32 %v3926, 1e-05
      %v3928 = vrsqrt.pop %v3927
      %v3929 = vmul.f32 %v3921, %v3928
      %v3930 = vlaneseq
      %v3931 = vshrl.u32 %v3930, 7
      %v3932 = vsub.s32 2, %v3931
      %v3933 = vrot.slane %v1084, %v3932
      %v3934 = vmul.f32 %v3929, %v3933
      %v3935 = vlaneseq
      %v3936 = vshrl.u32 %v3935, 7
      %v3937 = vsub.s32 3, %v3936
      %v3938 = vrot.slane %v1084, %v3937
      %v3939 = vadd.f32 %v3934, %v3938
      %v3940 = vld [vmem:[%s1076] sm:$0x1]
      %v3941 = vld [vmem:[%s63] sm:$0xff]
      %v3942 = vld [vmem:[%s35] sm:$0xf]
      %v3943 = vld [vmem:[%s35 + $0x4] sm:$0xf]
      %v3944 = vld [vmem:[%s35 + $0x8] sm:$0xf]
      %v3945 = vld [vmem:[%s35 + $0xc] sm:$0xf]
      %v3946 = vld [vmem:[%s33] sm:$0xf]
      %v3947 = vld [vmem:[%s33 + $0x4] sm:$0xf]
      %v3948 = vld [vmem:[%s33 + $0x8] sm:$0xf]
      %v3949 = vld [vmem:[%s33 + $0xc] sm:$0xf]
      %v3950 = vld [vmem:[%s27] sm:$0xf]
      %v3951 = vld [vmem:[%s27 + $0x4] sm:$0xf]
      %v3952 = vld [vmem:[%s27 + $0x8] sm:$0xf]
      %v3953 = vld [vmem:[%s27 + $0xc] sm:$0xf]
      %v3954 = vld [vmem:[%s23] sm:$0xf]
      %v3955 = vld [vmem:[%s23 + $0x4] sm:$0xf]
      %v3956 = vld [vmem:[%s23 + $0x8] sm:$0xf]
      %v3957 = vld [vmem:[%s23 + $0xc] sm:$0xf]
      %v3958 = vld [vmem:[%s25] sm:$0xf]
      %v3959 = vld [vmem:[%s25 + $0x4] sm:$0xf]
      %v3960 = vld [vmem:[%s25 + $0x8] sm:$0xf]
      %v3961 = vld [vmem:[%s25 + $0xc] sm:$0xf]
      %v3962 = vld [vmem:[%s29] sm:$0xf]
      %v3963 = vld [vmem:[%s29 + $0x4] sm:$0xf]
      %v3964 = vld [vmem:[%s29 + $0x8] sm:$0xf]
      %v3965 = vld [vmem:[%s29 + $0xc] sm:$0xf]
      %v3966 = vld [vmem:[%s31] sm:$0xf]
      %v3967 = vld [vmem:[%s31 + $0x4] sm:$0xf]
      %v3968 = vld [vmem:[%s31 + $0x8] sm:$0xf]
      %v3969 = vld [vmem:[%s31 + $0xc] sm:$0xf]
      %v3970 = vld [vmem:[%s31 + $0x10] sm:$0xf]
      %v3971 = vld [vmem:[%s31 + $0x14] sm:$0xf]
      %v3972 = vld [vmem:[%s31 + $0x18] sm:$0xf]
      %v3973 = vld [vmem:[%s31 + $0x1c] sm:$0xf]
      %v3974 = vpack.c.bf16 %v3941, %v3941
      %v3975 = vlaneseq
      %v3976 = vshrl.u32 %v3975, 7
      %v3977 = vsub.s32 4, %v3976
      %v3978 = vrot.slane %v1084, %v3977
      %v3983 = vunpack.c.l.b16 %v3942
      %v3984 = vunpack.c.l.b16 %v3943
      %v3985 = vunpack.c.l.b16 %v3944
      %v3986 = vunpack.c.l.b16 %v3945
      %v3987 = vpack.c.b16 %v3984, %v3983
      %v3988 = vpack.c.b16 %v3986, %v3985
      %v3992 = vsel %vm1090, %v3974, 0
      %3994 = vmatprep.subr.bf16.mxu0 0
      %3995 = vmatpush1.bf16.msra.mxu0 %v3987
      %3996 = vmatprep.subr.bf16.mxu0 0
      %3997 = vmatpush1.bf16.msra.mxu0 %v3988
      %3998 = vmatprep.subr.bf16.mxu0 0
      %3999 = vmatpush1.bf16.msra.mxu0 0
      %4000 = vmatprep.subr.bf16.mxu0 0
      %4001 = vmatpush1.bf16.msra.mxu0 0
      %4002 = vmatprep.subr.bf16.mxu0 0
      %4003 = vmatpush1.bf16.msra.mxu0 0
      %4004 = vmatprep.subr.bf16.mxu0 0
      %4005 = vmatpush1.bf16.msra.mxu0 0
      %4006 = vmatprep.subr.bf16.mxu0 0
      %4007 = vmatpush1.bf16.msra.mxu0 0
      %4008 = vmatprep.subr.bf16.mxu0 0
      %4009 = vmatpush1.bf16.msra.mxu0 0
      %4010 = vmatprep.subr.bf16.mxu0 0
      %4011 = vmatpush1.bf16.msra.mxu0 0
      %4012 = vmatprep.subr.bf16.mxu0 0
      %4013 = vmatpush1.bf16.msra.mxu0 0
      %4014 = vmatprep.subr.bf16.mxu0 0
      %4015 = vmatpush1.bf16.msra.mxu0 0
      %4016 = vmatprep.subr.bf16.mxu0 0
      %4017 = vmatpush1.bf16.msra.mxu0 0
      %4018 = vmatprep.subr.bf16.mxu0 0
      %4019 = vmatpush1.bf16.msra.mxu0 0
      %4020 = vmatprep.subr.bf16.mxu0 0
      %4021 = vmatpush1.bf16.msra.mxu0 0
      %4022 = vmatprep.subr.bf16.mxu0 0
      %4023 = vmatpush1.bf16.msra.mxu0 0
      %4024 = vmatprep.subr.bf16.mxu0 0
      %4025 = vmatpush1.bf16.msra.mxu0 0
      %4026 = vmatprep.mubr.bf16.mxu0 0
      %4027 = vmatmul.mubr.bf16.gmra.mrb[0].mxu0 %v3992
      %v4028 = vpop.f32.mrb[0].mxu0
      %v4029 = vadd.f32 %v3978, %v4028
      %v4030 = vpop.f32.mrb[0].mxu0
      %v4031 = vpop.f32.mrb[0].mxu0
      %v4032 = vpop.f32.mrb[0].mxu0
      %4033 = vdwg.mxu0
      %4035 = vrot.lane.b32.xlu0 %v4029, 96
      %v4036 = vpop.permute.xlu0 %4035
      %v4037 = vsel %vm1122, %v4029, 0
      %v4039 = vsel %vm1122, %v4036, 0
      %4041 = vmatprep.subr.mxu0 0.0
      %4042 = vmatpush1.xpose.msra.mxu0 %v4039
      %4043 = vmatprep.subr.mxu0 0.0
      %4044 = vmatpush1.xpose.msra.mxu0 0.0
      %4045 = vmatprep.subr.mxu0 0.0
      %4046 = vmatpush1.xpose.msra.mxu0 0.0
      %4047 = vmatprep.subr.mxu0 0.0
      %4048 = vmatpush1.xpose.msra.mxu0 0.0
      %4049 = vmatprep.subr.mxu0 0.0
      %4050 = vmatpush1.xpose.msra.mxu0 0.0
      %4051 = vmatprep.subr.mxu0 0.0
      %4052 = vmatpush1.xpose.msra.mxu0 0.0
      %4053 = vmatprep.subr.mxu0 0.0
      %4054 = vmatpush1.xpose.msra.mxu0 0.0
      %4055 = vmatprep.subr.mxu0 0.0
      %4056 = vmatpush1.xpose.msra.mxu0 0.0
      %4057 = vmatprep.subr.mxu0 0.0
      %4058 = vmatpush1.xpose.msra.mxu0 0.0
      %4059 = vmatprep.subr.mxu0 0.0
      %4060 = vmatpush1.xpose.msra.mxu0 0.0
      %4061 = vmatprep.subr.mxu0 0.0
      %4062 = vmatpush1.xpose.msra.mxu0 0.0
      %4063 = vmatprep.subr.mxu0 0.0
      %4064 = vmatpush1.xpose.msra.mxu0 0.0
      %4065 = vmatprep.subr.mxu0 0.0
      %4066 = vmatpush1.xpose.msra.mxu0 0.0
      %4067 = vmatprep.subr.mxu0 0.0
      %4068 = vmatpush1.xpose.msra.mxu0 0.0
      %4069 = vmatprep.subr.mxu0 0.0
      %4070 = vmatpush1.xpose.msra.mxu0 0.0
      %4071 = vmatprep.subr.mxu0 0.0
      %4072 = vmatpush1.xpose.msra.mxu0 0.0
      %4073 = vmatprep.subr.mxu0 0.0
      %4074 = vmatpush1.xpose.msra.mxu0 0.0
      %4075 = vmatprep.subr.mxu0 0.0
      %4076 = vmatpush1.xpose.msra.mxu0 0.0
      %4077 = vmatprep.subr.mxu0 0.0
      %4078 = vmatpush1.xpose.msra.mxu0 0.0
      %4079 = vmatprep.subr.mxu0 0.0
      %4080 = vmatpush1.xpose.msra.mxu0 0.0
      %4081 = vmatprep.subr.mxu0 0.0
      %4082 = vmatpush1.xpose.msra.mxu0 0.0
      %4083 = vmatprep.subr.mxu0 0.0
      %4084 = vmatpush1.xpose.msra.mxu0 0.0
      %4085 = vmatprep.subr.mxu0 0.0
      %4086 = vmatpush1.xpose.msra.mxu0 0.0
      %4087 = vmatprep.subr.mxu0 0.0
      %4088 = vmatpush1.xpose.msra.mxu0 0.0
      %4089 = vmatprep.subr.mxu0 0.0
      %4090 = vmatpush1.xpose.msra.mxu0 0.0
      %4091 = vmatprep.subr.mxu0 0.0
      %4092 = vmatpush1.xpose.msra.mxu0 0.0
      %4093 = vmatprep.subr.mxu0 0.0
      %4094 = vmatpush1.xpose.msra.mxu0 0.0
      %4095 = vmatprep.subr.mxu0 0.0
      %4096 = vmatpush1.xpose.msra.mxu0 0.0
      %4097 = vmatprep.subr.mxu0 0.0
      %4098 = vmatpush1.xpose.msra.mxu0 0.0
      %4099 = vmatprep.subr.mxu0 0.0
      %4100 = vmatpush1.xpose.msra.mxu0 0.0
      %4101 = vmatprep.subr.mxu0 0.0
      %4102 = vmatpush1.xpose.msra.mxu0 0.0
      %4103 = vmatprep.subr.mxu0 0.0
      %4104 = vmatpush1.xpose.msra.mxu0 0.0
      %4105 = vmatprep.mubr.f32.mxu0 0.0
      %4106 = vmatmul.mubr.f32.gmra.mrb[0].mxu0 %v4037
      %v4107 = vpop.f32.mrb[0].mxu0
      %v4108 = vadd.f32 0.0, %v4107
      %v4109 = vpop.f32.mrb[0].mxu0
      %4110 = vdwg.mxu0
      %v4111 = vsel %vm1122, %v4108, -inf
      %4112 = vmax.xlane.f32.xlu0 %v4111
      %v4113 = vpop.xlane.xlu0 %4112
      %v4114 = vsub.f32 %v4108, %v4113
      %v4115 = vmul.f32 %v4114, 1.442695
      %v4116 = vpow.pop %v4115
      %v4117 = vsel %vm1122, %v4116, 0.0
      %4118 = vadd.xlane.f32.xlu0 %v4117
      %v4119 = vpop.xlane.xlu0 %4118
      %v4120 = vrcp.pop %v4119
      %v4121 = vmul.f32 %v4116, %v4120
      %4122 = vrot.lane.b32.xlu0 %v4029, 64
      %v4123 = vpop.permute.xlu0 %4122
      %v4126 = vsel %vm1122, %v4121, 0
      %4128 = vmatprep.subr.mxu0 0.0
      %4129 = vmatpush1.msra.mxu0 %v4123
      %4130 = vmatprep.subr.mxu0 0.0
      %4131 = vmatpush1.msra.mxu0 0.0
      %4132 = vmatprep.subr.mxu0 0.0
      %4133 = vmatpush1.msra.mxu0 0.0
      %4134 = vmatprep.subr.mxu0 0.0
      %4135 = vmatpush1.msra.mxu0 0.0
      %4136 = vmatprep.subr.mxu0 0.0
      %4137 = vmatpush1.msra.mxu0 0.0
      %4138 = vmatprep.subr.mxu0 0.0
      %4139 = vmatpush1.msra.mxu0 0.0
      %4140 = vmatprep.subr.mxu0 0.0
      %4141 = vmatpush1.msra.mxu0 0.0
      %4142 = vmatprep.subr.mxu0 0.0
      %4143 = vmatpush1.msra.mxu0 0.0
      %4144 = vmatprep.subr.mxu0 0.0
      %4145 = vmatpush1.msra.mxu0 0.0
      %4146 = vmatprep.subr.mxu0 0.0
      %4147 = vmatpush1.msra.mxu0 0.0
      %4148 = vmatprep.subr.mxu0 0.0
      %4149 = vmatpush1.msra.mxu0 0.0
      %4150 = vmatprep.subr.mxu0 0.0
      %4151 = vmatpush1.msra.mxu0 0.0
      %4152 = vmatprep.subr.mxu0 0.0
      %4153 = vmatpush1.msra.mxu0 0.0
      %4154 = vmatprep.subr.mxu0 0.0
      %4155 = vmatpush1.msra.mxu0 0.0
      %4156 = vmatprep.subr.mxu0 0.0
      %4157 = vmatpush1.msra.mxu0 0.0
      %4158 = vmatprep.subr.mxu0 0.0
      %4159 = vmatpush1.msra.mxu0 0.0
      %4160 = vmatprep.subr.mxu0 0.0
      %4161 = vmatpush1.msra.mxu0 0.0
      %4162 = vmatprep.subr.mxu0 0.0
      %4163 = vmatpush1.msra.mxu0 0.0
      %4164 = vmatprep.subr.mxu0 0.0
      %4165 = vmatpush1.msra.mxu0 0.0
      %4166 = vmatprep.subr.mxu0 0.0
      %4167 = vmatpush1.msra.mxu0 0.0
      %4168 = vmatprep.subr.mxu0 0.0
      %4169 = vmatpush1.msra.mxu0 0.0
      %4170 = vmatprep.subr.mxu0 0.0
      %4171 = vmatpush1.msra.mxu0 0.0
      %4172 = vmatprep.subr.mxu0 0.0
      %4173 = vmatpush1.msra.mxu0 0.0
      %4174 = vmatprep.subr.mxu0 0.0
      %4175 = vmatpush1.msra.mxu0 0.0
      %4176 = vmatprep.subr.mxu0 0.0
      %4177 = vmatpush1.msra.mxu0 0.0
      %4178 = vmatprep.subr.mxu0 0.0
      %4179 = vmatpush1.msra.mxu0 0.0
      %4180 = vmatprep.subr.mxu0 0.0
      %4181 = vmatpush1.msra.mxu0 0.0
      %4182 = vmatprep.subr.mxu0 0.0
      %4183 = vmatpush1.msra.mxu0 0.0
      %4184 = vmatprep.subr.mxu0 0.0
      %4185 = vmatpush1.msra.mxu0 0.0
      %4186 = vmatprep.subr.mxu0 0.0
      %4187 = vmatpush1.msra.mxu0 0.0
      %4188 = vmatprep.subr.mxu0 0.0
      %4189 = vmatpush1.msra.mxu0 0.0
      %4190 = vmatprep.subr.mxu0 0.0
      %4191 = vmatpush1.msra.mxu0 0.0
      %4192 = vmatprep.mubr.f32.mxu0 0.0
      %4193 = vmatmul.mubr.f32.gmra.mrb[0].mxu0 %v4126
      %v4194 = vpop.f32.mrb[0].mxu0
      %v4195 = vadd.f32 0.0, %v4194
      %v4196 = vpop.f32.mrb[0].mxu0
      %4197 = vdwg.mxu0
      %4198 = vrot.lane.b32.xlu0 %v4029, 120
      %v4199 = vpop.permute.xlu0 %4198
      %4200 = vrot.lane.b32.xlu0 %v4029, 88
      %v4201 = vpop.permute.xlu0 %4200
      %v4202 = vsel %vm1122, %v4199, 0
      %v4204 = vsel %vm1122, %v4201, 0
      %4206 = vmatprep.subr.mxu0 0.0
      %4207 = vmatpush1.xpose.msra.mxu0 %v4204
      %4208 = vmatprep.subr.mxu0 0.0
      %4209 = vmatpush1.xpose.msra.mxu0 0.0
      %4210 = vmatprep.subr.mxu0 0.0
      %4211 = vmatpush1.xpose.msra.mxu0 0.0
      %4212 = vmatprep.subr.mxu0 0.0
      %4213 = vmatpush1.xpose.msra.mxu0 0.0
      %4214 = vmatprep.subr.mxu0 0.0
      %4215 = vmatpush1.xpose.msra.mxu0 0.0
      %4216 = vmatprep.subr.mxu0 0.0
      %4217 = vmatpush1.xpose.msra.mxu0 0.0
      %4218 = vmatprep.subr.mxu0 0.0
      %4219 = vmatpush1.xpose.msra.mxu0 0.0
      %4220 = vmatprep.subr.mxu0 0.0
      %4221 = vmatpush1.xpose.msra.mxu0 0.0
      %4222 = vmatprep.subr.mxu0 0.0
      %4223 = vmatpush1.xpose.msra.mxu0 0.0
      %4224 = vmatprep.subr.mxu0 0.0
      %4225 = vmatpush1.xpose.msra.mxu0 0.0
      %4226 = vmatprep.subr.mxu0 0.0
      %4227 = vmatpush1.xpose.msra.mxu0 0.0
      %4228 = vmatprep.subr.mxu0 0.0
      %4229 = vmatpush1.xpose.msra.mxu0 0.0
      %4230 = vmatprep.subr.mxu0 0.0
      %4231 = vmatpush1.xpose.msra.mxu0 0.0
      %4232 = vmatprep.subr.mxu0 0.0
      %4233 = vmatpush1.xpose.msra.mxu0 0.0
      %4234 = vmatprep.subr.mxu0 0.0
      %4235 = vmatpush1.xpose.msra.mxu0 0.0
      %4236 = vmatprep.subr.mxu0 0.0
      %4237 = vmatpush1.xpose.msra.mxu0 0.0
      %4238 = vmatprep.subr.mxu0 0.0
      %4239 = vmatpush1.xpose.msra.mxu0 0.0
      %4240 = vmatprep.subr.mxu0 0.0
      %4241 = vmatpush1.xpose.msra.mxu0 0.0
      %4242 = vmatprep.subr.mxu0 0.0
      %4243 = vmatpush1.xpose.msra.mxu0 0.0
      %4244 = vmatprep.subr.mxu0 0.0
      %4245 = vmatpush1.xpose.msra.mxu0 0.0
      %4246 = vmatprep.subr.mxu0 0.0
      %4247 = vmatpush1.xpose.msra.mxu0 0.0
      %4248 = vmatprep.subr.mxu0 0.0
      %4249 = vmatpush1.xpose.msra.mxu0 0.0
      %4250 = vmatprep.subr.mxu0 0.0
      %4251 = vmatpush1.xpose.msra.mxu0 0.0
      %4252 = vmatprep.subr.mxu0 0.0
      %4253 = vmatpush1.xpose.msra.mxu0 0.0
      %4254 = vmatprep.subr.mxu0 0.0
      %4255 = vmatpush1.xpose.msra.mxu0 0.0
      %4256 = vmatprep.subr.mxu0 0.0
      %4257 = vmatpush1.xpose.msra.mxu0 0.0
      %4258 = vmatprep.subr.mxu0 0.0
      %4259 = vmatpush1.xpose.msra.mxu0 0.0
      %4260 = vmatprep.subr.mxu0 0.0
      %4261 = vmatpush1.xpose.msra.mxu0 0.0
      %4262 = vmatprep.subr.mxu0 0.0
      %4263 = vmatpush1.xpose.msra.mxu0 0.0
      %4264 = vmatprep.subr.mxu0 0.0
      %4265 = vmatpush1.xpose.msra.mxu0 0.0
      %4266 = vmatprep.subr.mxu0 0.0
      %4267 = vmatpush1.xpose.msra.mxu0 0.0
      %4268 = vmatprep.subr.mxu0 0.0
      %4269 = vmatpush1.xpose.msra.mxu0 0.0
      %4270 = vmatprep.mubr.f32.mxu0 0.0
      %4271 = vmatmul.mubr.f32.gmra.mrb[0].mxu0 %v4202
      %v4272 = vpop.f32.mrb[0].mxu0
      %v4273 = vadd.f32 0.0, %v4272
      %v4274 = vpop.f32.mrb[0].mxu0
      %4275 = vdwg.mxu0
      %v4276 = vsel %vm1122, %v4273, -inf
      %4277 = vmax.xlane.f32.xlu0 %v4276
      %v4278 = vpop.xlane.xlu0 %4277
      %v4279 = vsub.f32 %v4273, %v4278
      %v4280 = vmul.f32 %v4279, 1.442695
      %v4281 = vpow.pop %v4280
      %v4282 = vsel %vm1122, %v4281, 0.0
      %4283 = vadd.xlane.f32.xlu0 %v4282
      %v4284 = vpop.xlane.xlu0 %4283
      %v4285 = vrcp.pop %v4284
      %v4286 = vmul.f32 %v4281, %v4285
      %4287 = vrot.lane.b32.xlu0 %v4029, 56
      %v4288 = vpop.permute.xlu0 %4287
      %v4291 = vsel %vm1122, %v4286, 0
      %4293 = vmatprep.subr.mxu0 0.0
      %4294 = vmatpush1.msra.mxu0 %v4288
      %4295 = vmatprep.subr.mxu0 0.0
      %4296 = vmatpush1.msra.mxu0 0.0
      %4297 = vmatprep.subr.mxu0 0.0
      %4298 = vmatpush1.msra.mxu0 0.0
      %4299 = vmatprep.subr.mxu0 0.0
      %4300 = vmatpush1.msra.mxu0 0.0
      %4301 = vmatprep.subr.mxu0 0.0
      %4302 = vmatpush1.msra.mxu0 0.0
      %4303 = vmatprep.subr.mxu0 0.0
      %4304 = vmatpush1.msra.mxu0 0.0
      %4305 = vmatprep.subr.mxu0 0.0
      %4306 = vmatpush1.msra.mxu0 0.0
      %4307 = vmatprep.subr.mxu0 0.0
      %4308 = vmatpush1.msra.mxu0 0.0
      %4309 = vmatprep.subr.mxu0 0.0
      %4310 = vmatpush1.msra.mxu0 0.0
      %4311 = vmatprep.subr.mxu0 0.0
      %4312 = vmatpush1.msra.mxu0 0.0
      %4313 = vmatprep.subr.mxu0 0.0
      %4314 = vmatpush1.msra.mxu0 0.0
      %4315 = vmatprep.subr.mxu0 0.0
      %4316 = vmatpush1.msra.mxu0 0.0
      %4317 = vmatprep.subr.mxu0 0.0
      %4318 = vmatpush1.msra.mxu0 0.0
      %4319 = vmatprep.subr.mxu0 0.0
      %4320 = vmatpush1.msra.mxu0 0.0
      %4321 = vmatprep.subr.mxu0 0.0
      %4322 = vmatpush1.msra.mxu0 0.0
      %4323 = vmatprep.subr.mxu0 0.0
      %4324 = vmatpush1.msra.mxu0 0.0
      %4325 = vmatprep.subr.mxu0 0.0
      %4326 = vmatpush1.msra.mxu0 0.0
      %4327 = vmatprep.subr.mxu0 0.0
      %4328 = vmatpush1.msra.mxu0 0.0
      %4329 = vmatprep.subr.mxu0 0.0
      %4330 = vmatpush1.msra.mxu0 0.0
      %4331 = vmatprep.subr.mxu0 0.0
      %4332 = vmatpush1.msra.mxu0 0.0
      %4333 = vmatprep.subr.mxu0 0.0
      %4334 = vmatpush1.msra.mxu0 0.0
      %4335 = vmatprep.subr.mxu0 0.0
      %4336 = vmatpush1.msra.mxu0 0.0
      %4337 = vmatprep.subr.mxu0 0.0
      %4338 = vmatpush1.msra.mxu0 0.0
      %4339 = vmatprep.subr.mxu0 0.0
      %4340 = vmatpush1.msra.mxu0 0.0
      %4341 = vmatprep.subr.mxu0 0.0
      %4342 = vmatpush1.msra.mxu0 0.0
      %4343 = vmatprep.subr.mxu0 0.0
      %4344 = vmatpush1.msra.mxu0 0.0
      %4345 = vmatprep.subr.mxu0 0.0
      %4346 = vmatpush1.msra.mxu0 0.0
      %4347 = vmatprep.subr.mxu0 0.0
      %4348 = vmatpush1.msra.mxu0 0.0
      %4349 = vmatprep.subr.mxu0 0.0
      %4350 = vmatpush1.msra.mxu0 0.0
      %4351 = vmatprep.subr.mxu0 0.0
      %4352 = vmatpush1.msra.mxu0 0.0
      %4353 = vmatprep.subr.mxu0 0.0
      %4354 = vmatpush1.msra.mxu0 0.0
      %4355 = vmatprep.subr.mxu0 0.0
      %4356 = vmatpush1.msra.mxu0 0.0
      %4357 = vmatprep.mubr.f32.mxu0 0.0
      %4358 = vmatmul.mubr.f32.gmra.mrb[0].mxu0 %v4291
      %v4359 = vpop.f32.mrb[0].mxu0
      %v4360 = vadd.f32 0.0, %v4359
      %v4361 = vpop.f32.mrb[0].mxu0
      %4362 = vdwg.mxu0
      %4363 = vrot.lane.b32.xlu0 %v4029, 112
      %v4364 = vpop.permute.xlu0 %4363
      %4365 = vrot.lane.b32.xlu0 %v4029, 80
      %v4366 = vpop.permute.xlu0 %4365
      %v4367 = vsel %vm1122, %v4364, 0
      %v4369 = vsel %vm1122, %v4366, 0
      %4371 = vmatprep.subr.mxu0 0.0
      %4372 = vmatpush1.xpose.msra.mxu0 %v4369
      %4373 = vmatprep.subr.mxu0 0.0
      %4374 = vmatpush1.xpose.msra.mxu0 0.0
      %4375 = vmatprep.subr.mxu0 0.0
      %4376 = vmatpush1.xpose.msra.mxu0 0.0
      %4377 = vmatprep.subr.mxu0 0.0
      %4378 = vmatpush1.xpose.msra.mxu0 0.0
      %4379 = vmatprep.subr.mxu0 0.0
      %4380 = vmatpush1.xpose.msra.mxu0 0.0
      %4381 = vmatprep.subr.mxu0 0.0
      %4382 = vmatpush1.xpose.msra.mxu0 0.0
      %4383 = vmatprep.subr.mxu0 0.0
      %4384 = vmatpush1.xpose.msra.mxu0 0.0
      %4385 = vmatprep.subr.mxu0 0.0
      %4386 = vmatpush1.xpose.msra.mxu0 0.0
      %4387 = vmatprep.subr.mxu0 0.0
      %4388 = vmatpush1.xpose.msra.mxu0 0.0
      %4389 = vmatprep.subr.mxu0 0.0
      %4390 = vmatpush1.xpose.msra.mxu0 0.0
      %4391 = vmatprep.subr.mxu0 0.0
      %4392 = vmatpush1.xpose.msra.mxu0 0.0
      %4393 = vmatprep.subr.mxu0 0.0
      %4394 = vmatpush1.xpose.msra.mxu0 0.0
      %4395 = vmatprep.subr.mxu0 0.0
      %4396 = vmatpush1.xpose.msra.mxu0 0.0
      %4397 = vmatprep.subr.mxu0 0.0
      %4398 = vmatpush1.xpose.msra.mxu0 0.0
      %4399 = vmatprep.subr.mxu0 0.0
      %4400 = vmatpush1.xpose.msra.mxu0 0.0
      %4401 = vmatprep.subr.mxu0 0.0
      %4402 = vmatpush1.xpose.msra.mxu0 0.0
      %4403 = vmatprep.subr.mxu0 0.0
      %4404 = vmatpush1.xpose.msra.mxu0 0.0
      %4405 = vmatprep.subr.mxu0 0.0
      %4406 = vmatpush1.xpose.msra.mxu0 0.0
      %4407 = vmatprep.subr.mxu0 0.0
      %4408 = vmatpush1.xpose.msra.mxu0 0.0
      %4409 = vmatprep.subr.mxu0 0.0
      %4410 = vmatpush1.xpose.msra.mxu0 0.0
      %4411 = vmatprep.subr.mxu0 0.0
      %4412 = vmatpush1.xpose.msra.mxu0 0.0
      %4413 = vmatprep.subr.mxu0 0.0
      %4414 = vmatpush1.xpose.msra.mxu0 0.0
      %4415 = vmatprep.subr.mxu0 0.0
      %4416 = vmatpush1.xpose.msra.mxu0 0.0
      %4417 = vmatprep.subr.mxu0 0.0
      %4418 = vmatpush1.xpose.msra.mxu0 0.0
      %4419 = vmatprep.subr.mxu0 0.0
      %4420 = vmatpush1.xpose.msra.mxu0 0.0
      %4421 = vmatprep.subr.mxu0 0.0
      %4422 = vmatpush1.xpose.msra.mxu0 0.0
      %4423 = vmatprep.subr.mxu0 0.0
      %4424 = vmatpush1.xpose.msra.mxu0 0.0
      %4425 = vmatprep.subr.mxu0 0.0
      %4426 = vmatpush1.xpose.msra.mxu0 0.0
      %4427 = vmatprep.subr.mxu0 0.0
      %4428 = vmatpush1.xpose.msra.mxu0 0.0
      %4429 = vmatprep.subr.mxu0 0.0
      %4430 = vmatpush1.xpose.msra.mxu0 0.0
      %4431 = vmatprep.subr.mxu0 0.0
      %4432 = vmatpush1.xpose.msra.mxu0 0.0
      %4433 = vmatprep.subr.mxu0 0.0
      %4434 = vmatpush1.xpose.msra.mxu0 0.0
      %4435 = vmatprep.mubr.f32.mxu0 0.0
      %4436 = vmatmul.mubr.f32.gmra.mrb[0].mxu0 %v4367
      %v4437 = vpop.f32.mrb[0].mxu0
      %v4438 = vadd.f32 0.0, %v4437
      %v4439 = vpop.f32.mrb[0].mxu0
      %4440 = vdwg.mxu0
      %v4441 = vsel %vm1122, %v4438, -inf
      %4442 = vmax.xlane.f32.xlu0 %v4441
      %v4443 = vpop.xlane.xlu0 %4442
      %v4444 = vsub.f32 %v4438, %v4443
      %v4445 = vmul.f32 %v4444, 1.442695
      %v4446 = vpow.pop %v4445
      %v4447 = vsel %vm1122, %v4446, 0.0
      %4448 = vadd.xlane.f32.xlu0 %v4447
      %v4449 = vpop.xlane.xlu0 %4448
      %v4450 = vrcp.pop %v4449
      %v4451 = vmul.f32 %v4446, %v4450
      %4452 = vrot.lane.b32.xlu0 %v4029, 48
      %v4453 = vpop.permute.xlu0 %4452
      %v4456 = vsel %vm1122, %v4451, 0
      %4458 = vmatprep.subr.mxu0 0.0
      %4459 = vmatpush1.msra.mxu0 %v4453
      %4460 = vmatprep.subr.mxu0 0.0
      %4461 = vmatpush1.msra.mxu0 0.0
      %4462 = vmatprep.subr.mxu0 0.0
      %4463 = vmatpush1.msra.mxu0 0.0
      %4464 = vmatprep.subr.mxu0 0.0
      %4465 = vmatpush1.msra.mxu0 0.0
      %4466 = vmatprep.subr.mxu0 0.0
      %4467 = vmatpush1.msra.mxu0 0.0
      %4468 = vmatprep.subr.mxu0 0.0
      %4469 = vmatpush1.msra.mxu0 0.0
      %4470 = vmatprep.subr.mxu0 0.0
      %4471 = vmatpush1.msra.mxu0 0.0
      %4472 = vmatprep.subr.mxu0 0.0
      %4473 = vmatpush1.msra.mxu0 0.0
      %4474 = vmatprep.subr.mxu0 0.0
      %4475 = vmatpush1.msra.mxu0 0.0
      %4476 = vmatprep.subr.mxu0 0.0
      %4477 = vmatpush1.msra.mxu0 0.0
      %4478 = vmatprep.subr.mxu0 0.0
      %4479 = vmatpush1.msra.mxu0 0.0
      %4480 = vmatprep.subr.mxu0 0.0
      %4481 = vmatpush1.msra.mxu0 0.0
      %4482 = vmatprep.subr.mxu0 0.0
      %4483 = vmatpush1.msra.mxu0 0.0
      %4484 = vmatprep.subr.mxu0 0.0
      %4485 = vmatpush1.msra.mxu0 0.0
      %4486 = vmatprep.subr.mxu0 0.0
      %4487 = vmatpush1.msra.mxu0 0.0
      %4488 = vmatprep.subr.mxu0 0.0
      %4489 = vmatpush1.msra.mxu0 0.0
      %4490 = vmatprep.subr.mxu0 0.0
      %4491 = vmatpush1.msra.mxu0 0.0
      %4492 = vmatprep.subr.mxu0 0.0
      %4493 = vmatpush1.msra.mxu0 0.0
      %4494 = vmatprep.subr.mxu0 0.0
      %4495 = vmatpush1.msra.mxu0 0.0
      %4496 = vmatprep.subr.mxu0 0.0
      %4497 = vmatpush1.msra.mxu0 0.0
      %4498 = vmatprep.subr.mxu0 0.0
      %4499 = vmatpush1.msra.mxu0 0.0
      %4500 = vmatprep.subr.mxu0 0.0
      %4501 = vmatpush1.msra.mxu0 0.0
      %4502 = vmatprep.subr.mxu0 0.0
      %4503 = vmatpush1.msra.mxu0 0.0
      %4504 = vmatprep.subr.mxu0 0.0
      %4505 = vmatpush1.msra.mxu0 0.0
      %4506 = vmatprep.subr.mxu0 0.0
      %4507 = vmatpush1.msra.mxu0 0.0
      %4508 = vmatprep.subr.mxu0 0.0
      %4509 = vmatpush1.msra.mxu0 0.0
      %4510 = vmatprep.subr.mxu0 0.0
      %4511 = vmatpush1.msra.mxu0 0.0
      %4512 = vmatprep.subr.mxu0 0.0
      %4513 = vmatpush1.msra.mxu0 0.0
      %4514 = vmatprep.subr.mxu0 0.0
      %4515 = vmatpush1.msra.mxu0 0.0
      %4516 = vmatprep.subr.mxu0 0.0
      %4517 = vmatpush1.msra.mxu0 0.0
      %4518 = vmatprep.subr.mxu0 0.0
      %4519 = vmatpush1.msra.mxu0 0.0
      %4520 = vmatprep.subr.mxu0 0.0
      %4521 = vmatpush1.msra.mxu0 0.0
      %4522 = vmatprep.mubr.f32.mxu0 0.0
      %4523 = vmatmul.mubr.f32.gmra.mrb[0].mxu0 %v4456
      %v4524 = vpop.f32.mrb[0].mxu0
      %v4525 = vadd.f32 0.0, %v4524
      %v4526 = vpop.f32.mrb[0].mxu0
      %4527 = vdwg.mxu0
      %4528 = vrot.lane.b32.xlu0 %v4029, 104
      %v4529 = vpop.permute.xlu0 %4528
      %4530 = vrot.lane.b32.xlu0 %v4029, 72
      %v4531 = vpop.permute.xlu0 %4530
      %v4532 = vsel %vm1122, %v4529, 0
      %v4534 = vsel %vm1122, %v4531, 0
      %4536 = vmatprep.subr.mxu0 0.0
      %4537 = vmatpush1.xpose.msra.mxu0 %v4534
      %4538 = vmatprep.subr.mxu0 0.0
      %4539 = vmatpush1.xpose.msra.mxu0 0.0
      %4540 = vmatprep.subr.mxu0 0.0
      %4541 = vmatpush1.xpose.msra.mxu0 0.0
      %4542 = vmatprep.subr.mxu0 0.0
      %4543 = vmatpush1.xpose.msra.mxu0 0.0
      %4544 = vmatprep.subr.mxu0 0.0
      %4545 = vmatpush1.xpose.msra.mxu0 0.0
      %4546 = vmatprep.subr.mxu0 0.0
      %4547 = vmatpush1.xpose.msra.mxu0 0.0
      %4548 = vmatprep.subr.mxu0 0.0
      %4549 = vmatpush1.xpose.msra.mxu0 0.0
      %4550 = vmatprep.subr.mxu0 0.0
      %4551 = vmatpush1.xpose.msra.mxu0 0.0
      %4552 = vmatprep.subr.mxu0 0.0
      %4553 = vmatpush1.xpose.msra.mxu0 0.0
      %4554 = vmatprep.subr.mxu0 0.0
      %4555 = vmatpush1.xpose.msra.mxu0 0.0
      %4556 = vmatprep.subr.mxu0 0.0
      %4557 = vmatpush1.xpose.msra.mxu0 0.0
      %4558 = vmatprep.subr.mxu0 0.0
      %4559 = vmatpush1.xpose.msra.mxu0 0.0
      %4560 = vmatprep.subr.mxu0 0.0
      %4561 = vmatpush1.xpose.msra.mxu0 0.0
      %4562 = vmatprep.subr.mxu0 0.0
      %4563 = vmatpush1.xpose.msra.mxu0 0.0
      %4564 = vmatprep.subr.mxu0 0.0
      %4565 = vmatpush1.xpose.msra.mxu0 0.0
      %4566 = vmatprep.subr.mxu0 0.0
      %4567 = vmatpush1.xpose.msra.mxu0 0.0
      %4568 = vmatprep.subr.mxu0 0.0
      %4569 = vmatpush1.xpose.msra.mxu0 0.0
      %4570 = vmatprep.subr.mxu0 0.0
      %4571 = vmatpush1.xpose.msra.mxu0 0.0
      %4572 = vmatprep.subr.mxu0 0.0
      %4573 = vmatpush1.xpose.msra.mxu0 0.0
      %4574 = vmatprep.subr.mxu0 0.0
      %4575 = vmatpush1.xpose.msra.mxu0 0.0
      %4576 = vmatprep.subr.mxu0 0.0
      %4577 = vmatpush1.xpose.msra.mxu0 0.0
      %4578 = vmatprep.subr.mxu0 0.0
      %4579 = vmatpush1.xpose.msra.mxu0 0.0
      %4580 = vmatprep.subr.mxu0 0.0
      %4581 = vmatpush1.xpose.msra.mxu0 0.0
      %4582 = vmatprep.subr.mxu0 0.0
      %4583 = vmatpush1.xpose.msra.mxu0 0.0
      %4584 = vmatprep.subr.mxu0 0.0
      %4585 = vmatpush1.xpose.msra.mxu0 0.0
      %4586 = vmatprep.subr.mxu0 0.0
      %4587 = vmatpush1.xpose.msra.mxu0 0.0
      %4588 = vmatprep.subr.mxu0 0.0
      %4589 = vmatpush1.xpose.msra.mxu0 0.0
      %4590 = vmatprep.subr.mxu0 0.0
      %4591 = vmatpush1.xpose.msra.mxu0 0.0
      %4592 = vmatprep.subr.mxu0 0.0
      %4593 = vmatpush1.xpose.msra.mxu0 0.0
      %4594 = vmatprep.subr.mxu0 0.0
      %4595 = vmatpush1.xpose.msra.mxu0 0.0
      %4596 = vmatprep.subr.mxu0 0.0
      %4597 = vmatpush1.xpose.msra.mxu0 0.0
      %4598 = vmatprep.subr.mxu0 0.0
      %4599 = vmatpush1.xpose.msra.mxu0 0.0
      %4600 = vmatprep.mubr.f32.mxu0 0.0
      %4601 = vmatmul.mubr.f32.gmra.mrb[0].mxu0 %v4532
      %v4602 = vpop.f32.mrb[0].mxu0
      %v4603 = vadd.f32 0.0, %v4602
      %v4604 = vpop.f32.mrb[0].mxu0
      %4605 = vdwg.mxu0
      %v4606 = vsel %vm1122, %v4603, -inf
      %4607 = vmax.xlane.f32.xlu0 %v4606
      %v4608 = vpop.xlane.xlu0 %4607
      %v4609 = vsub.f32 %v4603, %v4608
      %v4610 = vmul.f32 %v4609, 1.442695
      %v4611 = vpow.pop %v4610
      %v4612 = vsel %vm1122, %v4611, 0.0
      %4613 = vadd.xlane.f32.xlu0 %v4612
      %v4614 = vpop.xlane.xlu0 %4613
      %v4615 = vrcp.pop %v4614
      %v4616 = vmul.f32 %v4611, %v4615
      %4617 = vrot.lane.b32.xlu0 %v4029, 40
      %v4618 = vpop.permute.xlu0 %4617
      %v4621 = vsel %vm1122, %v4616, 0
      %4623 = vmatprep.subr.mxu0 0.0
      %4624 = vmatpush1.msra.mxu0 %v4618
      %4625 = vmatprep.subr.mxu0 0.0
      %4626 = vmatpush1.msra.mxu0 0.0
      %4627 = vmatprep.subr.mxu0 0.0
      %4628 = vmatpush1.msra.mxu0 0.0
      %4629 = vmatprep.subr.mxu0 0.0
      %4630 = vmatpush1.msra.mxu0 0.0
      %4631 = vmatprep.subr.mxu0 0.0
      %4632 = vmatpush1.msra.mxu0 0.0
      %4633 = vmatprep.subr.mxu0 0.0
      %4634 = vmatpush1.msra.mxu0 0.0
      %4635 = vmatprep.subr.mxu0 0.0
      %4636 = vmatpush1.msra.mxu0 0.0
      %4637 = vmatprep.subr.mxu0 0.0
      %4638 = vmatpush1.msra.mxu0 0.0
      %4639 = vmatprep.subr.mxu0 0.0
      %4640 = vmatpush1.msra.mxu0 0.0
      %4641 = vmatprep.subr.mxu0 0.0
      %4642 = vmatpush1.msra.mxu0 0.0
      %4643 = vmatprep.subr.mxu0 0.0
      %4644 = vmatpush1.msra.mxu0 0.0
      %4645 = vmatprep.subr.mxu0 0.0
      %4646 = vmatpush1.msra.mxu0 0.0
      %4647 = vmatprep.subr.mxu0 0.0
      %4648 = vmatpush1.msra.mxu0 0.0
      %4649 = vmatprep.subr.mxu0 0.0
      %4650 = vmatpush1.msra.mxu0 0.0
      %4651 = vmatprep.subr.mxu0 0.0
      %4652 = vmatpush1.msra.mxu0 0.0
      %4653 = vmatprep.subr.mxu0 0.0
      %4654 = vmatpush1.msra.mxu0 0.0
      %4655 = vmatprep.subr.mxu0 0.0
      %4656 = vmatpush1.msra.mxu0 0.0
      %4657 = vmatprep.subr.mxu0 0.0
      %4658 = vmatpush1.msra.mxu0 0.0
      %4659 = vmatprep.subr.mxu0 0.0
      %4660 = vmatpush1.msra.mxu0 0.0
      %4661 = vmatprep.subr.mxu0 0.0
      %4662 = vmatpush1.msra.mxu0 0.0
      %4663 = vmatprep.subr.mxu0 0.0
      %4664 = vmatpush1.msra.mxu0 0.0
      %4665 = vmatprep.subr.mxu0 0.0
      %4666 = vmatpush1.msra.mxu0 0.0
      %4667 = vmatprep.subr.mxu0 0.0
      %4668 = vmatpush1.msra.mxu0 0.0
      %4669 = vmatprep.subr.mxu0 0.0
      %4670 = vmatpush1.msra.mxu0 0.0
      %4671 = vmatprep.subr.mxu0 0.0
      %4672 = vmatpush1.msra.mxu0 0.0
      %4673 = vmatprep.subr.mxu0 0.0
      %4674 = vmatpush1.msra.mxu0 0.0
      %4675 = vmatprep.subr.mxu0 0.0
      %4676 = vmatpush1.msra.mxu0 0.0
      %4677 = vmatprep.subr.mxu0 0.0
      %4678 = vmatpush1.msra.mxu0 0.0
      %4679 = vmatprep.subr.mxu0 0.0
      %4680 = vmatpush1.msra.mxu0 0.0
      %4681 = vmatprep.subr.mxu0 0.0
      %4682 = vmatpush1.msra.mxu0 0.0
      %4683 = vmatprep.subr.mxu0 0.0
      %4684 = vmatpush1.msra.mxu0 0.0
      %4685 = vmatprep.subr.mxu0 0.0
      %4686 = vmatpush1.msra.mxu0 0.0
      %4687 = vmatprep.mubr.f32.mxu0 0.0
      %4688 = vmatmul.mubr.f32.gmra.mrb[0].mxu0 %v4621
      %v4689 = vpop.f32.mrb[0].mxu0
      %v4690 = vadd.f32 0.0, %v4689
      %v4691 = vpop.f32.mrb[0].mxu0
      %4692 = vdwg.mxu0
      %4694 = vrot.lane.b32.xlu0 %v4360, 8
      %v4695 = vpop.permute.xlu0 %4694
      %4698 = vrot.lane.b32.xlu0 %v4525, 16
      %v4699 = vpop.permute.xlu0 %4698
      %4702 = vrot.lane.b32.xlu0 %v4690, 24
      %v4703 = vpop.permute.xlu0 %4702
      %v4705 = vsel %vm1122, %v4195, %v4695
      %v4706 = vsel %vm2428, %v4705, %v4699
      %v4707 = vsel %vm2430, %v4706, %v4703
      %v4708 = vpack.c.bf16 %v4707, %v4707
      %v4709 = vlaneseq
      %v4710 = vshrl.u32 %v4709, 7
      %v4711 = vsub.s32 5, %v4710
      %v4712 = vrot.slane %v1084, %v4711
      %v4717 = vunpack.c.l.b16 %v3946
      %v4718 = vunpack.c.l.b16 %v3947
      %v4719 = vunpack.c.l.b16 %v3948
      %v4720 = vunpack.c.l.b16 %v3949
      %v4721 = vpack.c.b16 %v4718, %v4717
      %v4722 = vpack.c.b16 %v4720, %v4719
      %v4726 = vsel %vm1090, %v4708, 0
      %4728 = vmatprep.subr.bf16.mxu0 0
      %4729 = vmatpush1.bf16.msra.mxu0 %v4721
      %4730 = vmatprep.subr.bf16.mxu0 0
      %4731 = vmatpush1.bf16.msra.mxu0 %v4722
      %4732 = vmatprep.subr.bf16.mxu0 0
      %4733 = vmatpush1.bf16.msra.mxu0 0
      %4734 = vmatprep.subr.bf16.mxu0 0
      %4735 = vmatpush1.bf16.msra.mxu0 0
      %4736 = vmatprep.subr.bf16.mxu0 0
      %4737 = vmatpush1.bf16.msra.mxu0 0
      %4738 = vmatprep.subr.bf16.mxu0 0
      %4739 = vmatpush1.bf16.msra.mxu0 0
      %4740 = vmatprep.subr.bf16.mxu0 0
      %4741 = vmatpush1.bf16.msra.mxu0 0
      %4742 = vmatprep.subr.bf16.mxu0 0
      %4743 = vmatpush1.bf16.msra.mxu0 0
      %4744 = vmatprep.subr.bf16.mxu0 0
      %4745 = vmatpush1.bf16.msra.mxu0 0
      %4746 = vmatprep.subr.bf16.mxu0 0
      %4747 = vmatpush1.bf16.msra.mxu0 0
      %4748 = vmatprep.subr.bf16.mxu0 0
      %4749 = vmatpush1.bf16.msra.mxu0 0
      %4750 = vmatprep.subr.bf16.mxu0 0
      %4751 = vmatpush1.bf16.msra.mxu0 0
      %4752 = vmatprep.subr.bf16.mxu0 0
      %4753 = vmatpush1.bf16.msra.mxu0 0
      %4754 = vmatprep.subr.bf16.mxu0 0
      %4755 = vmatpush1.bf16.msra.mxu0 0
      %4756 = vmatprep.subr.bf16.mxu0 0
      %4757 = vmatpush1.bf16.msra.mxu0 0
      %4758 = vmatprep.subr.bf16.mxu0 0
      %4759 = vmatpush1.bf16.msra.mxu0 0
      %4760 = vmatprep.mubr.bf16.mxu0 0
      %4761 = vmatmul.mubr.bf16.gmra.mrb[0].mxu0 %v4726
      %v4762 = vpop.f32.mrb[0].mxu0
      %v4763 = vadd.f32 %v4712, %v4762
      %v4764 = vpop.f32.mrb[0].mxu0
      %v4765 = vpop.f32.mrb[0].mxu0
      %v4766 = vpop.f32.mrb[0].mxu0
      %4767 = vdwg.mxu0
      %v4768 = vadd.f32 %v3941, %v4763
      %v4769 = vsel %vm1090, %v4768, 0.0
      %4770 = vadd.xlane.f32.xlu0 %v4769
      %v4771 = vpop.xlane.xlu0 %4770
      %v4772 = vmul.f32 %v4771, %v1094
      %v4773 = vsub.f32 %v4768, %v4772
      %v4774 = vmul.f32 %v4773, %v4773
      %v4775 = vsel %vm1090, %v4774, 0.0
      %4776 = vadd.xlane.f32.xlu0 %v4775
      %v4777 = vpop.xlane.xlu0 %4776
      %v4778 = vmul.f32 %v4777, %v1094
      %v4779 = vadd.f32 %v4778, 1e-05
      %v4780 = vrsqrt.pop %v4779
      %v4781 = vmul.f32 %v4773, %v4780
      %v4782 = vlaneseq
      %v4783 = vshrl.u32 %v4782, 7
      %v4784 = vsub.s32 3, %v4783
      %v4785 = vrot.slane %v1085, %v4784
      %v4786 = vmul.f32 %v4781, %v4785
      %v4787 = vlaneseq
      %v4788 = vshrl.u32 %v4787, 7
      %v4789 = vsub.s32 4, %v4788
      %v4790 = vrot.slane %v1085, %v4789
      %v4791 = vadd.f32 %v4786, %v4790
      %v4792 = vpack.c.bf16 %v4791, %v4791
      %v4793 = vlaneseq
      %v4794 = vshrl.u32 %v4793, 7
      %v4795 = vsub.s32 6, %v4794
      %v4796 = vrot.slane %v1084, %v4795
      %v4801 = vunpack.c.l.b16 %v3950
      %v4802 = vunpack.c.l.b16 %v3951
      %v4803 = vunpack.c.l.b16 %v3952
      %v4804 = vunpack.c.l.b16 %v3953
      %v4805 = vpack.c.b16 %v4802, %v4801
      %v4806 = vpack.c.b16 %v4804, %v4803
      %v4810 = vsel %vm1090, %v4792, 0
      %4812 = vmatprep.subr.bf16.mxu0 0
      %4813 = vmatpush1.bf16.msra.mxu0 %v4805
      %4814 = vmatprep.subr.bf16.mxu0 0
      %4815 = vmatpush1.bf16.msra.mxu0 %v4806
      %4816 = vmatprep.subr.bf16.mxu0 0
      %4817 = vmatpush1.bf16.msra.mxu0 0
      %4818 = vmatprep.subr.bf16.mxu0 0
      %4819 = vmatpush1.bf16.msra.mxu0 0
      %4820 = vmatprep.subr.bf16.mxu0 0
      %4821 = vmatpush1.bf16.msra.mxu0 0
      %4822 = vmatprep.subr.bf16.mxu0 0
      %4823 = vmatpush1.bf16.msra.mxu0 0
      %4824 = vmatprep.subr.bf16.mxu0 0
      %4825 = vmatpush1.bf16.msra.mxu0 0
      %4826 = vmatprep.subr.bf16.mxu0 0
      %4827 = vmatpush1.bf16.msra.mxu0 0
      %4828 = vmatprep.subr.bf16.mxu0 0
      %4829 = vmatpush1.bf16.msra.mxu0 0
      %4830 = vmatprep.subr.bf16.mxu0 0
      %4831 = vmatpush1.bf16.msra.mxu0 0
      %4832 = vmatprep.subr.bf16.mxu0 0
      %4833 = vmatpush1.bf16.msra.mxu0 0
      %4834 = vmatprep.subr.bf16.mxu0 0
      %4835 = vmatpush1.bf16.msra.mxu0 0
      %4836 = vmatprep.subr.bf16.mxu0 0
      %4837 = vmatpush1.bf16.msra.mxu0 0
      %4838 = vmatprep.subr.bf16.mxu0 0
      %4839 = vmatpush1.bf16.msra.mxu0 0
      %4840 = vmatprep.subr.bf16.mxu0 0
      %4841 = vmatpush1.bf16.msra.mxu0 0
      %4842 = vmatprep.subr.bf16.mxu0 0
      %4843 = vmatpush1.bf16.msra.mxu0 0
      %4844 = vmatprep.mubr.bf16.mxu0 0
      %4845 = vmatmul.mubr.bf16.gmra.mrb[0].mxu0 %v4810
      %v4846 = vpop.f32.mrb[0].mxu0
      %v4847 = vadd.f32 %v4796, %v4846
      %v4848 = vpop.f32.mrb[0].mxu0
      %v4849 = vpop.f32.mrb[0].mxu0
      %v4850 = vpop.f32.mrb[0].mxu0
      %4851 = vdwg.mxu0
      %v4852 = vpack.c.bf16 %v3939, %v3939
      %v4853 = vlaneseq
      %v4854 = vshrl.u32 %v4853, 7
      %v4855 = vsub.s32 7, %v4854
      %v4856 = vrot.slane %v1084, %v4855
      %v4861 = vunpack.c.l.b16 %v3954
      %v4862 = vunpack.c.l.b16 %v3955
      %v4863 = vunpack.c.l.b16 %v3956
      %v4864 = vunpack.c.l.b16 %v3957
      %v4865 = vpack.c.b16 %v4862, %v4861
      %v4866 = vpack.c.b16 %v4864, %v4863
      %v4870 = vsel %vm1090, %v4852, 0
      %4872 = vmatprep.subr.bf16.mxu0 0
      %4873 = vmatpush1.bf16.msra.mxu0 %v4865
      %4874 = vmatprep.subr.bf16.mxu0 0
      %4875 = vmatpush1.bf16.msra.mxu0 %v4866
      %4876 = vmatprep.subr.bf16.mxu0 0
      %4877 = vmatpush1.bf16.msra.mxu0 0
      %4878 = vmatprep.subr.bf16.mxu0 0
      %4879 = vmatpush1.bf16.msra.mxu0 0
      %4880 = vmatprep.subr.bf16.mxu0 0
      %4881 = vmatpush1.bf16.msra.mxu0 0
      %4882 = vmatprep.subr.bf16.mxu0 0
      %4883 = vmatpush1.bf16.msra.mxu0 0
      %4884 = vmatprep.subr.bf16.mxu0 0
      %4885 = vmatpush1.bf16.msra.mxu0 0
      %4886 = vmatprep.subr.bf16.mxu0 0
      %4887 = vmatpush1.bf16.msra.mxu0 0
      %4888 = vmatprep.subr.bf16.mxu0 0
      %4889 = vmatpush1.bf16.msra.mxu0 0
      %4890 = vmatprep.subr.bf16.mxu0 0
      %4891 = vmatpush1.bf16.msra.mxu0 0
      %4892 = vmatprep.subr.bf16.mxu0 0
      %4893 = vmatpush1.bf16.msra.mxu0 0
      %4894 = vmatprep.subr.bf16.mxu0 0
      %4895 = vmatpush1.bf16.msra.mxu0 0
      %4896 = vmatprep.subr.bf16.mxu0 0
      %4897 = vmatpush1.bf16.msra.mxu0 0
      %4898 = vmatprep.subr.bf16.mxu0 0
      %4899 = vmatpush1.bf16.msra.mxu0 0
      %4900 = vmatprep.subr.bf16.mxu0 0
      %4901 = vmatpush1.bf16.msra.mxu0 0
      %4902 = vmatprep.subr.bf16.mxu0 0
      %4903 = vmatpush1.bf16.msra.mxu0 0
      %4904 = vmatprep.mubr.bf16.mxu0 0
      %4905 = vmatmul.mubr.bf16.gmra.mrb[0].mxu0 %v4870
      %v4906 = vpop.f32.mrb[0].mxu0
      %v4907 = vadd.f32 %v4856, %v4906
      %v4908 = vpop.f32.mrb[0].mxu0
      %v4909 = vpop.f32.mrb[0].mxu0
      %v4910 = vpop.f32.mrb[0].mxu0
      %4911 = vdwg.mxu0
      %v4913 = vlaneseq
      %v4914 = vshrl.u32 %v4913, 7
      %v4915 = vsub.s32 0, %v4914
      %v4916 = vrot.slane %v3940, %v4915
      %v4919 = vsel %vm1122, %v4847, 0
      %v4922 = vsel %vm1122, %v4907, 0
      %4924 = vmatprep.subr.mxu0 0.0
      %4925 = vmatpush1.xpose.msra.mxu0 %v4922
      %4926 = vmatprep.subr.mxu0 0.0
      %4927 = vmatpush1.xpose.msra.mxu0 0.0
      %4928 = vmatprep.subr.mxu0 0.0
      %4929 = vmatpush1.xpose.msra.mxu0 0.0
      %4930 = vmatprep.subr.mxu0 0.0
      %4931 = vmatpush1.xpose.msra.mxu0 0.0
      %4932 = vmatprep.subr.mxu0 0.0
      %4933 = vmatpush1.xpose.msra.mxu0 0.0
      %4934 = vmatprep.subr.mxu0 0.0
      %4935 = vmatpush1.xpose.msra.mxu0 0.0
      %4936 = vmatprep.subr.mxu0 0.0
      %4937 = vmatpush1.xpose.msra.mxu0 0.0
      %4938 = vmatprep.subr.mxu0 0.0
      %4939 = vmatpush1.xpose.msra.mxu0 0.0
      %4940 = vmatprep.subr.mxu0 0.0
      %4941 = vmatpush1.xpose.msra.mxu0 0.0
      %4942 = vmatprep.subr.mxu0 0.0
      %4943 = vmatpush1.xpose.msra.mxu0 0.0
      %4944 = vmatprep.subr.mxu0 0.0
      %4945 = vmatpush1.xpose.msra.mxu0 0.0
      %4946 = vmatprep.subr.mxu0 0.0
      %4947 = vmatpush1.xpose.msra.mxu0 0.0
      %4948 = vmatprep.subr.mxu0 0.0
      %4949 = vmatpush1.xpose.msra.mxu0 0.0
      %4950 = vmatprep.subr.mxu0 0.0
      %4951 = vmatpush1.xpose.msra.mxu0 0.0
      %4952 = vmatprep.subr.mxu0 0.0
      %4953 = vmatpush1.xpose.msra.mxu0 0.0
      %4954 = vmatprep.subr.mxu0 0.0
      %4955 = vmatpush1.xpose.msra.mxu0 0.0
      %4956 = vmatprep.subr.mxu0 0.0
      %4957 = vmatpush1.xpose.msra.mxu0 0.0
      %4958 = vmatprep.subr.mxu0 0.0
      %4959 = vmatpush1.xpose.msra.mxu0 0.0
      %4960 = vmatprep.subr.mxu0 0.0
      %4961 = vmatpush1.xpose.msra.mxu0 0.0
      %4962 = vmatprep.subr.mxu0 0.0
      %4963 = vmatpush1.xpose.msra.mxu0 0.0
      %4964 = vmatprep.subr.mxu0 0.0
      %4965 = vmatpush1.xpose.msra.mxu0 0.0
      %4966 = vmatprep.subr.mxu0 0.0
      %4967 = vmatpush1.xpose.msra.mxu0 0.0
      %4968 = vmatprep.subr.mxu0 0.0
      %4969 = vmatpush1.xpose.msra.mxu0 0.0
      %4970 = vmatprep.subr.mxu0 0.0
      %4971 = vmatpush1.xpose.msra.mxu0 0.0
      %4972 = vmatprep.subr.mxu0 0.0
      %4973 = vmatpush1.xpose.msra.mxu0 0.0
      %4974 = vmatprep.subr.mxu0 0.0
      %4975 = vmatpush1.xpose.msra.mxu0 0.0
      %4976 = vmatprep.subr.mxu0 0.0
      %4977 = vmatpush1.xpose.msra.mxu0 0.0
      %4978 = vmatprep.subr.mxu0 0.0
      %4979 = vmatpush1.xpose.msra.mxu0 0.0
      %4980 = vmatprep.subr.mxu0 0.0
      %4981 = vmatpush1.xpose.msra.mxu0 0.0
      %4982 = vmatprep.subr.mxu0 0.0
      %4983 = vmatpush1.xpose.msra.mxu0 0.0
      %4984 = vmatprep.subr.mxu0 0.0
      %4985 = vmatpush1.xpose.msra.mxu0 0.0
      %4986 = vmatprep.subr.mxu0 0.0
      %4987 = vmatpush1.xpose.msra.mxu0 0.0
      %4988 = vmatprep.mubr.f32.mxu0 0.0
      %4989 = vmatmul.mubr.f32.gmra.mrb[0].mxu0 %v4919
      %v4990 = vpop.f32.mrb[0].mxu0
      %v4991 = vadd.f32 %v4916, %v4990
      %v4992 = vpop.f32.mrb[0].mxu0
      %4993 = vdwg.mxu0
      %v4994 = vsel %vm1122, %v4991, -inf
      %4995 = vmax.xlane.f32.xlu0 %v4994
      %v4996 = vpop.xlane.xlu0 %4995
      %v4997 = vsub.f32 %v4991, %v4996
      %v4998 = vmul.f32 %v4997, 1.442695
      %v4999 = vpow.pop %v4998
      %v5000 = vsel %vm1122, %v4999, 0.0
      %5001 = vadd.xlane.f32.xlu0 %v5000
      %v5002 = vpop.xlane.xlu0 %5001
      %v5003 = vrcp.pop %v5002
      %v5004 = vmul.f32 %v4999, %v5003
      %5005 = vrot.lane.b32.xlu0 %v4907, 96
      %v5006 = vpop.permute.xlu0 %5005
      %v5009 = vsel %vm1122, %v5004, 0
      %5011 = vmatprep.subr.mxu0 0.0
      %5012 = vmatpush1.msra.mxu0 %v5006
      %5013 = vmatprep.subr.mxu0 0.0
      %5014 = vmatpush1.msra.mxu0 0.0
      %5015 = vmatprep.subr.mxu0 0.0
      %5016 = vmatpush1.msra.mxu0 0.0
      %5017 = vmatprep.subr.mxu0 0.0
      %5018 = vmatpush1.msra.mxu0 0.0
      %5019 = vmatprep.subr.mxu0 0.0
      %5020 = vmatpush1.msra.mxu0 0.0
      %5021 = vmatprep.subr.mxu0 0.0
      %5022 = vmatpush1.msra.mxu0 0.0
      %5023 = vmatprep.subr.mxu0 0.0
      %5024 = vmatpush1.msra.mxu0 0.0
      %5025 = vmatprep.subr.mxu0 0.0
      %5026 = vmatpush1.msra.mxu0 0.0
      %5027 = vmatprep.subr.mxu0 0.0
      %5028 = vmatpush1.msra.mxu0 0.0
      %5029 = vmatprep.subr.mxu0 0.0
      %5030 = vmatpush1.msra.mxu0 0.0
      %5031 = vmatprep.subr.mxu0 0.0
      %5032 = vmatpush1.msra.mxu0 0.0
      %5033 = vmatprep.subr.mxu0 0.0
      %5034 = vmatpush1.msra.mxu0 0.0
      %5035 = vmatprep.subr.mxu0 0.0
      %5036 = vmatpush1.msra.mxu0 0.0
      %5037 = vmatprep.subr.mxu0 0.0
      %5038 = vmatpush1.msra.mxu0 0.0
      %5039 = vmatprep.subr.mxu0 0.0
      %5040 = vmatpush1.msra.mxu0 0.0
      %5041 = vmatprep.subr.mxu0 0.0
      %5042 = vmatpush1.msra.mxu0 0.0
      %5043 = vmatprep.subr.mxu0 0.0
      %5044 = vmatpush1.msra.mxu0 0.0
      %5045 = vmatprep.subr.mxu0 0.0
      %5046 = vmatpush1.msra.mxu0 0.0
      %5047 = vmatprep.subr.mxu0 0.0
      %5048 = vmatpush1.msra.mxu0 0.0
      %5049 = vmatprep.subr.mxu0 0.0
      %5050 = vmatpush1.msra.mxu0 0.0
      %5051 = vmatprep.subr.mxu0 0.0
      %5052 = vmatpush1.msra.mxu0 0.0
      %5053 = vmatprep.subr.mxu0 0.0
      %5054 = vmatpush1.msra.mxu0 0.0
      %5055 = vmatprep.subr.mxu0 0.0
      %5056 = vmatpush1.msra.mxu0 0.0
      %5057 = vmatprep.subr.mxu0 0.0
      %5058 = vmatpush1.msra.mxu0 0.0
      %5059 = vmatprep.subr.mxu0 0.0
      %5060 = vmatpush1.msra.mxu0 0.0
      %5061 = vmatprep.subr.mxu0 0.0
      %5062 = vmatpush1.msra.mxu0 0.0
      %5063 = vmatprep.subr.mxu0 0.0
      %5064 = vmatpush1.msra.mxu0 0.0
      %5065 = vmatprep.subr.mxu0 0.0
      %5066 = vmatpush1.msra.mxu0 0.0
      %5067 = vmatprep.subr.mxu0 0.0
      %5068 = vmatpush1.msra.mxu0 0.0
      %5069 = vmatprep.subr.mxu0 0.0
      %5070 = vmatpush1.msra.mxu0 0.0
      %5071 = vmatprep.subr.mxu0 0.0
      %5072 = vmatpush1.msra.mxu0 0.0
      %5073 = vmatprep.subr.mxu0 0.0
      %5074 = vmatpush1.msra.mxu0 0.0
      %5075 = vmatprep.mubr.f32.mxu0 0.0
      %5076 = vmatmul.mubr.f32.gmra.mrb[0].mxu0 %v5009
      %v5077 = vpop.f32.mrb[0].mxu0
      %v5078 = vadd.f32 0.0, %v5077
      %v5079 = vpop.f32.mrb[0].mxu0
      %5080 = vdwg.mxu0
      %5081 = vrot.lane.b32.xlu0 %v4847, 120
      %v5082 = vpop.permute.xlu0 %5081
      %5083 = vrot.lane.b32.xlu0 %v4907, 120
      %v5084 = vpop.permute.xlu0 %5083
      %v5085 = vsel %vm1122, %v5082, 0
      %v5087 = vsel %vm1122, %v5084, 0
      %5089 = vmatprep.subr.mxu0 0.0
      %5090 = vmatpush1.xpose.msra.mxu0 %v5087
      %5091 = vmatprep.subr.mxu0 0.0
      %5092 = vmatpush1.xpose.msra.mxu0 0.0
      %5093 = vmatprep.subr.mxu0 0.0
      %5094 = vmatpush1.xpose.msra.mxu0 0.0
      %5095 = vmatprep.subr.mxu0 0.0
      %5096 = vmatpush1.xpose.msra.mxu0 0.0
      %5097 = vmatprep.subr.mxu0 0.0
      %5098 = vmatpush1.xpose.msra.mxu0 0.0
      %5099 = vmatprep.subr.mxu0 0.0
      %5100 = vmatpush1.xpose.msra.mxu0 0.0
      %5101 = vmatprep.subr.mxu0 0.0
      %5102 = vmatpush1.xpose.msra.mxu0 0.0
      %5103 = vmatprep.subr.mxu0 0.0
      %5104 = vmatpush1.xpose.msra.mxu0 0.0
      %5105 = vmatprep.subr.mxu0 0.0
      %5106 = vmatpush1.xpose.msra.mxu0 0.0
      %5107 = vmatprep.subr.mxu0 0.0
      %5108 = vmatpush1.xpose.msra.mxu0 0.0
      %5109 = vmatprep.subr.mxu0 0.0
      %5110 = vmatpush1.xpose.msra.mxu0 0.0
      %5111 = vmatprep.subr.mxu0 0.0
      %5112 = vmatpush1.xpose.msra.mxu0 0.0
      %5113 = vmatprep.subr.mxu0 0.0
      %5114 = vmatpush1.xpose.msra.mxu0 0.0
      %5115 = vmatprep.subr.mxu0 0.0
      %5116 = vmatpush1.xpose.msra.mxu0 0.0
      %5117 = vmatprep.subr.mxu0 0.0
      %5118 = vmatpush1.xpose.msra.mxu0 0.0
      %5119 = vmatprep.subr.mxu0 0.0
      %5120 = vmatpush1.xpose.msra.mxu0 0.0
      %5121 = vmatprep.subr.mxu0 0.0
      %5122 = vmatpush1.xpose.msra.mxu0 0.0
      %5123 = vmatprep.subr.mxu0 0.0
      %5124 = vmatpush1.xpose.msra.mxu0 0.0
      %5125 = vmatprep.subr.mxu0 0.0
      %5126 = vmatpush1.xpose.msra.mxu0 0.0
      %5127 = vmatprep.subr.mxu0 0.0
      %5128 = vmatpush1.xpose.msra.mxu0 0.0
      %5129 = vmatprep.subr.mxu0 0.0
      %5130 = vmatpush1.xpose.msra.mxu0 0.0
      %5131 = vmatprep.subr.mxu0 0.0
      %5132 = vmatpush1.xpose.msra.mxu0 0.0
      %5133 = vmatprep.subr.mxu0 0.0
      %5134 = vmatpush1.xpose.msra.mxu0 0.0
      %5135 = vmatprep.subr.mxu0 0.0
      %5136 = vmatpush1.xpose.msra.mxu0 0.0
      %5137 = vmatprep.subr.mxu0 0.0
      %5138 = vmatpush1.xpose.msra.mxu0 0.0
      %5139 = vmatprep.subr.mxu0 0.0
      %5140 = vmatpush1.xpose.msra.mxu0 0.0
      %5141 = vmatprep.subr.mxu0 0.0
      %5142 = vmatpush1.xpose.msra.mxu0 0.0
      %5143 = vmatprep.subr.mxu0 0.0
      %5144 = vmatpush1.xpose.msra.mxu0 0.0
      %5145 = vmatprep.subr.mxu0 0.0
      %5146 = vmatpush1.xpose.msra.mxu0 0.0
      %5147 = vmatprep.subr.mxu0 0.0
      %5148 = vmatpush1.xpose.msra.mxu0 0.0
      %5149 = vmatprep.subr.mxu0 0.0
      %5150 = vmatpush1.xpose.msra.mxu0 0.0
      %5151 = vmatprep.subr.mxu0 0.0
      %5152 = vmatpush1.xpose.msra.mxu0 0.0
      %5153 = vmatprep.mubr.f32.mxu0 0.0
      %5154 = vmatmul.mubr.f32.gmra.mrb[0].mxu0 %v5085
      %v5155 = vpop.f32.mrb[0].mxu0
      %v5156 = vadd.f32 %v4916, %v5155
      %v5157 = vpop.f32.mrb[0].mxu0
      %5158 = vdwg.mxu0
      %v5159 = vsel %vm1122, %v5156, -inf
      %5160 = vmax.xlane.f32.xlu0 %v5159
      %v5161 = vpop.xlane.xlu0 %5160
      %v5162 = vsub.f32 %v5156, %v5161
      %v5163 = vmul.f32 %v5162, 1.442695
      %v5164 = vpow.pop %v5163
      %v5165 = vsel %vm1122, %v5164, 0.0
      %5166 = vadd.xlane.f32.xlu0 %v5165
      %v5167 = vpop.xlane.xlu0 %5166
      %v5168 = vrcp.pop %v5167
      %v5169 = vmul.f32 %v5164, %v5168
      %5170 = vrot.lane.b32.xlu0 %v4907, 88
      %v5171 = vpop.permute.xlu0 %5170
      %v5174 = vsel %vm1122, %v5169, 0
      %5176 = vmatprep.subr.mxu0 0.0
      %5177 = vmatpush1.msra.mxu0 %v5171
      %5178 = vmatprep.subr.mxu0 0.0
      %5179 = vmatpush1.msra.mxu0 0.0
      %5180 = vmatprep.subr.mxu0 0.0
      %5181 = vmatpush1.msra.mxu0 0.0
      %5182 = vmatprep.subr.mxu0 0.0
      %5183 = vmatpush1.msra.mxu0 0.0
      %5184 = vmatprep.subr.mxu0 0.0
      %5185 = vmatpush1.msra.mxu0 0.0
      %5186 = vmatprep.subr.mxu0 0.0
      %5187 = vmatpush1.msra.mxu0 0.0
      %5188 = vmatprep.subr.mxu0 0.0
      %5189 = vmatpush1.msra.mxu0 0.0
      %5190 = vmatprep.subr.mxu0 0.0
      %5191 = vmatpush1.msra.mxu0 0.0
      %5192 = vmatprep.subr.mxu0 0.0
      %5193 = vmatpush1.msra.mxu0 0.0
      %5194 = vmatprep.subr.mxu0 0.0
      %5195 = vmatpush1.msra.mxu0 0.0
      %5196 = vmatprep.subr.mxu0 0.0
      %5197 = vmatpush1.msra.mxu0 0.0
      %5198 = vmatprep.subr.mxu0 0.0
      %5199 = vmatpush1.msra.mxu0 0.0
      %5200 = vmatprep.subr.mxu0 0.0
      %5201 = vmatpush1.msra.mxu0 0.0
      %5202 = vmatprep.subr.mxu0 0.0
      %5203 = vmatpush1.msra.mxu0 0.0
      %5204 = vmatprep.subr.mxu0 0.0
      %5205 = vmatpush1.msra.mxu0 0.0
      %5206 = vmatprep.subr.mxu0 0.0
      %5207 = vmatpush1.msra.mxu0 0.0
      %5208 = vmatprep.subr.mxu0 0.0
      %5209 = vmatpush1.msra.mxu0 0.0
      %5210 = vmatprep.subr.mxu0 0.0
      %5211 = vmatpush1.msra.mxu0 0.0
      %5212 = vmatprep.subr.mxu0 0.0
      %5213 = vmatpush1.msra.mxu0 0.0
      %5214 = vmatprep.subr.mxu0 0.0
      %5215 = vmatpush1.msra.mxu0 0.0
      %5216 = vmatprep.subr.mxu0 0.0
      %5217 = vmatpush1.msra.mxu0 0.0
      %5218 = vmatprep.subr.mxu0 0.0
      %5219 = vmatpush1.msra.mxu0 0.0
      %5220 = vmatprep.subr.mxu0 0.0
      %5221 = vmatpush1.msra.mxu0 0.0
      %5222 = vmatprep.subr.mxu0 0.0
      %5223 = vmatpush1.msra.mxu0 0.0
      %5224 = vmatprep.subr.mxu0 0.0
      %5225 = vmatpush1.msra.mxu0 0.0
      %5226 = vmatprep.subr.mxu0 0.0
      %5227 = vmatpush1.msra.mxu0 0.0
      %5228 = vmatprep.subr.mxu0 0.0
      %5229 = vmatpush1.msra.mxu0 0.0
      %5230 = vmatprep.subr.mxu0 0.0
      %5231 = vmatpush1.msra.mxu0 0.0
      %5232 = vmatprep.subr.mxu0 0.0
      %5233 = vmatpush1.msra.mxu0 0.0
      %5234 = vmatprep.subr.mxu0 0.0
      %5235 = vmatpush1.msra.mxu0 0.0
      %5236 = vmatprep.subr.mxu0 0.0
      %5237 = vmatpush1.msra.mxu0 0.0
      %5238 = vmatprep.subr.mxu0 0.0
      %5239 = vmatpush1.msra.mxu0 0.0
      %5240 = vmatprep.mubr.f32.mxu0 0.0
      %5241 = vmatmul.mubr.f32.gmra.mrb[0].mxu0 %v5174
      %v5242 = vpop.f32.mrb[0].mxu0
      %v5243 = vadd.f32 0.0, %v5242
      %v5244 = vpop.f32.mrb[0].mxu0
      %5245 = vdwg.mxu0
      %5246 = vrot.lane.b32.xlu0 %v4847, 112
      %v5247 = vpop.permute.xlu0 %5246
      %5248 = vrot.lane.b32.xlu0 %v4907, 112
      %v5249 = vpop.permute.xlu0 %5248
      %v5250 = vsel %vm1122, %v5247, 0
      %v5252 = vsel %vm1122, %v5249, 0
      %5254 = vmatprep.subr.mxu0 0.0
      %5255 = vmatpush1.xpose.msra.mxu0 %v5252
      %5256 = vmatprep.subr.mxu0 0.0
      %5257 = vmatpush1.xpose.msra.mxu0 0.0
      %5258 = vmatprep.subr.mxu0 0.0
      %5259 = vmatpush1.xpose.msra.mxu0 0.0
      %5260 = vmatprep.subr.mxu0 0.0
      %5261 = vmatpush1.xpose.msra.mxu0 0.0
      %5262 = vmatprep.subr.mxu0 0.0
      %5263 = vmatpush1.xpose.msra.mxu0 0.0
      %5264 = vmatprep.subr.mxu0 0.0
      %5265 = vmatpush1.xpose.msra.mxu0 0.0
      %5266 = vmatprep.subr.mxu0 0.0
      %5267 = vmatpush1.xpose.msra.mxu0 0.0
      %5268 = vmatprep.subr.mxu0 0.0
      %5269 = vmatpush1.xpose.msra.mxu0 0.0
      %5270 = vmatprep.subr.mxu0 0.0
      %5271 = vmatpush1.xpose.msra.mxu0 0.0
      %5272 = vmatprep.subr.mxu0 0.0
      %5273 = vmatpush1.xpose.msra.mxu0 0.0
      %5274 = vmatprep.subr.mxu0 0.0
      %5275 = vmatpush1.xpose.msra.mxu0 0.0
      %5276 = vmatprep.subr.mxu0 0.0
      %5277 = vmatpush1.xpose.msra.mxu0 0.0
      %5278 = vmatprep.subr.mxu0 0.0
      %5279 = vmatpush1.xpose.msra.mxu0 0.0
      %5280 = vmatprep.subr.mxu0 0.0
      %5281 = vmatpush1.xpose.msra.mxu0 0.0
      %5282 = vmatprep.subr.mxu0 0.0
      %5283 = vmatpush1.xpose.msra.mxu0 0.0
      %5284 = vmatprep.subr.mxu0 0.0
      %5285 = vmatpush1.xpose.msra.mxu0 0.0
      %5286 = vmatprep.subr.mxu0 0.0
      %5287 = vmatpush1.xpose.msra.mxu0 0.0
      %5288 = vmatprep.subr.mxu0 0.0
      %5289 = vmatpush1.xpose.msra.mxu0 0.0
      %5290 = vmatprep.subr.mxu0 0.0
      %5291 = vmatpush1.xpose.msra.mxu0 0.0
      %5292 = vmatprep.subr.mxu0 0.0
      %5293 = vmatpush1.xpose.msra.mxu0 0.0
      %5294 = vmatprep.subr.mxu0 0.0
      %5295 = vmatpush1.xpose.msra.mxu0 0.0
      %5296 = vmatprep.subr.mxu0 0.0
      %5297 = vmatpush1.xpose.msra.mxu0 0.0
      %5298 = vmatprep.subr.mxu0 0.0
      %5299 = vmatpush1.xpose.msra.mxu0 0.0
      %5300 = vmatprep.subr.mxu0 0.0
      %5301 = vmatpush1.xpose.msra.mxu0 0.0
      %5302 = vmatprep.subr.mxu0 0.0
      %5303 = vmatpush1.xpose.msra.mxu0 0.0
      %5304 = vmatprep.subr.mxu0 0.0
      %5305 = vmatpush1.xpose.msra.mxu0 0.0
      %5306 = vmatprep.subr.mxu0 0.0
      %5307 = vmatpush1.xpose.msra.mxu0 0.0
      %5308 = vmatprep.subr.mxu0 0.0
      %5309 = vmatpush1.xpose.msra.mxu0 0.0
      %5310 = vmatprep.subr.mxu0 0.0
      %5311 = vmatpush1.xpose.msra.mxu0 0.0
      %5312 = vmatprep.subr.mxu0 0.0
      %5313 = vmatpush1.xpose.msra.mxu0 0.0
      %5314 = vmatprep.subr.mxu0 0.0
      %5315 = vmatpush1.xpose.msra.mxu0 0.0
      %5316 = vmatprep.subr.mxu0 0.0
      %5317 = vmatpush1.xpose.msra.mxu0 0.0
      %5318 = vmatprep.mubr.f32.mxu0 0.0
      %5319 = vmatmul.mubr.f32.gmra.mrb[0].mxu0 %v5250
      %v5320 = vpop.f32.mrb[0].mxu0
      %v5321 = vadd.f32 %v4916, %v5320
      %v5322 = vpop.f32.mrb[0].mxu0
      %5323 = vdwg.mxu0
      %v5324 = vsel %vm1122, %v5321, -inf
      %5325 = vmax.xlane.f32.xlu0 %v5324
      %v5326 = vpop.xlane.xlu0 %5325
      %v5327 = vsub.f32 %v5321, %v5326
      %v5328 = vmul.f32 %v5327, 1.442695
      %v5329 = vpow.pop %v5328
      %v5330 = vsel %vm1122, %v5329, 0.0
      %5331 = vadd.xlane.f32.xlu0 %v5330
      %v5332 = vpop.xlane.xlu0 %5331
      %v5333 = vrcp.pop %v5332
      %v5334 = vmul.f32 %v5329, %v5333
      %5335 = vrot.lane.b32.xlu0 %v4907, 80
      %v5336 = vpop.permute.xlu0 %5335
      %v5339 = vsel %vm1122, %v5334, 0
      %5341 = vmatprep.subr.mxu0 0.0
      %5342 = vmatpush1.msra.mxu0 %v5336
      %5343 = vmatprep.subr.mxu0 0.0
      %5344 = vmatpush1.msra.mxu0 0.0
      %5345 = vmatprep.subr.mxu0 0.0
      %5346 = vmatpush1.msra.mxu0 0.0
      %5347 = vmatprep.subr.mxu0 0.0
      %5348 = vmatpush1.msra.mxu0 0.0
      %5349 = vmatprep.subr.mxu0 0.0
      %5350 = vmatpush1.msra.mxu0 0.0
      %5351 = vmatprep.subr.mxu0 0.0
      %5352 = vmatpush1.msra.mxu0 0.0
      %5353 = vmatprep.subr.mxu0 0.0
      %5354 = vmatpush1.msra.mxu0 0.0
      %5355 = vmatprep.subr.mxu0 0.0
      %5356 = vmatpush1.msra.mxu0 0.0
      %5357 = vmatprep.subr.mxu0 0.0
      %5358 = vmatpush1.msra.mxu0 0.0
      %5359 = vmatprep.subr.mxu0 0.0
      %5360 = vmatpush1.msra.mxu0 0.0
      %5361 = vmatprep.subr.mxu0 0.0
      %5362 = vmatpush1.msra.mxu0 0.0
      %5363 = vmatprep.subr.mxu0 0.0
      %5364 = vmatpush1.msra.mxu0 0.0
      %5365 = vmatprep.subr.mxu0 0.0
      %5366 = vmatpush1.msra.mxu0 0.0
      %5367 = vmatprep.subr.mxu0 0.0
      %5368 = vmatpush1.msra.mxu0 0.0
      %5369 = vmatprep.subr.mxu0 0.0
      %5370 = vmatpush1.msra.mxu0 0.0
      %5371 = vmatprep.subr.mxu0 0.0
      %5372 = vmatpush1.msra.mxu0 0.0
      %5373 = vmatprep.subr.mxu0 0.0
      %5374 = vmatpush1.msra.mxu0 0.0
      %5375 = vmatprep.subr.mxu0 0.0
      %5376 = vmatpush1.msra.mxu0 0.0
      %5377 = vmatprep.subr.mxu0 0.0
      %5378 = vmatpush1.msra.mxu0 0.0
      %5379 = vmatprep.subr.mxu0 0.0
      %5380 = vmatpush1.msra.mxu0 0.0
      %5381 = vmatprep.subr.mxu0 0.0
      %5382 = vmatpush1.msra.mxu0 0.0
      %5383 = vmatprep.subr.mxu0 0.0
      %5384 = vmatpush1.msra.mxu0 0.0
      %5385 = vmatprep.subr.mxu0 0.0
      %5386 = vmatpush1.msra.mxu0 0.0
      %5387 = vmatprep.subr.mxu0 0.0
      %5388 = vmatpush1.msra.mxu0 0.0
      %5389 = vmatprep.subr.mxu0 0.0
      %5390 = vmatpush1.msra.mxu0 0.0
      %5391 = vmatprep.subr.mxu0 0.0
      %5392 = vmatpush1.msra.mxu0 0.0
      %5393 = vmatprep.subr.mxu0 0.0
      %5394 = vmatpush1.msra.mxu0 0.0
      %5395 = vmatprep.subr.mxu0 0.0
      %5396 = vmatpush1.msra.mxu0 0.0
      %5397 = vmatprep.subr.mxu0 0.0
      %5398 = vmatpush1.msra.mxu0 0.0
      %5399 = vmatprep.subr.mxu0 0.0
      %5400 = vmatpush1.msra.mxu0 0.0
      %5401 = vmatprep.subr.mxu0 0.0
      %5402 = vmatpush1.msra.mxu0 0.0
      %5403 = vmatprep.subr.mxu0 0.0
      %5404 = vmatpush1.msra.mxu0 0.0
      %5405 = vmatprep.mubr.f32.mxu0 0.0
      %5406 = vmatmul.mubr.f32.gmra.mrb[0].mxu0 %v5339
      %v5407 = vpop.f32.mrb[0].mxu0
      %v5408 = vadd.f32 0.0, %v5407
      %v5409 = vpop.f32.mrb[0].mxu0
      %5410 = vdwg.mxu0
      %5411 = vrot.lane.b32.xlu0 %v4847, 104
      %v5412 = vpop.permute.xlu0 %5411
      %5413 = vrot.lane.b32.xlu0 %v4907, 104
      %v5414 = vpop.permute.xlu0 %5413
      %v5415 = vsel %vm1122, %v5412, 0
      %v5417 = vsel %vm1122, %v5414, 0
      %5419 = vmatprep.subr.mxu0 0.0
      %5420 = vmatpush1.xpose.msra.mxu0 %v5417
      %5421 = vmatprep.subr.mxu0 0.0
      %5422 = vmatpush1.xpose.msra.mxu0 0.0
      %5423 = vmatprep.subr.mxu0 0.0
      %5424 = vmatpush1.xpose.msra.mxu0 0.0
      %5425 = vmatprep.subr.mxu0 0.0
      %5426 = vmatpush1.xpose.msra.mxu0 0.0
      %5427 = vmatprep.subr.mxu0 0.0
      %5428 = vmatpush1.xpose.msra.mxu0 0.0
      %5429 = vmatprep.subr.mxu0 0.0
      %5430 = vmatpush1.xpose.msra.mxu0 0.0
      %5431 = vmatprep.subr.mxu0 0.0
      %5432 = vmatpush1.xpose.msra.mxu0 0.0
      %5433 = vmatprep.subr.mxu0 0.0
      %5434 = vmatpush1.xpose.msra.mxu0 0.0
      %5435 = vmatprep.subr.mxu0 0.0
      %5436 = vmatpush1.xpose.msra.mxu0 0.0
      %5437 = vmatprep.subr.mxu0 0.0
      %5438 = vmatpush1.xpose.msra.mxu0 0.0
      %5439 = vmatprep.subr.mxu0 0.0
      %5440 = vmatpush1.xpose.msra.mxu0 0.0
      %5441 = vmatprep.subr.mxu0 0.0
      %5442 = vmatpush1.xpose.msra.mxu0 0.0
      %5443 = vmatprep.subr.mxu0 0.0
      %5444 = vmatpush1.xpose.msra.mxu0 0.0
      %5445 = vmatprep.subr.mxu0 0.0
      %5446 = vmatpush1.xpose.msra.mxu0 0.0
      %5447 = vmatprep.subr.mxu0 0.0
      %5448 = vmatpush1.xpose.msra.mxu0 0.0
      %5449 = vmatprep.subr.mxu0 0.0
      %5450 = vmatpush1.xpose.msra.mxu0 0.0
      %5451 = vmatprep.subr.mxu0 0.0
      %5452 = vmatpush1.xpose.msra.mxu0 0.0
      %5453 = vmatprep.subr.mxu0 0.0
      %5454 = vmatpush1.xpose.msra.mxu0 0.0
      %5455 = vmatprep.subr.mxu0 0.0
      %5456 = vmatpush1.xpose.msra.mxu0 0.0
      %5457 = vmatprep.subr.mxu0 0.0
      %5458 = vmatpush1.xpose.msra.mxu0 0.0
      %5459 = vmatprep.subr.mxu0 0.0
      %5460 = vmatpush1.xpose.msra.mxu0 0.0
      %5461 = vmatprep.subr.mxu0 0.0
      %5462 = vmatpush1.xpose.msra.mxu0 0.0
      %5463 = vmatprep.subr.mxu0 0.0
      %5464 = vmatpush1.xpose.msra.mxu0 0.0
      %5465 = vmatprep.subr.mxu0 0.0
      %5466 = vmatpush1.xpose.msra.mxu0 0.0
      %5467 = vmatprep.subr.mxu0 0.0
      %5468 = vmatpush1.xpose.msra.mxu0 0.0
      %5469 = vmatprep.subr.mxu0 0.0
      %5470 = vmatpush1.xpose.msra.mxu0 0.0
      %5471 = vmatprep.subr.mxu0 0.0
      %5472 = vmatpush1.xpose.msra.mxu0 0.0
      %5473 = vmatprep.subr.mxu0 0.0
      %5474 = vmatpush1.xpose.msra.mxu0 0.0
      %5475 = vmatprep.subr.mxu0 0.0
      %5476 = vmatpush1.xpose.msra.mxu0 0.0
      %5477 = vmatprep.subr.mxu0 0.0
      %5478 = vmatpush1.xpose.msra.mxu0 0.0
      %5479 = vmatprep.subr.mxu0 0.0
      %5480 = vmatpush1.xpose.msra.mxu0 0.0
      %5481 = vmatprep.subr.mxu0 0.0
      %5482 = vmatpush1.xpose.msra.mxu0 0.0
      %5483 = vmatprep.mubr.f32.mxu0 0.0
      %5484 = vmatmul.mubr.f32.gmra.mrb[0].mxu0 %v5415
      %v5485 = vpop.f32.mrb[0].mxu0
      %v5486 = vadd.f32 %v4916, %v5485
      %v5487 = vpop.f32.mrb[0].mxu0
      %5488 = vdwg.mxu0
      %v5489 = vsel %vm1122, %v5486, -inf
      %5490 = vmax.xlane.f32.xlu0 %v5489
      %v5491 = vpop.xlane.xlu0 %5490
      %v5492 = vsub.f32 %v5486, %v5491
      %v5493 = vmul.f32 %v5492, 1.442695
      %v5494 = vpow.pop %v5493
      %v5495 = vsel %vm1122, %v5494, 0.0
      %5496 = vadd.xlane.f32.xlu0 %v5495
      %v5497 = vpop.xlane.xlu0 %5496
      %v5498 = vrcp.pop %v5497
      %v5499 = vmul.f32 %v5494, %v5498
      %5500 = vrot.lane.b32.xlu0 %v4907, 72
      %v5501 = vpop.permute.xlu0 %5500
      %v5504 = vsel %vm1122, %v5499, 0
      %5506 = vmatprep.subr.mxu0 0.0
      %5507 = vmatpush1.msra.mxu0 %v5501
      %5508 = vmatprep.subr.mxu0 0.0
      %5509 = vmatpush1.msra.mxu0 0.0
      %5510 = vmatprep.subr.mxu0 0.0
      %5511 = vmatpush1.msra.mxu0 0.0
      %5512 = vmatprep.subr.mxu0 0.0
      %5513 = vmatpush1.msra.mxu0 0.0
      %5514 = vmatprep.subr.mxu0 0.0
      %5515 = vmatpush1.msra.mxu0 0.0
      %5516 = vmatprep.subr.mxu0 0.0
      %5517 = vmatpush1.msra.mxu0 0.0
      %5518 = vmatprep.subr.mxu0 0.0
      %5519 = vmatpush1.msra.mxu0 0.0
      %5520 = vmatprep.subr.mxu0 0.0
      %5521 = vmatpush1.msra.mxu0 0.0
      %5522 = vmatprep.subr.mxu0 0.0
      %5523 = vmatpush1.msra.mxu0 0.0
      %5524 = vmatprep.subr.mxu0 0.0
      %5525 = vmatpush1.msra.mxu0 0.0
      %5526 = vmatprep.subr.mxu0 0.0
      %5527 = vmatpush1.msra.mxu0 0.0
      %5528 = vmatprep.subr.mxu0 0.0
      %5529 = vmatpush1.msra.mxu0 0.0
      %5530 = vmatprep.subr.mxu0 0.0
      %5531 = vmatpush1.msra.mxu0 0.0
      %5532 = vmatprep.subr.mxu0 0.0
      %5533 = vmatpush1.msra.mxu0 0.0
      %5534 = vmatprep.subr.mxu0 0.0
      %5535 = vmatpush1.msra.mxu0 0.0
      %5536 = vmatprep.subr.mxu0 0.0
      %5537 = vmatpush1.msra.mxu0 0.0
      %5538 = vmatprep.subr.mxu0 0.0
      %5539 = vmatpush1.msra.mxu0 0.0
      %5540 = vmatprep.subr.mxu0 0.0
      %5541 = vmatpush1.msra.mxu0 0.0
      %5542 = vmatprep.subr.mxu0 0.0
      %5543 = vmatpush1.msra.mxu0 0.0
      %5544 = vmatprep.subr.mxu0 0.0
      %5545 = vmatpush1.msra.mxu0 0.0
      %5546 = vmatprep.subr.mxu0 0.0
      %5547 = vmatpush1.msra.mxu0 0.0
      %5548 = vmatprep.subr.mxu0 0.0
      %5549 = vmatpush1.msra.mxu0 0.0
      %5550 = vmatprep.subr.mxu0 0.0
      %5551 = vmatpush1.msra.mxu0 0.0
      %5552 = vmatprep.subr.mxu0 0.0
      %5553 = vmatpush1.msra.mxu0 0.0
      %5554 = vmatprep.subr.mxu0 0.0
      %5555 = vmatpush1.msra.mxu0 0.0
      %5556 = vmatprep.subr.mxu0 0.0
      %5557 = vmatpush1.msra.mxu0 0.0
      %5558 = vmatprep.subr.mxu0 0.0
      %5559 = vmatpush1.msra.mxu0 0.0
      %5560 = vmatprep.subr.mxu0 0.0
      %5561 = vmatpush1.msra.mxu0 0.0
      %5562 = vmatprep.subr.mxu0 0.0
      %5563 = vmatpush1.msra.mxu0 0.0
      %5564 = vmatprep.subr.mxu0 0.0
      %5565 = vmatpush1.msra.mxu0 0.0
      %5566 = vmatprep.subr.mxu0 0.0
      %5567 = vmatpush1.msra.mxu0 0.0
      %5568 = vmatprep.subr.mxu0 0.0
      %5569 = vmatpush1.msra.mxu0 0.0
      %5570 = vmatprep.mubr.f32.mxu0 0.0
      %5571 = vmatmul.mubr.f32.gmra.mrb[0].mxu0 %v5504
      %v5572 = vpop.f32.mrb[0].mxu0
      %v5573 = vadd.f32 0.0, %v5572
      %v5574 = vpop.f32.mrb[0].mxu0
      %5575 = vdwg.mxu0
      %5577 = vrot.lane.b32.xlu0 %v5243, 8
      %v5578 = vpop.permute.xlu0 %5577
      %5581 = vrot.lane.b32.xlu0 %v5408, 16
      %v5582 = vpop.permute.xlu0 %5581
      %5585 = vrot.lane.b32.xlu0 %v5573, 24
      %v5586 = vpop.permute.xlu0 %5585
      %v5588 = vsel %vm1122, %v5078, %v5578
      %v5589 = vsel %vm2428, %v5588, %v5582
      %v5590 = vsel %vm2430, %v5589, %v5586
      %v5591 = vpack.c.bf16 %v5590, %v5590
      %v5592 = vlaneseq
      %v5593 = vshrl.u32 %v5592, 7
      %v5594 = vsub.s32 0, %v5593
      %v5595 = vrot.slane %v1085, %v5594
      %v5600 = vunpack.c.l.b16 %v3958
      %v5601 = vunpack.c.l.b16 %v3959
      %v5602 = vunpack.c.l.b16 %v3960
      %v5603 = vunpack.c.l.b16 %v3961
      %v5604 = vpack.c.b16 %v5601, %v5600
      %v5605 = vpack.c.b16 %v5603, %v5602
      %v5609 = vsel %vm1090, %v5591, 0
      %5611 = vmatprep.subr.bf16.mxu0 0
      %5612 = vmatpush1.bf16.msra.mxu0 %v5604
      %5613 = vmatprep.subr.bf16.mxu0 0
      %5614 = vmatpush1.bf16.msra.mxu0 %v5605
      %5615 = vmatprep.subr.bf16.mxu0 0
      %5616 = vmatpush1.bf16.msra.mxu0 0
      %5617 = vmatprep.subr.bf16.mxu0 0
      %5618 = vmatpush1.bf16.msra.mxu0 0
      %5619 = vmatprep.subr.bf16.mxu0 0
      %5620 = vmatpush1.bf16.msra.mxu0 0
      %5621 = vmatprep.subr.bf16.mxu0 0
      %5622 = vmatpush1.bf16.msra.mxu0 0
      %5623 = vmatprep.subr.bf16.mxu0 0
      %5624 = vmatpush1.bf16.msra.mxu0 0
      %5625 = vmatprep.subr.bf16.mxu0 0
      %5626 = vmatpush1.bf16.msra.mxu0 0
      %5627 = vmatprep.subr.bf16.mxu0 0
      %5628 = vmatpush1.bf16.msra.mxu0 0
      %5629 = vmatprep.subr.bf16.mxu0 0
      %5630 = vmatpush1.bf16.msra.mxu0 0
      %5631 = vmatprep.subr.bf16.mxu0 0
      %5632 = vmatpush1.bf16.msra.mxu0 0
      %5633 = vmatprep.subr.bf16.mxu0 0
      %5634 = vmatpush1.bf16.msra.mxu0 0
      %5635 = vmatprep.subr.bf16.mxu0 0
      %5636 = vmatpush1.bf16.msra.mxu0 0
      %5637 = vmatprep.subr.bf16.mxu0 0
      %5638 = vmatpush1.bf16.msra.mxu0 0
      %5639 = vmatprep.subr.bf16.mxu0 0
      %5640 = vmatpush1.bf16.msra.mxu0 0
      %5641 = vmatprep.subr.bf16.mxu0 0
      %5642 = vmatpush1.bf16.msra.mxu0 0
      %5643 = vmatprep.mubr.bf16.mxu0 0
      %5644 = vmatmul.mubr.bf16.gmra.mrb[0].mxu0 %v5609
      %v5645 = vpop.f32.mrb[0].mxu0
      %v5646 = vadd.f32 %v5595, %v5645
      %v5647 = vpop.f32.mrb[0].mxu0
      %v5648 = vpop.f32.mrb[0].mxu0
      %v5649 = vpop.f32.mrb[0].mxu0
      %5650 = vdwg.mxu0
      %v5651 = vadd.f32 %v4791, %v5646
      %v5652 = vsel %vm1090, %v5651, 0.0
      %5653 = vadd.xlane.f32.xlu0 %v5652
      %v5654 = vpop.xlane.xlu0 %5653
      %v5655 = vmul.f32 %v5654, %v1094
      %v5656 = vsub.f32 %v5651, %v5655
      %v5657 = vmul.f32 %v5656, %v5656
      %v5658 = vsel %vm1090, %v5657, 0.0
      %5659 = vadd.xlane.f32.xlu0 %v5658
      %v5660 = vpop.xlane.xlu0 %5659
      %v5661 = vmul.f32 %v5660, %v1094
      %v5662 = vadd.f32 %v5661, 1e-05
      %v5663 = vrsqrt.pop %v5662
      %v5664 = vmul.f32 %v5656, %v5663
      %v5665 = vlaneseq
      %v5666 = vshrl.u32 %v5665, 7
      %v5667 = vsub.s32 5, %v5666
      %v5668 = vrot.slane %v1085, %v5667
      %v5669 = vmul.f32 %v5664, %v5668
      %v5670 = vlaneseq
      %v5671 = vshrl.u32 %v5670, 7
      %v5672 = vsub.s32 6, %v5671
      %v5673 = vrot.slane %v1085, %v5672
      %v5674 = vadd.f32 %v5669, %v5673
      %v5675 = vpack.c.bf16 %v5674, %v5674
      %v5676 = vlaneseq
      %v5677 = vshrl.u32 %v5676, 7
      %v5678 = vsub.s32 1, %v5677
      %v5679 = vrot.slane %v1085, %v5678
      %v5684 = vunpack.c.l.b16 %v3962
      %v5685 = vunpack.c.l.b16 %v3963
      %v5686 = vunpack.c.l.b16 %v3964
      %v5687 = vunpack.c.l.b16 %v3965
      %v5688 = vpack.c.b16 %v5685, %v5684
      %v5689 = vpack.c.b16 %v5687, %v5686
      %v5693 = vsel %vm1090, %v5675, 0
      %5695 = vmatprep.subr.bf16.mxu0 0
      %5696 = vmatpush1.bf16.msra.mxu0 %v5688
      %5697 = vmatprep.subr.bf16.mxu0 0
      %5698 = vmatpush1.bf16.msra.mxu0 %v5689
      %5699 = vmatprep.subr.bf16.mxu0 0
      %5700 = vmatpush1.bf16.msra.mxu0 0
      %5701 = vmatprep.subr.bf16.mxu0 0
      %5702 = vmatpush1.bf16.msra.mxu0 0
      %5703 = vmatprep.subr.bf16.mxu0 0
      %5704 = vmatpush1.bf16.msra.mxu0 0
      %5705 = vmatprep.subr.bf16.mxu0 0
      %5706 = vmatpush1.bf16.msra.mxu0 0
      %5707 = vmatprep.subr.bf16.mxu0 0
      %5708 = vmatpush1.bf16.msra.mxu0 0
      %5709 = vmatprep.subr.bf16.mxu0 0
      %5710 = vmatpush1.bf16.msra.mxu0 0
      %5711 = vmatprep.subr.bf16.mxu0 0
      %5712 = vmatpush1.bf16.msra.mxu0 0
      %5713 = vmatprep.subr.bf16.mxu0 0
      %5714 = vmatpush1.bf16.msra.mxu0 0
      %5715 = vmatprep.subr.bf16.mxu0 0
      %5716 = vmatpush1.bf16.msra.mxu0 0
      %5717 = vmatprep.subr.bf16.mxu0 0
      %5718 = vmatpush1.bf16.msra.mxu0 0
      %5719 = vmatprep.subr.bf16.mxu0 0
      %5720 = vmatpush1.bf16.msra.mxu0 0
      %5721 = vmatprep.subr.bf16.mxu0 0
      %5722 = vmatpush1.bf16.msra.mxu0 0
      %5723 = vmatprep.subr.bf16.mxu0 0
      %5724 = vmatpush1.bf16.msra.mxu0 0
      %5725 = vmatprep.subr.bf16.mxu0 0
      %5726 = vmatpush1.bf16.msra.mxu0 0
      %5727 = vmatprep.mubr.bf16.mxu0 0
      %5728 = vmatmul.mubr.bf16.gmra.mrb[0].mxu0 %v5693
      %v5729 = vpop.f32.mrb[0].mxu0
      %v5730 = vadd.f32 %v5679, %v5729
      %v5731 = vpop.f32.mrb[0].mxu0
      %v5732 = vpop.f32.mrb[0].mxu0
      %v5733 = vpop.f32.mrb[0].mxu0
      %5734 = vdwg.mxu0
      %vm5735 = vcmp.ge.f32.partialorder %v5730, 0.0
      %v5736 = vmul.f32 %v5730, 0.01
      %v5737 = vsel %vm5735, %v5730, %v5736
      %v5738 = vpack.c.bf16 %v5737, %v5737
      %v5739 = vlaneseq
      %v5740 = vshrl.u32 %v5739, 7
      %v5741 = vsub.s32 2, %v5740
      %v5742 = vrot.slane %v1085, %v5741
      %v5751 = vunpack.c.l.b16 %v3966
      %v5752 = vunpack.c.l.b16 %v3967
      %v5753 = vunpack.c.l.b16 %v3968
      %v5754 = vunpack.c.l.b16 %v3969
      %v5755 = vunpack.c.l.b16 %v3970
      %v5756 = vunpack.c.l.b16 %v3971
      %v5757 = vunpack.c.l.b16 %v3972
      %v5758 = vunpack.c.l.b16 %v3973
      %v5759 = vpack.c.b16 %v5752, %v5751
      %v5760 = vpack.c.b16 %v5754, %v5753
      %v5761 = vpack.c.b16 %v5756, %v5755
      %v5762 = vpack.c.b16 %v5758, %v5757
      %v5768 = vsel %vm1235, %v5738, 0
      %5770 = vmatprep.subr.bf16.mxu0 0
      %5771 = vmatpush1.bf16.msra.mxu0 %v5759
      %5772 = vmatprep.subr.bf16.mxu0 0
      %5773 = vmatpush1.bf16.msra.mxu0 %v5760
      %5774 = vmatprep.subr.bf16.mxu0 0
      %5775 = vmatpush1.bf16.msra.mxu0 %v5761
      %5776 = vmatprep.subr.bf16.mxu0 0
      %5777 = vmatpush1.bf16.msra.mxu0 %v5762
      %5778 = vmatprep.subr.bf16.mxu0 0
      %5779 = vmatpush1.bf16.msra.mxu0 0
      %5780 = vmatprep.subr.bf16.mxu0 0
      %5781 = vmatpush1.bf16.msra.mxu0 0
      %5782 = vmatprep.subr.bf16.mxu0 0
      %5783 = vmatpush1.bf16.msra.mxu0 0
      %5784 = vmatprep.subr.bf16.mxu0 0
      %5785 = vmatpush1.bf16.msra.mxu0 0
      %5786 = vmatprep.subr.bf16.mxu0 0
      %5787 = vmatpush1.bf16.msra.mxu0 0
      %5788 = vmatprep.subr.bf16.mxu0 0
      %5789 = vmatpush1.bf16.msra.mxu0 0
      %5790 = vmatprep.subr.bf16.mxu0 0
      %5791 = vmatpush1.bf16.msra.mxu0 0
      %5792 = vmatprep.subr.bf16.mxu0 0
      %5793 = vmatpush1.bf16.msra.mxu0 0
      %5794 = vmatprep.subr.bf16.mxu0 0
      %5795 = vmatpush1.bf16.msra.mxu0 0
      %5796 = vmatprep.subr.bf16.mxu0 0
      %5797 = vmatpush1.bf16.msra.mxu0 0
      %5798 = vmatprep.subr.bf16.mxu0 0
      %5799 = vmatpush1.bf16.msra.mxu0 0
      %5800 = vmatprep.subr.bf16.mxu0 0
      %5801 = vmatpush1.bf16.msra.mxu0 0
      %5802 = vmatprep.mubr.bf16.mxu0 0
      %5803 = vmatmul.mubr.bf16.gmra.mrb[0].mxu0 %v5768
      %v5804 = vpop.f32.mrb[0].mxu0
      %v5805 = vadd.f32 %v5742, %v5804
      %v5806 = vpop.f32.mrb[0].mxu0
      %v5807 = vpop.f32.mrb[0].mxu0
      %v5808 = vpop.f32.mrb[0].mxu0
      %5809 = vdwg.mxu0
      %v5810 = vadd.f32 %v5674, %v5805
      %v5811 = vsel %vm1090, %v5810, 0.0
      %5812 = vadd.xlane.f32.xlu0 %v5811
      %v5813 = vpop.xlane.xlu0 %5812
      %v5814 = vmul.f32 %v5813, %v1094
      %v5815 = vsub.f32 %v5810, %v5814
      %v5816 = vmul.f32 %v5815, %v5815
      %v5817 = vsel %vm1090, %v5816, 0.0
      %5818 = vadd.xlane.f32.xlu0 %v5817
      %v5819 = vpop.xlane.xlu0 %5818
      %v5820 = vmul.f32 %v5819, %v1094
      %v5821 = vadd.f32 %v5820, 1e-05
      %v5822 = vrsqrt.pop %v5821
      %v5823 = vmul.f32 %v5815, %v5822
      %v5824 = vlaneseq
      %v5825 = vshrl.u32 %v5824, 7
      %v5826 = vsub.s32 7, %v5825
      %v5827 = vrot.slane %v1085, %v5826
      %v5828 = vmul.f32 %v5823, %v5827
      %v5829 = vlaneseq
      %v5830 = vshrl.u32 %v5829, 7
      %v5831 = vsub.s32 0, %v5830
      %v5832 = vrot.slane %v1086, %v5831
      %v5833 = vadd.f32 %v5828, %v5832
      %v5834 = vld [vmem:[%s49] sm:$0xf]
      %v5835 = vld [vmem:[%s49 + $0x4] sm:$0xf]
      %v5836 = vld [vmem:[%s49 + $0x8] sm:$0xf]
      %v5837 = vld [vmem:[%s49 + $0xc] sm:$0xf]
      %v5838 = vld [vmem:[%s47] sm:$0xf]
      %v5839 = vld [vmem:[%s47 + $0x4] sm:$0xf]
      %v5840 = vld [vmem:[%s47 + $0x8] sm:$0xf]
      %v5841 = vld [vmem:[%s47 + $0xc] sm:$0xf]
      %v5842 = vld [vmem:[%s41] sm:$0xf]
      %v5843 = vld [vmem:[%s41 + $0x4] sm:$0xf]
      %v5844 = vld [vmem:[%s41 + $0x8] sm:$0xf]
      %v5845 = vld [vmem:[%s41 + $0xc] sm:$0xf]
      %v5846 = vld [vmem:[%s37] sm:$0xf]
      %v5847 = vld [vmem:[%s37 + $0x4] sm:$0xf]
      %v5848 = vld [vmem:[%s37 + $0x8] sm:$0xf]
      %v5849 = vld [vmem:[%s37 + $0xc] sm:$0xf]
      %v5850 = vld [vmem:[%s39] sm:$0xf]
      %v5851 = vld [vmem:[%s39 + $0x4] sm:$0xf]
      %v5852 = vld [vmem:[%s39 + $0x8] sm:$0xf]
      %v5853 = vld [vmem:[%s39 + $0xc] sm:$0xf]
      %v5854 = vld [vmem:[%s43] sm:$0xf]
      %v5855 = vld [vmem:[%s43 + $0x4] sm:$0xf]
      %v5856 = vld [vmem:[%s43 + $0x8] sm:$0xf]
      %v5857 = vld [vmem:[%s43 + $0xc] sm:$0xf]
      %v5858 = vld [vmem:[%s45] sm:$0xf]
      %v5859 = vld [vmem:[%s45 + $0x4] sm:$0xf]
      %v5860 = vld [vmem:[%s45 + $0x8] sm:$0xf]
      %v5861 = vld [vmem:[%s45 + $0xc] sm:$0xf]
      %v5862 = vld [vmem:[%s45 + $0x10] sm:$0xf]
      %v5863 = vld [vmem:[%s45 + $0x14] sm:$0xf]
      %v5864 = vld [vmem:[%s45 + $0x18] sm:$0xf]
      %v5865 = vld [vmem:[%s45 + $0x1c] sm:$0xf]
      %v5866 = vpack.c.bf16 %v5833, %v5833
      %v5867 = vlaneseq
      %v5868 = vshrl.u32 %v5867, 7
      %v5869 = vsub.s32 1, %v5868
      %v5870 = vrot.slane %v1086, %v5869
      %v5875 = vunpack.c.l.b16 %v5834
      %v5876 = vunpack.c.l.b16 %v5835
      %v5877 = vunpack.c.l.b16 %v5836
      %v5878 = vunpack.c.l.b16 %v5837
      %v5879 = vpack.c.b16 %v5876, %v5875
      %v5880 = vpack.c.b16 %v5878, %v5877
      %v5884 = vsel %vm1090, %v5866, 0
      %5886 = vmatprep.subr.bf16.mxu0 0
      %5887 = vmatpush1.bf16.msra.mxu0 %v5879
      %5888 = vmatprep.subr.bf16.mxu0 0
      %5889 = vmatpush1.bf16.msra.mxu0 %v5880
      %5890 = vmatprep.subr.bf16.mxu0 0
      %5891 = vmatpush1.bf16.msra.mxu0 0
      %5892 = vmatprep.subr.bf16.mxu0 0
      %5893 = vmatpush1.bf16.msra.mxu0 0
      %5894 = vmatprep.subr.bf16.mxu0 0
      %5895 = vmatpush1.bf16.msra.mxu0 0
      %5896 = vmatprep.subr.bf16.mxu0 0
      %5897 = vmatpush1.bf16.msra.mxu0 0
      %5898 = vmatprep.subr.bf16.mxu0 0
      %5899 = vmatpush1.bf16.msra.mxu0 0
      %5900 = vmatprep.subr.bf16.mxu0 0
      %5901 = vmatpush1.bf16.msra.mxu0 0
      %5902 = vmatprep.subr.bf16.mxu0 0
      %5903 = vmatpush1.bf16.msra.mxu0 0
      %5904 = vmatprep.subr.bf16.mxu0 0
      %5905 = vmatpush1.bf16.msra.mxu0 0
      %5906 = vmatprep.subr.bf16.mxu0 0
      %5907 = vmatpush1.bf16.msra.mxu0 0
      %5908 = vmatprep.subr.bf16.mxu0 0
      %5909 = vmatpush1.bf16.msra.mxu0 0
      %5910 = vmatprep.subr.bf16.mxu0 0
      %5911 = vmatpush1.bf16.msra.mxu0 0
      %5912 = vmatprep.subr.bf16.mxu0 0
      %5913 = vmatpush1.bf16.msra.mxu0 0
      %5914 = vmatprep.subr.bf16.mxu0 0
      %5915 = vmatpush1.bf16.msra.mxu0 0
      %5916 = vmatprep.subr.bf16.mxu0 0
      %5917 = vmatpush1.bf16.msra.mxu0 0
      %5918 = vmatprep.mubr.bf16.mxu0 0
      %5919 = vmatmul.mubr.bf16.gmra.mrb[0].mxu0 %v5884
      %v5920 = vpop.f32.mrb[0].mxu0
      %v5921 = vadd.f32 %v5870, %v5920
      %v5922 = vpop.f32.mrb[0].mxu0
      %v5923 = vpop.f32.mrb[0].mxu0
      %v5924 = vpop.f32.mrb[0].mxu0
      %5925 = vdwg.mxu0
      %5927 = vrot.lane.b32.xlu0 %v5921, 96
      %v5928 = vpop.permute.xlu0 %5927
      %v5929 = vsel %vm1122, %v5921, 0
      %v5931 = vsel %vm1122, %v5928, 0
      %5933 = vmatprep.subr.mxu0 0.0
      %5934 = vmatpush1.xpose.msra.mxu0 %v5931
      %5935 = vmatprep.subr.mxu0 0.0
      %5936 = vmatpush1.xpose.msra.mxu0 0.0
      %5937 = vmatprep.subr.mxu0 0.0
      %5938 = vmatpush1.xpose.msra.mxu0 0.0
      %5939 = vmatprep.subr.mxu0 0.0
      %5940 = vmatpush1.xpose.msra.mxu0 0.0
      %5941 = vmatprep.subr.mxu0 0.0
      %5942 = vmatpush1.xpose.msra.mxu0 0.0
      %5943 = vmatprep.subr.mxu0 0.0
      %5944 = vmatpush1.xpose.msra.mxu0 0.0
      %5945 = vmatprep.subr.mxu0 0.0
      %5946 = vmatpush1.xpose.msra.mxu0 0.0
      %5947 = vmatprep.subr.mxu0 0.0
      %5948 = vmatpush1.xpose.msra.mxu0 0.0
      %5949 = vmatprep.subr.mxu0 0.0
      %5950 = vmatpush1.xpose.msra.mxu0 0.0
      %5951 = vmatprep.subr.mxu0 0.0
      %5952 = vmatpush1.xpose.msra.mxu0 0.0
      %5953 = vmatprep.subr.mxu0 0.0
      %5954 = vmatpush1.xpose.msra.mxu0 0.0
      %5955 = vmatprep.subr.mxu0 0.0
      %5956 = vmatpush1.xpose.msra.mxu0 0.0
      %5957 = vmatprep.subr.mxu0 0.0
      %5958 = vmatpush1.xpose.msra.mxu0 0.0
      %5959 = vmatprep.subr.mxu0 0.0
      %5960 = vmatpush1.xpose.msra.mxu0 0.0
      %5961 = vmatprep.subr.mxu0 0.0
      %5962 = vmatpush1.xpose.msra.mxu0 0.0
      %5963 = vmatprep.subr.mxu0 0.0
      %5964 = vmatpush1.xpose.msra.mxu0 0.0
      %5965 = vmatprep.subr.mxu0 0.0
      %5966 = vmatpush1.xpose.msra.mxu0 0.0
      %5967 = vmatprep.subr.mxu0 0.0
      %5968 = vmatpush1.xpose.msra.mxu0 0.0
      %5969 = vmatprep.subr.mxu0 0.0
      %5970 = vmatpush1.xpose.msra.mxu0 0.0
      %5971 = vmatprep.subr.mxu0 0.0
      %5972 = vmatpush1.xpose.msra.mxu0 0.0
      %5973 = vmatprep.subr.mxu0 0.0
      %5974 = vmatpush1.xpose.msra.mxu0 0.0
      %5975 = vmatprep.subr.mxu0 0.0
      %5976 = vmatpush1.xpose.msra.mxu0 0.0
      %5977 = vmatprep.subr.mxu0 0.0
      %5978 = vmatpush1.xpose.msra.mxu0 0.0
      %5979 = vmatprep.subr.mxu0 0.0
      %5980 = vmatpush1.xpose.msra.mxu0 0.0
      %5981 = vmatprep.subr.mxu0 0.0
      %5982 = vmatpush1.xpose.msra.mxu0 0.0
      %5983 = vmatprep.subr.mxu0 0.0
      %5984 = vmatpush1.xpose.msra.mxu0 0.0
      %5985 = vmatprep.subr.mxu0 0.0
      %5986 = vmatpush1.xpose.msra.mxu0 0.0
      %5987 = vmatprep.subr.mxu0 0.0
      %5988 = vmatpush1.xpose.msra.mxu0 0.0
      %5989 = vmatprep.subr.mxu0 0.0
      %5990 = vmatpush1.xpose.msra.mxu0 0.0
      %5991 = vmatprep.subr.mxu0 0.0
      %5992 = vmatpush1.xpose.msra.mxu0 0.0
      %5993 = vmatprep.subr.mxu0 0.0
      %5994 = vmatpush1.xpose.msra.mxu0 0.0
      %5995 = vmatprep.subr.mxu0 0.0
      %5996 = vmatpush1.xpose.msra.mxu0 0.0
      %5997 = vmatprep.mubr.f32.mxu0 0.0
      %5998 = vmatmul.mubr.f32.gmra.mrb[0].mxu0 %v5929
      %v5999 = vpop.f32.mrb[0].mxu0
      %v6000 = vadd.f32 0.0, %v5999
      %v6001 = vpop.f32.mrb[0].mxu0
      %6002 = vdwg.mxu0
      %v6003 = vsel %vm1122, %v6000, -inf
      %6004 = vmax.xlane.f32.xlu0 %v6003
      %v6005 = vpop.xlane.xlu0 %6004
      %v6006 = vsub.f32 %v6000, %v6005
      %v6007 = vmul.f32 %v6006, 1.442695
      %v6008 = vpow.pop %v6007
      %v6009 = vsel %vm1122, %v6008, 0.0
      %6010 = vadd.xlane.f32.xlu0 %v6009
      %v6011 = vpop.xlane.xlu0 %6010
      %v6012 = vrcp.pop %v6011
      %v6013 = vmul.f32 %v6008, %v6012
      %6014 = vrot.lane.b32.xlu0 %v5921, 64
      %v6015 = vpop.permute.xlu0 %6014
      %v6018 = vsel %vm1122, %v6013, 0
      %6020 = vmatprep.subr.mxu0 0.0
      %6021 = vmatpush1.msra.mxu0 %v6015
      %6022 = vmatprep.subr.mxu0 0.0
      %6023 = vmatpush1.msra.mxu0 0.0
      %6024 = vmatprep.subr.mxu0 0.0
      %6025 = vmatpush1.msra.mxu0 0.0
      %6026 = vmatprep.subr.mxu0 0.0
      %6027 = vmatpush1.msra.mxu0 0.0
      %6028 = vmatprep.subr.mxu0 0.0
      %6029 = vmatpush1.msra.mxu0 0.0
      %6030 = vmatprep.subr.mxu0 0.0
      %6031 = vmatpush1.msra.mxu0 0.0
      %6032 = vmatprep.subr.mxu0 0.0
      %6033 = vmatpush1.msra.mxu0 0.0
      %6034 = vmatprep.subr.mxu0 0.0
      %6035 = vmatpush1.msra.mxu0 0.0
      %6036 = vmatprep.subr.mxu0 0.0
      %6037 = vmatpush1.msra.mxu0 0.0
      %6038 = vmatprep.subr.mxu0 0.0
      %6039 = vmatpush1.msra.mxu0 0.0
      %6040 = vmatprep.subr.mxu0 0.0
      %6041 = vmatpush1.msra.mxu0 0.0
      %6042 = vmatprep.subr.mxu0 0.0
      %6043 = vmatpush1.msra.mxu0 0.0
      %6044 = vmatprep.subr.mxu0 0.0
      %6045 = vmatpush1.msra.mxu0 0.0
      %6046 = vmatprep.subr.mxu0 0.0
      %6047 = vmatpush1.msra.mxu0 0.0
      %6048 = vmatprep.subr.mxu0 0.0
      %6049 = vmatpush1.msra.mxu0 0.0
      %6050 = vmatprep.subr.mxu0 0.0
      %6051 = vmatpush1.msra.mxu0 0.0
      %6052 = vmatprep.subr.mxu0 0.0
      %6053 = vmatpush1.msra.mxu0 0.0
      %6054 = vmatprep.subr.mxu0 0.0
      %6055 = vmatpush1.msra.mxu0 0.0
      %6056 = vmatprep.subr.mxu0 0.0
      %6057 = vmatpush1.msra.mxu0 0.0
      %6058 = vmatprep.subr.mxu0 0.0
      %6059 = vmatpush1.msra.mxu0 0.0
      %6060 = vmatprep.subr.mxu0 0.0
      %6061 = vmatpush1.msra.mxu0 0.0
      %6062 = vmatprep.subr.mxu0 0.0
      %6063 = vmatpush1.msra.mxu0 0.0
      %6064 = vmatprep.subr.mxu0 0.0
      %6065 = vmatpush1.msra.mxu0 0.0
      %6066 = vmatprep.subr.mxu0 0.0
      %6067 = vmatpush1.msra.mxu0 0.0
      %6068 = vmatprep.subr.mxu0 0.0
      %6069 = vmatpush1.msra.mxu0 0.0
      %6070 = vmatprep.subr.mxu0 0.0
      %6071 = vmatpush1.msra.mxu0 0.0
      %6072 = vmatprep.subr.mxu0 0.0
      %6073 = vmatpush1.msra.mxu0 0.0
      %6074 = vmatprep.subr.mxu0 0.0
      %6075 = vmatpush1.msra.mxu0 0.0
      %6076 = vmatprep.subr.mxu0 0.0
      %6077 = vmatpush1.msra.mxu0 0.0
      %6078 = vmatprep.subr.mxu0 0.0
      %6079 = vmatpush1.msra.mxu0 0.0
      %6080 = vmatprep.subr.mxu0 0.0
      %6081 = vmatpush1.msra.mxu0 0.0
      %6082 = vmatprep.subr.mxu0 0.0
      %6083 = vmatpush1.msra.mxu0 0.0
      %6084 = vmatprep.mubr.f32.mxu0 0.0
      %6085 = vmatmul.mubr.f32.gmra.mrb[0].mxu0 %v6018
      %v6086 = vpop.f32.mrb[0].mxu0
      %v6087 = vadd.f32 0.0, %v6086
      %v6088 = vpop.f32.mrb[0].mxu0
      %6089 = vdwg.mxu0
      %6090 = vrot.lane.b32.xlu0 %v5921, 120
      %v6091 = vpop.permute.xlu0 %6090
      %6092 = vrot.lane.b32.xlu0 %v5921, 88
      %v6093 = vpop.permute.xlu0 %6092
      %v6094 = vsel %vm1122, %v6091, 0
      %v6096 = vsel %vm1122, %v6093, 0
      %6098 = vmatprep.subr.mxu0 0.0
      %6099 = vmatpush1.xpose.msra.mxu0 %v6096
      %6100 = vmatprep.subr.mxu0 0.0
      %6101 = vmatpush1.xpose.msra.mxu0 0.0
      %6102 = vmatprep.subr.mxu0 0.0
      %6103 = vmatpush1.xpose.msra.mxu0 0.0
      %6104 = vmatprep.subr.mxu0 0.0
      %6105 = vmatpush1.xpose.msra.mxu0 0.0
      %6106 = vmatprep.subr.mxu0 0.0
      %6107 = vmatpush1.xpose.msra.mxu0 0.0
      %6108 = vmatprep.subr.mxu0 0.0
      %6109 = vmatpush1.xpose.msra.mxu0 0.0
      %6110 = vmatprep.subr.mxu0 0.0
      %6111 = vmatpush1.xpose.msra.mxu0 0.0
      %6112 = vmatprep.subr.mxu0 0.0
      %6113 = vmatpush1.xpose.msra.mxu0 0.0
      %6114 = vmatprep.subr.mxu0 0.0
      %6115 = vmatpush1.xpose.msra.mxu0 0.0
      %6116 = vmatprep.subr.mxu0 0.0
      %6117 = vmatpush1.xpose.msra.mxu0 0.0
      %6118 = vmatprep.subr.mxu0 0.0
      %6119 = vmatpush1.xpose.msra.mxu0 0.0
      %6120 = vmatprep.subr.mxu0 0.0
      %6121 = vmatpush1.xpose.msra.mxu0 0.0
      %6122 = vmatprep.subr.mxu0 0.0
      %6123 = vmatpush1.xpose.msra.mxu0 0.0
      %6124 = vmatprep.subr.mxu0 0.0
      %6125 = vmatpush1.xpose.msra.mxu0 0.0
      %6126 = vmatprep.subr.mxu0 0.0
      %6127 = vmatpush1.xpose.msra.mxu0 0.0
      %6128 = vmatprep.subr.mxu0 0.0
      %6129 = vmatpush1.xpose.msra.mxu0 0.0
      %6130 = vmatprep.subr.mxu0 0.0
      %6131 = vmatpush1.xpose.msra.mxu0 0.0
      %6132 = vmatprep.subr.mxu0 0.0
      %6133 = vmatpush1.xpose.msra.mxu0 0.0
      %6134 = vmatprep.subr.mxu0 0.0
      %6135 = vmatpush1.xpose.msra.mxu0 0.0
      %6136 = vmatprep.subr.mxu0 0.0
      %6137 = vmatpush1.xpose.msra.mxu0 0.0
      %6138 = vmatprep.subr.mxu0 0.0
      %6139 = vmatpush1.xpose.msra.mxu0 0.0
      %6140 = vmatprep.subr.mxu0 0.0
      %6141 = vmatpush1.xpose.msra.mxu0 0.0
      %6142 = vmatprep.subr.mxu0 0.0
      %6143 = vmatpush1.xpose.msra.mxu0 0.0
      %6144 = vmatprep.subr.mxu0 0.0
      %6145 = vmatpush1.xpose.msra.mxu0 0.0
      %6146 = vmatprep.subr.mxu0 0.0
      %6147 = vmatpush1.xpose.msra.mxu0 0.0
      %6148 = vmatprep.subr.mxu0 0.0
      %6149 = vmatpush1.xpose.msra.mxu0 0.0
      %6150 = vmatprep.subr.mxu0 0.0
      %6151 = vmatpush1.xpose.msra.mxu0 0.0
      %6152 = vmatprep.subr.mxu0 0.0
      %6153 = vmatpush1.xpose.msra.mxu0 0.0
      %6154 = vmatprep.subr.mxu0 0.0
      %6155 = vmatpush1.xpose.msra.mxu0 0.0
      %6156 = vmatprep.subr.mxu0 0.0
      %6157 = vmatpush1.xpose.msra.mxu0 0.0
      %6158 = vmatprep.subr.mxu0 0.0
      %6159 = vmatpush1.xpose.msra.mxu0 0.0
      %6160 = vmatprep.subr.mxu0 0.0
      %6161 = vmatpush1.xpose.msra.mxu0 0.0
      %6162 = vmatprep.mubr.f32.mxu0 0.0
      %6163 = vmatmul.mubr.f32.gmra.mrb[0].mxu0 %v6094
      %v6164 = vpop.f32.mrb[0].mxu0
      %v6165 = vadd.f32 0.0, %v6164
      %v6166 = vpop.f32.mrb[0].mxu0
      %6167 = vdwg.mxu0
      %v6168 = vsel %vm1122, %v6165, -inf
      %6169 = vmax.xlane.f32.xlu0 %v6168
      %v6170 = vpop.xlane.xlu0 %6169
      %v6171 = vsub.f32 %v6165, %v6170
      %v6172 = vmul.f32 %v6171, 1.442695
      %v6173 = vpow.pop %v6172
      %v6174 = vsel %vm1122, %v6173, 0.0
      %6175 = vadd.xlane.f32.xlu0 %v6174
      %v6176 = vpop.xlane.xlu0 %6175
      %v6177 = vrcp.pop %v6176
      %v6178 = vmul.f32 %v6173, %v6177
      %6179 = vrot.lane.b32.xlu0 %v5921, 56
      %v6180 = vpop.permute.xlu0 %6179
      %v6183 = vsel %vm1122, %v6178, 0
      %6185 = vmatprep.subr.mxu0 0.0
      %6186 = vmatpush1.msra.mxu0 %v6180
      %6187 = vmatprep.subr.mxu0 0.0
      %6188 = vmatpush1.msra.mxu0 0.0
      %6189 = vmatprep.subr.mxu0 0.0
      %6190 = vmatpush1.msra.mxu0 0.0
      %6191 = vmatprep.subr.mxu0 0.0
      %6192 = vmatpush1.msra.mxu0 0.0
      %6193 = vmatprep.subr.mxu0 0.0
      %6194 = vmatpush1.msra.mxu0 0.0
      %6195 = vmatprep.subr.mxu0 0.0
      %6196 = vmatpush1.msra.mxu0 0.0
      %6197 = vmatprep.subr.mxu0 0.0
      %6198 = vmatpush1.msra.mxu0 0.0
      %6199 = vmatprep.subr.mxu0 0.0
      %6200 = vmatpush1.msra.mxu0 0.0
      %6201 = vmatprep.subr.mxu0 0.0
      %6202 = vmatpush1.msra.mxu0 0.0
      %6203 = vmatprep.subr.mxu0 0.0
      %6204 = vmatpush1.msra.mxu0 0.0
      %6205 = vmatprep.subr.mxu0 0.0
      %6206 = vmatpush1.msra.mxu0 0.0
      %6207 = vmatprep.subr.mxu0 0.0
      %6208 = vmatpush1.msra.mxu0 0.0
      %6209 = vmatprep.subr.mxu0 0.0
      %6210 = vmatpush1.msra.mxu0 0.0
      %6211 = vmatprep.subr.mxu0 0.0
      %6212 = vmatpush1.msra.mxu0 0.0
      %6213 = vmatprep.subr.mxu0 0.0
      %6214 = vmatpush1.msra.mxu0 0.0
      %6215 = vmatprep.subr.mxu0 0.0
      %6216 = vmatpush1.msra.mxu0 0.0
      %6217 = vmatprep.subr.mxu0 0.0
      %6218 = vmatpush1.msra.mxu0 0.0
      %6219 = vmatprep.subr.mxu0 0.0
      %6220 = vmatpush1.msra.mxu0 0.0
      %6221 = vmatprep.subr.mxu0 0.0
      %6222 = vmatpush1.msra.mxu0 0.0
      %6223 = vmatprep.subr.mxu0 0.0
      %6224 = vmatpush1.msra.mxu0 0.0
      %6225 = vmatprep.subr.mxu0 0.0
      %6226 = vmatpush1.msra.mxu0 0.0
      %6227 = vmatprep.subr.mxu0 0.0
      %6228 = vmatpush1.msra.mxu0 0.0
      %6229 = vmatprep.subr.mxu0 0.0
      %6230 = vmatpush1.msra.mxu0 0.0
      %6231 = vmatprep.subr.mxu0 0.0
      %6232 = vmatpush1.msra.mxu0 0.0
      %6233 = vmatprep.subr.mxu0 0.0
      %6234 = vmatpush1.msra.mxu0 0.0
      %6235 = vmatprep.subr.mxu0 0.0
      %6236 = vmatpush1.msra.mxu0 0.0
      %6237 = vmatprep.subr.mxu0 0.0
      %6238 = vmatpush1.msra.mxu0 0.0
      %6239 = vmatprep.subr.mxu0 0.0
      %6240 = vmatpush1.msra.mxu0 0.0
      %6241 = vmatprep.subr.mxu0 0.0
      %6242 = vmatpush1.msra.mxu0 0.0
      %6243 = vmatprep.subr.mxu0 0.0
      %6244 = vmatpush1.msra.mxu0 0.0
      %6245 = vmatprep.subr.mxu0 0.0
      %6246 = vmatpush1.msra.mxu0 0.0
      %6247 = vmatprep.subr.mxu0 0.0
      %6248 = vmatpush1.msra.mxu0 0.0
      %6249 = vmatprep.mubr.f32.mxu0 0.0
      %6250 = vmatmul.mubr.f32.gmra.mrb[0].mxu0 %v6183
      %v6251 = vpop.f32.mrb[0].mxu0
      %v6252 = vadd.f32 0.0, %v6251
      %v6253 = vpop.f32.mrb[0].mxu0
      %6254 = vdwg.mxu0
      %6255 = vrot.lane.b32.xlu0 %v5921, 112
      %v6256 = vpop.permute.xlu0 %6255
      %6257 = vrot.lane.b32.xlu0 %v5921, 80
      %v6258 = vpop.permute.xlu0 %6257
      %v6259 = vsel %vm1122, %v6256, 0
      %v6261 = vsel %vm1122, %v6258, 0
      %6263 = vmatprep.subr.mxu0 0.0
      %6264 = vmatpush1.xpose.msra.mxu0 %v6261
      %6265 = vmatprep.subr.mxu0 0.0
      %6266 = vmatpush1.xpose.msra.mxu0 0.0
      %6267 = vmatprep.subr.mxu0 0.0
      %6268 = vmatpush1.xpose.msra.mxu0 0.0
      %6269 = vmatprep.subr.mxu0 0.0
      %6270 = vmatpush1.xpose.msra.mxu0 0.0
      %6271 = vmatprep.subr.mxu0 0.0
      %6272 = vmatpush1.xpose.msra.mxu0 0.0
      %6273 = vmatprep.subr.mxu0 0.0
      %6274 = vmatpush1.xpose.msra.mxu0 0.0
      %6275 = vmatprep.subr.mxu0 0.0
      %6276 = vmatpush1.xpose.msra.mxu0 0.0
      %6277 = vmatprep.subr.mxu0 0.0
      %6278 = vmatpush1.xpose.msra.mxu0 0.0
      %6279 = vmatprep.subr.mxu0 0.0
      %6280 = vmatpush1.xpose.msra.mxu0 0.0
      %6281 = vmatprep.subr.mxu0 0.0
      %6282 = vmatpush1.xpose.msra.mxu0 0.0
      %6283 = vmatprep.subr.mxu0 0.0
      %6284 = vmatpush1.xpose.msra.mxu0 0.0
      %6285 = vmatprep.subr.mxu0 0.0
      %6286 = vmatpush1.xpose.msra.mxu0 0.0
      %6287 = vmatprep.subr.mxu0 0.0
      %6288 = vmatpush1.xpose.msra.mxu0 0.0
      %6289 = vmatprep.subr.mxu0 0.0
      %6290 = vmatpush1.xpose.msra.mxu0 0.0
      %6291 = vmatprep.subr.mxu0 0.0
      %6292 = vmatpush1.xpose.msra.mxu0 0.0
      %6293 = vmatprep.subr.mxu0 0.0
      %6294 = vmatpush1.xpose.msra.mxu0 0.0
      %6295 = vmatprep.subr.mxu0 0.0
      %6296 = vmatpush1.xpose.msra.mxu0 0.0
      %6297 = vmatprep.subr.mxu0 0.0
      %6298 = vmatpush1.xpose.msra.mxu0 0.0
      %6299 = vmatprep.subr.mxu0 0.0
      %6300 = vmatpush1.xpose.msra.mxu0 0.0
      %6301 = vmatprep.subr.mxu0 0.0
      %6302 = vmatpush1.xpose.msra.mxu0 0.0
      %6303 = vmatprep.subr.mxu0 0.0
      %6304 = vmatpush1.xpose.msra.mxu0 0.0
      %6305 = vmatprep.subr.mxu0 0.0
      %6306 = vmatpush1.xpose.msra.mxu0 0.0
      %6307 = vmatprep.subr.mxu0 0.0
      %6308 = vmatpush1.xpose.msra.mxu0 0.0
      %6309 = vmatprep.subr.mxu0 0.0
      %6310 = vmatpush1.xpose.msra.mxu0 0.0
      %6311 = vmatprep.subr.mxu0 0.0
      %6312 = vmatpush1.xpose.msra.mxu0 0.0
      %6313 = vmatprep.subr.mxu0 0.0
      %6314 = vmatpush1.xpose.msra.mxu0 0.0
      %6315 = vmatprep.subr.mxu0 0.0
      %6316 = vmatpush1.xpose.msra.mxu0 0.0
      %6317 = vmatprep.subr.mxu0 0.0
      %6318 = vmatpush1.xpose.msra.mxu0 0.0
      %6319 = vmatprep.subr.mxu0 0.0
      %6320 = vmatpush1.xpose.msra.mxu0 0.0
      %6321 = vmatprep.subr.mxu0 0.0
      %6322 = vmatpush1.xpose.msra.mxu0 0.0
      %6323 = vmatprep.subr.mxu0 0.0
      %6324 = vmatpush1.xpose.msra.mxu0 0.0
      %6325 = vmatprep.subr.mxu0 0.0
      %6326 = vmatpush1.xpose.msra.mxu0 0.0
      %6327 = vmatprep.mubr.f32.mxu0 0.0
      %6328 = vmatmul.mubr.f32.gmra.mrb[0].mxu0 %v6259
      %v6329 = vpop.f32.mrb[0].mxu0
      %v6330 = vadd.f32 0.0, %v6329
      %v6331 = vpop.f32.mrb[0].mxu0
      %6332 = vdwg.mxu0
      %v6333 = vsel %vm1122, %v6330, -inf
      %6334 = vmax.xlane.f32.xlu0 %v6333
      %v6335 = vpop.xlane.xlu0 %6334
      %v6336 = vsub.f32 %v6330, %v6335
      %v6337 = vmul.f32 %v6336, 1.442695
      %v6338 = vpow.pop %v6337
      %v6339 = vsel %vm1122, %v6338, 0.0
      %6340 = vadd.xlane.f32.xlu0 %v6339
      %v6341 = vpop.xlane.xlu0 %6340
      %v6342 = vrcp.pop %v6341
      %v6343 = vmul.f32 %v6338, %v6342
      %6344 = vrot.lane.b32.xlu0 %v5921, 48
      %v6345 = vpop.permute.xlu0 %6344
      %v6348 = vsel %vm1122, %v6343, 0
      %6350 = vmatprep.subr.mxu0 0.0
      %6351 = vmatpush1.msra.mxu0 %v6345
      %6352 = vmatprep.subr.mxu0 0.0
      %6353 = vmatpush1.msra.mxu0 0.0
      %6354 = vmatprep.subr.mxu0 0.0
      %6355 = vmatpush1.msra.mxu0 0.0
      %6356 = vmatprep.subr.mxu0 0.0
      %6357 = vmatpush1.msra.mxu0 0.0
      %6358 = vmatprep.subr.mxu0 0.0
      %6359 = vmatpush1.msra.mxu0 0.0
      %6360 = vmatprep.subr.mxu0 0.0
      %6361 = vmatpush1.msra.mxu0 0.0
      %6362 = vmatprep.subr.mxu0 0.0
      %6363 = vmatpush1.msra.mxu0 0.0
      %6364 = vmatprep.subr.mxu0 0.0
      %6365 = vmatpush1.msra.mxu0 0.0
      %6366 = vmatprep.subr.mxu0 0.0
      %6367 = vmatpush1.msra.mxu0 0.0
      %6368 = vmatprep.subr.mxu0 0.0
      %6369 = vmatpush1.msra.mxu0 0.0
      %6370 = vmatprep.subr.mxu0 0.0
      %6371 = vmatpush1.msra.mxu0 0.0
      %6372 = vmatprep.subr.mxu0 0.0
      %6373 = vmatpush1.msra.mxu0 0.0
      %6374 = vmatprep.subr.mxu0 0.0
      %6375 = vmatpush1.msra.mxu0 0.0
      %6376 = vmatprep.subr.mxu0 0.0
      %6377 = vmatpush1.msra.mxu0 0.0
      %6378 = vmatprep.subr.mxu0 0.0
      %6379 = vmatpush1.msra.mxu0 0.0
      %6380 = vmatprep.subr.mxu0 0.0
      %6381 = vmatpush1.msra.mxu0 0.0
      %6382 = vmatprep.subr.mxu0 0.0
      %6383 = vmatpush1.msra.mxu0 0.0
      %6384 = vmatprep.subr.mxu0 0.0
      %6385 = vmatpush1.msra.mxu0 0.0
      %6386 = vmatprep.subr.mxu0 0.0
      %6387 = vmatpush1.msra.mxu0 0.0
      %6388 = vmatprep.subr.mxu0 0.0
      %6389 = vmatpush1.msra.mxu0 0.0
      %6390 = vmatprep.subr.mxu0 0.0
      %6391 = vmatpush1.msra.mxu0 0.0
      %6392 = vmatprep.subr.mxu0 0.0
      %6393 = vmatpush1.msra.mxu0 0.0
      %6394 = vmatprep.subr.mxu0 0.0
      %6395 = vmatpush1.msra.mxu0 0.0
      %6396 = vmatprep.subr.mxu0 0.0
      %6397 = vmatpush1.msra.mxu0 0.0
      %6398 = vmatprep.subr.mxu0 0.0
      %6399 = vmatpush1.msra.mxu0 0.0
      %6400 = vmatprep.subr.mxu0 0.0
      %6401 = vmatpush1.msra.mxu0 0.0
      %6402 = vmatprep.subr.mxu0 0.0
      %6403 = vmatpush1.msra.mxu0 0.0
      %6404 = vmatprep.subr.mxu0 0.0
      %6405 = vmatpush1.msra.mxu0 0.0
      %6406 = vmatprep.subr.mxu0 0.0
      %6407 = vmatpush1.msra.mxu0 0.0
      %6408 = vmatprep.subr.mxu0 0.0
      %6409 = vmatpush1.msra.mxu0 0.0
      %6410 = vmatprep.subr.mxu0 0.0
      %6411 = vmatpush1.msra.mxu0 0.0
      %6412 = vmatprep.subr.mxu0 0.0
      %6413 = vmatpush1.msra.mxu0 0.0
      %6414 = vmatprep.mubr.f32.mxu0 0.0
      %6415 = vmatmul.mubr.f32.gmra.mrb[0].mxu0 %v6348
      %v6416 = vpop.f32.mrb[0].mxu0
      %v6417 = vadd.f32 0.0, %v6416
      %v6418 = vpop.f32.mrb[0].mxu0
      %6419 = vdwg.mxu0
      %6420 = vrot.lane.b32.xlu0 %v5921, 104
      %v6421 = vpop.permute.xlu0 %6420
      %6422 = vrot.lane.b32.xlu0 %v5921, 72
      %v6423 = vpop.permute.xlu0 %6422
      %v6424 = vsel %vm1122, %v6421, 0
      %v6426 = vsel %vm1122, %v6423, 0
      %6428 = vmatprep.subr.mxu0 0.0
      %6429 = vmatpush1.xpose.msra.mxu0 %v6426
      %6430 = vmatprep.subr.mxu0 0.0
      %6431 = vmatpush1.xpose.msra.mxu0 0.0
      %6432 = vmatprep.subr.mxu0 0.0
      %6433 = vmatpush1.xpose.msra.mxu0 0.0
      %6434 = vmatprep.subr.mxu0 0.0
      %6435 = vmatpush1.xpose.msra.mxu0 0.0
      %6436 = vmatprep.subr.mxu0 0.0
      %6437 = vmatpush1.xpose.msra.mxu0 0.0
      %6438 = vmatprep.subr.mxu0 0.0
      %6439 = vmatpush1.xpose.msra.mxu0 0.0
      %6440 = vmatprep.subr.mxu0 0.0
      %6441 = vmatpush1.xpose.msra.mxu0 0.0
      %6442 = vmatprep.subr.mxu0 0.0
      %6443 = vmatpush1.xpose.msra.mxu0 0.0
      %6444 = vmatprep.subr.mxu0 0.0
      %6445 = vmatpush1.xpose.msra.mxu0 0.0
      %6446 = vmatprep.subr.mxu0 0.0
      %6447 = vmatpush1.xpose.msra.mxu0 0.0
      %6448 = vmatprep.subr.mxu0 0.0
      %6449 = vmatpush1.xpose.msra.mxu0 0.0
      %6450 = vmatprep.subr.mxu0 0.0
      %6451 = vmatpush1.xpose.msra.mxu0 0.0
      %6452 = vmatprep.subr.mxu0 0.0
      %6453 = vmatpush1.xpose.msra.mxu0 0.0
      %6454 = vmatprep.subr.mxu0 0.0
      %6455 = vmatpush1.xpose.msra.mxu0 0.0
      %6456 = vmatprep.subr.mxu0 0.0
      %6457 = vmatpush1.xpose.msra.mxu0 0.0
      %6458 = vmatprep.subr.mxu0 0.0
      %6459 = vmatpush1.xpose.msra.mxu0 0.0
      %6460 = vmatprep.subr.mxu0 0.0
      %6461 = vmatpush1.xpose.msra.mxu0 0.0
      %6462 = vmatprep.subr.mxu0 0.0
      %6463 = vmatpush1.xpose.msra.mxu0 0.0
      %6464 = vmatprep.subr.mxu0 0.0
      %6465 = vmatpush1.xpose.msra.mxu0 0.0
      %6466 = vmatprep.subr.mxu0 0.0
      %6467 = vmatpush1.xpose.msra.mxu0 0.0
      %6468 = vmatprep.subr.mxu0 0.0
      %6469 = vmatpush1.xpose.msra.mxu0 0.0
      %6470 = vmatprep.subr.mxu0 0.0
      %6471 = vmatpush1.xpose.msra.mxu0 0.0
      %6472 = vmatprep.subr.mxu0 0.0
      %6473 = vmatpush1.xpose.msra.mxu0 0.0
      %6474 = vmatprep.subr.mxu0 0.0
      %6475 = vmatpush1.xpose.msra.mxu0 0.0
      %6476 = vmatprep.subr.mxu0 0.0
      %6477 = vmatpush1.xpose.msra.mxu0 0.0
      %6478 = vmatprep.subr.mxu0 0.0
      %6479 = vmatpush1.xpose.msra.mxu0 0.0
      %6480 = vmatprep.subr.mxu0 0.0
      %6481 = vmatpush1.xpose.msra.mxu0 0.0
      %6482 = vmatprep.subr.mxu0 0.0
      %6483 = vmatpush1.xpose.msra.mxu0 0.0
      %6484 = vmatprep.subr.mxu0 0.0
      %6485 = vmatpush1.xpose.msra.mxu0 0.0
      %6486 = vmatprep.subr.mxu0 0.0
      %6487 = vmatpush1.xpose.msra.mxu0 0.0
      %6488 = vmatprep.subr.mxu0 0.0
      %6489 = vmatpush1.xpose.msra.mxu0 0.0
      %6490 = vmatprep.subr.mxu0 0.0
      %6491 = vmatpush1.xpose.msra.mxu0 0.0
      %6492 = vmatprep.mubr.f32.mxu0 0.0
      %6493 = vmatmul.mubr.f32.gmra.mrb[0].mxu0 %v6424
      %v6494 = vpop.f32.mrb[0].mxu0
      %v6495 = vadd.f32 0.0, %v6494
      %v6496 = vpop.f32.mrb[0].mxu0
      %6497 = vdwg.mxu0
      %v6498 = vsel %vm1122, %v6495, -inf
      %6499 = vmax.xlane.f32.xlu0 %v6498
      %v6500 = vpop.xlane.xlu0 %6499
      %v6501 = vsub.f32 %v6495, %v6500
      %v6502 = vmul.f32 %v6501, 1.442695
      %v6503 = vpow.pop %v6502
      %v6504 = vsel %vm1122, %v6503, 0.0
      %6505 = vadd.xlane.f32.xlu0 %v6504
      %v6506 = vpop.xlane.xlu0 %6505
      %v6507 = vrcp.pop %v6506
      %v6508 = vmul.f32 %v6503, %v6507
      %6509 = vrot.lane.b32.xlu0 %v5921, 40
      %v6510 = vpop.permute.xlu0 %6509
      %v6513 = vsel %vm1122, %v6508, 0
      %6515 = vmatprep.subr.mxu0 0.0
      %6516 = vmatpush1.msra.mxu0 %v6510
      %6517 = vmatprep.subr.mxu0 0.0
      %6518 = vmatpush1.msra.mxu0 0.0
      %6519 = vmatprep.subr.mxu0 0.0
      %6520 = vmatpush1.msra.mxu0 0.0
      %6521 = vmatprep.subr.mxu0 0.0
      %6522 = vmatpush1.msra.mxu0 0.0
      %6523 = vmatprep.subr.mxu0 0.0
      %6524 = vmatpush1.msra.mxu0 0.0
      %6525 = vmatprep.subr.mxu0 0.0
      %6526 = vmatpush1.msra.mxu0 0.0
      %6527 = vmatprep.subr.mxu0 0.0
      %6528 = vmatpush1.msra.mxu0 0.0
      %6529 = vmatprep.subr.mxu0 0.0
      %6530 = vmatpush1.msra.mxu0 0.0
      %6531 = vmatprep.subr.mxu0 0.0
      %6532 = vmatpush1.msra.mxu0 0.0
      %6533 = vmatprep.subr.mxu0 0.0
      %6534 = vmatpush1.msra.mxu0 0.0
      %6535 = vmatprep.subr.mxu0 0.0
      %6536 = vmatpush1.msra.mxu0 0.0
      %6537 = vmatprep.subr.mxu0 0.0
      %6538 = vmatpush1.msra.mxu0 0.0
      %6539 = vmatprep.subr.mxu0 0.0
      %6540 = vmatpush1.msra.mxu0 0.0
      %6541 = vmatprep.subr.mxu0 0.0
      %6542 = vmatpush1.msra.mxu0 0.0
      %6543 = vmatprep.subr.mxu0 0.0
      %6544 = vmatpush1.msra.mxu0 0.0
      %6545 = vmatprep.subr.mxu0 0.0
      %6546 = vmatpush1.msra.mxu0 0.0
      %6547 = vmatprep.subr.mxu0 0.0
      %6548 = vmatpush1.msra.mxu0 0.0
      %6549 = vmatprep.subr.mxu0 0.0
      %6550 = vmatpush1.msra.mxu0 0.0
      %6551 = vmatprep.subr.mxu0 0.0
      %6552 = vmatpush1.msra.mxu0 0.0
      %6553 = vmatprep.subr.mxu0 0.0
      %6554 = vmatpush1.msra.mxu0 0.0
      %6555 = vmatprep.subr.mxu0 0.0
      %6556 = vmatpush1.msra.mxu0 0.0
      %6557 = vmatprep.subr.mxu0 0.0
      %6558 = vmatpush1.msra.mxu0 0.0
      %6559 = vmatprep.subr.mxu0 0.0
      %6560 = vmatpush1.msra.mxu0 0.0
      %6561 = vmatprep.subr.mxu0 0.0
      %6562 = vmatpush1.msra.mxu0 0.0
      %6563 = vmatprep.subr.mxu0 0.0
      %6564 = vmatpush1.msra.mxu0 0.0
      %6565 = vmatprep.subr.mxu0 0.0
      %6566 = vmatpush1.msra.mxu0 0.0
      %6567 = vmatprep.subr.mxu0 0.0
      %6568 = vmatpush1.msra.mxu0 0.0
      %6569 = vmatprep.subr.mxu0 0.0
      %6570 = vmatpush1.msra.mxu0 0.0
      %6571 = vmatprep.subr.mxu0 0.0
      %6572 = vmatpush1.msra.mxu0 0.0
      %6573 = vmatprep.subr.mxu0 0.0
      %6574 = vmatpush1.msra.mxu0 0.0
      %6575 = vmatprep.subr.mxu0 0.0
      %6576 = vmatpush1.msra.mxu0 0.0
      %6577 = vmatprep.subr.mxu0 0.0
      %6578 = vmatpush1.msra.mxu0 0.0
      %6579 = vmatprep.mubr.f32.mxu0 0.0
      %6580 = vmatmul.mubr.f32.gmra.mrb[0].mxu0 %v6513
      %v6581 = vpop.f32.mrb[0].mxu0
      %v6582 = vadd.f32 0.0, %v6581
      %v6583 = vpop.f32.mrb[0].mxu0
      %6584 = vdwg.mxu0
      %6586 = vrot.lane.b32.xlu0 %v6252, 8
      %v6587 = vpop.permute.xlu0 %6586
      %6590 = vrot.lane.b32.xlu0 %v6417, 16
      %v6591 = vpop.permute.xlu0 %6590
      %6594 = vrot.lane.b32.xlu0 %v6582, 24
      %v6595 = vpop.permute.xlu0 %6594
      %v6597 = vsel %vm1122, %v6087, %v6587
      %v6598 = vsel %vm2428, %v6597, %v6591
      %v6599 = vsel %vm2430, %v6598, %v6595
      %v6600 = vpack.c.bf16 %v6599, %v6599
      %v6601 = vlaneseq
      %v6602 = vshrl.u32 %v6601, 7
      %v6603 = vsub.s32 2, %v6602
      %v6604 = vrot.slane %v1086, %v6603
      %v6609 = vunpack.c.l.b16 %v5838
      %v6610 = vunpack.c.l.b16 %v5839
      %v6611 = vunpack.c.l.b16 %v5840
      %v6612 = vunpack.c.l.b16 %v5841
      %v6613 = vpack.c.b16 %v6610, %v6609
      %v6614 = vpack.c.b16 %v6612, %v6611
      %v6618 = vsel %vm1090, %v6600, 0
      %6620 = vmatprep.subr.bf16.mxu0 0
      %6621 = vmatpush1.bf16.msra.mxu0 %v6613
      %6622 = vmatprep.subr.bf16.mxu0 0
      %6623 = vmatpush1.bf16.msra.mxu0 %v6614
      %6624 = vmatprep.subr.bf16.mxu0 0
      %6625 = vmatpush1.bf16.msra.mxu0 0
      %6626 = vmatprep.subr.bf16.mxu0 0
      %6627 = vmatpush1.bf16.msra.mxu0 0
      %6628 = vmatprep.subr.bf16.mxu0 0
      %6629 = vmatpush1.bf16.msra.mxu0 0
      %6630 = vmatprep.subr.bf16.mxu0 0
      %6631 = vmatpush1.bf16.msra.mxu0 0
      %6632 = vmatprep.subr.bf16.mxu0 0
      %6633 = vmatpush1.bf16.msra.mxu0 0
      %6634 = vmatprep.subr.bf16.mxu0 0
      %6635 = vmatpush1.bf16.msra.mxu0 0
      %6636 = vmatprep.subr.bf16.mxu0 0
      %6637 = vmatpush1.bf16.msra.mxu0 0
      %6638 = vmatprep.subr.bf16.mxu0 0
      %6639 = vmatpush1.bf16.msra.mxu0 0
      %6640 = vmatprep.subr.bf16.mxu0 0
      %6641 = vmatpush1.bf16.msra.mxu0 0
      %6642 = vmatprep.subr.bf16.mxu0 0
      %6643 = vmatpush1.bf16.msra.mxu0 0
      %6644 = vmatprep.subr.bf16.mxu0 0
      %6645 = vmatpush1.bf16.msra.mxu0 0
      %6646 = vmatprep.subr.bf16.mxu0 0
      %6647 = vmatpush1.bf16.msra.mxu0 0
      %6648 = vmatprep.subr.bf16.mxu0 0
      %6649 = vmatpush1.bf16.msra.mxu0 0
      %6650 = vmatprep.subr.bf16.mxu0 0
      %6651 = vmatpush1.bf16.msra.mxu0 0
      %6652 = vmatprep.mubr.bf16.mxu0 0
      %6653 = vmatmul.mubr.bf16.gmra.mrb[0].mxu0 %v6618
      %v6654 = vpop.f32.mrb[0].mxu0
      %v6655 = vadd.f32 %v6604, %v6654
      %v6656 = vpop.f32.mrb[0].mxu0
      %v6657 = vpop.f32.mrb[0].mxu0
      %v6658 = vpop.f32.mrb[0].mxu0
      %6659 = vdwg.mxu0
      %v6660 = vadd.f32 %v5833, %v6655
      %v6661 = vsel %vm1090, %v6660, 0.0
      %6662 = vadd.xlane.f32.xlu0 %v6661
      %v6663 = vpop.xlane.xlu0 %6662
      %v6664 = vmul.f32 %v6663, %v1094
      %v6665 = vsub.f32 %v6660, %v6664
      %v6666 = vmul.f32 %v6665, %v6665
      %v6667 = vsel %vm1090, %v6666, 0.0
      %6668 = vadd.xlane.f32.xlu0 %v6667
      %v6669 = vpop.xlane.xlu0 %6668
      %v6670 = vmul.f32 %v6669, %v1094
      %v6671 = vadd.f32 %v6670, 1e-05
      %v6672 = vrsqrt.pop %v6671
      %v6673 = vmul.f32 %v6665, %v6672
      %v6674 = vlaneseq
      %v6675 = vshrl.u32 %v6674, 7
      %v6676 = vsub.s32 0, %v6675
      %v6677 = vrot.slane %v1087, %v6676
      %v6678 = vmul.f32 %v6673, %v6677
      %v6679 = vlaneseq
      %v6680 = vshrl.u32 %v6679, 7
      %v6681 = vsub.s32 1, %v6680
      %v6682 = vrot.slane %v1087, %v6681
      %v6683 = vadd.f32 %v6678, %v6682
      %v6684 = vpack.c.bf16 %v6683, %v6683
      %v6685 = vlaneseq
      %v6686 = vshrl.u32 %v6685, 7
      %v6687 = vsub.s32 3, %v6686
      %v6688 = vrot.slane %v1086, %v6687
      %v6693 = vunpack.c.l.b16 %v5842
      %v6694 = vunpack.c.l.b16 %v5843
      %v6695 = vunpack.c.l.b16 %v5844
      %v6696 = vunpack.c.l.b16 %v5845
      %v6697 = vpack.c.b16 %v6694, %v6693
      %v6698 = vpack.c.b16 %v6696, %v6695
      %v6702 = vsel %vm1090, %v6684, 0
      %6704 = vmatprep.subr.bf16.mxu0 0
      %6705 = vmatpush1.bf16.msra.mxu0 %v6697
      %6706 = vmatprep.subr.bf16.mxu0 0
      %6707 = vmatpush1.bf16.msra.mxu0 %v6698
      %6708 = vmatprep.subr.bf16.mxu0 0
      %6709 = vmatpush1.bf16.msra.mxu0 0
      %6710 = vmatprep.subr.bf16.mxu0 0
      %6711 = vmatpush1.bf16.msra.mxu0 0
      %6712 = vmatprep.subr.bf16.mxu0 0
      %6713 = vmatpush1.bf16.msra.mxu0 0
      %6714 = vmatprep.subr.bf16.mxu0 0
      %6715 = vmatpush1.bf16.msra.mxu0 0
      %6716 = vmatprep.subr.bf16.mxu0 0
      %6717 = vmatpush1.bf16.msra.mxu0 0
      %6718 = vmatprep.subr.bf16.mxu0 0
      %6719 = vmatpush1.bf16.msra.mxu0 0
      %6720 = vmatprep.subr.bf16.mxu0 0
      %6721 = vmatpush1.bf16.msra.mxu0 0
      %6722 = vmatprep.subr.bf16.mxu0 0
      %6723 = vmatpush1.bf16.msra.mxu0 0
      %6724 = vmatprep.subr.bf16.mxu0 0
      %6725 = vmatpush1.bf16.msra.mxu0 0
      %6726 = vmatprep.subr.bf16.mxu0 0
      %6727 = vmatpush1.bf16.msra.mxu0 0
      %6728 = vmatprep.subr.bf16.mxu0 0
      %6729 = vmatpush1.bf16.msra.mxu0 0
      %6730 = vmatprep.subr.bf16.mxu0 0
      %6731 = vmatpush1.bf16.msra.mxu0 0
      %6732 = vmatprep.subr.bf16.mxu0 0
      %6733 = vmatpush1.bf16.msra.mxu0 0
      %6734 = vmatprep.subr.bf16.mxu0 0
      %6735 = vmatpush1.bf16.msra.mxu0 0
      %6736 = vmatprep.mubr.bf16.mxu0 0
      %6737 = vmatmul.mubr.bf16.gmra.mrb[0].mxu0 %v6702
      %v6738 = vpop.f32.mrb[0].mxu0
      %v6739 = vadd.f32 %v6688, %v6738
      %v6740 = vpop.f32.mrb[0].mxu0
      %v6741 = vpop.f32.mrb[0].mxu0
      %v6742 = vpop.f32.mrb[0].mxu0
      %6743 = vdwg.mxu0
      %v6744 = vlaneseq
      %v6745 = vshrl.u32 %v6744, 7
      %v6746 = vsub.s32 4, %v6745
      %v6747 = vrot.slane %v1086, %v6746
      %v6752 = vunpack.c.l.b16 %v5846
      %v6753 = vunpack.c.l.b16 %v5847
      %v6754 = vunpack.c.l.b16 %v5848
      %v6755 = vunpack.c.l.b16 %v5849
      %v6756 = vpack.c.b16 %v6753, %v6752
      %v6757 = vpack.c.b16 %v6755, %v6754
      %6760 = vmatprep.subr.bf16.mxu0 0
      %6761 = vmatpush1.bf16.msra.mxu0 %v6756
      %6762 = vmatprep.subr.bf16.mxu0 0
      %6763 = vmatpush1.bf16.msra.mxu0 %v6757
      %6764 = vmatprep.subr.bf16.mxu0 0
      %6765 = vmatpush1.bf16.msra.mxu0 0
      %6766 = vmatprep.subr.bf16.mxu0 0
      %6767 = vmatpush1.bf16.msra.mxu0 0
      %6768 = vmatprep.subr.bf16.mxu0 0
      %6769 = vmatpush1.bf16.msra.mxu0 0
      %6770 = vmatprep.subr.bf16.mxu0 0
      %6771 = vmatpush1.bf16.msra.mxu0 0
      %6772 = vmatprep.subr.bf16.mxu0 0
      %6773 = vmatpush1.bf16.msra.mxu0 0
      %6774 = vmatprep.subr.bf16.mxu0 0
      %6775 = vmatpush1.bf16.msra.mxu0 0
      %6776 = vmatprep.subr.bf16.mxu0 0
      %6777 = vmatpush1.bf16.msra.mxu0 0
      %6778 = vmatprep.subr.bf16.mxu0 0
      %6779 = vmatpush1.bf16.msra.mxu0 0
      %6780 = vmatprep.subr.bf16.mxu0 0
      %6781 = vmatpush1.bf16.msra.mxu0 0
      %6782 = vmatprep.subr.bf16.mxu0 0
      %6783 = vmatpush1.bf16.msra.mxu0 0
      %6784 = vmatprep.subr.bf16.mxu0 0
      %6785 = vmatpush1.bf16.msra.mxu0 0
      %6786 = vmatprep.subr.bf16.mxu0 0
      %6787 = vmatpush1.bf16.msra.mxu0 0
      %6788 = vmatprep.subr.bf16.mxu0 0
      %6789 = vmatpush1.bf16.msra.mxu0 0
      %6790 = vmatprep.subr.bf16.mxu0 0
      %6791 = vmatpush1.bf16.msra.mxu0 0
      %6792 = vmatprep.mubr.bf16.mxu0 0
      %6793 = vmatmul.mubr.bf16.gmra.mrb[0].mxu0 %v4870
      %v6794 = vpop.f32.mrb[0].mxu0
      %v6795 = vadd.f32 %v6747, %v6794
      %v6796 = vpop.f32.mrb[0].mxu0
      %v6797 = vpop.f32.mrb[0].mxu0
      %v6798 = vpop.f32.mrb[0].mxu0
      %6799 = vdwg.mxu0
      %v6801 = vsel %vm1122, %v6739, 0
      %v6804 = vsel %vm1122, %v6795, 0
      %6806 = vmatprep.subr.mxu0 0.0
      %6807 = vmatpush1.xpose.msra.mxu0 %v6804
      %6808 = vmatprep.subr.mxu0 0.0
      %6809 = vmatpush1.xpose.msra.mxu0 0.0
      %6810 = vmatprep.subr.mxu0 0.0
      %6811 = vmatpush1.xpose.msra.mxu0 0.0
      %6812 = vmatprep.subr.mxu0 0.0
      %6813 = vmatpush1.xpose.msra.mxu0 0.0
      %6814 = vmatprep.subr.mxu0 0.0
      %6815 = vmatpush1.xpose.msra.mxu0 0.0
      %6816 = vmatprep.subr.mxu0 0.0
      %6817 = vmatpush1.xpose.msra.mxu0 0.0
      %6818 = vmatprep.subr.mxu0 0.0
      %6819 = vmatpush1.xpose.msra.mxu0 0.0
      %6820 = vmatprep.subr.mxu0 0.0
      %6821 = vmatpush1.xpose.msra.mxu0 0.0
      %6822 = vmatprep.subr.mxu0 0.0
      %6823 = vmatpush1.xpose.msra.mxu0 0.0
      %6824 = vmatprep.subr.mxu0 0.0
      %6825 = vmatpush1.xpose.msra.mxu0 0.0
      %6826 = vmatprep.subr.mxu0 0.0
      %6827 = vmatpush1.xpose.msra.mxu0 0.0
      %6828 = vmatprep.subr.mxu0 0.0
      %6829 = vmatpush1.xpose.msra.mxu0 0.0
      %6830 = vmatprep.subr.mxu0 0.0
      %6831 = vmatpush1.xpose.msra.mxu0 0.0
      %6832 = vmatprep.subr.mxu0 0.0
      %6833 = vmatpush1.xpose.msra.mxu0 0.0
      %6834 = vmatprep.subr.mxu0 0.0
      %6835 = vmatpush1.xpose.msra.mxu0 0.0
      %6836 = vmatprep.subr.mxu0 0.0
      %6837 = vmatpush1.xpose.msra.mxu0 0.0
      %6838 = vmatprep.subr.mxu0 0.0
      %6839 = vmatpush1.xpose.msra.mxu0 0.0
      %6840 = vmatprep.subr.mxu0 0.0
      %6841 = vmatpush1.xpose.msra.mxu0 0.0
      %6842 = vmatprep.subr.mxu0 0.0
      %6843 = vmatpush1.xpose.msra.mxu0 0.0
      %6844 = vmatprep.subr.mxu0 0.0
      %6845 = vmatpush1.xpose.msra.mxu0 0.0
      %6846 = vmatprep.subr.mxu0 0.0
      %6847 = vmatpush1.xpose.msra.mxu0 0.0
      %6848 = vmatprep.subr.mxu0 0.0
      %6849 = vmatpush1.xpose.msra.mxu0 0.0
      %6850 = vmatprep.subr.mxu0 0.0
      %6851 = vmatpush1.xpose.msra.mxu0 0.0
      %6852 = vmatprep.subr.mxu0 0.0
      %6853 = vmatpush1.xpose.msra.mxu0 0.0
      %6854 = vmatprep.subr.mxu0 0.0
      %6855 = vmatpush1.xpose.msra.mxu0 0.0
      %6856 = vmatprep.subr.mxu0 0.0
      %6857 = vmatpush1.xpose.msra.mxu0 0.0
      %6858 = vmatprep.subr.mxu0 0.0
      %6859 = vmatpush1.xpose.msra.mxu0 0.0
      %6860 = vmatprep.subr.mxu0 0.0
      %6861 = vmatpush1.xpose.msra.mxu0 0.0
      %6862 = vmatprep.subr.mxu0 0.0
      %6863 = vmatpush1.xpose.msra.mxu0 0.0
      %6864 = vmatprep.subr.mxu0 0.0
      %6865 = vmatpush1.xpose.msra.mxu0 0.0
      %6866 = vmatprep.subr.mxu0 0.0
      %6867 = vmatpush1.xpose.msra.mxu0 0.0
      %6868 = vmatprep.subr.mxu0 0.0
      %6869 = vmatpush1.xpose.msra.mxu0 0.0
      %6870 = vmatprep.mubr.f32.mxu0 0.0
      %6871 = vmatmul.mubr.f32.gmra.mrb[0].mxu0 %v6801
      %v6872 = vpop.f32.mrb[0].mxu0
      %v6873 = vadd.f32 %v4916, %v6872
      %v6874 = vpop.f32.mrb[0].mxu0
      %6875 = vdwg.mxu0
      %v6876 = vsel %vm1122, %v6873, -inf
      %6877 = vmax.xlane.f32.xlu0 %v6876
      %v6878 = vpop.xlane.xlu0 %6877
      %v6879 = vsub.f32 %v6873, %v6878
      %v6880 = vmul.f32 %v6879, 1.442695
      %v6881 = vpow.pop %v6880
      %v6882 = vsel %vm1122, %v6881, 0.0
      %6883 = vadd.xlane.f32.xlu0 %v6882
      %v6884 = vpop.xlane.xlu0 %6883
      %v6885 = vrcp.pop %v6884
      %v6886 = vmul.f32 %v6881, %v6885
      %6887 = vrot.lane.b32.xlu0 %v6795, 96
      %v6888 = vpop.permute.xlu0 %6887
      %v6891 = vsel %vm1122, %v6886, 0
      %6893 = vmatprep.subr.mxu0 0.0
      %6894 = vmatpush1.msra.mxu0 %v6888
      %6895 = vmatprep.subr.mxu0 0.0
      %6896 = vmatpush1.msra.mxu0 0.0
      %6897 = vmatprep.subr.mxu0 0.0
      %6898 = vmatpush1.msra.mxu0 0.0
      %6899 = vmatprep.subr.mxu0 0.0
      %6900 = vmatpush1.msra.mxu0 0.0
      %6901 = vmatprep.subr.mxu0 0.0
      %6902 = vmatpush1.msra.mxu0 0.0
      %6903 = vmatprep.subr.mxu0 0.0
      %6904 = vmatpush1.msra.mxu0 0.0
      %6905 = vmatprep.subr.mxu0 0.0
      %6906 = vmatpush1.msra.mxu0 0.0
      %6907 = vmatprep.subr.mxu0 0.0
      %6908 = vmatpush1.msra.mxu0 0.0
      %6909 = vmatprep.subr.mxu0 0.0
      %6910 = vmatpush1.msra.mxu0 0.0
      %6911 = vmatprep.subr.mxu0 0.0
      %6912 = vmatpush1.msra.mxu0 0.0
      %6913 = vmatprep.subr.mxu0 0.0
      %6914 = vmatpush1.msra.mxu0 0.0
      %6915 = vmatprep.subr.mxu0 0.0
      %6916 = vmatpush1.msra.mxu0 0.0
      %6917 = vmatprep.subr.mxu0 0.0
      %6918 = vmatpush1.msra.mxu0 0.0
      %6919 = vmatprep.subr.mxu0 0.0
      %6920 = vmatpush1.msra.mxu0 0.0
      %6921 = vmatprep.subr.mxu0 0.0
      %6922 = vmatpush1.msra.mxu0 0.0
      %6923 = vmatprep.subr.mxu0 0.0
      %6924 = vmatpush1.msra.mxu0 0.0
      %6925 = vmatprep.subr.mxu0 0.0
      %6926 = vmatpush1.msra.mxu0 0.0
      %6927 = vmatprep.subr.mxu0 0.0
      %6928 = vmatpush1.msra.mxu0 0.0
      %6929 = vmatprep.subr.mxu0 0.0
      %6930 = vmatpush1.msra.mxu0 0.0
      %6931 = vmatprep.subr.mxu0 0.0
      %6932 = vmatpush1.msra.mxu0 0.0
      %6933 = vmatprep.subr.mxu0 0.0
      %6934 = vmatpush1.msra.mxu0 0.0
      %6935 = vmatprep.subr.mxu0 0.0
      %6936 = vmatpush1.msra.mxu0 0.0
      %6937 = vmatprep.subr.mxu0 0.0
      %6938 = vmatpush1.msra.mxu0 0.0
      %6939 = vmatprep.subr.mxu0 0.0
      %6940 = vmatpush1.msra.mxu0 0.0
      %6941 = vmatprep.subr.mxu0 0.0
      %6942 = vmatpush1.msra.mxu0 0.0
      %6943 = vmatprep.subr.mxu0 0.0
      %6944 = vmatpush1.msra.mxu0 0.0
      %6945 = vmatprep.subr.mxu0 0.0
      %6946 = vmatpush1.msra.mxu0 0.0
      %6947 = vmatprep.subr.mxu0 0.0
      %6948 = vmatpush1.msra.mxu0 0.0
      %6949 = vmatprep.subr.mxu0 0.0
      %6950 = vmatpush1.msra.mxu0 0.0
      %6951 = vmatprep.subr.mxu0 0.0
      %6952 = vmatpush1.msra.mxu0 0.0
      %6953 = vmatprep.subr.mxu0 0.0
      %6954 = vmatpush1.msra.mxu0 0.0
      %6955 = vmatprep.subr.mxu0 0.0
      %6956 = vmatpush1.msra.mxu0 0.0
      %6957 = vmatprep.mubr.f32.mxu0 0.0
      %6958 = vmatmul.mubr.f32.gmra.mrb[0].mxu0 %v6891
      %v6959 = vpop.f32.mrb[0].mxu0
      %v6960 = vadd.f32 0.0, %v6959
      %v6961 = vpop.f32.mrb[0].mxu0
      %6962 = vdwg.mxu0
      %6963 = vrot.lane.b32.xlu0 %v6739, 120
      %v6964 = vpop.permute.xlu0 %6963
      %6965 = vrot.lane.b32.xlu0 %v6795, 120
      %v6966 = vpop.permute.xlu0 %6965
      %v6967 = vsel %vm1122, %v6964, 0
      %v6969 = vsel %vm1122, %v6966, 0
      %6971 = vmatprep.subr.mxu0 0.0
      %6972 = vmatpush1.xpose.msra.mxu0 %v6969
      %6973 = vmatprep.subr.mxu0 0.0
      %6974 = vmatpush1.xpose.msra.mxu0 0.0
      %6975 = vmatprep.subr.mxu0 0.0
      %6976 = vmatpush1.xpose.msra.mxu0 0.0
      %6977 = vmatprep.subr.mxu0 0.0
      %6978 = vmatpush1.xpose.msra.mxu0 0.0
      %6979 = vmatprep.subr.mxu0 0.0
      %6980 = vmatpush1.xpose.msra.mxu0 0.0
      %6981 = vmatprep.subr.mxu0 0.0
      %6982 = vmatpush1.xpose.msra.mxu0 0.0
      %6983 = vmatprep.subr.mxu0 0.0
      %6984 = vmatpush1.xpose.msra.mxu0 0.0
      %6985 = vmatprep.subr.mxu0 0.0
      %6986 = vmatpush1.xpose.msra.mxu0 0.0
      %6987 = vmatprep.subr.mxu0 0.0
      %6988 = vmatpush1.xpose.msra.mxu0 0.0
      %6989 = vmatprep.subr.mxu0 0.0
      %6990 = vmatpush1.xpose.msra.mxu0 0.0
      %6991 = vmatprep.subr.mxu0 0.0
      %6992 = vmatpush1.xpose.msra.mxu0 0.0
      %6993 = vmatprep.subr.mxu0 0.0
      %6994 = vmatpush1.xpose.msra.mxu0 0.0
      %6995 = vmatprep.subr.mxu0 0.0
      %6996 = vmatpush1.xpose.msra.mxu0 0.0
      %6997 = vmatprep.subr.mxu0 0.0
      %6998 = vmatpush1.xpose.msra.mxu0 0.0
      %6999 = vmatprep.subr.mxu0 0.0
      %7000 = vmatpush1.xpose.msra.mxu0 0.0
      %7001 = vmatprep.subr.mxu0 0.0
      %7002 = vmatpush1.xpose.msra.mxu0 0.0
      %7003 = vmatprep.subr.mxu0 0.0
      %7004 = vmatpush1.xpose.msra.mxu0 0.0
      %7005 = vmatprep.subr.mxu0 0.0
      %7006 = vmatpush1.xpose.msra.mxu0 0.0
      %7007 = vmatprep.subr.mxu0 0.0
      %7008 = vmatpush1.xpose.msra.mxu0 0.0
      %7009 = vmatprep.subr.mxu0 0.0
      %7010 = vmatpush1.xpose.msra.mxu0 0.0
      %7011 = vmatprep.subr.mxu0 0.0
      %7012 = vmatpush1.xpose.msra.mxu0 0.0
      %7013 = vmatprep.subr.mxu0 0.0
      %7014 = vmatpush1.xpose.msra.mxu0 0.0
      %7015 = vmatprep.subr.mxu0 0.0
      %7016 = vmatpush1.xpose.msra.mxu0 0.0
      %7017 = vmatprep.subr.mxu0 0.0
      %7018 = vmatpush1.xpose.msra.mxu0 0.0
      %7019 = vmatprep.subr.mxu0 0.0
      %7020 = vmatpush1.xpose.msra.mxu0 0.0
      %7021 = vmatprep.subr.mxu0 0.0
      %7022 = vmatpush1.xpose.msra.mxu0 0.0
      %7023 = vmatprep.subr.mxu0 0.0
      %7024 = vmatpush1.xpose.msra.mxu0 0.0
      %7025 = vmatprep.subr.mxu0 0.0
      %7026 = vmatpush1.xpose.msra.mxu0 0.0
      %7027 = vmatprep.subr.mxu0 0.0
      %7028 = vmatpush1.xpose.msra.mxu0 0.0
      %7029 = vmatprep.subr.mxu0 0.0
      %7030 = vmatpush1.xpose.msra.mxu0 0.0
      %7031 = vmatprep.subr.mxu0 0.0
      %7032 = vmatpush1.xpose.msra.mxu0 0.0
      %7033 = vmatprep.subr.mxu0 0.0
      %7034 = vmatpush1.xpose.msra.mxu0 0.0
      %7035 = vmatprep.mubr.f32.mxu0 0.0
      %7036 = vmatmul.mubr.f32.gmra.mrb[0].mxu0 %v6967
      %v7037 = vpop.f32.mrb[0].mxu0
      %v7038 = vadd.f32 %v4916, %v7037
      %v7039 = vpop.f32.mrb[0].mxu0
      %7040 = vdwg.mxu0
      %v7041 = vsel %vm1122, %v7038, -inf
      %7042 = vmax.xlane.f32.xlu0 %v7041
      %v7043 = vpop.xlane.xlu0 %7042
      %v7044 = vsub.f32 %v7038, %v7043
      %v7045 = vmul.f32 %v7044, 1.442695
      %v7046 = vpow.pop %v7045
      %v7047 = vsel %vm1122, %v7046, 0.0
      %7048 = vadd.xlane.f32.xlu0 %v7047
      %v7049 = vpop.xlane.xlu0 %7048
      %v7050 = vrcp.pop %v7049
      %v7051 = vmul.f32 %v7046, %v7050
      %7052 = vrot.lane.b32.xlu0 %v6795, 88
      %v7053 = vpop.permute.xlu0 %7052
      %v7056 = vsel %vm1122, %v7051, 0
      %7058 = vmatprep.subr.mxu0 0.0
      %7059 = vmatpush1.msra.mxu0 %v7053
      %7060 = vmatprep.subr.mxu0 0.0
      %7061 = vmatpush1.msra.mxu0 0.0
      %7062 = vmatprep.subr.mxu0 0.0
      %7063 = vmatpush1.msra.mxu0 0.0
      %7064 = vmatprep.subr.mxu0 0.0
      %7065 = vmatpush1.msra.mxu0 0.0
      %7066 = vmatprep.subr.mxu0 0.0
      %7067 = vmatpush1.msra.mxu0 0.0
      %7068 = vmatprep.subr.mxu0 0.0
      %7069 = vmatpush1.msra.mxu0 0.0
      %7070 = vmatprep.subr.mxu0 0.0
      %7071 = vmatpush1.msra.mxu0 0.0
      %7072 = vmatprep.subr.mxu0 0.0
      %7073 = vmatpush1.msra.mxu0 0.0
      %7074 = vmatprep.subr.mxu0 0.0
      %7075 = vmatpush1.msra.mxu0 0.0
      %7076 = vmatprep.subr.mxu0 0.0
      %7077 = vmatpush1.msra.mxu0 0.0
      %7078 = vmatprep.subr.mxu0 0.0
      %7079 = vmatpush1.msra.mxu0 0.0
      %7080 = vmatprep.subr.mxu0 0.0
      %7081 = vmatpush1.msra.mxu0 0.0
      %7082 = vmatprep.subr.mxu0 0.0
      %7083 = vmatpush1.msra.mxu0 0.0
      %7084 = vmatprep.subr.mxu0 0.0
      %7085 = vmatpush1.msra.mxu0 0.0
      %7086 = vmatprep.subr.mxu0 0.0
      %7087 = vmatpush1.msra.mxu0 0.0
      %7088 = vmatprep.subr.mxu0 0.0
      %7089 = vmatpush1.msra.mxu0 0.0
      %7090 = vmatprep.subr.mxu0 0.0
      %7091 = vmatpush1.msra.mxu0 0.0
      %7092 = vmatprep.subr.mxu0 0.0
      %7093 = vmatpush1.msra.mxu0 0.0
      %7094 = vmatprep.subr.mxu0 0.0
      %7095 = vmatpush1.msra.mxu0 0.0
      %7096 = vmatprep.subr.mxu0 0.0
      %7097 = vmatpush1.msra.mxu0 0.0
      %7098 = vmatprep.subr.mxu0 0.0
      %7099 = vmatpush1.msra.mxu0 0.0
      %7100 = vmatprep.subr.mxu0 0.0
      %7101 = vmatpush1.msra.mxu0 0.0
      %7102 = vmatprep.subr.mxu0 0.0
      %7103 = vmatpush1.msra.mxu0 0.0
      %7104 = vmatprep.subr.mxu0 0.0
      %7105 = vmatpush1.msra.mxu0 0.0
      %7106 = vmatprep.subr.mxu0 0.0
      %7107 = vmatpush1.msra.mxu0 0.0
      %7108 = vmatprep.subr.mxu0 0.0
      %7109 = vmatpush1.msra.mxu0 0.0
      %7110 = vmatprep.subr.mxu0 0.0
      %7111 = vmatpush1.msra.mxu0 0.0
      %7112 = vmatprep.subr.mxu0 0.0
      %7113 = vmatpush1.msra.mxu0 0.0
      %7114 = vmatprep.subr.mxu0 0.0
      %7115 = vmatpush1.msra.mxu0 0.0
      %7116 = vmatprep.subr.mxu0 0.0
      %7117 = vmatpush1.msra.mxu0 0.0
      %7118 = vmatprep.subr.mxu0 0.0
      %7119 = vmatpush1.msra.mxu0 0.0
      %7120 = vmatprep.subr.mxu0 0.0
      %7121 = vmatpush1.msra.mxu0 0.0
      %7122 = vmatprep.mubr.f32.mxu0 0.0
      %7123 = vmatmul.mubr.f32.gmra.mrb[0].mxu0 %v7056
      %v7124 = vpop.f32.mrb[0].mxu0
      %v7125 = vadd.f32 0.0, %v7124
      %v7126 = vpop.f32.mrb[0].mxu0
      %7127 = vdwg.mxu0
      %v7128 = vadd.f32 %v6886, %v7051
      %7129 = vrot.lane.b32.xlu0 %v6739, 112
      %v7130 = vpop.permute.xlu0 %7129
      %7131 = vrot.lane.b32.xlu0 %v6795, 112
      %v7132 = vpop.permute.xlu0 %7131
      %v7133 = vsel %vm1122, %v7130, 0
      %v7135 = vsel %vm1122, %v7132, 0
      %7137 = vmatprep.subr.mxu0 0.0
      %7138 = vmatpush1.xpose.msra.mxu0 %v7135
      %7139 = vmatprep.subr.mxu0 0.0
      %7140 = vmatpush1.xpose.msra.mxu0 0.0
      %7141 = vmatprep.subr.mxu0 0.0
      %7142 = vmatpush1.xpose.msra.mxu0 0.0
      %7143 = vmatprep.subr.mxu0 0.0
      %7144 = vmatpush1.xpose.msra.mxu0 0.0
      %7145 = vmatprep.subr.mxu0 0.0
      %7146 = vmatpush1.xpose.msra.mxu0 0.0
      %7147 = vmatprep.subr.mxu0 0.0
      %7148 = vmatpush1.xpose.msra.mxu0 0.0
      %7149 = vmatprep.subr.mxu0 0.0
      %7150 = vmatpush1.xpose.msra.mxu0 0.0
      %7151 = vmatprep.subr.mxu0 0.0
      %7152 = vmatpush1.xpose.msra.mxu0 0.0
      %7153 = vmatprep.subr.mxu0 0.0
      %7154 = vmatpush1.xpose.msra.mxu0 0.0
      %7155 = vmatprep.subr.mxu0 0.0
      %7156 = vmatpush1.xpose.msra.mxu0 0.0
      %7157 = vmatprep.subr.mxu0 0.0
      %7158 = vmatpush1.xpose.msra.mxu0 0.0
      %7159 = vmatprep.subr.mxu0 0.0
      %7160 = vmatpush1.xpose.msra.mxu0 0.0
      %7161 = vmatprep.subr.mxu0 0.0
      %7162 = vmatpush1.xpose.msra.mxu0 0.0
      %7163 = vmatprep.subr.mxu0 0.0
      %7164 = vmatpush1.xpose.msra.mxu0 0.0
      %7165 = vmatprep.subr.mxu0 0.0
      %7166 = vmatpush1.xpose.msra.mxu0 0.0
      %7167 = vmatprep.subr.mxu0 0.0
      %7168 = vmatpush1.xpose.msra.mxu0 0.0
      %7169 = vmatprep.subr.mxu0 0.0
      %7170 = vmatpush1.xpose.msra.mxu0 0.0
      %7171 = vmatprep.subr.mxu0 0.0
      %7172 = vmatpush1.xpose.msra.mxu0 0.0
      %7173 = vmatprep.subr.mxu0 0.0
      %7174 = vmatpush1.xpose.msra.mxu0 0.0
      %7175 = vmatprep.subr.mxu0 0.0
      %7176 = vmatpush1.xpose.msra.mxu0 0.0
      %7177 = vmatprep.subr.mxu0 0.0
      %7178 = vmatpush1.xpose.msra.mxu0 0.0
      %7179 = vmatprep.subr.mxu0 0.0
      %7180 = vmatpush1.xpose.msra.mxu0 0.0
      %7181 = vmatprep.subr.mxu0 0.0
      %7182 = vmatpush1.xpose.msra.mxu0 0.0
      %7183 = vmatprep.subr.mxu0 0.0
      %7184 = vmatpush1.xpose.msra.mxu0 0.0
      %7185 = vmatprep.subr.mxu0 0.0
      %7186 = vmatpush1.xpose.msra.mxu0 0.0
      %7187 = vmatprep.subr.mxu0 0.0
      %7188 = vmatpush1.xpose.msra.mxu0 0.0
      %7189 = vmatprep.subr.mxu0 0.0
      %7190 = vmatpush1.xpose.msra.mxu0 0.0
      %7191 = vmatprep.subr.mxu0 0.0
      %7192 = vmatpush1.xpose.msra.mxu0 0.0
      %7193 = vmatprep.subr.mxu0 0.0
      %7194 = vmatpush1.xpose.msra.mxu0 0.0
      %7195 = vmatprep.subr.mxu0 0.0
      %7196 = vmatpush1.xpose.msra.mxu0 0.0
      %7197 = vmatprep.subr.mxu0 0.0
      %7198 = vmatpush1.xpose.msra.mxu0 0.0
      %7199 = vmatprep.subr.mxu0 0.0
      %7200 = vmatpush1.xpose.msra.mxu0 0.0
      %7201 = vmatprep.mubr.f32.mxu0 0.0
      %7202 = vmatmul.mubr.f32.gmra.mrb[0].mxu0 %v7133
      %v7203 = vpop.f32.mrb[0].mxu0
      %v7204 = vadd.f32 %v4916, %v7203
      %v7205 = vpop.f32.mrb[0].mxu0
      %7206 = vdwg.mxu0
      %v7207 = vsel %vm1122, %v7204, -inf
      %7208 = vmax.xlane.f32.xlu0 %v7207
      %v7209 = vpop.xlane.xlu0 %7208
      %v7210 = vsub.f32 %v7204, %v7209
      %v7211 = vmul.f32 %v7210, 1.442695
      %v7212 = vpow.pop %v7211
      %v7213 = vsel %vm1122, %v7212, 0.0
      %7214 = vadd.xlane.f32.xlu0 %v7213
      %v7215 = vpop.xlane.xlu0 %7214
      %v7216 = vrcp.pop %v7215
      %v7217 = vmul.f32 %v7212, %v7216
      %7218 = vrot.lane.b32.xlu0 %v6795, 80
      %v7219 = vpop.permute.xlu0 %7218
      %v7222 = vsel %vm1122, %v7217, 0
      %7224 = vmatprep.subr.mxu0 0.0
      %7225 = vmatpush1.msra.mxu0 %v7219
      %7226 = vmatprep.subr.mxu0 0.0
      %7227 = vmatpush1.msra.mxu0 0.0
      %7228 = vmatprep.subr.mxu0 0.0
      %7229 = vmatpush1.msra.mxu0 0.0
      %7230 = vmatprep.subr.mxu0 0.0
      %7231 = vmatpush1.msra.mxu0 0.0
      %7232 = vmatprep.subr.mxu0 0.0
      %7233 = vmatpush1.msra.mxu0 0.0
      %7234 = vmatprep.subr.mxu0 0.0
      %7235 = vmatpush1.msra.mxu0 0.0
      %7236 = vmatprep.subr.mxu0 0.0
      %7237 = vmatpush1.msra.mxu0 0.0
      %7238 = vmatprep.subr.mxu0 0.0
      %7239 = vmatpush1.msra.mxu0 0.0
      %7240 = vmatprep.subr.mxu0 0.0
      %7241 = vmatpush1.msra.mxu0 0.0
      %7242 = vmatprep.subr.mxu0 0.0
      %7243 = vmatpush1.msra.mxu0 0.0
      %7244 = vmatprep.subr.mxu0 0.0
      %7245 = vmatpush1.msra.mxu0 0.0
      %7246 = vmatprep.subr.mxu0 0.0
      %7247 = vmatpush1.msra.mxu0 0.0
      %7248 = vmatprep.subr.mxu0 0.0
      %7249 = vmatpush1.msra.mxu0 0.0
      %7250 = vmatprep.subr.mxu0 0.0
      %7251 = vmatpush1.msra.mxu0 0.0
      %7252 = vmatprep.subr.mxu0 0.0
      %7253 = vmatpush1.msra.mxu0 0.0
      %7254 = vmatprep.subr.mxu0 0.0
      %7255 = vmatpush1.msra.mxu0 0.0
      %7256 = vmatprep.subr.mxu0 0.0
      %7257 = vmatpush1.msra.mxu0 0.0
      %7258 = vmatprep.subr.mxu0 0.0
      %7259 = vmatpush1.msra.mxu0 0.0
      %7260 = vmatprep.subr.mxu0 0.0
      %7261 = vmatpush1.msra.mxu0 0.0
      %7262 = vmatprep.subr.mxu0 0.0
      %7263 = vmatpush1.msra.mxu0 0.0
      %7264 = vmatprep.subr.mxu0 0.0
      %7265 = vmatpush1.msra.mxu0 0.0
      %7266 = vmatprep.subr.mxu0 0.0
      %7267 = vmatpush1.msra.mxu0 0.0
      %7268 = vmatprep.subr.mxu0 0.0
      %7269 = vmatpush1.msra.mxu0 0.0
      %7270 = vmatprep.subr.mxu0 0.0
      %7271 = vmatpush1.msra.mxu0 0.0
      %7272 = vmatprep.subr.mxu0 0.0
      %7273 = vmatpush1.msra.mxu0 0.0
      %7274 = vmatprep.subr.mxu0 0.0
      %7275 = vmatpush1.msra.mxu0 0.0
      %7276 = vmatprep.subr.mxu0 0.0
      %7277 = vmatpush1.msra.mxu0 0.0
      %7278 = vmatprep.subr.mxu0 0.0
      %7279 = vmatpush1.msra.mxu0 0.0
      %7280 = vmatprep.subr.mxu0 0.0
      %7281 = vmatpush1.msra.mxu0 0.0
      %7282 = vmatprep.subr.mxu0 0.0
      %7283 = vmatpush1.msra.mxu0 0.0
      %7284 = vmatprep.subr.mxu0 0.0
      %7285 = vmatpush1.msra.mxu0 0.0
      %7286 = vmatprep.subr.mxu0 0.0
      %7287 = vmatpush1.msra.mxu0 0.0
      %7288 = vmatprep.mubr.f32.mxu0 0.0
      %7289 = vmatmul.mubr.f32.gmra.mrb[0].mxu0 %v7222
      %v7290 = vpop.f32.mrb[0].mxu0
      %v7291 = vadd.f32 0.0, %v7290
      %v7292 = vpop.f32.mrb[0].mxu0
      %7293 = vdwg.mxu0
      %v7294 = vadd.f32 %v7128, %v7217
      %7295 = vrot.lane.b32.xlu0 %v6739, 104
      %v7296 = vpop.permute.xlu0 %7295
      %7297 = vrot.lane.b32.xlu0 %v6795, 104
      %v7298 = vpop.permute.xlu0 %7297
      %v7299 = vsel %vm1122, %v7296, 0
      %v7301 = vsel %vm1122, %v7298, 0
      %7303 = vmatprep.subr.mxu0 0.0
      %7304 = vmatpush1.xpose.msra.mxu0 %v7301
      %7305 = vmatprep.subr.mxu0 0.0
      %7306 = vmatpush1.xpose.msra.mxu0 0.0
      %7307 = vmatprep.subr.mxu0 0.0
      %7308 = vmatpush1.xpose.msra.mxu0 0.0
      %7309 = vmatprep.subr.mxu0 0.0
      %7310 = vmatpush1.xpose.msra.mxu0 0.0
      %7311 = vmatprep.subr.mxu0 0.0
      %7312 = vmatpush1.xpose.msra.mxu0 0.0
      %7313 = vmatprep.subr.mxu0 0.0
      %7314 = vmatpush1.xpose.msra.mxu0 0.0
      %7315 = vmatprep.subr.mxu0 0.0
      %7316 = vmatpush1.xpose.msra.mxu0 0.0
      %7317 = vmatprep.subr.mxu0 0.0
      %7318 = vmatpush1.xpose.msra.mxu0 0.0
      %7319 = vmatprep.subr.mxu0 0.0
      %7320 = vmatpush1.xpose.msra.mxu0 0.0
      %7321 = vmatprep.subr.mxu0 0.0
      %7322 = vmatpush1.xpose.msra.mxu0 0.0
      %7323 = vmatprep.subr.mxu0 0.0
      %7324 = vmatpush1.xpose.msra.mxu0 0.0
      %7325 = vmatprep.subr.mxu0 0.0
      %7326 = vmatpush1.xpose.msra.mxu0 0.0
      %7327 = vmatprep.subr.mxu0 0.0
      %7328 = vmatpush1.xpose.msra.mxu0 0.0
      %7329 = vmatprep.subr.mxu0 0.0
      %7330 = vmatpush1.xpose.msra.mxu0 0.0
      %7331 = vmatprep.subr.mxu0 0.0
      %7332 = vmatpush1.xpose.msra.mxu0 0.0
      %7333 = vmatprep.subr.mxu0 0.0
      %7334 = vmatpush1.xpose.msra.mxu0 0.0
      %7335 = vmatprep.subr.mxu0 0.0
      %7336 = vmatpush1.xpose.msra.mxu0 0.0
      %7337 = vmatprep.subr.mxu0 0.0
      %7338 = vmatpush1.xpose.msra.mxu0 0.0
      %7339 = vmatprep.subr.mxu0 0.0
      %7340 = vmatpush1.xpose.msra.mxu0 0.0
      %7341 = vmatprep.subr.mxu0 0.0
      %7342 = vmatpush1.xpose.msra.mxu0 0.0
      %7343 = vmatprep.subr.mxu0 0.0
      %7344 = vmatpush1.xpose.msra.mxu0 0.0
      %7345 = vmatprep.subr.mxu0 0.0
      %7346 = vmatpush1.xpose.msra.mxu0 0.0
      %7347 = vmatprep.subr.mxu0 0.0
      %7348 = vmatpush1.xpose.msra.mxu0 0.0
      %7349 = vmatprep.subr.mxu0 0.0
      %7350 = vmatpush1.xpose.msra.mxu0 0.0
      %7351 = vmatprep.subr.mxu0 0.0
      %7352 = vmatpush1.xpose.msra.mxu0 0.0
      %7353 = vmatprep.subr.mxu0 0.0
      %7354 = vmatpush1.xpose.msra.mxu0 0.0
      %7355 = vmatprep.subr.mxu0 0.0
      %7356 = vmatpush1.xpose.msra.mxu0 0.0
      %7357 = vmatprep.subr.mxu0 0.0
      %7358 = vmatpush1.xpose.msra.mxu0 0.0
      %7359 = vmatprep.subr.mxu0 0.0
      %7360 = vmatpush1.xpose.msra.mxu0 0.0
      %7361 = vmatprep.subr.mxu0 0.0
      %7362 = vmatpush1.xpose.msra.mxu0 0.0
      %7363 = vmatprep.subr.mxu0 0.0
      %7364 = vmatpush1.xpose.msra.mxu0 0.0
      %7365 = vmatprep.subr.mxu0 0.0
      %7366 = vmatpush1.xpose.msra.mxu0 0.0
      %7367 = vmatprep.mubr.f32.mxu0 0.0
      %7368 = vmatmul.mubr.f32.gmra.mrb[0].mxu0 %v7299
      %v7369 = vpop.f32.mrb[0].mxu0
      %v7370 = vadd.f32 %v4916, %v7369
      %v7371 = vpop.f32.mrb[0].mxu0
      %7372 = vdwg.mxu0
      %v7373 = vsel %vm1122, %v7370, -inf
      %7374 = vmax.xlane.f32.xlu0 %v7373
      %v7375 = vpop.xlane.xlu0 %7374
      %v7376 = vsub.f32 %v7370, %v7375
      %v7377 = vmul.f32 %v7376, 1.442695
      %v7378 = vpow.pop %v7377
      %v7379 = vsel %vm1122, %v7378, 0.0
      %7380 = vadd.xlane.f32.xlu0 %v7379
      %v7381 = vpop.xlane.xlu0 %7380
      %v7382 = vrcp.pop %v7381
      %v7383 = vmul.f32 %v7378, %v7382
      %7384 = vrot.lane.b32.xlu0 %v6795, 72
      %v7385 = vpop.permute.xlu0 %7384
      %v7388 = vsel %vm1122, %v7383, 0
      %7390 = vmatprep.subr.mxu0 0.0
      %7391 = vmatpush1.msra.mxu0 %v7385
      %7392 = vmatprep.subr.mxu0 0.0
      %7393 = vmatpush1.msra.mxu0 0.0
      %7394 = vmatprep.subr.mxu0 0.0
      %7395 = vmatpush1.msra.mxu0 0.0
      %7396 = vmatprep.subr.mxu0 0.0
      %7397 = vmatpush1.msra.mxu0 0.0
      %7398 = vmatprep.subr.mxu0 0.0
      %7399 = vmatpush1.msra.mxu0 0.0
      %7400 = vmatprep.subr.mxu0 0.0
      %7401 = vmatpush1.msra.mxu0 0.0
      %7402 = vmatprep.subr.mxu0 0.0
      %7403 = vmatpush1.msra.mxu0 0.0
      %7404 = vmatprep.subr.mxu0 0.0
      %7405 = vmatpush1.msra.mxu0 0.0
      %7406 = vmatprep.subr.mxu0 0.0
      %7407 = vmatpush1.msra.mxu0 0.0
      %7408 = vmatprep.subr.mxu0 0.0
      %7409 = vmatpush1.msra.mxu0 0.0
      %7410 = vmatprep.subr.mxu0 0.0
      %7411 = vmatpush1.msra.mxu0 0.0
      %7412 = vmatprep.subr.mxu0 0.0
      %7413 = vmatpush1.msra.mxu0 0.0
      %7414 = vmatprep.subr.mxu0 0.0
      %7415 = vmatpush1.msra.mxu0 0.0
      %7416 = vmatprep.subr.mxu0 0.0
      %7417 = vmatpush1.msra.mxu0 0.0
      %7418 = vmatprep.subr.mxu0 0.0
      %7419 = vmatpush1.msra.mxu0 0.0
      %7420 = vmatprep.subr.mxu0 0.0
      %7421 = vmatpush1.msra.mxu0 0.0
      %7422 = vmatprep.subr.mxu0 0.0
      %7423 = vmatpush1.msra.mxu0 0.0
      %7424 = vmatprep.subr.mxu0 0.0
      %7425 = vmatpush1.msra.mxu0 0.0
      %7426 = vmatprep.subr.mxu0 0.0
      %7427 = vmatpush1.msra.mxu0 0.0
      %7428 = vmatprep.subr.mxu0 0.0
      %7429 = vmatpush1.msra.mxu0 0.0
      %7430 = vmatprep.subr.mxu0 0.0
      %7431 = vmatpush1.msra.mxu0 0.0
      %7432 = vmatprep.subr.mxu0 0.0
      %7433 = vmatpush1.msra.mxu0 0.0
      %7434 = vmatprep.subr.mxu0 0.0
      %7435 = vmatpush1.msra.mxu0 0.0
      %7436 = vmatprep.subr.mxu0 0.0
      %7437 = vmatpush1.msra.mxu0 0.0
      %7438 = vmatprep.subr.mxu0 0.0
      %7439 = vmatpush1.msra.mxu0 0.0
      %7440 = vmatprep.subr.mxu0 0.0
      %7441 = vmatpush1.msra.mxu0 0.0
      %7442 = vmatprep.subr.mxu0 0.0
      %7443 = vmatpush1.msra.mxu0 0.0
      %7444 = vmatprep.subr.mxu0 0.0
      %7445 = vmatpush1.msra.mxu0 0.0
      %7446 = vmatprep.subr.mxu0 0.0
      %7447 = vmatpush1.msra.mxu0 0.0
      %7448 = vmatprep.subr.mxu0 0.0
      %7449 = vmatpush1.msra.mxu0 0.0
      %7450 = vmatprep.subr.mxu0 0.0
      %7451 = vmatpush1.msra.mxu0 0.0
      %7452 = vmatprep.subr.mxu0 0.0
      %7453 = vmatpush1.msra.mxu0 0.0
      %7454 = vmatprep.mubr.f32.mxu0 0.0
      %7455 = vmatmul.mubr.f32.gmra.mrb[0].mxu0 %v7388
      %v7456 = vpop.f32.mrb[0].mxu0
      %v7457 = vadd.f32 0.0, %v7456
      %v7458 = vpop.f32.mrb[0].mxu0
      %7459 = vdwg.mxu0
      %v7460 = vadd.f32 %v7294, %v7383
      %7462 = vrot.lane.b32.xlu0 %v7125, 8
      %v7463 = vpop.permute.xlu0 %7462
      %7466 = vrot.lane.b32.xlu0 %v7291, 16
      %v7467 = vpop.permute.xlu0 %7466
      %7470 = vrot.lane.b32.xlu0 %v7457, 24
      %v7471 = vpop.permute.xlu0 %7470
      %v7473 = vsel %vm1122, %v6960, %v7463
      %v7474 = vsel %vm2428, %v7473, %v7467
      %v7475 = vsel %vm2430, %v7474, %v7471
      %v7476 = vmul.f32 %v7460, 0.25
      %v7477 = vpack.c.bf16 %v7475, %v7475
      %v7478 = vlaneseq
      %v7479 = vshrl.u32 %v7478, 7
      %v7480 = vsub.s32 5, %v7479
      %v7481 = vrot.slane %v1086, %v7480
      %v7486 = vunpack.c.l.b16 %v5850
      %v7487 = vunpack.c.l.b16 %v5851
      %v7488 = vunpack.c.l.b16 %v5852
      %v7489 = vunpack.c.l.b16 %v5853
      %v7490 = vpack.c.b16 %v7487, %v7486
      %v7491 = vpack.c.b16 %v7489, %v7488
      %v7495 = vsel %vm1090, %v7477, 0
      %7497 = vmatprep.subr.bf16.mxu0 0
      %7498 = vmatpush1.bf16.msra.mxu0 %v7490
      %7499 = vmatprep.subr.bf16.mxu0 0
      %7500 = vmatpush1.bf16.msra.mxu0 %v7491
      %7501 = vmatprep.subr.bf16.mxu0 0
      %7502 = vmatpush1.bf16.msra.mxu0 0
      %7503 = vmatprep.subr.bf16.mxu0 0
      %7504 = vmatpush1.bf16.msra.mxu0 0
      %7505 = vmatprep.subr.bf16.mxu0 0
      %7506 = vmatpush1.bf16.msra.mxu0 0
      %7507 = vmatprep.subr.bf16.mxu0 0
      %7508 = vmatpush1.bf16.msra.mxu0 0
      %7509 = vmatprep.subr.bf16.mxu0 0
      %7510 = vmatpush1.bf16.msra.mxu0 0
      %7511 = vmatprep.subr.bf16.mxu0 0
      %7512 = vmatpush1.bf16.msra.mxu0 0
      %7513 = vmatprep.subr.bf16.mxu0 0
      %7514 = vmatpush1.bf16.msra.mxu0 0
      %7515 = vmatprep.subr.bf16.mxu0 0
      %7516 = vmatpush1.bf16.msra.mxu0 0
      %7517 = vmatprep.subr.bf16.mxu0 0
      %7518 = vmatpush1.bf16.msra.mxu0 0
      %7519 = vmatprep.subr.bf16.mxu0 0
      %7520 = vmatpush1.bf16.msra.mxu0 0
      %7521 = vmatprep.subr.bf16.mxu0 0
      %7522 = vmatpush1.bf16.msra.mxu0 0
      %7523 = vmatprep.subr.bf16.mxu0 0
      %7524 = vmatpush1.bf16.msra.mxu0 0
      %7525 = vmatprep.subr.bf16.mxu0 0
      %7526 = vmatpush1.bf16.msra.mxu0 0
      %7527 = vmatprep.subr.bf16.mxu0 0
      %7528 = vmatpush1.bf16.msra.mxu0 0
      %7529 = vmatprep.mubr.bf16.mxu0 0
      %7530 = vmatmul.mubr.bf16.gmra.mrb[0].mxu0 %v7495
      %v7531 = vpop.f32.mrb[0].mxu0
      %v7532 = vadd.f32 %v7481, %v7531
      %v7533 = vpop.f32.mrb[0].mxu0
      %v7534 = vpop.f32.mrb[0].mxu0
      %v7535 = vpop.f32.mrb[0].mxu0
      %7536 = vdwg.mxu0
      %v7537 = vadd.f32 %v6683, %v7532
      %v7538 = vsel %vm1090, %v7537, 0.0
      %7539 = vadd.xlane.f32.xlu0 %v7538
      %v7540 = vpop.xlane.xlu0 %7539
      %v7541 = vmul.f32 %v7540, %v1094
      %v7542 = vsub.f32 %v7537, %v7541
      %v7543 = vmul.f32 %v7542, %v7542
      %v7544 = vsel %vm1090, %v7543, 0.0
      %7545 = vadd.xlane.f32.xlu0 %v7544
      %v7546 = vpop.xlane.xlu0 %7545
      %v7547 = vmul.f32 %v7546, %v1094
      %v7548 = vadd.f32 %v7547, 1e-05
      %v7549 = vrsqrt.pop %v7548
      %v7550 = vmul.f32 %v7542, %v7549
      %v7551 = vlaneseq
      %v7552 = vshrl.u32 %v7551, 7
      %v7553 = vsub.s32 2, %v7552
      %v7554 = vrot.slane %v1087, %v7553
      %v7555 = vmul.f32 %v7550, %v7554
      %v7556 = vlaneseq
      %v7557 = vshrl.u32 %v7556, 7
      %v7558 = vsub.s32 3, %v7557
      %v7559 = vrot.slane %v1087, %v7558
      %v7560 = vadd.f32 %v7555, %v7559
      %v7561 = vpack.c.bf16 %v7560, %v7560
      %v7562 = vlaneseq
      %v7563 = vshrl.u32 %v7562, 7
      %v7564 = vsub.s32 6, %v7563
      %v7565 = vrot.slane %v1086, %v7564
      %v7570 = vunpack.c.l.b16 %v5854
      %v7571 = vunpack.c.l.b16 %v5855
      %v7572 = vunpack.c.l.b16 %v5856
      %v7573 = vunpack.c.l.b16 %v5857
      %v7574 = vpack.c.b16 %v7571, %v7570
      %v7575 = vpack.c.b16 %v7573, %v7572
      %v7579 = vsel %vm1090, %v7561, 0
      %7581 = vmatprep.subr.bf16.mxu0 0
      %7582 = vmatpush1.bf16.msra.mxu0 %v7574
      %7583 = vmatprep.subr.bf16.mxu0 0
      %7584 = vmatpush1.bf16.msra.mxu0 %v7575
      %7585 = vmatprep.subr.bf16.mxu0 0
      %7586 = vmatpush1.bf16.msra.mxu0 0
      %7587 = vmatprep.subr.bf16.mxu0 0
      %7588 = vmatpush1.bf16.msra.mxu0 0
      %7589 = vmatprep.subr.bf16.mxu0 0
      %7590 = vmatpush1.bf16.msra.mxu0 0
      %7591 = vmatprep.subr.bf16.mxu0 0
      %7592 = vmatpush1.bf16.msra.mxu0 0
      %7593 = vmatprep.subr.bf16.mxu0 0
      %7594 = vmatpush1.bf16.msra.mxu0 0
      %7595 = vmatprep.subr.bf16.mxu0 0
      %7596 = vmatpush1.bf16.msra.mxu0 0
      %7597 = vmatprep.subr.bf16.mxu0 0
      %7598 = vmatpush1.bf16.msra.mxu0 0
      %7599 = vmatprep.subr.bf16.mxu0 0
      %7600 = vmatpush1.bf16.msra.mxu0 0
      %7601 = vmatprep.subr.bf16.mxu0 0
      %7602 = vmatpush1.bf16.msra.mxu0 0
      %7603 = vmatprep.subr.bf16.mxu0 0
      %7604 = vmatpush1.bf16.msra.mxu0 0
      %7605 = vmatprep.subr.bf16.mxu0 0
      %7606 = vmatpush1.bf16.msra.mxu0 0
      %7607 = vmatprep.subr.bf16.mxu0 0
      %7608 = vmatpush1.bf16.msra.mxu0 0
      %7609 = vmatprep.subr.bf16.mxu0 0
      %7610 = vmatpush1.bf16.msra.mxu0 0
      %7611 = vmatprep.subr.bf16.mxu0 0
      %7612 = vmatpush1.bf16.msra.mxu0 0
      %7613 = vmatprep.mubr.bf16.mxu0 0
      %7614 = vmatmul.mubr.bf16.gmra.mrb[0].mxu0 %v7579
      %v7615 = vpop.f32.mrb[0].mxu0
      %v7616 = vadd.f32 %v7565, %v7615
      %v7617 = vpop.f32.mrb[0].mxu0
      %v7618 = vpop.f32.mrb[0].mxu0
      %v7619 = vpop.f32.mrb[0].mxu0
      %7620 = vdwg.mxu0
      %vm7621 = vcmp.ge.f32.partialorder %v7616, 0.0
      %v7622 = vmul.f32 %v7616, 0.01
      %v7623 = vsel %vm7621, %v7616, %v7622
      %v7624 = vpack.c.bf16 %v7623, %v7623
      %v7625 = vlaneseq
      %v7626 = vshrl.u32 %v7625, 7
      %v7627 = vsub.s32 7, %v7626
      %v7628 = vrot.slane %v1086, %v7627
      %v7637 = vunpack.c.l.b16 %v5858
      %v7638 = vunpack.c.l.b16 %v5859
      %v7639 = vunpack.c.l.b16 %v5860
      %v7640 = vunpack.c.l.b16 %v5861
      %v7641 = vunpack.c.l.b16 %v5862
      %v7642 = vunpack.c.l.b16 %v5863
      %v7643 = vunpack.c.l.b16 %v5864
      %v7644 = vunpack.c.l.b16 %v5865
      %v7645 = vpack.c.b16 %v7638, %v7637
      %v7646 = vpack.c.b16 %v7640, %v7639
      %v7647 = vpack.c.b16 %v7642, %v7641
      %v7648 = vpack.c.b16 %v7644, %v7643
      %v7654 = vsel %vm1235, %v7624, 0
      %7656 = vmatprep.subr.bf16.mxu0 0
      %7657 = vmatpush1.bf16.msra.mxu0 %v7645
      %7658 = vmatprep.subr.bf16.mxu0 0
      %7659 = vmatpush1.bf16.msra.mxu0 %v7646
      %7660 = vmatprep.subr.bf16.mxu0 0
      %7661 = vmatpush1.bf16.msra.mxu0 %v7647
      %7662 = vmatprep.subr.bf16.mxu0 0
      %7663 = vmatpush1.bf16.msra.mxu0 %v7648
      %7664 = vmatprep.subr.bf16.mxu0 0
      %7665 = vmatpush1.bf16.msra.mxu0 0
      %7666 = vmatprep.subr.bf16.mxu0 0
      %7667 = vmatpush1.bf16.msra.mxu0 0
      %7668 = vmatprep.subr.bf16.mxu0 0
      %7669 = vmatpush1.bf16.msra.mxu0 0
      %7670 = vmatprep.subr.bf16.mxu0 0
      %7671 = vmatpush1.bf16.msra.mxu0 0
      %7672 = vmatprep.subr.bf16.mxu0 0
      %7673 = vmatpush1.bf16.msra.mxu0 0
      %7674 = vmatprep.subr.bf16.mxu0 0
      %7675 = vmatpush1.bf16.msra.mxu0 0
      %7676 = vmatprep.subr.bf16.mxu0 0
      %7677 = vmatpush1.bf16.msra.mxu0 0
      %7678 = vmatprep.subr.bf16.mxu0 0
      %7679 = vmatpush1.bf16.msra.mxu0 0
      %7680 = vmatprep.subr.bf16.mxu0 0
      %7681 = vmatpush1.bf16.msra.mxu0 0
      %7682 = vmatprep.subr.bf16.mxu0 0
      %7683 = vmatpush1.bf16.msra.mxu0 0
      %7684 = vmatprep.subr.bf16.mxu0 0
      %7685 = vmatpush1.bf16.msra.mxu0 0
      %7686 = vmatprep.subr.bf16.mxu0 0
      %7687 = vmatpush1.bf16.msra.mxu0 0
      %7688 = vmatprep.mubr.bf16.mxu0 0
      %7689 = vmatmul.mubr.bf16.gmra.mrb[0].mxu0 %v7654
      %v7690 = vpop.f32.mrb[0].mxu0
      %v7691 = vadd.f32 %v7628, %v7690
      %v7692 = vpop.f32.mrb[0].mxu0
      %v7693 = vpop.f32.mrb[0].mxu0
      %v7694 = vpop.f32.mrb[0].mxu0
      %7695 = vdwg.mxu0
      %v7696 = vadd.f32 %v7560, %v7691
      %v7697 = vsel %vm1090, %v7696, 0.0
      %7698 = vadd.xlane.f32.xlu0 %v7697
      %v7699 = vpop.xlane.xlu0 %7698
      %v7700 = vmul.f32 %v7699, %v1094
      %v7701 = vsub.f32 %v7696, %v7700
      %v7702 = vmul.f32 %v7701, %v7701
      %v7703 = vsel %vm1090, %v7702, 0.0
      %7704 = vadd.xlane.f32.xlu0 %v7703
      %v7705 = vpop.xlane.xlu0 %7704
      %v7706 = vmul.f32 %v7705, %v1094
      %v7707 = vadd.f32 %v7706, 1e-05
      %v7708 = vrsqrt.pop %v7707
      %v7709 = vmul.f32 %v7701, %v7708
      %v7710 = vlaneseq
      %v7711 = vshrl.u32 %v7710, 7
      %v7712 = vsub.s32 4, %v7711
      %v7713 = vrot.slane %v1087, %v7712
      %v7714 = vmul.f32 %v7709, %v7713
      %v7715 = vlaneseq
      %v7716 = vshrl.u32 %v7715, 7
      %v7717 = vsub.s32 5, %v7716
      %v7718 = vrot.slane %v1087, %v7717
      %v7719 = vadd.f32 %v7714, %v7718
      %v7720 = vsel %vm1090, %v7719, 0.0
      %7721 = vadd.xlane.f32.xlu0 %v7720
      %v7722 = vpop.xlane.xlu0 %7721
      %v7723 = vmul.f32 %v7722, %v1094
      %v7724 = vsub.f32 %v7719, %v7723
      %v7725 = vmul.f32 %v7724, %v7724
      %v7726 = vsel %vm1090, %v7725, 0.0
      %7727 = vadd.xlane.f32.xlu0 %v7726
      %v7728 = vpop.xlane.xlu0 %7727
      %v7729 = vmul.f32 %v7728, %v1094
      %v7730 = vadd.f32 %v7729, 1e-05
      %v7731 = vrsqrt.pop %v7730
      %v7732 = vmul.f32 %v7724, %v7731
      %v7733 = vlaneseq
      %v7734 = vshrl.u32 %v7733, 7
      %v7735 = vsub.s32 6, %v7734
      %v7736 = vrot.slane %v1082, %v7735
      %v7737 = vmul.f32 %v7732, %v7736
      %v7738 = vlaneseq
      %v7739 = vshrl.u32 %v7738, 7
      %v7740 = vsub.s32 7, %v7739
      %v7741 = vrot.slane %v1082, %v7740
      %v7742 = vadd.f32 %v7737, %v7741
      %v7743 = vld [vmem:[%s11] sm:$0xff]
      %v7744 = vld [vmem:[%s11 + $0x8] sm:$0xf]
      %v7745 = vld [vmem:[%s11 + $0xc] sm:$0xff]
      %v7746 = vld [vmem:[%s11 + $0x14] sm:$0xf]
      %v7747 = vld [vmem:[%s11 + $0x18] sm:$0xff]
      %v7748 = vld [vmem:[%s11 + $0x20] sm:$0xf]
      %v7749 = vld [vmem:[%s11 + $0x24] sm:$0xff]
      %v7750 = vld [vmem:[%s11 + $0x2c] sm:$0xf]
      %v7751 = vld [vmem:[%s13] sm:$0xff]
      %v7752 = vld [vmem:[%s13 + $0x8] sm:$0xf]
      %v7753 = vld [vmem:[%s13 + $0xc] sm:$0xff]
      %v7754 = vld [vmem:[%s13 + $0x14] sm:$0xf]
      %v7755 = vld [vmem:[%s13 + $0x18] sm:$0xff]
      %v7756 = vld [vmem:[%s13 + $0x20] sm:$0xf]
      %v7757 = vld [vmem:[%s13 + $0x24] sm:$0xff]
      %v7758 = vld [vmem:[%s13 + $0x2c] sm:$0xf]
      %v7759 = vld [vmem:[%s13 + $0x30] sm:$0xff]
      %v7760 = vld [vmem:[%s13 + $0x38] sm:$0xf]
      %v7761 = vld [vmem:[%s13 + $0x3c] sm:$0xff]
      %v7762 = vld [vmem:[%s13 + $0x44] sm:$0xf]
      %v7763 = vld [vmem:[%s13 + $0x48] sm:$0xff]
      %v7764 = vld [vmem:[%s13 + $0x50] sm:$0xf]
      %v7765 = vld [vmem:[%s13 + $0x54] sm:$0xff]
      %v7766 = vld [vmem:[%s13 + $0x5c] sm:$0xf]
      %v7767 = vld [vmem:[%s13 + $0x60] sm:$0xff]
      %v7768 = vld [vmem:[%s13 + $0x68] sm:$0xf]
      %v7769 = vld [vmem:[%s13 + $0x6c] sm:$0xff]
      %v7770 = vld [vmem:[%s13 + $0x74] sm:$0xf]
      %v7771 = vld [vmem:[%s13 + $0x78] sm:$0xff]
      %v7772 = vld [vmem:[%s13 + $0x80] sm:$0xf]
      %v7773 = vld [vmem:[%s13 + $0x84] sm:$0xff]
      %v7774 = vld [vmem:[%s13 + $0x8c] sm:$0xf]
      %v7775 = vld [vmem:[%s15] sm:$0xff]
      %v7776 = vld [vmem:[%s15 + $0x8] sm:$0xf]
      %v7777 = vld [vmem:[%s15 + $0xc] sm:$0xff]
      %v7778 = vld [vmem:[%s15 + $0x14] sm:$0xf]
      %v7779 = vld [vmem:[%s15 + $0x18] sm:$0xff]
      %v7780 = vld [vmem:[%s15 + $0x20] sm:$0xf]
      %v7781 = vld [vmem:[%s15 + $0x24] sm:$0xff]
      %v7782 = vld [vmem:[%s15 + $0x2c] sm:$0xf]
      %v7783 = vld [vmem:[%s15 + $0x30] sm:$0xff]
      %v7784 = vld [vmem:[%s15 + $0x38] sm:$0xf]
      %v7785 = vld [vmem:[%s15 + $0x3c] sm:$0xff]
      %v7786 = vld [vmem:[%s15 + $0x44] sm:$0xf]
      %v7787 = vld [vmem:[%s15 + $0x48] sm:$0xff]
      %v7788 = vld [vmem:[%s15 + $0x50] sm:$0xf]
      %v7789 = vld [vmem:[%s15 + $0x54] sm:$0xff]
      %v7790 = vld [vmem:[%s15 + $0x5c] sm:$0xf]
      %v7791 = vld [vmem:[%s15 + $0x60] sm:$0xff]
      %v7792 = vld [vmem:[%s15 + $0x68] sm:$0xf]
      %v7793 = vld [vmem:[%s15 + $0x6c] sm:$0xff]
      %v7794 = vld [vmem:[%s15 + $0x74] sm:$0xf]
      %v7795 = vld [vmem:[%s15 + $0x78] sm:$0xff]
      %v7796 = vld [vmem:[%s15 + $0x80] sm:$0xf]
      %v7797 = vld [vmem:[%s15 + $0x84] sm:$0xff]
      %v7798 = vld [vmem:[%s15 + $0x8c] sm:$0xf]
      %v7799 = vld [vmem:[%s17] sm:$0xff]
      %v7800 = vld [vmem:[%s17 + $0x8] sm:$0xf]
      %v7801 = vld [vmem:[%s17 + $0xc] sm:$0xff]
      %v7802 = vld [vmem:[%s17 + $0x14] sm:$0xf]
      %v7803 = vld [vmem:[%s17 + $0x18] sm:$0xff]
      %v7804 = vld [vmem:[%s17 + $0x20] sm:$0xf]
      %v7805 = vld [vmem:[%s17 + $0x24] sm:$0xff]
      %v7806 = vld [vmem:[%s17 + $0x2c] sm:$0xf]
      %v7807 = vld [vmem:[%s17 + $0x30] sm:$0xff]
      %v7808 = vld [vmem:[%s17 + $0x38] sm:$0xf]
      %v7809 = vld [vmem:[%s17 + $0x3c] sm:$0xff]
      %v7810 = vld [vmem:[%s17 + $0x44] sm:$0xf]
      %v7811 = vld [vmem:[%s17 + $0x48] sm:$0xff]
      %v7812 = vld [vmem:[%s17 + $0x50] sm:$0xf]
      %v7813 = vld [vmem:[%s17 + $0x54] sm:$0xff]
      %v7814 = vld [vmem:[%s17 + $0x5c] sm:$0xf]
      %v7815 = vld [vmem:[%s17 + $0x60] sm:$0xff]
      %v7816 = vld [vmem:[%s17 + $0x68] sm:$0xf]
      %v7817 = vld [vmem:[%s17 + $0x6c] sm:$0xff]
      %v7818 = vld [vmem:[%s17 + $0x74] sm:$0xf]
      %v7819 = vld [vmem:[%s17 + $0x78] sm:$0xff]
      %v7820 = vld [vmem:[%s17 + $0x80] sm:$0xf]
      %v7821 = vld [vmem:[%s17 + $0x84] sm:$0xff]
      %v7822 = vld [vmem:[%s17 + $0x8c] sm:$0xf]
      %v7823 = vld [vmem:[%s19] sm:$0xff]
      %v7824 = vld [vmem:[%s19 + $0x8] sm:$0xf]
      %v7825 = vld [vmem:[%s19 + $0xc] sm:$0xff]
      %v7826 = vld [vmem:[%s19 + $0x14] sm:$0xf]
      %v7827 = vld [vmem:[%s19 + $0x18] sm:$0xff]
      %v7828 = vld [vmem:[%s19 + $0x20] sm:$0xf]
      %v7829 = vld [vmem:[%s19 + $0x24] sm:$0xff]
      %v7830 = vld [vmem:[%s19 + $0x2c] sm:$0xf]
      %v7831 = vld [vmem:[%s19 + $0x30] sm:$0xff]
      %v7832 = vld [vmem:[%s19 + $0x38] sm:$0xf]
      %v7833 = vld [vmem:[%s19 + $0x3c] sm:$0xff]
      %v7834 = vld [vmem:[%s19 + $0x44] sm:$0xf]
      %v7835 = vld [vmem:[%s19 + $0x48] sm:$0xff]
      %v7836 = vld [vmem:[%s19 + $0x50] sm:$0xf]
      %v7837 = vld [vmem:[%s19 + $0x54] sm:$0xff]
      %v7838 = vld [vmem:[%s19 + $0x5c] sm:$0xf]
      %v7839 = vld [vmem:[%s19 + $0x60] sm:$0xff]
      %v7840 = vld [vmem:[%s19 + $0x68] sm:$0xf]
      %v7841 = vld [vmem:[%s19 + $0x6c] sm:$0xff]
      %v7842 = vld [vmem:[%s19 + $0x74] sm:$0xf]
      %v7843 = vld [vmem:[%s19 + $0x78] sm:$0xff]
      %v7844 = vld [vmem:[%s19 + $0x80] sm:$0xf]
      %v7845 = vld [vmem:[%s19 + $0x84] sm:$0xff]
      %v7846 = vld [vmem:[%s19 + $0x8c] sm:$0xf]
      %v7847 = vld [vmem:[%s21] sm:$0xf]
      %v7848 = vld [vmem:[%s21 + $0x4] sm:$0xf]
      %v7849 = vld [vmem:[%s21 + $0x8] sm:$0xf]
      %v7850 = vld [vmem:[%s21 + $0xc] sm:$0xf]
      %v7851 = vld [vmem:[%s21 + $0x10] sm:$0xf]
      %v7852 = vld [vmem:[%s21 + $0x14] sm:$0xf]
      %v7853 = vld [vmem:[%s21 + $0x18] sm:$0xf]
      %v7854 = vld [vmem:[%s21 + $0x1c] sm:$0xf]
      %v7855 = vld [vmem:[%s21 + $0x20] sm:$0xf]
      %v7856 = vld [vmem:[%s21 + $0x24] sm:$0xf]
      %v7857 = vld [vmem:[%s21 + $0x28] sm:$0xf]
      %v7858 = vld [vmem:[%s21 + $0x2c] sm:$0xf]
      %v7859 = vpack.c.bf16 %v7742, %v7742
      %v7868 = vunpack.c.l.b16 %v7743
      %v7869 = vunpack.c.h.b16 %v7743
      %v7870 = vunpack.c.l.b16 %v7744
      %v7871 = vunpack.c.l.b16 %v7745
      %v7872 = vunpack.c.h.b16 %v7745
      %v7873 = vunpack.c.l.b16 %v7746
      %v7874 = vunpack.c.l.b16 %v7747
      %v7875 = vunpack.c.h.b16 %v7747
      %v7876 = vunpack.c.l.b16 %v7748
      %v7877 = vunpack.c.l.b16 %v7749
      %v7878 = vunpack.c.h.b16 %v7749
      %v7879 = vunpack.c.l.b16 %v7750
      %v7880 = vpack.c.b16 %v7871, %v7868
      %v7881 = vpack.c.b16 %v7872, %v7869
      %v7882 = vpack.c.b16 %v7873, %v7870
      %v7883 = vpack.c.b16 %v7877, %v7874
      %v7884 = vpack.c.b16 %v7878, %v7875
      %v7885 = vpack.c.b16 %v7879, %v7876
      %v7893 = vsel %vm1090, %v7859, 0
      %7895 = vmatprep.subr.bf16.mxu0 %v7881
      %7896 = vmatpush1.bf16.msra.mxu0 %v7880
      %7897 = vmatprep.subr.bf16.mxu0 %v7884
      %7898 = vmatpush1.bf16.msra.mxu0 %v7883
      %7899 = vmatprep.subr.bf16.mxu0 0
      %7900 = vmatpush1.bf16.msra.mxu0 0
      %7901 = vmatprep.subr.bf16.mxu0 0
      %7902 = vmatpush1.bf16.msra.mxu0 0
      %7903 = vmatprep.subr.bf16.mxu0 0
      %7904 = vmatpush1.bf16.msra.mxu0 0
      %7905 = vmatprep.subr.bf16.mxu0 0
      %7906 = vmatpush1.bf16.msra.mxu0 0
      %7907 = vmatprep.subr.bf16.mxu0 0
      %7908 = vmatpush1.bf16.msra.mxu0 0
      %7909 = vmatprep.subr.bf16.mxu0 0
      %7910 = vmatpush1.bf16.msra.mxu0 0
      %7911 = vmatprep.subr.bf16.mxu0 0
      %7912 = vmatpush1.bf16.msra.mxu0 0
      %7913 = vmatprep.subr.bf16.mxu0 0
      %7914 = vmatpush1.bf16.msra.mxu0 0
      %7915 = vmatprep.subr.bf16.mxu0 0
      %7916 = vmatpush1.bf16.msra.mxu0 0
      %7917 = vmatprep.subr.bf16.mxu0 0
      %7918 = vmatpush1.bf16.msra.mxu0 0
      %7919 = vmatprep.subr.bf16.mxu0 0
      %7920 = vmatpush1.bf16.msra.mxu0 0
      %7921 = vmatprep.subr.bf16.mxu0 0
      %7922 = vmatpush1.bf16.msra.mxu0 0
      %7923 = vmatprep.subr.bf16.mxu0 0
      %7924 = vmatpush1.bf16.msra.mxu0 0
      %7925 = vmatprep.subr.bf16.mxu0 0
      %7926 = vmatpush1.bf16.msra.mxu0 0
      %7927 = vmatprep.mubr.bf16.mxu0 0
      %7928 = vmatmul.mubr.bf16.gmra.mrb[0].mxu0 %v7893
      %v7929 = vpop.f32.mrb[0].mxu0
      %v7930 = vadd.f32 0.0, %v7929
      %v7931 = vpop.f32.mrb[0].mxu0
      %v7932 = vadd.f32 0.0, %v7931
      %v7933 = vpop.f32.mrb[0].mxu0
      %v7934 = vpop.f32.mrb[0].mxu0
      %7935 = vdwg.mxu0
      %7936 = vmatprep.subr.bf16.mxu0 0
      %7937 = vmatpush1.bf16.msra.mxu0 %v7882
      %7938 = vmatprep.subr.bf16.mxu0 0
      %7939 = vmatpush1.bf16.msra.mxu0 %v7885
      %7940 = vmatprep.subr.bf16.mxu0 0
      %7941 = vmatpush1.bf16.msra.mxu0 0
      %7942 = vmatprep.subr.bf16.mxu0 0
      %7943 = vmatpush1.bf16.msra.mxu0 0
      %7944 = vmatprep.subr.bf16.mxu0 0
      %7945 = vmatpush1.bf16.msra.mxu0 0
      %7946 = vmatprep.subr.bf16.mxu0 0
      %7947 = vmatpush1.bf16.msra.mxu0 0
      %7948 = vmatprep.subr.bf16.mxu0 0
      %7949 = vmatpush1.bf16.msra.mxu0 0
      %7950 = vmatprep.subr.bf16.mxu0 0
      %7951 = vmatpush1.bf16.msra.mxu0 0
      %7952 = vmatprep.subr.bf16.mxu0 0
      %7953 = vmatpush1.bf16.msra.mxu0 0
      %7954 = vmatprep.subr.bf16.mxu0 0
      %7955 = vmatpush1.bf16.msra.mxu0 0
      %7956 = vmatprep.subr.bf16.mxu0 0
      %7957 = vmatpush1.bf16.msra.mxu0 0
      %7958 = vmatprep.subr.bf16.mxu0 0
      %7959 = vmatpush1.bf16.msra.mxu0 0
      %7960 = vmatprep.subr.bf16.mxu0 0
      %7961 = vmatpush1.bf16.msra.mxu0 0
      %7962 = vmatprep.subr.bf16.mxu0 0
      %7963 = vmatpush1.bf16.msra.mxu0 0
      %7964 = vmatprep.subr.bf16.mxu0 0
      %7965 = vmatpush1.bf16.msra.mxu0 0
      %7966 = vmatprep.subr.bf16.mxu0 0
      %7967 = vmatpush1.bf16.msra.mxu0 0
      %7968 = vmatprep.mubr.bf16.mxu0 0
      %7969 = vmatmul.mubr.bf16.gmra.mrb[0].mxu0 %v7893
      %v7970 = vpop.f32.mrb[0].mxu0
      %v7971 = vadd.f32 0.0, %v7970
      %v7972 = vpop.f32.mrb[0].mxu0
      %v7973 = vpop.f32.mrb[0].mxu0
      %v7974 = vpop.f32.mrb[0].mxu0
      %7975 = vdwg.mxu0
      %v7977 = vrot.slane %v7930, 7
      %vm7979 = vcmask 1040384
      %v7980 = vsel %vm7979, 0.0, %v7977
      %7982 = vrot.lane.b32.xlu0 %v7930, 32
      %v7983 = vpop.permute.xlu0 %7982
      %7984 = vrot.lane.b32.xlu0 %v7932, 32
      %v7985 = vpop.permute.xlu0 %7984
      %v7986 = vsel %vm1090, %v7983, %v7985
      %v7988 = vadd.f32 %v7980, %v7986
      %v7990 = vrot.slane %v7932, 1
      %v7991 = vrot.slane %v7971, 1
      %vm7994 = vcmask 1046528
      %v7995 = vsel %vm7994, %v7990, 0.0
      %v7996 = vsel %vm7994, %v7991, 0.0
      %7999 = vrot.lane.b32.xlu0 %v7995, 64
      %v8000 = vpop.permute.xlu0 %7999
      %8001 = vrot.lane.b32.xlu0 %v7996, 64
      %v8002 = vpop.permute.xlu0 %8001
      %v8003 = vsel %vm1235, %v8000, %v8002
      %v8005 = vadd.f32 %v7988, %v8003
      %v8006 = vlaneseq
      %v8007 = vshrl.u32 %v8006, 7
      %v8008 = vsub.s32 6, %v8007
      %v8009 = vrot.slane %v1087, %v8008
      %v8010 = vadd.f32 %v8005, %v8009
      %v8011 = vmax.f32 %v8010, 0.0
      %v8012 = vpack.c.bf16 %v8011, %v8011
      %v8037 = vunpack.c.l.b16 %v7751
      %v8038 = vunpack.c.h.b16 %v7751
      %v8039 = vunpack.c.l.b16 %v7752
      %v8040 = vunpack.c.l.b16 %v7753
      %v8041 = vunpack.c.h.b16 %v7753
      %v8042 = vunpack.c.l.b16 %v7754
      %v8043 = vunpack.c.l.b16 %v7755
      %v8044 = vunpack.c.h.b16 %v7755
      %v8045 = vunpack.c.l.b16 %v7756
      %v8046 = vunpack.c.l.b16 %v7757
      %v8047 = vunpack.c.h.b16 %v7757
      %v8048 = vunpack.c.l.b16 %v7758
      %v8049 = vunpack.c.l.b16 %v7759
      %v8050 = vunpack.c.h.b16 %v7759
      %v8051 = vunpack.c.l.b16 %v7760
      %v8052 = vunpack.c.l.b16 %v7761
      %v8053 = vunpack.c.h.b16 %v7761
      %v8054 = vunpack.c.l.b16 %v7762
      %v8055 = vunpack.c.l.b16 %v7763
      %v8056 = vunpack.c.h.b16 %v7763
      %v8057 = vunpack.c.l.b16 %v7764
      %v8058 = vunpack.c.l.b16 %v7765
      %v8059 = vunpack.c.h.b16 %v7765
      %v8060 = vunpack.c.l.b16 %v7766
      %v8061 = vunpack.c.l.b16 %v7767
      %v8062 = vunpack.c.h.b16 %v7767
      %v8063 = vunpack.c.l.b16 %v7768
      %v8064 = vunpack.c.l.b16 %v7769
      %v8065 = vunpack.c.h.b16 %v7769
      %v8066 = vunpack.c.l.b16 %v7770
      %v8067 = vunpack.c.l.b16 %v7771
      %v8068 = vunpack.c.h.b16 %v7771
      %v8069 = vunpack.c.l.b16 %v7772
      %v8070 = vunpack.c.l.b16 %v7773
      %v8071 = vunpack.c.h.b16 %v7773
      %v8072 = vunpack.c.l.b16 %v7774
      %v8073 = vpack.c.b16 %v8040, %v8037
      %v8074 = vpack.c.b16 %v8041, %v8038
      %v8075 = vpack.c.b16 %v8042, %v8039
      %v8076 = vpack.c.b16 %v8046, %v8043
      %v8077 = vpack.c.b16 %v8047, %v8044
      %v8078 = vpack.c.b16 %v8048, %v8045
      %v8079 = vpack.c.b16 %v8052, %v8049
      %v8080 = vpack.c.b16 %v8053, %v8050
      %v8081 = vpack.c.b16 %v8054, %v8051
      %v8082 = vpack.c.b16 %v8058, %v8055
      %v8083 = vpack.c.b16 %v8059, %v8056
      %v8084 = vpack.c.b16 %v8060, %v8057
      %v8085 = vpack.c.b16 %v8064, %v8061
      %v8086 = vpack.c.b16 %v8065, %v8062
      %v8087 = vpack.c.b16 %v8066, %v8063
      %v8088 = vpack.c.b16 %v8070, %v8067
      %v8089 = vpack.c.b16 %v8071, %v8068
      %v8090 = vpack.c.b16 %v8072, %v8069
      %vm8109 = vcmask 785408
      %v8111 = vsel %vm8109, %v8012, 0
      %8113 = vmatprep.subr.bf16.mxu0 %v8074
      %8114 = vmatpush1.bf16.msra.mxu0 %v8073
      %8115 = vmatprep.subr.bf16.mxu0 %v8077
      %8116 = vmatpush1.bf16.msra.mxu0 %v8076
      %8117 = vmatprep.subr.bf16.mxu0 %v8080
      %8118 = vmatpush1.bf16.msra.mxu0 %v8079
      %8119 = vmatprep.subr.bf16.mxu0 %v8083
      %8120 = vmatpush1.bf16.msra.mxu0 %v8082
      %8121 = vmatprep.subr.bf16.mxu0 %v8086
      %8122 = vmatpush1.bf16.msra.mxu0 %v8085
      %8123 = vmatprep.subr.bf16.mxu0 %v8089
      %8124 = vmatpush1.bf16.msra.mxu0 %v8088
      %8125 = vmatprep.subr.bf16.mxu0 0
      %8126 = vmatpush1.bf16.msra.mxu0 0
      %8127 = vmatprep.subr.bf16.mxu0 0
      %8128 = vmatpush1.bf16.msra.mxu0 0
      %8129 = vmatprep.subr.bf16.mxu0 0
      %8130 = vmatpush1.bf16.msra.mxu0 0
      %8131 = vmatprep.subr.bf16.mxu0 0
      %8132 = vmatpush1.bf16.msra.mxu0 0
      %8133 = vmatprep.subr.bf16.mxu0 0
      %8134 = vmatpush1.bf16.msra.mxu0 0
      %8135 = vmatprep.subr.bf16.mxu0 0
      %8136 = vmatpush1.bf16.msra.mxu0 0
      %8137 = vmatprep.subr.bf16.mxu0 0
      %8138 = vmatpush1.bf16.msra.mxu0 0
      %8139 = vmatprep.subr.bf16.mxu0 0
      %8140 = vmatpush1.bf16.msra.mxu0 0
      %8141 = vmatprep.subr.bf16.mxu0 0
      %8142 = vmatpush1.bf16.msra.mxu0 0
      %8143 = vmatprep.subr.bf16.mxu0 0
      %8144 = vmatpush1.bf16.msra.mxu0 0
      %8145 = vmatprep.mubr.bf16.mxu0 0
      %8146 = vmatmul.mubr.bf16.gmra.mrb[0].mxu0 %v8111
      %v8147 = vpop.f32.mrb[0].mxu0
      %v8148 = vadd.f32 0.0, %v8147
      %v8149 = vpop.f32.mrb[0].mxu0
      %v8150 = vadd.f32 0.0, %v8149
      %v8151 = vpop.f32.mrb[0].mxu0
      %v8152 = vpop.f32.mrb[0].mxu0
      %8153 = vdwg.mxu0
      %8154 = vmatprep.subr.bf16.mxu0 0
      %8155 = vmatpush1.bf16.msra.mxu0 %v8075
      %8156 = vmatprep.subr.bf16.mxu0 0
      %8157 = vmatpush1.bf16.msra.mxu0 %v8078
      %8158 = vmatprep.subr.bf16.mxu0 0
      %8159 = vmatpush1.bf16.msra.mxu0 %v8081
      %8160 = vmatprep.subr.bf16.mxu0 0
      %8161 = vmatpush1.bf16.msra.mxu0 %v8084
      %8162 = vmatprep.subr.bf16.mxu0 0
      %8163 = vmatpush1.bf16.msra.mxu0 %v8087
      %8164 = vmatprep.subr.bf16.mxu0 0
      %8165 = vmatpush1.bf16.msra.mxu0 %v8090
      %8166 = vmatprep.subr.bf16.mxu0 0
      %8167 = vmatpush1.bf16.msra.mxu0 0
      %8168 = vmatprep.subr.bf16.mxu0 0
      %8169 = vmatpush1.bf16.msra.mxu0 0
      %8170 = vmatprep.subr.bf16.mxu0 0
      %8171 = vmatpush1.bf16.msra.mxu0 0
      %8172 = vmatprep.subr.bf16.mxu0 0
      %8173 = vmatpush1.bf16.msra.mxu0 0
      %8174 = vmatprep.subr.bf16.mxu0 0
      %8175 = vmatpush1.bf16.msra.mxu0 0
      %8176 = vmatprep.subr.bf16.mxu0 0
      %8177 = vmatpush1.bf16.msra.mxu0 0
      %8178 = vmatprep.subr.bf16.mxu0 0
      %8179 = vmatpush1.bf16.msra.mxu0 0
      %8180 = vmatprep.subr.bf16.mxu0 0
      %8181 = vmatpush1.bf16.msra.mxu0 0
      %8182 = vmatprep.subr.bf16.mxu0 0
      %8183 = vmatpush1.bf16.msra.mxu0 0
      %8184 = vmatprep.subr.bf16.mxu0 0
      %8185 = vmatpush1.bf16.msra.mxu0 0
      %8186 = vmatprep.mubr.bf16.mxu0 0
      %8187 = vmatmul.mubr.bf16.gmra.mrb[0].mxu0 %v8111
      %v8188 = vpop.f32.mrb[0].mxu0
      %v8189 = vadd.f32 0.0, %v8188
      %v8190 = vpop.f32.mrb[0].mxu0
      %v8191 = vpop.f32.mrb[0].mxu0
      %v8192 = vpop.f32.mrb[0].mxu0
      %8193 = vdwg.mxu0
      %v8195 = vrot.slane %v8148, 7
      %v8197 = vsel %vm7979, 0.0, %v8195
      %8199 = vrot.lane.b32.xlu0 %v8148, 32
      %v8200 = vpop.permute.xlu0 %8199
      %8201 = vrot.lane.b32.xlu0 %v8150, 32
      %v8202 = vpop.permute.xlu0 %8201
      %v8203 = vsel %vm1090, %v8200, %v8202
      %v8205 = vadd.f32 %v8197, %v8203
      %v8207 = vrot.slane %v8150, 1
      %v8208 = vrot.slane %v8189, 1
      %v8211 = vsel %vm7994, %v8207, 0.0
      %v8212 = vsel %vm7994, %v8208, 0.0
      %8215 = vrot.lane.b32.xlu0 %v8211, 64
      %v8216 = vpop.permute.xlu0 %8215
      %8217 = vrot.lane.b32.xlu0 %v8212, 64
      %v8218 = vpop.permute.xlu0 %8217
      %v8219 = vsel %vm1235, %v8216, %v8218
      %v8221 = vadd.f32 %v8205, %v8219
      %v8222 = vlaneseq
      %v8223 = vshrl.u32 %v8222, 7
      %v8224 = vsub.s32 7, %v8223
      %v8225 = vrot.slane %v1087, %v8224
      %v8226 = vadd.f32 %v8221, %v8225
      %v8227 = vmax.f32 %v8226, 0.0
      %v8228 = vpack.c.bf16 %v8227, %v8227
      %v8253 = vunpack.c.l.b16 %v7775
      %v8254 = vunpack.c.h.b16 %v7775
      %v8255 = vunpack.c.l.b16 %v7776
      %v8256 = vunpack.c.l.b16 %v7777
      %v8257 = vunpack.c.h.b16 %v7777
      %v8258 = vunpack.c.l.b16 %v7778
      %v8259 = vunpack.c.l.b16 %v7779
      %v8260 = vunpack.c.h.b16 %v7779
      %v8261 = vunpack.c.l.b16 %v7780
      %v8262 = vunpack.c.l.b16 %v7781
      %v8263 = vunpack.c.h.b16 %v7781
      %v8264 = vunpack.c.l.b16 %v7782
      %v8265 = vunpack.c.l.b16 %v7783
      %v8266 = vunpack.c.h.b16 %v7783
      %v8267 = vunpack.c.l.b16 %v7784
      %v8268 = vunpack.c.l.b16 %v7785
      %v8269 = vunpack.c.h.b16 %v7785
      %v8270 = vunpack.c.l.b16 %v7786
      %v8271 = vunpack.c.l.b16 %v7787
      %v8272 = vunpack.c.h.b16 %v7787
      %v8273 = vunpack.c.l.b16 %v7788
      %v8274 = vunpack.c.l.b16 %v7789
      %v8275 = vunpack.c.h.b16 %v7789
      %v8276 = vunpack.c.l.b16 %v7790
      %v8277 = vunpack.c.l.b16 %v7791
      %v8278 = vunpack.c.h.b16 %v7791
      %v8279 = vunpack.c.l.b16 %v7792
      %v8280 = vunpack.c.l.b16 %v7793
      %v8281 = vunpack.c.h.b16 %v7793
      %v8282 = vunpack.c.l.b16 %v7794
      %v8283 = vunpack.c.l.b16 %v7795
      %v8284 = vunpack.c.h.b16 %v7795
      %v8285 = vunpack.c.l.b16 %v7796
      %v8286 = vunpack.c.l.b16 %v7797
      %v8287 = vunpack.c.h.b16 %v7797
      %v8288 = vunpack.c.l.b16 %v7798
      %v8289 = vpack.c.b16 %v8256, %v8253
      %v8290 = vpack.c.b16 %v8257, %v8254
      %v8291 = vpack.c.b16 %v8258, %v8255
      %v8292 = vpack.c.b16 %v8262, %v8259
      %v8293 = vpack.c.b16 %v8263, %v8260
      %v8294 = vpack.c.b16 %v8264, %v8261
      %v8295 = vpack.c.b16 %v8268, %v8265
      %v8296 = vpack.c.b16 %v8269, %v8266
      %v8297 = vpack.c.b16 %v8270, %v8267
      %v8298 = vpack.c.b16 %v8274, %v8271
      %v8299 = vpack.c.b16 %v8275, %v8272
      %v8300 = vpack.c.b16 %v8276, %v8273
      %v8301 = vpack.c.b16 %v8280, %v8277
      %v8302 = vpack.c.b16 %v8281, %v8278
      %v8303 = vpack.c.b16 %v8282, %v8279
      %v8304 = vpack.c.b16 %v8286, %v8283
      %v8305 = vpack.c.b16 %v8287, %v8284
      %v8306 = vpack.c.b16 %v8288, %v8285
      %v8326 = vsel %vm8109, %v8228, 0
      %8328 = vmatprep.subr.bf16.mxu0 %v8290
      %8329 = vmatpush1.bf16.msra.mxu0 %v8289
      %8330 = vmatprep.subr.bf16.mxu0 %v8293
      %8331 = vmatpush1.bf16.msra.mxu0 %v8292
      %8332 = vmatprep.subr.bf16.mxu0 %v8296
      %8333 = vmatpush1.bf16.msra.mxu0 %v8295
      %8334 = vmatprep.subr.bf16.mxu0 %v8299
      %8335 = vmatpush1.bf16.msra.mxu0 %v8298
      %8336 = vmatprep.subr.bf16.mxu0 %v8302
      %8337 = vmatpush1.bf16.msra.mxu0 %v8301
      %8338 = vmatprep.subr.bf16.mxu0 %v8305
      %8339 = vmatpush1.bf16.msra.mxu0 %v8304
      %8340 = vmatprep.subr.bf16.mxu0 0
      %8341 = vmatpush1.bf16.msra.mxu0 0
      %8342 = vmatprep.subr.bf16.mxu0 0
      %8343 = vmatpush1.bf16.msra.mxu0 0
      %8344 = vmatprep.subr.bf16.mxu0 0
      %8345 = vmatpush1.bf16.msra.mxu0 0
      %8346 = vmatprep.subr.bf16.mxu0 0
      %8347 = vmatpush1.bf16.msra.mxu0 0
      %8348 = vmatprep.subr.bf16.mxu0 0
      %8349 = vmatpush1.bf16.msra.mxu0 0
      %8350 = vmatprep.subr.bf16.mxu0 0
      %8351 = vmatpush1.bf16.msra.mxu0 0
      %8352 = vmatprep.subr.bf16.mxu0 0
      %8353 = vmatpush1.bf16.msra.mxu0 0
      %8354 = vmatprep.subr.bf16.mxu0 0
      %8355 = vmatpush1.bf16.msra.mxu0 0
      %8356 = vmatprep.subr.bf16.mxu0 0
      %8357 = vmatpush1.bf16.msra.mxu0 0
      %8358 = vmatprep.subr.bf16.mxu0 0
      %8359 = vmatpush1.bf16.msra.mxu0 0
      %8360 = vmatprep.mubr.bf16.mxu0 0
      %8361 = vmatmul.mubr.bf16.gmra.mrb[0].mxu0 %v8326
      %v8362 = vpop.f32.mrb[0].mxu0
      %v8363 = vadd.f32 0.0, %v8362
      %v8364 = vpop.f32.mrb[0].mxu0
      %v8365 = vadd.f32 0.0, %v8364
      %v8366 = vpop.f32.mrb[0].mxu0
      %v8367 = vpop.f32.mrb[0].mxu0
      %8368 = vdwg.mxu0
      %8369 = vmatprep.subr.bf16.mxu0 0
      %8370 = vmatpush1.bf16.msra.mxu0 %v8291
      %8371 = vmatprep.subr.bf16.mxu0 0
      %8372 = vmatpush1.bf16.msra.mxu0 %v8294
      %8373 = vmatprep.subr.bf16.mxu0 0
      %8374 = vmatpush1.bf16.msra.mxu0 %v8297
      %8375 = vmatprep.subr.bf16.mxu0 0
      %8376 = vmatpush1.bf16.msra.mxu0 %v8300
      %8377 = vmatprep.subr.bf16.mxu0 0
      %8378 = vmatpush1.bf16.msra.mxu0 %v8303
      %8379 = vmatprep.subr.bf16.mxu0 0
      %8380 = vmatpush1.bf16.msra.mxu0 %v8306
      %8381 = vmatprep.subr.bf16.mxu0 0
      %8382 = vmatpush1.bf16.msra.mxu0 0
      %8383 = vmatprep.subr.bf16.mxu0 0
      %8384 = vmatpush1.bf16.msra.mxu0 0
      %8385 = vmatprep.subr.bf16.mxu0 0
      %8386 = vmatpush1.bf16.msra.mxu0 0
      %8387 = vmatprep.subr.bf16.mxu0 0
      %8388 = vmatpush1.bf16.msra.mxu0 0
      %8389 = vmatprep.subr.bf16.mxu0 0
      %8390 = vmatpush1.bf16.msra.mxu0 0
      %8391 = vmatprep.subr.bf16.mxu0 0
      %8392 = vmatpush1.bf16.msra.mxu0 0
      %8393 = vmatprep.subr.bf16.mxu0 0
      %8394 = vmatpush1.bf16.msra.mxu0 0
      %8395 = vmatprep.subr.bf16.mxu0 0
      %8396 = vmatpush1.bf16.msra.mxu0 0
      %8397 = vmatprep.subr.bf16.mxu0 0
      %8398 = vmatpush1.bf16.msra.mxu0 0
      %8399 = vmatprep.subr.bf16.mxu0 0
      %8400 = vmatpush1.bf16.msra.mxu0 0
      %8401 = vmatprep.mubr.bf16.mxu0 0
      %8402 = vmatmul.mubr.bf16.gmra.mrb[0].mxu0 %v8326
      %v8403 = vpop.f32.mrb[0].mxu0
      %v8404 = vadd.f32 0.0, %v8403
      %v8405 = vpop.f32.mrb[0].mxu0
      %v8406 = vpop.f32.mrb[0].mxu0
      %v8407 = vpop.f32.mrb[0].mxu0
      %8408 = vdwg.mxu0
      %v8410 = vrot.slane %v8363, 7
      %v8412 = vsel %vm7979, 0.0, %v8410
      %8414 = vrot.lane.b32.xlu0 %v8363, 32
      %v8415 = vpop.permute.xlu0 %8414
      %8416 = vrot.lane.b32.xlu0 %v8365, 32
      %v8417 = vpop.permute.xlu0 %8416
      %v8418 = vsel %vm1090, %v8415, %v8417
      %v8420 = vadd.f32 %v8412, %v8418
      %v8422 = vrot.slane %v8365, 1
      %v8423 = vrot.slane %v8404, 1
      %v8426 = vsel %vm7994, %v8422, 0.0
      %v8427 = vsel %vm7994, %v8423, 0.0
      %8430 = vrot.lane.b32.xlu0 %v8426, 64
      %v8431 = vpop.permute.xlu0 %8430
      %8432 = vrot.lane.b32.xlu0 %v8427, 64
      %v8433 = vpop.permute.xlu0 %8432
      %v8434 = vsel %vm1235, %v8431, %v8433
      %v8436 = vadd.f32 %v8420, %v8434
      %v8437 = vlaneseq
      %v8438 = vshrl.u32 %v8437, 7
      %v8439 = vsub.s32 0, %v8438
      %v8440 = vrot.slane %v1088, %v8439
      %v8441 = vadd.f32 %v8436, %v8440
      %v8442 = vmax.f32 %v8441, 0.0
      %v8443 = vpack.c.bf16 %v8442, %v8442
      %v8468 = vunpack.c.l.b16 %v7799
      %v8469 = vunpack.c.h.b16 %v7799
      %v8470 = vunpack.c.l.b16 %v7800
      %v8471 = vunpack.c.l.b16 %v7801
      %v8472 = vunpack.c.h.b16 %v7801
      %v8473 = vunpack.c.l.b16 %v7802
      %v8474 = vunpack.c.l.b16 %v7803
      %v8475 = vunpack.c.h.b16 %v7803
      %v8476 = vunpack.c.l.b16 %v7804
      %v8477 = vunpack.c.l.b16 %v7805
      %v8478 = vunpack.c.h.b16 %v7805
      %v8479 = vunpack.c.l.b16 %v7806
      %v8480 = vunpack.c.l.b16 %v7807
      %v8481 = vunpack.c.h.b16 %v7807
      %v8482 = vunpack.c.l.b16 %v7808
      %v8483 = vunpack.c.l.b16 %v7809
      %v8484 = vunpack.c.h.b16 %v7809
      %v8485 = vunpack.c.l.b16 %v7810
      %v8486 = vunpack.c.l.b16 %v7811
      %v8487 = vunpack.c.h.b16 %v7811
      %v8488 = vunpack.c.l.b16 %v7812
      %v8489 = vunpack.c.l.b16 %v7813
      %v8490 = vunpack.c.h.b16 %v7813
      %v8491 = vunpack.c.l.b16 %v7814
      %v8492 = vunpack.c.l.b16 %v7815
      %v8493 = vunpack.c.h.b16 %v7815
      %v8494 = vunpack.c.l.b16 %v7816
      %v8495 = vunpack.c.l.b16 %v7817
      %v8496 = vunpack.c.h.b16 %v7817
      %v8497 = vunpack.c.l.b16 %v7818
      %v8498 = vunpack.c.l.b16 %v7819
      %v8499 = vunpack.c.h.b16 %v7819
      %v8500 = vunpack.c.l.b16 %v7820
      %v8501 = vunpack.c.l.b16 %v7821
      %v8502 = vunpack.c.h.b16 %v7821
      %v8503 = vunpack.c.l.b16 %v7822
      %v8504 = vpack.c.b16 %v8471, %v8468
      %v8505 = vpack.c.b16 %v8472, %v8469
      %v8506 = vpack.c.b16 %v8473, %v8470
      %v8507 = vpack.c.b16 %v8477, %v8474
      %v8508 = vpack.c.b16 %v8478, %v8475
      %v8509 = vpack.c.b16 %v8479, %v8476
      %v8510 = vpack.c.b16 %v8483, %v8480
      %v8511 = vpack.c.b16 %v8484, %v8481
      %v8512 = vpack.c.b16 %v8485, %v8482
      %v8513 = vpack.c.b16 %v8489, %v8486
      %v8514 = vpack.c.b16 %v8490, %v8487
      %v8515 = vpack.c.b16 %v8491, %v8488
      %v8516 = vpack.c.b16 %v8495, %v8492
      %v8517 = vpack.c.b16 %v8496, %v8493
      %v8518 = vpack.c.b16 %v8497, %v8494
      %v8519 = vpack.c.b16 %v8501, %v8498
      %v8520 = vpack.c.b16 %v8502, %v8499
      %v8521 = vpack.c.b16 %v8503, %v8500
      %v8541 = vsel %vm8109, %v8443, 0
      %8543 = vmatprep.subr.bf16.mxu0 %v8505
      %8544 = vmatpush1.bf16.msra.mxu0 %v8504
      %8545 = vmatprep.subr.bf16.mxu0 %v8508
      %8546 = vmatpush1.bf16.msra.mxu0 %v8507
      %8547 = vmatprep.subr.bf16.mxu0 %v8511
      %8548 = vmatpush1.bf16.msra.mxu0 %v8510
      %8549 = vmatprep.subr.bf16.mxu0 %v8514
      %8550 = vmatpush1.bf16.msra.mxu0 %v8513
      %8551 = vmatprep.subr.bf16.mxu0 %v8517
      %8552 = vmatpush1.bf16.msra.mxu0 %v8516
      %8553 = vmatprep.subr.bf16.mxu0 %v8520
      %8554 = vmatpush1.bf16.msra.mxu0 %v8519
      %8555 = vmatprep.subr.bf16.mxu0 0
      %8556 = vmatpush1.bf16.msra.mxu0 0
      %8557 = vmatprep.subr.bf16.mxu0 0
      %8558 = vmatpush1.bf16.msra.mxu0 0
      %8559 = vmatprep.subr.bf16.mxu0 0
      %8560 = vmatpush1.bf16.msra.mxu0 0
      %8561 = vmatprep.subr.bf16.mxu0 0
      %8562 = vmatpush1.bf16.msra.mxu0 0
      %8563 = vmatprep.subr.bf16.mxu0 0
      %8564 = vmatpush1.bf16.msra.mxu0 0
      %8565 = vmatprep.subr.bf16.mxu0 0
      %8566 = vmatpush1.bf16.msra.mxu0 0
      %8567 = vmatprep.subr.bf16.mxu0 0
      %8568 = vmatpush1.bf16.msra.mxu0 0
      %8569 = vmatprep.subr.bf16.mxu0 0
      %8570 = vmatpush1.bf16.msra.mxu0 0
      %8571 = vmatprep.subr.bf16.mxu0 0
      %8572 = vmatpush1.bf16.msra.mxu0 0
      %8573 = vmatprep.subr.bf16.mxu0 0
      %8574 = vmatpush1.bf16.msra.mxu0 0
      %8575 = vmatprep.mubr.bf16.mxu0 0
      %8576 = vmatmul.mubr.bf16.gmra.mrb[0].mxu0 %v8541
      %v8577 = vpop.f32.mrb[0].mxu0
      %v8578 = vadd.f32 0.0, %v8577
      %v8579 = vpop.f32.mrb[0].mxu0
      %v8580 = vadd.f32 0.0, %v8579
      %v8581 = vpop.f32.mrb[0].mxu0
      %v8582 = vpop.f32.mrb[0].mxu0
      %8583 = vdwg.mxu0
      %8584 = vmatprep.subr.bf16.mxu0 0
      %8585 = vmatpush1.bf16.msra.mxu0 %v8506
      %8586 = vmatprep.subr.bf16.mxu0 0
      %8587 = vmatpush1.bf16.msra.mxu0 %v8509
      %8588 = vmatprep.subr.bf16.mxu0 0
      %8589 = vmatpush1.bf16.msra.mxu0 %v8512
      %8590 = vmatprep.subr.bf16.mxu0 0
      %8591 = vmatpush1.bf16.msra.mxu0 %v8515
      %8592 = vmatprep.subr.bf16.mxu0 0
      %8593 = vmatpush1.bf16.msra.mxu0 %v8518
      %8594 = vmatprep.subr.bf16.mxu0 0
      %8595 = vmatpush1.bf16.msra.mxu0 %v8521
      %8596 = vmatprep.subr.bf16.mxu0 0
      %8597 = vmatpush1.bf16.msra.mxu0 0
      %8598 = vmatprep.subr.bf16.mxu0 0
      %8599 = vmatpush1.bf16.msra.mxu0 0
      %8600 = vmatprep.subr.bf16.mxu0 0
      %8601 = vmatpush1.bf16.msra.mxu0 0
      %8602 = vmatprep.subr.bf16.mxu0 0
      %8603 = vmatpush1.bf16.msra.mxu0 0
      %8604 = vmatprep.subr.bf16.mxu0 0
      %8605 = vmatpush1.bf16.msra.mxu0 0
      %8606 = vmatprep.subr.bf16.mxu0 0
      %8607 = vmatpush1.bf16.msra.mxu0 0
      %8608 = vmatprep.subr.bf16.mxu0 0
      %8609 = vmatpush1.bf16.msra.mxu0 0
      %8610 = vmatprep.subr.bf16.mxu0 0
      %8611 = vmatpush1.bf16.msra.mxu0 0
      %8612 = vmatprep.subr.bf16.mxu0 0
      %8613 = vmatpush1.bf16.msra.mxu0 0
      %8614 = vmatprep.subr.bf16.mxu0 0
      %8615 = vmatpush1.bf16.msra.mxu0 0
      %8616 = vmatprep.mubr.bf16.mxu0 0
      %8617 = vmatmul.mubr.bf16.gmra.mrb[0].mxu0 %v8541
      %v8618 = vpop.f32.mrb[0].mxu0
      %v8619 = vadd.f32 0.0, %v8618
      %v8620 = vpop.f32.mrb[0].mxu0
      %v8621 = vpop.f32.mrb[0].mxu0
      %v8622 = vpop.f32.mrb[0].mxu0
      %8623 = vdwg.mxu0
      %v8625 = vrot.slane %v8578, 7
      %v8627 = vsel %vm7979, 0.0, %v8625
      %8629 = vrot.lane.b32.xlu0 %v8578, 32
      %v8630 = vpop.permute.xlu0 %8629
      %8631 = vrot.lane.b32.xlu0 %v8580, 32
      %v8632 = vpop.permute.xlu0 %8631
      %v8633 = vsel %vm1090, %v8630, %v8632
      %v8635 = vadd.f32 %v8627, %v8633
      %v8637 = vrot.slane %v8580, 1
      %v8638 = vrot.slane %v8619, 1
      %v8641 = vsel %vm7994, %v8637, 0.0
      %v8642 = vsel %vm7994, %v8638, 0.0
      %8645 = vrot.lane.b32.xlu0 %v8641, 64
      %v8646 = vpop.permute.xlu0 %8645
      %8647 = vrot.lane.b32.xlu0 %v8642, 64
      %v8648 = vpop.permute.xlu0 %8647
      %v8649 = vsel %vm1235, %v8646, %v8648
      %v8651 = vadd.f32 %v8635, %v8649
      %v8652 = vlaneseq
      %v8653 = vshrl.u32 %v8652, 7
      %v8654 = vsub.s32 1, %v8653
      %v8655 = vrot.slane %v1088, %v8654
      %v8656 = vadd.f32 %v8651, %v8655
      %v8657 = vmax.f32 %v8656, 0.0
      %v8658 = vpack.c.bf16 %v8657, %v8657
      %v8683 = vunpack.c.l.b16 %v7823
      %v8684 = vunpack.c.h.b16 %v7823
      %v8685 = vunpack.c.l.b16 %v7824
      %v8686 = vunpack.c.l.b16 %v7825
      %v8687 = vunpack.c.h.b16 %v7825
      %v8688 = vunpack.c.l.b16 %v7826
      %v8689 = vunpack.c.l.b16 %v7827
      %v8690 = vunpack.c.h.b16 %v7827
      %v8691 = vunpack.c.l.b16 %v7828
      %v8692 = vunpack.c.l.b16 %v7829
      %v8693 = vunpack.c.h.b16 %v7829
      %v8694 = vunpack.c.l.b16 %v7830
      %v8695 = vunpack.c.l.b16 %v7831
      %v8696 = vunpack.c.h.b16 %v7831
      %v8697 = vunpack.c.l.b16 %v7832
      %v8698 = vunpack.c.l.b16 %v7833
      %v8699 = vunpack.c.h.b16 %v7833
      %v8700 = vunpack.c.l.b16 %v7834
      %v8701 = vunpack.c.l.b16 %v7835
      %v8702 = vunpack.c.h.b16 %v7835
      %v8703 = vunpack.c.l.b16 %v7836
      %v8704 = vunpack.c.l.b16 %v7837
      %v8705 = vunpack.c.h.b16 %v7837
      %v8706 = vunpack.c.l.b16 %v7838
      %v8707 = vunpack.c.l.b16 %v7839
      %v8708 = vunpack.c.h.b16 %v7839
      %v8709 = vunpack.c.l.b16 %v7840
      %v8710 = vunpack.c.l.b16 %v7841
      %v8711 = vunpack.c.h.b16 %v7841
      %v8712 = vunpack.c.l.b16 %v7842
      %v8713 = vunpack.c.l.b16 %v7843
      %v8714 = vunpack.c.h.b16 %v7843
      %v8715 = vunpack.c.l.b16 %v7844
      %v8716 = vunpack.c.l.b16 %v7845
      %v8717 = vunpack.c.h.b16 %v7845
      %v8718 = vunpack.c.l.b16 %v7846
      %v8719 = vpack.c.b16 %v8686, %v8683
      %v8720 = vpack.c.b16 %v8687, %v8684
      %v8721 = vpack.c.b16 %v8688, %v8685
      %v8722 = vpack.c.b16 %v8692, %v8689
      %v8723 = vpack.c.b16 %v8693, %v8690
      %v8724 = vpack.c.b16 %v8694, %v8691
      %v8725 = vpack.c.b16 %v8698, %v8695
      %v8726 = vpack.c.b16 %v8699, %v8696
      %v8727 = vpack.c.b16 %v8700, %v8697
      %v8728 = vpack.c.b16 %v8704, %v8701
      %v8729 = vpack.c.b16 %v8705, %v8702
      %v8730 = vpack.c.b16 %v8706, %v8703
      %v8731 = vpack.c.b16 %v8710, %v8707
      %v8732 = vpack.c.b16 %v8711, %v8708
      %v8733 = vpack.c.b16 %v8712, %v8709
      %v8734 = vpack.c.b16 %v8716, %v8713
      %v8735 = vpack.c.b16 %v8717, %v8714
      %v8736 = vpack.c.b16 %v8718, %v8715
      %v8756 = vsel %vm8109, %v8658, 0
      %8758 = vmatprep.subr.bf16.mxu0 %v8720
      %8759 = vmatpush1.bf16.msra.mxu0 %v8719
      %8760 = vmatprep.subr.bf16.mxu0 %v8723
      %8761 = vmatpush1.bf16.msra.mxu0 %v8722
      %8762 = vmatprep.subr.bf16.mxu0 %v8726
      %8763 = vmatpush1.bf16.msra.mxu0 %v8725
      %8764 = vmatprep.subr.bf16.mxu0 %v8729
      %8765 = vmatpush1.bf16.msra.mxu0 %v8728
      %8766 = vmatprep.subr.bf16.mxu0 %v8732
      %8767 = vmatpush1.bf16.msra.mxu0 %v8731
      %8768 = vmatprep.subr.bf16.mxu0 %v8735
      %8769 = vmatpush1.bf16.msra.mxu0 %v8734
      %8770 = vmatprep.subr.bf16.mxu0 0
      %8771 = vmatpush1.bf16.msra.mxu0 0
      %8772 = vmatprep.subr.bf16.mxu0 0
      %8773 = vmatpush1.bf16.msra.mxu0 0
      %8774 = vmatprep.subr.bf16.mxu0 0
      %8775 = vmatpush1.bf16.msra.mxu0 0
      %8776 = vmatprep.subr.bf16.mxu0 0
      %8777 = vmatpush1.bf16.msra.mxu0 0
      %8778 = vmatprep.subr.bf16.mxu0 0
      %8779 = vmatpush1.bf16.msra.mxu0 0
      %8780 = vmatprep.subr.bf16.mxu0 0
      %8781 = vmatpush1.bf16.msra.mxu0 0
      %8782 = vmatprep.subr.bf16.mxu0 0
      %8783 = vmatpush1.bf16.msra.mxu0 0
      %8784 = vmatprep.subr.bf16.mxu0 0
      %8785 = vmatpush1.bf16.msra.mxu0 0
      %8786 = vmatprep.subr.bf16.mxu0 0
      %8787 = vmatpush1.bf16.msra.mxu0 0
      %8788 = vmatprep.subr.bf16.mxu0 0
      %8789 = vmatpush1.bf16.msra.mxu0 0
      %8790 = vmatprep.mubr.bf16.mxu0 0
      %8791 = vmatmul.mubr.bf16.gmra.mrb[0].mxu0 %v8756
      %v8792 = vpop.f32.mrb[0].mxu0
      %v8793 = vadd.f32 0.0, %v8792
      %v8794 = vpop.f32.mrb[0].mxu0
      %v8795 = vadd.f32 0.0, %v8794
      %v8796 = vpop.f32.mrb[0].mxu0
      %v8797 = vpop.f32.mrb[0].mxu0
      %8798 = vdwg.mxu0
      %8799 = vmatprep.subr.bf16.mxu0 0
      %8800 = vmatpush1.bf16.msra.mxu0 %v8721
      %8801 = vmatprep.subr.bf16.mxu0 0
      %8802 = vmatpush1.bf16.msra.mxu0 %v8724
      %8803 = vmatprep.subr.bf16.mxu0 0
      %8804 = vmatpush1.bf16.msra.mxu0 %v8727
      %8805 = vmatprep.subr.bf16.mxu0 0
      %8806 = vmatpush1.bf16.msra.mxu0 %v8730
      %8807 = vmatprep.subr.bf16.mxu0 0
      %8808 = vmatpush1.bf16.msra.mxu0 %v8733
      %8809 = vmatprep.subr.bf16.mxu0 0
      %8810 = vmatpush1.bf16.msra.mxu0 %v8736
      %8811 = vmatprep.subr.bf16.mxu0 0
      %8812 = vmatpush1.bf16.msra.mxu0 0
      %8813 = vmatprep.subr.bf16.mxu0 0
      %8814 = vmatpush1.bf16.msra.mxu0 0
      %8815 = vmatprep.subr.bf16.mxu0 0
      %8816 = vmatpush1.bf16.msra.mxu0 0
      %8817 = vmatprep.subr.bf16.mxu0 0
      %8818 = vmatpush1.bf16.msra.mxu0 0
      %8819 = vmatprep.subr.bf16.mxu0 0
      %8820 = vmatpush1.bf16.msra.mxu0 0
      %8821 = vmatprep.subr.bf16.mxu0 0
      %8822 = vmatpush1.bf16.msra.mxu0 0
      %8823 = vmatprep.subr.bf16.mxu0 0
      %8824 = vmatpush1.bf16.msra.mxu0 0
      %8825 = vmatprep.subr.bf16.mxu0 0
      %8826 = vmatpush1.bf16.msra.mxu0 0
      %8827 = vmatprep.subr.bf16.mxu0 0
      %8828 = vmatpush1.bf16.msra.mxu0 0
      %8829 = vmatprep.subr.bf16.mxu0 0
      %8830 = vmatpush1.bf16.msra.mxu0 0
      %8831 = vmatprep.mubr.bf16.mxu0 0
      %8832 = vmatmul.mubr.bf16.gmra.mrb[0].mxu0 %v8756
      %v8833 = vpop.f32.mrb[0].mxu0
      %v8834 = vadd.f32 0.0, %v8833
      %v8835 = vpop.f32.mrb[0].mxu0
      %v8836 = vpop.f32.mrb[0].mxu0
      %v8837 = vpop.f32.mrb[0].mxu0
      %8838 = vdwg.mxu0
      %v8840 = vrot.slane %v8793, 7
      %v8842 = vsel %vm7979, 0.0, %v8840
      %8844 = vrot.lane.b32.xlu0 %v8793, 32
      %v8845 = vpop.permute.xlu0 %8844
      %8846 = vrot.lane.b32.xlu0 %v8795, 32
      %v8847 = vpop.permute.xlu0 %8846
      %v8848 = vsel %vm1090, %v8845, %v8847
      %v8850 = vadd.f32 %v8842, %v8848
      %v8852 = vrot.slane %v8795, 1
      %v8853 = vrot.slane %v8834, 1
      %v8856 = vsel %vm7994, %v8852, 0.0
      %v8857 = vsel %vm7994, %v8853, 0.0
      %8860 = vrot.lane.b32.xlu0 %v8856, 64
      %v8861 = vpop.permute.xlu0 %8860
      %8862 = vrot.lane.b32.xlu0 %v8857, 64
      %v8863 = vpop.permute.xlu0 %8862
      %v8864 = vsel %vm1235, %v8861, %v8863
      %v8866 = vadd.f32 %v8850, %v8864
      %v8867 = vlaneseq
      %v8868 = vshrl.u32 %v8867, 7
      %v8869 = vsub.s32 2, %v8868
      %v8870 = vrot.slane %v1088, %v8869
      %v8871 = vadd.f32 %v8866, %v8870
      %v8872 = vmax.f32 %v8871, 0.0
      %v8873 = vpack.c.bf16 %v8872, %v8872
      %v8886 = vunpack.c.l.b16 %v7847
      %v8887 = vunpack.c.l.b16 %v7848
      %v8888 = vunpack.c.l.b16 %v7849
      %v8889 = vunpack.c.l.b16 %v7850
      %v8890 = vunpack.c.l.b16 %v7851
      %v8891 = vunpack.c.l.b16 %v7852
      %v8892 = vunpack.c.l.b16 %v7853
      %v8893 = vunpack.c.l.b16 %v7854
      %v8894 = vunpack.c.l.b16 %v7855
      %v8895 = vunpack.c.l.b16 %v7856
      %v8896 = vunpack.c.l.b16 %v7857
      %v8897 = vunpack.c.l.b16 %v7858
      %v8898 = vpack.c.b16 %v8887, %v8886
      %v8899 = vpack.c.b16 %v8889, %v8888
      %v8900 = vpack.c.b16 %v8891, %v8890
      %v8901 = vpack.c.b16 %v8893, %v8892
      %v8902 = vpack.c.b16 %v8895, %v8894
      %v8903 = vpack.c.b16 %v8897, %v8896
      %v8911 = vsel %vm8109, %v8873, 0
      %8913 = vmatprep.subr.bf16.mxu0 0
      %8914 = vmatpush1.bf16.msra.mxu0 %v8898
      %8915 = vmatprep.subr.bf16.mxu0 0
      %8916 = vmatpush1.bf16.msra.mxu0 %v8899
      %8917 = vmatprep.subr.bf16.mxu0 0
      %8918 = vmatpush1.bf16.msra.mxu0 %v8900
      %8919 = vmatprep.subr.bf16.mxu0 0
      %8920 = vmatpush1.bf16.msra.mxu0 %v8901
      %8921 = vmatprep.subr.bf16.mxu0 0
      %8922 = vmatpush1.bf16.msra.mxu0 %v8902
      %8923 = vmatprep.subr.bf16.mxu0 0
      %8924 = vmatpush1.bf16.msra.mxu0 %v8903
      %8925 = vmatprep.subr.bf16.mxu0 0
      %8926 = vmatpush1.bf16.msra.mxu0 0
      %8927 = vmatprep.subr.bf16.mxu0 0
      %8928 = vmatpush1.bf16.msra.mxu0 0
      %8929 = vmatprep.subr.bf16.mxu0 0
      %8930 = vmatpush1.bf16.msra.mxu0 0
      %8931 = vmatprep.subr.bf16.mxu0 0
      %8932 = vmatpush1.bf16.msra.mxu0 0
      %8933 = vmatprep.subr.bf16.mxu0 0
      %8934 = vmatpush1.bf16.msra.mxu0 0
      %8935 = vmatprep.subr.bf16.mxu0 0
      %8936 = vmatpush1.bf16.msra.mxu0 0
      %8937 = vmatprep.subr.bf16.mxu0 0
      %8938 = vmatpush1.bf16.msra.mxu0 0
      %8939 = vmatprep.subr.bf16.mxu0 0
      %8940 = vmatpush1.bf16.msra.mxu0 0
      %8941 = vmatprep.subr.bf16.mxu0 0
      %8942 = vmatpush1.bf16.msra.mxu0 0
      %8943 = vmatprep.subr.bf16.mxu0 0
      %8944 = vmatpush1.bf16.msra.mxu0 0
      %8945 = vmatprep.mubr.bf16.mxu0 0
      %8946 = vmatmul.mubr.bf16.gmra.mrb[0].mxu0 %v8911
      %v8947 = vpop.f32.mrb[0].mxu0
      %v8948 = vadd.f32 0.0, %v8947
      %v8949 = vpop.f32.mrb[0].mxu0
      %v8950 = vpop.f32.mrb[0].mxu0
      %v8951 = vpop.f32.mrb[0].mxu0
      %8952 = vdwg.mxu0
      %v8954 = vrot.slane %v8948, 7
      %v8956 = vsel %vm7979, 0.0, %v8954
      %8957 = vrot.lane.b32.xlu0 %v8948, 127
      %v8958 = vpop.permute.xlu0 %8957
      %v8960 = vadd.f32 %v8956, %v8958
      %v8961 = vrot.slane %v8948, 1
      %v8963 = vsel %vm7994, %v8961, 0.0
      %8965 = vrot.lane.b32.xlu0 %v8963, 126
      %v8966 = vpop.permute.xlu0 %8965
      %v8968 = vadd.f32 %v8960, %v8966
      %v8969 = vlaneseq
      %v8970 = vshrl.u32 %v8969, 7
      %v8971 = vsub.s32 3, %v8970
      %v8972 = vrot.slane %v1088, %v8971
      %v8973 = vadd.f32 %v8968, %v8972
      %8975 = vrot.lane.b32.xlu0 %v7476, 1
      %v8976 = vpop.permute.xlu0 %8975
      %vm8978 = vcmask 7168
      %v8979 = vsel %vm8978, %v8973, %v8976
      %vm8980 = vcmask 72704
      %v8981 = vsel %vm8980, %v8979, 0.0
      %8982 = vst [vmem:[%s1080] sm:$0xff] %v8981
      %p8983 = scmp.lt.s32.totalorder %s78, 1
      %s8984 = scalar_select %p8983, %s78, 1
      %s8985 = smul.addr %s8984, 8
      %s8986 = scalar_lea.vmem %s67, %s8985
      // Predicated region
      $region153: #{transformer_forward.1} parent=151 // pred_check
        %p8987 = pneg %p814
      $region154: #{transformer_forward.1} parent=151 // pred_check_branch
        %8989 = sbr.rel (%p8987) target = $region156
      $region155: #{transformer_forward.1} parent=151 // pred_region
        _
      $region156: #{transformer_forward.1} parent=151 // pred_fallthru
        _
    $region152: #{transformer_forward.1} parent=5 // pred_fallthru
      _
    %p8990 = scmp.le.s32.totalorder 2, %s73
    // Predicated region
    $region157: #{transformer_forward.1} parent=5 // pred_check
      %p8991 = pneg %p8990
    $region158: #{transformer_forward.1} parent=5 // pred_check_branch
      %8993 = sbr.rel (%p8991) target = $region160
    $region159: #{transformer_forward.1} parent=5 // pred_region
      %s8994 = ssub.s32 %s73, 2
      // Predicated region
      $region161: #{transformer_forward.1} parent=159 // pred_check
        %p8995 = pneg %p820
      $region162: #{transformer_forward.1} parent=159 // pred_check_branch
        %8997 = sbr.rel (%p8995) target = $region164
      $region163: #{transformer_forward.1} parent=159 // pred_region
        %p8998 = scmp.lt.s32.totalorder %s79, 1
        %s8999 = scalar_select %p8998, %s79, 1
        %s9000 = smul.addr %s8999, 8
        %s9001 = scalar_lea.vmem %s67, %s9000
      $region164: #{transformer_forward.1} parent=159 // pred_fallthru
        _
    $region160: #{transformer_forward.1} parent=5 // pred_fallthru
      _
  $region6: #{transformer_forward.1} parent=0 // loop_footer
    %s77 = sadd.s32 1, %s73
  $region7: #{transformer_forward.1} parent=0 // loop_footer_branch
    %72 = sbr.rel target = $region3
  $region8: #{transformer_forward.1} parent=0 // loop_exit
    _

</llo_original>
